<compile_context>
chip_gen: v6e
topology: v6e:2x2x1
jax: 0.10.0
libtpu: 0.0.40
codegen_flags: <defaults>
</compile_context>

<pallas_src>
import jax
import jax.numpy as jnp
from jax.experimental import pallas as pl
from jax.experimental.pallas import tpu as pltpu

H = W = 7
P = H * W                        # 49 pixels per image
C_IN, C_MID, C_OUT = 512, 256, 64
FLAT = C_OUT * P                 # 3136
EPS = 1e-5
_CHUNK_IMGS = 16                 # conv phase processes 16 images (784 rows) at a time
_CHUNK_ROWS = _CHUNK_IMGS * P    # 784 (multiple of 16 -> bf16 sublane-pack aligned)


def _make_kernel(img: int, dout_pad: int):
    """Kernel for one grid step handling `img` whole images (img*49 rows)."""
    n_chunks = img // _CHUNK_IMGS

    def kernel(x_ref, w1_ref, s1_ref, t1_ref, w2_ref, s2_ref, t2_ref,
               wfc_ref, bfc_ref, o_ref, z_ref):
        # ---- Phase 1: conv1 + bn1 + relu, conv2 + bn2 + relu (per pixel-row) ----
        for s in range(n_chunks):                       # static, unrolled
            r0 = s * _CHUNK_ROWS
            xs = x_ref[r0:r0 + _CHUNK_ROWS, :]          # (784, 512) bf16
            h = jnp.dot(xs, w1_ref[...], preferred_element_type=jnp.float32)
            h = jnp.maximum(h * s1_ref[...] + t1_ref[...], 0.0)   # (784, 256) f32
            z = jnp.dot(h.astype(jnp.bfloat16), w2_ref[...],
                        preferred_element_type=jnp.float32)
            z = jnp.maximum(z * s2_ref[...] + t2_ref[...], 0.0)   # (784, 64) f32
            z_ref[r0:r0 + _CHUNK_ROWS, :] = z

        # ---- Phase 2: fused FC, accumulated per pixel position ----
        # rows in z_ref are ordered (pixel, image-in-tile), so the rows for
        # pixel p across all images of the tile are one contiguous aligned slab.
        acc = jnp.zeros((img, dout_pad), jnp.float32)
        for p in range(P):                              # static, unrolled
            zp = z_ref[p * img:(p + 1) * img, :].astype(jnp.bfloat16)  # (img, 64)
            acc = acc + jnp.dot(zp, wfc_ref[p], preferred_element_type=jnp.float32)
        o_ref[...] = acc + bfc_ref[...]

    return kernel


def _fold_bn(conv_b, gamma, beta, mean, var):
    """Fold conv bias + eval-mode BN into per-channel scale/shift (f32)."""
    inv_std = 1.0 / jnp.sqrt(var + EPS)
    scale = gamma * inv_std
    shift = (conv_b - mean) * scale + beta
    return (scale.reshape(1, -1).astype(jnp.float32),
            shift.reshape(1, -1).astype(jnp.float32))


def resnet_visual_encoder(x_nchw, params):
    """x_nchw: (B, 512, 7, 7) float32 -> (B, dframe) float32."""
    B = x_nchw.shape[0]
    dframe = params["wfc"].shape[1]
    dout_pad = ((dframe + 127) // 128) * 128            # lane-dense output width

    # Whole-image tiles; multiple of 16 images so bf16 rows stay pack-aligned.
    img = 32 if B >= 32 else 16
    b_pad = ((B + img - 1) // img) * img
    n_tiles = b_pad // img
    rows_per_tile = img * P

    if b_pad != B:
        x_nchw = jnp.concatenate(
            [x_nchw, jnp.zeros((b_pad - B, C_IN, H, W), x_nchw.dtype)], axis=0)

    # Rows ordered (tile, pixel, image-in-tile); channels on the lane axis.
    x_rows = (x_nchw.reshape(n_tiles, img, C_IN, P)
              .transpose(0, 3, 1, 2)
              .reshape(n_tiles * rows_per_tile, C_IN)
              .astype(jnp.bfloat16))

    s1, t1 = _fold_bn(params["b1"], params["g1"], params["beta1"],
                      params["m1"], params["v1"])
    s2, t2 = _fold_bn(params["b2"], params["g2"], params["beta2"],
                      params["m2"], params["v2"])
    w1 = params["w1"].astype(jnp.bfloat16)
    w2 = params["w2"].astype(jnp.bfloat16)

    # FC weight: rows are channel-major (c*49 + p) in PyTorch's flatten order.
    # Rearrange once to per-pixel (p, c, n) and pad output lanes to 128*k.
    wfc3 = params["wfc"].reshape(C_OUT, P, dframe).transpose(1, 0, 2)   # (49, 64, dframe)
    wfc3 = jnp.pad(wfc3, ((0, 0), (0, 0), (0, dout_pad - dframe))).astype(jnp.bfloat16)
    bfc = jnp.pad(params["bfc"], (0, dout_pad - dframe)).reshape(1, dout_pad)
    bfc = bfc.astype(jnp.float32)

    flops = (2 * b_pad * P * (C_IN * C_MID + C_MID * C_OUT)
             + 2 * b_pad * FLAT * dout_pad)
    bytes_accessed = (x_rows.size * 2 + w1.size * 2 + w2.size * 2 + wfc3.size * 2
                      + (s1.size + t1.size + s2.size + t2.size + bfc.size) * 4
                      + b_pad * dout_pad * 4)

    grid_spec = pltpu.PrefetchScalarGridSpec(
        num_scalar_prefetch=0,
        grid=(n_tiles,),
        in_specs=[
            pl.BlockSpec((rows_per_tile, C_IN), lambda i: (i, 0)),    # x rows (tiled)
            pl.BlockSpec((C_IN, C_MID), lambda i: (0, 0)),            # w1 (resident)
            pl.BlockSpec((1, C_MID), lambda i: (0, 0)),               # bn1 scale
            pl.BlockSpec((1, C_MID), lambda i: (0, 0)),               # bn1 shift
            pl.BlockSpec((C_MID, C_OUT), lambda i: (0, 0)),           # w2 (resident)
            pl.BlockSpec((1, C_OUT), lambda i: (0, 0)),               # bn2 scale
            pl.BlockSpec((1, C_OUT), lambda i: (0, 0)),               # bn2 shift
            pl.BlockSpec((P, C_OUT, dout_pad), lambda i: (0, 0, 0)),  # fc weight (per pixel)
            pl.BlockSpec((1, dout_pad), lambda i: (0, 0)),            # fc bias
        ],
        out_specs=pl.BlockSpec((img, dout_pad), lambda i: (i, 0)),
        scratch_shapes=[pltpu.VMEM((rows_per_tile, C_OUT), jnp.float32)],
    )

    out_pad = pl.pallas_call(
        _make_kernel(img, dout_pad),
        out_shape=jax.ShapeDtypeStruct((b_pad, dout_pad), jnp.float32),
        grid_spec=grid_spec,
        compiler_params=pltpu.CompilerParams(dimension_semantics=("parallel",)),
        cost_estimate=pl.CostEstimate(flops=flops, transcendentals=0,
                                      bytes_accessed=bytes_accessed),
    )(x_rows, w1, s1, t1, w2, s2, t2, wfc3, bfc)

    return out_pad[:B, :dframe]


def init_params(key, dframe):
    ks = jax.random.split(key, 14)
    p = {}
    # conv weights stored already transposed for right-matmul: (C_in, C_out)
    p["w1"] = jax.random.normal(ks[0], (C_IN, C_MID), jnp.float32) * 0.02
    p["b1"] = jax.random.normal(ks[1], (C_MID,), jnp.float32) * 0.01
    p["w2"] = jax.random.normal(ks[2], (C_MID, C_OUT), jnp.float32) * 0.02
    p["b2"] = jax.random.normal(ks[3], (C_OUT,), jnp.float32) * 0.01
    p["g1"] = 1.0 + 0.1 * jax.random.normal(ks[4], (C_MID,), jnp.float32)
    p["beta1"] = 0.1 * jax.random.normal(ks[5], (C_MID,), jnp.float32)
    p["m1"] = 0.05 * jax.random.normal(ks[6], (C_MID,), jnp.float32)
    p["v1"] = jax.random.uniform(ks[7], (C_MID,), jnp.float32, 0.5, 1.5)
    p["g2"] = 1.0 + 0.1 * jax.random.normal(ks[8], (C_OUT,), jnp.float32)
    p["beta2"] = 0.1 * jax.random.normal(ks[9], (C_OUT,), jnp.float32)
    p["m2"] = 0.05 * jax.random.normal(ks[10], (C_OUT,), jnp.float32)
    p["v2"] = jax.random.uniform(ks[11], (C_OUT,), jnp.float32, 0.5, 1.5)
    p["wfc"] = jax.random.normal(ks[12], (FLAT, dframe), jnp.float32) * 0.02
    p["bfc"] = jax.random.normal(ks[13], (dframe,), jnp.float32) * 0.01
    return p


def _reference(x_nchw, params):
    """Plain-JAX reference (eval-mode BN), mirroring the kernel's bf16
    rounding points so the comparison is tight."""
    bf = lambda a: a.astype(jnp.bfloat16).astype(jnp.float32)
    B = x_nchw.shape[0]
    x = bf(jnp.transpose(x_nchw, (0, 2, 3, 1)).reshape(B * P, C_IN))
    h = x @ bf(params["w1"]) + params["b1"]
    h = (h - params["m1"]) / jnp.sqrt(params["v1"] + EPS) * params["g1"] + params["beta1"]
    h = jnp.maximum(h, 0.0)
    z = bf(h) @ bf(params["w2"]) + params["b2"]
    z = (z - params["m2"]) / jnp.sqrt(params["v2"] + EPS) * params["g2"] + params["beta2"]
    z = jnp.maximum(z, 0.0)
    # PyTorch flatten: (B, 64, 7, 7).view(-1, 3136)  => channel-major
    z = jnp.transpose(z.reshape(B, H, W, C_OUT), (0, 3, 1, 2)).reshape(B, FLAT)
    return bf(z) @ bf(params["wfc"]) + params["bfc"]


if __name__ == "__main__":
    dframe = 32
    B = 2
    key = jax.random.PRNGKey(0)
    k_x, k_p = jax.random.split(key)
    x = jax.random.normal(k_x, (B, C_IN, H, W), jnp.float32)
    params = init_params(k_p, dframe)

    fwd = jax.jit(resnet_visual_encoder)
    out = jax.block_until_ready(fwd(x, params))
    ref = jax.block_until_ready(_reference(x, params))

    assert out.shape == (B, dframe), out.shape
    max_err = float(jnp.max(jnp.abs(out - ref)))
    assert jnp.allclose(out, ref, atol=2e-2, rtol=2e-2), max_err
    print("KERNEL_OK")
</pallas_src>

<mosaic_0001>
module attributes {stable_mosaic.version = 11 : i64} {
  func.func @kernel(%arg0: i32, %arg1: memref<784x512xbf16, #tpu.memory_space<vmem>>, %arg2: memref<512x256xbf16, #tpu.memory_space<vmem>>, %arg3: memref<1x256xf32, #tpu.memory_space<vmem>>, %arg4: memref<1x256xf32, #tpu.memory_space<vmem>>, %arg5: memref<256x64xbf16, #tpu.memory_space<vmem>>, %arg6: memref<1x64xf32, #tpu.memory_space<vmem>>, %arg7: memref<1x64xf32, #tpu.memory_space<vmem>>, %arg8: memref<49x64x128xbf16, #tpu.memory_space<vmem>>, %arg9: memref<1x128xf32, #tpu.memory_space<vmem>>, %arg10: memref<16x128xf32, #tpu.memory_space<vmem>>, %arg11: memref<784x64xf32, #tpu.memory_space<vmem>>) attributes {dimension_semantics = [#tpu.dimension_semantics<parallel>], iteration_bounds = array<i64: 1>, scalar_prefetch = 0 : i64, scratch_operands = 1 : i64, tpu.core_type = #tpu.core_type<tc>, window_params = [{transform_indices = @transform_0, window_bounds = array<i64: 784, 512>}, {pipeline_mode = #tpu.pipeline_mode<synchronous>, transform_indices = @transform_1, window_bounds = array<i64: 512, 256>}, {pipeline_mode = #tpu.pipeline_mode<synchronous>, transform_indices = @transform_2, window_bounds = array<i64: 1, 256>}, {pipeline_mode = #tpu.pipeline_mode<synchronous>, transform_indices = @transform_3, window_bounds = array<i64: 1, 256>}, {pipeline_mode = #tpu.pipeline_mode<synchronous>, transform_indices = @transform_4, window_bounds = array<i64: 256, 64>}, {pipeline_mode = #tpu.pipeline_mode<synchronous>, transform_indices = @transform_5, window_bounds = array<i64: 1, 64>}, {pipeline_mode = #tpu.pipeline_mode<synchronous>, transform_indices = @transform_6, window_bounds = array<i64: 1, 64>}, {pipeline_mode = #tpu.pipeline_mode<synchronous>, transform_indices = @transform_7, window_bounds = array<i64: 49, 64, 128>}, {pipeline_mode = #tpu.pipeline_mode<synchronous>, transform_indices = @transform_8, window_bounds = array<i64: 1, 128>}, {transform_indices = @transform_9, window_bounds = array<i64: 16, 128>}]} {
    %c0 = arith.constant 0 : index
    %c0_0 = arith.constant 0 : index
    %0 = vector.load %arg1[%c0, %c0_0] : memref<784x512xbf16, #tpu.memory_space<vmem>>, vector<784x512xbf16>
    %c0_1 = arith.constant 0 : index
    %c0_2 = arith.constant 0 : index
    %1 = vector.load %arg2[%c0_1, %c0_2] : memref<512x256xbf16, #tpu.memory_space<vmem>>, vector<512x256xbf16>
    %cst = arith.constant dense<0.000000e+00> : vector<784x256xf32>
    %2 = tpu.matmul %0, %1, %cst {dimension_numbers = #tpu.dot_dimension_numbers<[1], [0], [0], [1], [0, 0, 1, 1], [], []>} : vector<784x512xbf16>, vector<512x256xbf16>, vector<784x256xf32> -> vector<784x256xf32>
    %c0_3 = arith.constant 0 : index
    %c0_4 = arith.constant 0 : index
    %3 = vector.load %arg3[%c0_3, %c0_4] : memref<1x256xf32, #tpu.memory_space<vmem>>, vector<1x256xf32>
    %4 = vector.broadcast %3 : vector<1x256xf32> to vector<784x256xf32>
    %5 = arith.mulf %2, %4 : vector<784x256xf32>
    %c0_5 = arith.constant 0 : index
    %c0_6 = arith.constant 0 : index
    %6 = vector.load %arg4[%c0_5, %c0_6] : memref<1x256xf32, #tpu.memory_space<vmem>>, vector<1x256xf32>
    %7 = vector.broadcast %6 : vector<1x256xf32> to vector<784x256xf32>
    %8 = arith.addf %5, %7 : vector<784x256xf32>
    %cst_7 = arith.constant 0.000000e+00 : f32
    %9 = vector.broadcast %cst_7 : f32 to vector<784x256xf32>
    %10 = arith.maximumf %8, %9 : vector<784x256xf32>
    %11 = arith.truncf %10 : vector<784x256xf32> to vector<784x256xbf16>
    %c0_8 = arith.constant 0 : index
    %c0_9 = arith.constant 0 : index
    %12 = vector.load %arg5[%c0_8, %c0_9] : memref<256x64xbf16, #tpu.memory_space<vmem>>, vector<256x64xbf16>
    %cst_10 = arith.constant dense<0.000000e+00> : vector<784x64xf32>
    %13 = tpu.matmul %11, %12, %cst_10 {dimension_numbers = #tpu.dot_dimension_numbers<[1], [0], [0], [1], [0, 0, 1, 1], [], []>} : vector<784x256xbf16>, vector<256x64xbf16>, vector<784x64xf32> -> vector<784x64xf32>
    %c0_11 = arith.constant 0 : index
    %c0_12 = arith.constant 0 : index
    %14 = vector.load %arg6[%c0_11, %c0_12] : memref<1x64xf32, #tpu.memory_space<vmem>>, vector<1x64xf32>
    %15 = vector.broadcast %14 : vector<1x64xf32> to vector<784x64xf32>
    %16 = arith.mulf %13, %15 : vector<784x64xf32>
    %c0_13 = arith.constant 0 : index
    %c0_14 = arith.constant 0 : index
    %17 = vector.load %arg7[%c0_13, %c0_14] : memref<1x64xf32, #tpu.memory_space<vmem>>, vector<1x64xf32>
    %18 = vector.broadcast %17 : vector<1x64xf32> to vector<784x64xf32>
    %19 = arith.addf %16, %18 : vector<784x64xf32>
    %cst_15 = arith.constant 0.000000e+00 : f32
    %20 = vector.broadcast %cst_15 : f32 to vector<784x64xf32>
    %21 = arith.maximumf %19, %20 : vector<784x64xf32>
    %c0_16 = arith.constant 0 : index
    %c0_17 = arith.constant 0 : index
    %22 = vector.load %arg11[%c0_16, %c0_17] : memref<784x64xf32, #tpu.memory_space<vmem>>, vector<784x64xf32>
    tpu.vector_store %arg11[%c0_16, %c0_17], %21 {strides = array<i32>} : memref<784x64xf32, #tpu.memory_space<vmem>>, vector<784x64xf32>,
    %cst_18 = arith.constant 0.000000e+00 : f32
    %23 = vector.broadcast %cst_18 : f32 to vector<16x128xf32>
    %c0_19 = arith.constant 0 : index
    %c0_20 = arith.constant 0 : index
    %24 = vector.load %arg11[%c0_19, %c0_20] : memref<784x64xf32, #tpu.memory_space<vmem>>, vector<16x64xf32>
    %25 = arith.truncf %24 : vector<16x64xf32> to vector<16x64xbf16>
    %c0_21 = arith.constant 0 : index
    %c0_22 = arith.constant 0 : index
    %c0_23 = arith.constant 0 : index
    %26 = vector.load %arg8[%c0_21, %c0_22, %c0_23] : memref<49x64x128xbf16, #tpu.memory_space<vmem>>, vector<1x64x128xbf16>
    %27 = vector.shape_cast %26 : vector<1x64x128xbf16> to vector<64x128xbf16>
    %cst_24 = arith.constant dense<0.000000e+00> : vector<16x128xf32>
    %28 = tpu.matmul %25, %27, %cst_24 {dimension_numbers = #tpu.dot_dimension_numbers<[1], [0], [0], [1], [0, 0, 1, 1], [], []>} : vector<16x64xbf16>, vector<64x128xbf16>, vector<16x128xf32> -> vector<16x128xf32>
    %29 = arith.addf %23, %28 : vector<16x128xf32>
    %c16 = arith.constant 16 : index
    %c0_25 = arith.constant 0 : index
    %30 = vector.load %arg11[%c16, %c0_25] : memref<784x64xf32, #tpu.memory_space<vmem>>, vector<16x64xf32>
    %31 = arith.truncf %30 : vector<16x64xf32> to vector<16x64xbf16>
    %c1 = arith.constant 1 : index
    %c0_26 = arith.constant 0 : index
    %c0_27 = arith.constant 0 : index
    %32 = vector.load %arg8[%c1, %c0_26, %c0_27] : memref<49x64x128xbf16, #tpu.memory_space<vmem>>, vector<1x64x128xbf16>
    %33 = vector.shape_cast %32 : vector<1x64x128xbf16> to vector<64x128xbf16>
    %cst_28 = arith.constant dense<0.000000e+00> : vector<16x128xf32>
    %34 = tpu.matmul %31, %33, %cst_28 {dimension_numbers = #tpu.dot_dimension_numbers<[1], [0], [0], [1], [0, 0, 1, 1], [], []>} : vector<16x64xbf16>, vector<64x128xbf16>, vector<16x128xf32> -> vector<16x128xf32>
    %35 = arith.addf %29, %34 : vector<16x128xf32>
    %c32 = arith.constant 32 : index
    %c0_29 = arith.constant 0 : index
    %36 = vector.load %arg11[%c32, %c0_29] : memref<784x64xf32, #tpu.memory_space<vmem>>, vector<16x64xf32>
    %37 = arith.truncf %36 : vector<16x64xf32> to vector<16x64xbf16>
    %c2 = arith.constant 2 : index
    %c0_30 = arith.constant 0 : index
    %c0_31 = arith.constant 0 : index
    %38 = vector.load %arg8[%c2, %c0_30, %c0_31] : memref<49x64x128xbf16, #tpu.memory_space<vmem>>, vector<1x64x128xbf16>
    %39 = vector.shape_cast %38 : vector<1x64x128xbf16> to vector<64x128xbf16>
    %cst_32 = arith.constant dense<0.000000e+00> : vector<16x128xf32>
    %40 = tpu.matmul %37, %39, %cst_32 {dimension_numbers = #tpu.dot_dimension_numbers<[1], [0], [0], [1], [0, 0, 1, 1], [], []>} : vector<16x64xbf16>, vector<64x128xbf16>, vector<16x128xf32> -> vector<16x128xf32>
    %41 = arith.addf %35, %40 : vector<16x128xf32>
    %c48 = arith.constant 48 : index
    %c0_33 = arith.constant 0 : index
    %42 = vector.load %arg11[%c48, %c0_33] : memref<784x64xf32, #tpu.memory_space<vmem>>, vector<16x64xf32>
    %43 = arith.truncf %42 : vector<16x64xf32> to vector<16x64xbf16>
    %c3 = arith.constant 3 : index
    %c0_34 = arith.constant 0 : index
    %c0_35 = arith.constant 0 : index
    %44 = vector.load %arg8[%c3, %c0_34, %c0_35] : memref<49x64x128xbf16, #tpu.memory_space<vmem>>, vector<1x64x128xbf16>
    %45 = vector.shape_cast %44 : vector<1x64x128xbf16> to vector<64x128xbf16>
    %cst_36 = arith.constant dense<0.000000e+00> : vector<16x128xf32>
    %46 = tpu.matmul %43, %45, %cst_36 {dimension_numbers = #tpu.dot_dimension_numbers<[1], [0], [0], [1], [0, 0, 1, 1], [], []>} : vector<16x64xbf16>, vector<64x128xbf16>, vector<16x128xf32> -> vector<16x128xf32>
    %47 = arith.addf %41, %46 : vector<16x128xf32>
    %c64 = arith.constant 64 : index
    %c0_37 = arith.constant 0 : index
    %48 = vector.load %arg11[%c64, %c0_37] : memref<784x64xf32, #tpu.memory_space<vmem>>, vector<16x64xf32>
    %49 = arith.truncf %48 : vector<16x64xf32> to vector<16x64xbf16>
    %c4 = arith.constant 4 : index
    %c0_38 = arith.constant 0 : index
    %c0_39 = arith.constant 0 : index
    %50 = vector.load %arg8[%c4, %c0_38, %c0_39] : memref<49x64x128xbf16, #tpu.memory_space<vmem>>, vector<1x64x128xbf16>
    %51 = vector.shape_cast %50 : vector<1x64x128xbf16> to vector<64x128xbf16>
    %cst_40 = arith.constant dense<0.000000e+00> : vector<16x128xf32>
    %52 = tpu.matmul %49, %51, %cst_40 {dimension_numbers = #tpu.dot_dimension_numbers<[1], [0], [0], [1], [0, 0, 1, 1], [], []>} : vector<16x64xbf16>, vector<64x128xbf16>, vector<16x128xf32> -> vector<16x128xf32>
    %53 = arith.addf %47, %52 : vector<16x128xf32>
    %c80 = arith.constant 80 : index
    %c0_41 = arith.constant 0 : index
    %54 = vector.load %arg11[%c80, %c0_41] : memref<784x64xf32, #tpu.memory_space<vmem>>, vector<16x64xf32>
    %55 = arith.truncf %54 : vector<16x64xf32> to vector<16x64xbf16>
    %c5 = arith.constant 5 : index
    %c0_42 = arith.constant 0 : index
    %c0_43 = arith.constant 0 : index
    %56 = vector.load %arg8[%c5, %c0_42, %c0_43] : memref<49x64x128xbf16, #tpu.memory_space<vmem>>, vector<1x64x128xbf16>
    %57 = vector.shape_cast %56 : vector<1x64x128xbf16> to vector<64x128xbf16>
    %cst_44 = arith.constant dense<0.000000e+00> : vector<16x128xf32>
    %58 = tpu.matmul %55, %57, %cst_44 {dimension_numbers = #tpu.dot_dimension_numbers<[1], [0], [0], [1], [0, 0, 1, 1], [], []>} : vector<16x64xbf16>, vector<64x128xbf16>, vector<16x128xf32> -> vector<16x128xf32>
    %59 = arith.addf %53, %58 : vector<16x128xf32>
    %c96 = arith.constant 96 : index
    %c0_45 = arith.constant 0 : index
    %60 = vector.load %arg11[%c96, %c0_45] : memref<784x64xf32, #tpu.memory_space<vmem>>, vector<16x64xf32>
    %61 = arith.truncf %60 : vector<16x64xf32> to vector<16x64xbf16>
    %c6 = arith.constant 6 : index
    %c0_46 = arith.constant 0 : index
    %c0_47 = arith.constant 0 : index
    %62 = vector.load %arg8[%c6, %c0_46, %c0_47] : memref<49x64x128xbf16, #tpu.memory_space<vmem>>, vector<1x64x128xbf16>
    %63 = vector.shape_cast %62 : vector<1x64x128xbf16> to vector<64x128xbf16>
    %cst_48 = arith.constant dense<0.000000e+00> : vector<16x128xf32>
    %64 = tpu.matmul %61, %63, %cst_48 {dimension_numbers = #tpu.dot_dimension_numbers<[1], [0], [0], [1], [0, 0, 1, 1], [], []>} : vector<16x64xbf16>, vector<64x128xbf16>, vector<16x128xf32> -> vector<16x128xf32>
    %65 = arith.addf %59, %64 : vector<16x128xf32>
    %c112 = arith.constant 112 : index
    %c0_49 = arith.constant 0 : index
    %66 = vector.load %arg11[%c112, %c0_49] : memref<784x64xf32, #tpu.memory_space<vmem>>, vector<16x64xf32>
    %67 = arith.truncf %66 : vector<16x64xf32> to vector<16x64xbf16>
    %c7 = arith.constant 7 : index
    %c0_50 = arith.constant 0 : index
    %c0_51 = arith.constant 0 : index
    %68 = vector.load %arg8[%c7, %c0_50, %c0_51] : memref<49x64x128xbf16, #tpu.memory_space<vmem>>, vector<1x64x128xbf16>
    %69 = vector.shape_cast %68 : vector<1x64x128xbf16> to vector<64x128xbf16>
    %cst_52 = arith.constant dense<0.000000e+00> : vector<16x128xf32>
    %70 = tpu.matmul %67, %69, %cst_52 {dimension_numbers = #tpu.dot_dimension_numbers<[1], [0], [0], [1], [0, 0, 1, 1], [], []>} : vector<16x64xbf16>, vector<64x128xbf16>, vector<16x128xf32> -> vector<16x128xf32>
    %71 = arith.addf %65, %70 : vector<16x128xf32>
    %c128 = arith.constant 128 : index
    %c0_53 = arith.constant 0 : index
    %72 = vector.load %arg11[%c128, %c0_53] : memref<784x64xf32, #tpu.memory_space<vmem>>, vector<16x64xf32>
    %73 = arith.truncf %72 : vector<16x64xf32> to vector<16x64xbf16>
    %c8 = arith.constant 8 : index
    %c0_54 = arith.constant 0 : index
    %c0_55 = arith.constant 0 : index
    %74 = vector.load %arg8[%c8, %c0_54, %c0_55] : memref<49x64x128xbf16, #tpu.memory_space<vmem>>, vector<1x64x128xbf16>
    %75 = vector.shape_cast %74 : vector<1x64x128xbf16> to vector<64x128xbf16>
    %cst_56 = arith.constant dense<0.000000e+00> : vector<16x128xf32>
    %76 = tpu.matmul %73, %75, %cst_56 {dimension_numbers = #tpu.dot_dimension_numbers<[1], [0], [0], [1], [0, 0, 1, 1], [], []>} : vector<16x64xbf16>, vector<64x128xbf16>, vector<16x128xf32> -> vector<16x128xf32>
    %77 = arith.addf %71, %76 : vector<16x128xf32>
    %c144 = arith.constant 144 : index
    %c0_57 = arith.constant 0 : index
    %78 = vector.load %arg11[%c144, %c0_57] : memref<784x64xf32, #tpu.memory_space<vmem>>, vector<16x64xf32>
    %79 = arith.truncf %78 : vector<16x64xf32> to vector<16x64xbf16>
    %c9 = arith.constant 9 : index
    %c0_58 = arith.constant 0 : index
    %c0_59 = arith.constant 0 : index
    %80 = vector.load %arg8[%c9, %c0_58, %c0_59] : memref<49x64x128xbf16, #tpu.memory_space<vmem>>, vector<1x64x128xbf16>
    %81 = vector.shape_cast %80 : vector<1x64x128xbf16> to vector<64x128xbf16>
    %cst_60 = arith.constant dense<0.000000e+00> : vector<16x128xf32>
    %82 = tpu.matmul %79, %81, %cst_60 {dimension_numbers = #tpu.dot_dimension_numbers<[1], [0], [0], [1], [0, 0, 1, 1], [], []>} : vector<16x64xbf16>, vector<64x128xbf16>, vector<16x128xf32> -> vector<16x128xf32>
    %83 = arith.addf %77, %82 : vector<16x128xf32>
    %c160 = arith.constant 160 : index
    %c0_61 = arith.constant 0 : index
    %84 = vector.load %arg11[%c160, %c0_61] : memref<784x64xf32, #tpu.memory_space<vmem>>, vector<16x64xf32>
    %85 = arith.truncf %84 : vector<16x64xf32> to vector<16x64xbf16>
    %c10 = arith.constant 10 : index
    %c0_62 = arith.constant 0 : index
    %c0_63 = arith.constant 0 : index
    %86 = vector.load %arg8[%c10, %c0_62, %c0_63] : memref<49x64x128xbf16, #tpu.memory_space<vmem>>, vector<1x64x128xbf16>
    %87 = vector.shape_cast %86 : vector<1x64x128xbf16> to vector<64x128xbf16>
    %cst_64 = arith.constant dense<0.000000e+00> : vector<16x128xf32>
    %88 = tpu.matmul %85, %87, %cst_64 {dimension_numbers = #tpu.dot_dimension_numbers<[1], [0], [0], [1], [0, 0, 1, 1], [], []>} : vector<16x64xbf16>, vector<64x128xbf16>, vector<16x128xf32> -> vector<16x128xf32>
    %89 = arith.addf %83, %88 : vector<16x128xf32>
    %c176 = arith.constant 176 : index
    %c0_65 = arith.constant 0 : index
    %90 = vector.load %arg11[%c176, %c0_65] : memref<784x64xf32, #tpu.memory_space<vmem>>, vector<16x64xf32>
    %91 = arith.truncf %90 : vector<16x64xf32> to vector<16x64xbf16>
    %c11 = arith.constant 11 : index
    %c0_66 = arith.constant 0 : index
    %c0_67 = arith.constant 0 : index
    %92 = vector.load %arg8[%c11, %c0_66, %c0_67] : memref<49x64x128xbf16, #tpu.memory_space<vmem>>, vector<1x64x128xbf16>
    %93 = vector.shape_cast %92 : vector<1x64x128xbf16> to vector<64x128xbf16>
    %cst_68 = arith.constant dense<0.000000e+00> : vector<16x128xf32>
    %94 = tpu.matmul %91, %93, %cst_68 {dimension_numbers = #tpu.dot_dimension_numbers<[1], [0], [0], [1], [0, 0, 1, 1], [], []>} : vector<16x64xbf16>, vector<64x128xbf16>, vector<16x128xf32> -> vector<16x128xf32>
    %95 = arith.addf %89, %94 : vector<16x128xf32>
    %c192 = arith.constant 192 : index
    %c0_69 = arith.constant 0 : index
    %96 = vector.load %arg11[%c192, %c0_69] : memref<784x64xf32, #tpu.memory_space<vmem>>, vector<16x64xf32>
    %97 = arith.truncf %96 : vector<16x64xf32> to vector<16x64xbf16>
    %c12 = arith.constant 12 : index
    %c0_70 = arith.constant 0 : index
    %c0_71 = arith.constant 0 : index
    %98 = vector.load %arg8[%c12, %c0_70, %c0_71] : memref<49x64x128xbf16, #tpu.memory_space<vmem>>, vector<1x64x128xbf16>
    %99 = vector.shape_cast %98 : vector<1x64x128xbf16> to vector<64x128xbf16>
    %cst_72 = arith.constant dense<0.000000e+00> : vector<16x128xf32>
    %100 = tpu.matmul %97, %99, %cst_72 {dimension_numbers = #tpu.dot_dimension_numbers<[1], [0], [0], [1], [0, 0, 1, 1], [], []>} : vector<16x64xbf16>, vector<64x128xbf16>, vector<16x128xf32> -> vector<16x128xf32>
    %101 = arith.addf %95, %100 : vector<16x128xf32>
    %c208 = arith.constant 208 : index
    %c0_73 = arith.constant 0 : index
    %102 = vector.load %arg11[%c208, %c0_73] : memref<784x64xf32, #tpu.memory_space<vmem>>, vector<16x64xf32>
    %103 = arith.truncf %102 : vector<16x64xf32> to vector<16x64xbf16>
    %c13 = arith.constant 13 : index
    %c0_74 = arith.constant 0 : index
    %c0_75 = arith.constant 0 : index
    %104 = vector.load %arg8[%c13, %c0_74, %c0_75] : memref<49x64x128xbf16, #tpu.memory_space<vmem>>, vector<1x64x128xbf16>
    %105 = vector.shape_cast %104 : vector<1x64x128xbf16> to vector<64x128xbf16>
    %cst_76 = arith.constant dense<0.000000e+00> : vector<16x128xf32>
    %106 = tpu.matmul %103, %105, %cst_76 {dimension_numbers = #tpu.dot_dimension_numbers<[1], [0], [0], [1], [0, 0, 1, 1], [], []>} : vector<16x64xbf16>, vector<64x128xbf16>, vector<16x128xf32> -> vector<16x128xf32>
    %107 = arith.addf %101, %106 : vector<16x128xf32>
    %c224 = arith.constant 224 : index
    %c0_77 = arith.constant 0 : index
    %108 = vector.load %arg11[%c224, %c0_77] : memref<784x64xf32, #tpu.memory_space<vmem>>, vector<16x64xf32>
    %109 = arith.truncf %108 : vector<16x64xf32> to vector<16x64xbf16>
    %c14 = arith.constant 14 : index
    %c0_78 = arith.constant 0 : index
    %c0_79 = arith.constant 0 : index
    %110 = vector.load %arg8[%c14, %c0_78, %c0_79] : memref<49x64x128xbf16, #tpu.memory_space<vmem>>, vector<1x64x128xbf16>
    %111 = vector.shape_cast %110 : vector<1x64x128xbf16> to vector<64x128xbf16>
    %cst_80 = arith.constant dense<0.000000e+00> : vector<16x128xf32>
    %112 = tpu.matmul %109, %111, %cst_80 {dimension_numbers = #tpu.dot_dimension_numbers<[1], [0], [0], [1], [0, 0, 1, 1], [], []>} : vector<16x64xbf16>, vector<64x128xbf16>, vector<16x128xf32> -> vector<16x128xf32>
    %113 = arith.addf %107, %112 : vector<16x128xf32>
    %c240 = arith.constant 240 : index
    %c0_81 = arith.constant 0 : index
    %114 = vector.load %arg11[%c240, %c0_81] : memref<784x64xf32, #tpu.memory_space<vmem>>, vector<16x64xf32>
    %115 = arith.truncf %114 : vector<16x64xf32> to vector<16x64xbf16>
    %c15 = arith.constant 15 : index
    %c0_82 = arith.constant 0 : index
    %c0_83 = arith.constant 0 : index
    %116 = vector.load %arg8[%c15, %c0_82, %c0_83] : memref<49x64x128xbf16, #tpu.memory_space<vmem>>, vector<1x64x128xbf16>
    %117 = vector.shape_cast %116 : vector<1x64x128xbf16> to vector<64x128xbf16>
    %cst_84 = arith.constant dense<0.000000e+00> : vector<16x128xf32>
    %118 = tpu.matmul %115, %117, %cst_84 {dimension_numbers = #tpu.dot_dimension_numbers<[1], [0], [0], [1], [0, 0, 1, 1], [], []>} : vector<16x64xbf16>, vector<64x128xbf16>, vector<16x128xf32> -> vector<16x128xf32>
    %119 = arith.addf %113, %118 : vector<16x128xf32>
    %c256 = arith.constant 256 : index
    %c0_85 = arith.constant 0 : index
    %120 = vector.load %arg11[%c256, %c0_85] : memref<784x64xf32, #tpu.memory_space<vmem>>, vector<16x64xf32>
    %121 = arith.truncf %120 : vector<16x64xf32> to vector<16x64xbf16>
    %c16_86 = arith.constant 16 : index
    %c0_87 = arith.constant 0 : index
    %c0_88 = arith.constant 0 : index
    %122 = vector.load %arg8[%c16_86, %c0_87, %c0_88] : memref<49x64x128xbf16, #tpu.memory_space<vmem>>, vector<1x64x128xbf16>
    %123 = vector.shape_cast %122 : vector<1x64x128xbf16> to vector<64x128xbf16>
    %cst_89 = arith.constant dense<0.000000e+00> : vector<16x128xf32>
    %124 = tpu.matmul %121, %123, %cst_89 {dimension_numbers = #tpu.dot_dimension_numbers<[1], [0], [0], [1], [0, 0, 1, 1], [], []>} : vector<16x64xbf16>, vector<64x128xbf16>, vector<16x128xf32> -> vector<16x128xf32>
    %125 = arith.addf %119, %124 : vector<16x128xf32>
    %c272 = arith.constant 272 : index
    %c0_90 = arith.constant 0 : index
    %126 = vector.load %arg11[%c272, %c0_90] : memref<784x64xf32, #tpu.memory_space<vmem>>, vector<16x64xf32>
    %127 = arith.truncf %126 : vector<16x64xf32> to vector<16x64xbf16>
    %c17 = arith.constant 17 : index
    %c0_91 = arith.constant 0 : index
    %c0_92 = arith.constant 0 : index
    %128 = vector.load %arg8[%c17, %c0_91, %c0_92] : memref<49x64x128xbf16, #tpu.memory_space<vmem>>, vector<1x64x128xbf16>
    %129 = vector.shape_cast %128 : vector<1x64x128xbf16> to vector<64x128xbf16>
    %cst_93 = arith.constant dense<0.000000e+00> : vector<16x128xf32>
    %130 = tpu.matmul %127, %129, %cst_93 {dimension_numbers = #tpu.dot_dimension_numbers<[1], [0], [0], [1], [0, 0, 1, 1], [], []>} : vector<16x64xbf16>, vector<64x128xbf16>, vector<16x128xf32> -> vector<16x128xf32>
    %131 = arith.addf %125, %130 : vector<16x128xf32>
    %c288 = arith.constant 288 : index
    %c0_94 = arith.constant 0 : index
    %132 = vector.load %arg11[%c288, %c0_94] : memref<784x64xf32, #tpu.memory_space<vmem>>, vector<16x64xf32>
    %133 = arith.truncf %132 : vector<16x64xf32> to vector<16x64xbf16>
    %c18 = arith.constant 18 : index
    %c0_95 = arith.constant 0 : index
    %c0_96 = arith.constant 0 : index
    %134 = vector.load %arg8[%c18, %c0_95, %c0_96] : memref<49x64x128xbf16, #tpu.memory_space<vmem>>, vector<1x64x128xbf16>
    %135 = vector.shape_cast %134 : vector<1x64x128xbf16> to vector<64x128xbf16>
    %cst_97 = arith.constant dense<0.000000e+00> : vector<16x128xf32>
    %136 = tpu.matmul %133, %135, %cst_97 {dimension_numbers = #tpu.dot_dimension_numbers<[1], [0], [0], [1], [0, 0, 1, 1], [], []>} : vector<16x64xbf16>, vector<64x128xbf16>, vector<16x128xf32> -> vector<16x128xf32>
    %137 = arith.addf %131, %136 : vector<16x128xf32>
    %c304 = arith.constant 304 : index
    %c0_98 = arith.constant 0 : index
    %138 = vector.load %arg11[%c304, %c0_98] : memref<784x64xf32, #tpu.memory_space<vmem>>, vector<16x64xf32>
    %139 = arith.truncf %138 : vector<16x64xf32> to vector<16x64xbf16>
    %c19 = arith.constant 19 : index
    %c0_99 = arith.constant 0 : index
    %c0_100 = arith.constant 0 : index
    %140 = vector.load %arg8[%c19, %c0_99, %c0_100] : memref<49x64x128xbf16, #tpu.memory_space<vmem>>, vector<1x64x128xbf16>
    %141 = vector.shape_cast %140 : vector<1x64x128xbf16> to vector<64x128xbf16>
    %cst_101 = arith.constant dense<0.000000e+00> : vector<16x128xf32>
    %142 = tpu.matmul %139, %141, %cst_101 {dimension_numbers = #tpu.dot_dimension_numbers<[1], [0], [0], [1], [0, 0, 1, 1], [], []>} : vector<16x64xbf16>, vector<64x128xbf16>, vector<16x128xf32> -> vector<16x128xf32>
    %143 = arith.addf %137, %142 : vector<16x128xf32>
    %c320 = arith.constant 320 : index
    %c0_102 = arith.constant 0 : index
    %144 = vector.load %arg11[%c320, %c0_102] : memref<784x64xf32, #tpu.memory_space<vmem>>, vector<16x64xf32>
    %145 = arith.truncf %144 : vector<16x64xf32> to vector<16x64xbf16>
    %c20 = arith.constant 20 : index
    %c0_103 = arith.constant 0 : index
    %c0_104 = arith.constant 0 : index
    %146 = vector.load %arg8[%c20, %c0_103, %c0_104] : memref<49x64x128xbf16, #tpu.memory_space<vmem>>, vector<1x64x128xbf16>
    %147 = vector.shape_cast %146 : vector<1x64x128xbf16> to vector<64x128xbf16>
    %cst_105 = arith.constant dense<0.000000e+00> : vector<16x128xf32>
    %148 = tpu.matmul %145, %147, %cst_105 {dimension_numbers = #tpu.dot_dimension_numbers<[1], [0], [0], [1], [0, 0, 1, 1], [], []>} : vector<16x64xbf16>, vector<64x128xbf16>, vector<16x128xf32> -> vector<16x128xf32>
    %149 = arith.addf %143, %148 : vector<16x128xf32>
    %c336 = arith.constant 336 : index
    %c0_106 = arith.constant 0 : index
    %150 = vector.load %arg11[%c336, %c0_106] : memref<784x64xf32, #tpu.memory_space<vmem>>, vector<16x64xf32>
    %151 = arith.truncf %150 : vector<16x64xf32> to vector<16x64xbf16>
    %c21 = arith.constant 21 : index
    %c0_107 = arith.constant 0 : index
    %c0_108 = arith.constant 0 : index
    %152 = vector.load %arg8[%c21, %c0_107, %c0_108] : memref<49x64x128xbf16, #tpu.memory_space<vmem>>, vector<1x64x128xbf16>
    %153 = vector.shape_cast %152 : vector<1x64x128xbf16> to vector<64x128xbf16>
    %cst_109 = arith.constant dense<0.000000e+00> : vector<16x128xf32>
    %154 = tpu.matmul %151, %153, %cst_109 {dimension_numbers = #tpu.dot_dimension_numbers<[1], [0], [0], [1], [0, 0, 1, 1], [], []>} : vector<16x64xbf16>, vector<64x128xbf16>, vector<16x128xf32> -> vector<16x128xf32>
    %155 = arith.addf %149, %154 : vector<16x128xf32>
    %c352 = arith.constant 352 : index
    %c0_110 = arith.constant 0 : index
    %156 = vector.load %arg11[%c352, %c0_110] : memref<784x64xf32, #tpu.memory_space<vmem>>, vector<16x64xf32>
    %157 = arith.truncf %156 : vector<16x64xf32> to vector<16x64xbf16>
    %c22 = arith.constant 22 : index
    %c0_111 = arith.constant 0 : index
    %c0_112 = arith.constant 0 : index
    %158 = vector.load %arg8[%c22, %c0_111, %c0_112] : memref<49x64x128xbf16, #tpu.memory_space<vmem>>, vector<1x64x128xbf16>
    %159 = vector.shape_cast %158 : vector<1x64x128xbf16> to vector<64x128xbf16>
    %cst_113 = arith.constant dense<0.000000e+00> : vector<16x128xf32>
    %160 = tpu.matmul %157, %159, %cst_113 {dimension_numbers = #tpu.dot_dimension_numbers<[1], [0], [0], [1], [0, 0, 1, 1], [], []>} : vector<16x64xbf16>, vector<64x128xbf16>, vector<16x128xf32> -> vector<16x128xf32>
    %161 = arith.addf %155, %160 : vector<16x128xf32>
    %c368 = arith.constant 368 : index
    %c0_114 = arith.constant 0 : index
    %162 = vector.load %arg11[%c368, %c0_114] : memref<784x64xf32, #tpu.memory_space<vmem>>, vector<16x64xf32>
    %163 = arith.truncf %162 : vector<16x64xf32> to vector<16x64xbf16>
    %c23 = arith.constant 23 : index
    %c0_115 = arith.constant 0 : index
    %c0_116 = arith.constant 0 : index
    %164 = vector.load %arg8[%c23, %c0_115, %c0_116] : memref<49x64x128xbf16, #tpu.memory_space<vmem>>, vector<1x64x128xbf16>
    %165 = vector.shape_cast %164 : vector<1x64x128xbf16> to vector<64x128xbf16>
    %cst_117 = arith.constant dense<0.000000e+00> : vector<16x128xf32>
    %166 = tpu.matmul %163, %165, %cst_117 {dimension_numbers = #tpu.dot_dimension_numbers<[1], [0], [0], [1], [0, 0, 1, 1], [], []>} : vector<16x64xbf16>, vector<64x128xbf16>, vector<16x128xf32> -> vector<16x128xf32>
    %167 = arith.addf %161, %166 : vector<16x128xf32>
    %c384 = arith.constant 384 : index
    %c0_118 = arith.constant 0 : index
    %168 = vector.load %arg11[%c384, %c0_118] : memref<784x64xf32, #tpu.memory_space<vmem>>, vector<16x64xf32>
    %169 = arith.truncf %168 : vector<16x64xf32> to vector<16x64xbf16>
    %c24 = arith.constant 24 : index
    %c0_119 = arith.constant 0 : index
    %c0_120 = arith.constant 0 : index
    %170 = vector.load %arg8[%c24, %c0_119, %c0_120] : memref<49x64x128xbf16, #tpu.memory_space<vmem>>, vector<1x64x128xbf16>
    %171 = vector.shape_cast %170 : vector<1x64x128xbf16> to vector<64x128xbf16>
    %cst_121 = arith.constant dense<0.000000e+00> : vector<16x128xf32>
    %172 = tpu.matmul %169, %171, %cst_121 {dimension_numbers = #tpu.dot_dimension_numbers<[1], [0], [0], [1], [0, 0, 1, 1], [], []>} : vector<16x64xbf16>, vector<64x128xbf16>, vector<16x128xf32> -> vector<16x128xf32>
    %173 = arith.addf %167, %172 : vector<16x128xf32>
    %c400 = arith.constant 400 : index
    %c0_122 = arith.constant 0 : index
    %174 = vector.load %arg11[%c400, %c0_122] : memref<784x64xf32, #tpu.memory_space<vmem>>, vector<16x64xf32>
    %175 = arith.truncf %174 : vector<16x64xf32> to vector<16x64xbf16>
    %c25 = arith.constant 25 : index
    %c0_123 = arith.constant 0 : index
    %c0_124 = arith.constant 0 : index
    %176 = vector.load %arg8[%c25, %c0_123, %c0_124] : memref<49x64x128xbf16, #tpu.memory_space<vmem>>, vector<1x64x128xbf16>
    %177 = vector.shape_cast %176 : vector<1x64x128xbf16> to vector<64x128xbf16>
    %cst_125 = arith.constant dense<0.000000e+00> : vector<16x128xf32>
    %178 = tpu.matmul %175, %177, %cst_125 {dimension_numbers = #tpu.dot_dimension_numbers<[1], [0], [0], [1], [0, 0, 1, 1], [], []>} : vector<16x64xbf16>, vector<64x128xbf16>, vector<16x128xf32> -> vector<16x128xf32>
    %179 = arith.addf %173, %178 : vector<16x128xf32>
    %c416 = arith.constant 416 : index
    %c0_126 = arith.constant 0 : index
    %180 = vector.load %arg11[%c416, %c0_126] : memref<784x64xf32, #tpu.memory_space<vmem>>, vector<16x64xf32>
    %181 = arith.truncf %180 : vector<16x64xf32> to vector<16x64xbf16>
    %c26 = arith.constant 26 : index
    %c0_127 = arith.constant 0 : index
    %c0_128 = arith.constant 0 : index
    %182 = vector.load %arg8[%c26, %c0_127, %c0_128] : memref<49x64x128xbf16, #tpu.memory_space<vmem>>, vector<1x64x128xbf16>
    %183 = vector.shape_cast %182 : vector<1x64x128xbf16> to vector<64x128xbf16>
    %cst_129 = arith.constant dense<0.000000e+00> : vector<16x128xf32>
    %184 = tpu.matmul %181, %183, %cst_129 {dimension_numbers = #tpu.dot_dimension_numbers<[1], [0], [0], [1], [0, 0, 1, 1], [], []>} : vector<16x64xbf16>, vector<64x128xbf16>, vector<16x128xf32> -> vector<16x128xf32>
    %185 = arith.addf %179, %184 : vector<16x128xf32>
    %c432 = arith.constant 432 : index
    %c0_130 = arith.constant 0 : index
    %186 = vector.load %arg11[%c432, %c0_130] : memref<784x64xf32, #tpu.memory_space<vmem>>, vector<16x64xf32>
    %187 = arith.truncf %186 : vector<16x64xf32> to vector<16x64xbf16>
    %c27 = arith.constant 27 : index
    %c0_131 = arith.constant 0 : index
    %c0_132 = arith.constant 0 : index
    %188 = vector.load %arg8[%c27, %c0_131, %c0_132] : memref<49x64x128xbf16, #tpu.memory_space<vmem>>, vector<1x64x128xbf16>
    %189 = vector.shape_cast %188 : vector<1x64x128xbf16> to vector<64x128xbf16>
    %cst_133 = arith.constant dense<0.000000e+00> : vector<16x128xf32>
    %190 = tpu.matmul %187, %189, %cst_133 {dimension_numbers = #tpu.dot_dimension_numbers<[1], [0], [0], [1], [0, 0, 1, 1], [], []>} : vector<16x64xbf16>, vector<64x128xbf16>, vector<16x128xf32> -> vector<16x128xf32>
    %191 = arith.addf %185, %190 : vector<16x128xf32>
    %c448 = arith.constant 448 : index
    %c0_134 = arith.constant 0 : index
    %192 = vector.load %arg11[%c448, %c0_134] : memref<784x64xf32, #tpu.memory_space<vmem>>, vector<16x64xf32>
    %193 = arith.truncf %192 : vector<16x64xf32> to vector<16x64xbf16>
    %c28 = arith.constant 28 : index
    %c0_135 = arith.constant 0 : index
    %c0_136 = arith.constant 0 : index
    %194 = vector.load %arg8[%c28, %c0_135, %c0_136] : memref<49x64x128xbf16, #tpu.memory_space<vmem>>, vector<1x64x128xbf16>
    %195 = vector.shape_cast %194 : vector<1x64x128xbf16> to vector<64x128xbf16>
    %cst_137 = arith.constant dense<0.000000e+00> : vector<16x128xf32>
    %196 = tpu.matmul %193, %195, %cst_137 {dimension_numbers = #tpu.dot_dimension_numbers<[1], [0], [0], [1], [0, 0, 1, 1], [], []>} : vector<16x64xbf16>, vector<64x128xbf16>, vector<16x128xf32> -> vector<16x128xf32>
    %197 = arith.addf %191, %196 : vector<16x128xf32>
    %c464 = arith.constant 464 : index
    %c0_138 = arith.constant 0 : index
    %198 = vector.load %arg11[%c464, %c0_138] : memref<784x64xf32, #tpu.memory_space<vmem>>, vector<16x64xf32>
    %199 = arith.truncf %198 : vector<16x64xf32> to vector<16x64xbf16>
    %c29 = arith.constant 29 : index
    %c0_139 = arith.constant 0 : index
    %c0_140 = arith.constant 0 : index
    %200 = vector.load %arg8[%c29, %c0_139, %c0_140] : memref<49x64x128xbf16, #tpu.memory_space<vmem>>, vector<1x64x128xbf16>
    %201 = vector.shape_cast %200 : vector<1x64x128xbf16> to vector<64x128xbf16>
    %cst_141 = arith.constant dense<0.000000e+00> : vector<16x128xf32>
    %202 = tpu.matmul %199, %201, %cst_141 {dimension_numbers = #tpu.dot_dimension_numbers<[1], [0], [0], [1], [0, 0, 1, 1], [], []>} : vector<16x64xbf16>, vector<64x128xbf16>, vector<16x128xf32> -> vector<16x128xf32>
    %203 = arith.addf %197, %202 : vector<16x128xf32>
    %c480 = arith.constant 480 : index
    %c0_142 = arith.constant 0 : index
    %204 = vector.load %arg11[%c480, %c0_142] : memref<784x64xf32, #tpu.memory_space<vmem>>, vector<16x64xf32>
    %205 = arith.truncf %204 : vector<16x64xf32> to vector<16x64xbf16>
    %c30 = arith.constant 30 : index
    %c0_143 = arith.constant 0 : index
    %c0_144 = arith.constant 0 : index
    %206 = vector.load %arg8[%c30, %c0_143, %c0_144] : memref<49x64x128xbf16, #tpu.memory_space<vmem>>, vector<1x64x128xbf16>
    %207 = vector.shape_cast %206 : vector<1x64x128xbf16> to vector<64x128xbf16>
    %cst_145 = arith.constant dense<0.000000e+00> : vector<16x128xf32>
    %208 = tpu.matmul %205, %207, %cst_145 {dimension_numbers = #tpu.dot_dimension_numbers<[1], [0], [0], [1], [0, 0, 1, 1], [], []>} : vector<16x64xbf16>, vector<64x128xbf16>, vector<16x128xf32> -> vector<16x128xf32>
    %209 = arith.addf %203, %208 : vector<16x128xf32>
    %c496 = arith.constant 496 : index
    %c0_146 = arith.constant 0 : index
    %210 = vector.load %arg11[%c496, %c0_146] : memref<784x64xf32, #tpu.memory_space<vmem>>, vector<16x64xf32>
    %211 = arith.truncf %210 : vector<16x64xf32> to vector<16x64xbf16>
    %c31 = arith.constant 31 : index
    %c0_147 = arith.constant 0 : index
    %c0_148 = arith.constant 0 : index
    %212 = vector.load %arg8[%c31, %c0_147, %c0_148] : memref<49x64x128xbf16, #tpu.memory_space<vmem>>, vector<1x64x128xbf16>
    %213 = vector.shape_cast %212 : vector<1x64x128xbf16> to vector<64x128xbf16>
    %cst_149 = arith.constant dense<0.000000e+00> : vector<16x128xf32>
    %214 = tpu.matmul %211, %213, %cst_149 {dimension_numbers = #tpu.dot_dimension_numbers<[1], [0], [0], [1], [0, 0, 1, 1], [], []>} : vector<16x64xbf16>, vector<64x128xbf16>, vector<16x128xf32> -> vector<16x128xf32>
    %215 = arith.addf %209, %214 : vector<16x128xf32>
    %c512 = arith.constant 512 : index
    %c0_150 = arith.constant 0 : index
    %216 = vector.load %arg11[%c512, %c0_150] : memref<784x64xf32, #tpu.memory_space<vmem>>, vector<16x64xf32>
    %217 = arith.truncf %216 : vector<16x64xf32> to vector<16x64xbf16>
    %c32_151 = arith.constant 32 : index
    %c0_152 = arith.constant 0 : index
    %c0_153 = arith.constant 0 : index
    %218 = vector.load %arg8[%c32_151, %c0_152, %c0_153] : memref<49x64x128xbf16, #tpu.memory_space<vmem>>, vector<1x64x128xbf16>
    %219 = vector.shape_cast %218 : vector<1x64x128xbf16> to vector<64x128xbf16>
    %cst_154 = arith.constant dense<0.000000e+00> : vector<16x128xf32>
    %220 = tpu.matmul %217, %219, %cst_154 {dimension_numbers = #tpu.dot_dimension_numbers<[1], [0], [0], [1], [0, 0, 1, 1], [], []>} : vector<16x64xbf16>, vector<64x128xbf16>, vector<16x128xf32> -> vector<16x128xf32>
    %221 = arith.addf %215, %220 : vector<16x128xf32>
    %c528 = arith.constant 528 : index
    %c0_155 = arith.constant 0 : index
    %222 = vector.load %arg11[%c528, %c0_155] : memref<784x64xf32, #tpu.memory_space<vmem>>, vector<16x64xf32>
    %223 = arith.truncf %222 : vector<16x64xf32> to vector<16x64xbf16>
    %c33 = arith.constant 33 : index
    %c0_156 = arith.constant 0 : index
    %c0_157 = arith.constant 0 : index
    %224 = vector.load %arg8[%c33, %c0_156, %c0_157] : memref<49x64x128xbf16, #tpu.memory_space<vmem>>, vector<1x64x128xbf16>
    %225 = vector.shape_cast %224 : vector<1x64x128xbf16> to vector<64x128xbf16>
    %cst_158 = arith.constant dense<0.000000e+00> : vector<16x128xf32>
    %226 = tpu.matmul %223, %225, %cst_158 {dimension_numbers = #tpu.dot_dimension_numbers<[1], [0], [0], [1], [0, 0, 1, 1], [], []>} : vector<16x64xbf16>, vector<64x128xbf16>, vector<16x128xf32> -> vector<16x128xf32>
    %227 = arith.addf %221, %226 : vector<16x128xf32>
    %c544 = arith.constant 544 : index
    %c0_159 = arith.constant 0 : index
    %228 = vector.load %arg11[%c544, %c0_159] : memref<784x64xf32, #tpu.memory_space<vmem>>, vector<16x64xf32>
    %229 = arith.truncf %228 : vector<16x64xf32> to vector<16x64xbf16>
    %c34 = arith.constant 34 : index
    %c0_160 = arith.constant 0 : index
    %c0_161 = arith.constant 0 : index
    %230 = vector.load %arg8[%c34, %c0_160, %c0_161] : memref<49x64x128xbf16, #tpu.memory_space<vmem>>, vector<1x64x128xbf16>
    %231 = vector.shape_cast %230 : vector<1x64x128xbf16> to vector<64x128xbf16>
    %cst_162 = arith.constant dense<0.000000e+00> : vector<16x128xf32>
    %232 = tpu.matmul %229, %231, %cst_162 {dimension_numbers = #tpu.dot_dimension_numbers<[1], [0], [0], [1], [0, 0, 1, 1], [], []>} : vector<16x64xbf16>, vector<64x128xbf16>, vector<16x128xf32> -> vector<16x128xf32>
    %233 = arith.addf %227, %232 : vector<16x128xf32>
    %c560 = arith.constant 560 : index
    %c0_163 = arith.constant 0 : index
    %234 = vector.load %arg11[%c560, %c0_163] : memref<784x64xf32, #tpu.memory_space<vmem>>, vector<16x64xf32>
    %235 = arith.truncf %234 : vector<16x64xf32> to vector<16x64xbf16>
    %c35 = arith.constant 35 : index
    %c0_164 = arith.constant 0 : index
    %c0_165 = arith.constant 0 : index
    %236 = vector.load %arg8[%c35, %c0_164, %c0_165] : memref<49x64x128xbf16, #tpu.memory_space<vmem>>, vector<1x64x128xbf16>
    %237 = vector.shape_cast %236 : vector<1x64x128xbf16> to vector<64x128xbf16>
    %cst_166 = arith.constant dense<0.000000e+00> : vector<16x128xf32>
    %238 = tpu.matmul %235, %237, %cst_166 {dimension_numbers = #tpu.dot_dimension_numbers<[1], [0], [0], [1], [0, 0, 1, 1], [], []>} : vector<16x64xbf16>, vector<64x128xbf16>, vector<16x128xf32> -> vector<16x128xf32>
    %239 = arith.addf %233, %238 : vector<16x128xf32>
    %c576 = arith.constant 576 : index
    %c0_167 = arith.constant 0 : index
    %240 = vector.load %arg11[%c576, %c0_167] : memref<784x64xf32, #tpu.memory_space<vmem>>, vector<16x64xf32>
    %241 = arith.truncf %240 : vector<16x64xf32> to vector<16x64xbf16>
    %c36 = arith.constant 36 : index
    %c0_168 = arith.constant 0 : index
    %c0_169 = arith.constant 0 : index
    %242 = vector.load %arg8[%c36, %c0_168, %c0_169] : memref<49x64x128xbf16, #tpu.memory_space<vmem>>, vector<1x64x128xbf16>
    %243 = vector.shape_cast %242 : vector<1x64x128xbf16> to vector<64x128xbf16>
    %cst_170 = arith.constant dense<0.000000e+00> : vector<16x128xf32>
    %244 = tpu.matmul %241, %243, %cst_170 {dimension_numbers = #tpu.dot_dimension_numbers<[1], [0], [0], [1], [0, 0, 1, 1], [], []>} : vector<16x64xbf16>, vector<64x128xbf16>, vector<16x128xf32> -> vector<16x128xf32>
    %245 = arith.addf %239, %244 : vector<16x128xf32>
    %c592 = arith.constant 592 : index
    %c0_171 = arith.constant 0 : index
    %246 = vector.load %arg11[%c592, %c0_171] : memref<784x64xf32, #tpu.memory_space<vmem>>, vector<16x64xf32>
    %247 = arith.truncf %246 : vector<16x64xf32> to vector<16x64xbf16>
    %c37 = arith.constant 37 : index
    %c0_172 = arith.constant 0 : index
    %c0_173 = arith.constant 0 : index
    %248 = vector.load %arg8[%c37, %c0_172, %c0_173] : memref<49x64x128xbf16, #tpu.memory_space<vmem>>, vector<1x64x128xbf16>
    %249 = vector.shape_cast %248 : vector<1x64x128xbf16> to vector<64x128xbf16>
    %cst_174 = arith.constant dense<0.000000e+00> : vector<16x128xf32>
    %250 = tpu.matmul %247, %249, %cst_174 {dimension_numbers = #tpu.dot_dimension_numbers<[1], [0], [0], [1], [0, 0, 1, 1], [], []>} : vector<16x64xbf16>, vector<64x128xbf16>, vector<16x128xf32> -> vector<16x128xf32>
    %251 = arith.addf %245, %250 : vector<16x128xf32>
    %c608 = arith.constant 608 : index
    %c0_175 = arith.constant 0 : index
    %252 = vector.load %arg11[%c608, %c0_175] : memref<784x64xf32, #tpu.memory_space<vmem>>, vector<16x64xf32>
    %253 = arith.truncf %252 : vector<16x64xf32> to vector<16x64xbf16>
    %c38 = arith.constant 38 : index
    %c0_176 = arith.constant 0 : index
    %c0_177 = arith.constant 0 : index
    %254 = vector.load %arg8[%c38, %c0_176, %c0_177] : memref<49x64x128xbf16, #tpu.memory_space<vmem>>, vector<1x64x128xbf16>
    %255 = vector.shape_cast %254 : vector<1x64x128xbf16> to vector<64x128xbf16>
    %cst_178 = arith.constant dense<0.000000e+00> : vector<16x128xf32>
    %256 = tpu.matmul %253, %255, %cst_178 {dimension_numbers = #tpu.dot_dimension_numbers<[1], [0], [0], [1], [0, 0, 1, 1], [], []>} : vector<16x64xbf16>, vector<64x128xbf16>, vector<16x128xf32> -> vector<16x128xf32>
    %257 = arith.addf %251, %256 : vector<16x128xf32>
    %c624 = arith.constant 624 : index
    %c0_179 = arith.constant 0 : index
    %258 = vector.load %arg11[%c624, %c0_179] : memref<784x64xf32, #tpu.memory_space<vmem>>, vector<16x64xf32>
    %259 = arith.truncf %258 : vector<16x64xf32> to vector<16x64xbf16>
    %c39 = arith.constant 39 : index
    %c0_180 = arith.constant 0 : index
    %c0_181 = arith.constant 0 : index
    %260 = vector.load %arg8[%c39, %c0_180, %c0_181] : memref<49x64x128xbf16, #tpu.memory_space<vmem>>, vector<1x64x128xbf16>
    %261 = vector.shape_cast %260 : vector<1x64x128xbf16> to vector<64x128xbf16>
    %cst_182 = arith.constant dense<0.000000e+00> : vector<16x128xf32>
    %262 = tpu.matmul %259, %261, %cst_182 {dimension_numbers = #tpu.dot_dimension_numbers<[1], [0], [0], [1], [0, 0, 1, 1], [], []>} : vector<16x64xbf16>, vector<64x128xbf16>, vector<16x128xf32> -> vector<16x128xf32>
    %263 = arith.addf %257, %262 : vector<16x128xf32>
    %c640 = arith.constant 640 : index
    %c0_183 = arith.constant 0 : index
    %264 = vector.load %arg11[%c640, %c0_183] : memref<784x64xf32, #tpu.memory_space<vmem>>, vector<16x64xf32>
    %265 = arith.truncf %264 : vector<16x64xf32> to vector<16x64xbf16>
    %c40 = arith.constant 40 : index
    %c0_184 = arith.constant 0 : index
    %c0_185 = arith.constant 0 : index
    %266 = vector.load %arg8[%c40, %c0_184, %c0_185] : memref<49x64x128xbf16, #tpu.memory_space<vmem>>, vector<1x64x128xbf16>
    %267 = vector.shape_cast %266 : vector<1x64x128xbf16> to vector<64x128xbf16>
    %cst_186 = arith.constant dense<0.000000e+00> : vector<16x128xf32>
    %268 = tpu.matmul %265, %267, %cst_186 {dimension_numbers = #tpu.dot_dimension_numbers<[1], [0], [0], [1], [0, 0, 1, 1], [], []>} : vector<16x64xbf16>, vector<64x128xbf16>, vector<16x128xf32> -> vector<16x128xf32>
    %269 = arith.addf %263, %268 : vector<16x128xf32>
    %c656 = arith.constant 656 : index
    %c0_187 = arith.constant 0 : index
    %270 = vector.load %arg11[%c656, %c0_187] : memref<784x64xf32, #tpu.memory_space<vmem>>, vector<16x64xf32>
    %271 = arith.truncf %270 : vector<16x64xf32> to vector<16x64xbf16>
    %c41 = arith.constant 41 : index
    %c0_188 = arith.constant 0 : index
    %c0_189 = arith.constant 0 : index
    %272 = vector.load %arg8[%c41, %c0_188, %c0_189] : memref<49x64x128xbf16, #tpu.memory_space<vmem>>, vector<1x64x128xbf16>
    %273 = vector.shape_cast %272 : vector<1x64x128xbf16> to vector<64x128xbf16>
    %cst_190 = arith.constant dense<0.000000e+00> : vector<16x128xf32>
    %274 = tpu.matmul %271, %273, %cst_190 {dimension_numbers = #tpu.dot_dimension_numbers<[1], [0], [0], [1], [0, 0, 1, 1], [], []>} : vector<16x64xbf16>, vector<64x128xbf16>, vector<16x128xf32> -> vector<16x128xf32>
    %275 = arith.addf %269, %274 : vector<16x128xf32>
    %c672 = arith.constant 672 : index
    %c0_191 = arith.constant 0 : index
    %276 = vector.load %arg11[%c672, %c0_191] : memref<784x64xf32, #tpu.memory_space<vmem>>, vector<16x64xf32>
    %277 = arith.truncf %276 : vector<16x64xf32> to vector<16x64xbf16>
    %c42 = arith.constant 42 : index
    %c0_192 = arith.constant 0 : index
    %c0_193 = arith.constant 0 : index
    %278 = vector.load %arg8[%c42, %c0_192, %c0_193] : memref<49x64x128xbf16, #tpu.memory_space<vmem>>, vector<1x64x128xbf16>
    %279 = vector.shape_cast %278 : vector<1x64x128xbf16> to vector<64x128xbf16>
    %cst_194 = arith.constant dense<0.000000e+00> : vector<16x128xf32>
    %280 = tpu.matmul %277, %279, %cst_194 {dimension_numbers = #tpu.dot_dimension_numbers<[1], [0], [0], [1], [0, 0, 1, 1], [], []>} : vector<16x64xbf16>, vector<64x128xbf16>, vector<16x128xf32> -> vector<16x128xf32>
    %281 = arith.addf %275, %280 : vector<16x128xf32>
    %c688 = arith.constant 688 : index
    %c0_195 = arith.constant 0 : index
    %282 = vector.load %arg11[%c688, %c0_195] : memref<784x64xf32, #tpu.memory_space<vmem>>, vector<16x64xf32>
    %283 = arith.truncf %282 : vector<16x64xf32> to vector<16x64xbf16>
    %c43 = arith.constant 43 : index
    %c0_196 = arith.constant 0 : index
    %c0_197 = arith.constant 0 : index
    %284 = vector.load %arg8[%c43, %c0_196, %c0_197] : memref<49x64x128xbf16, #tpu.memory_space<vmem>>, vector<1x64x128xbf16>
    %285 = vector.shape_cast %284 : vector<1x64x128xbf16> to vector<64x128xbf16>
    %cst_198 = arith.constant dense<0.000000e+00> : vector<16x128xf32>
    %286 = tpu.matmul %283, %285, %cst_198 {dimension_numbers = #tpu.dot_dimension_numbers<[1], [0], [0], [1], [0, 0, 1, 1], [], []>} : vector<16x64xbf16>, vector<64x128xbf16>, vector<16x128xf32> -> vector<16x128xf32>
    %287 = arith.addf %281, %286 : vector<16x128xf32>
    %c704 = arith.constant 704 : index
    %c0_199 = arith.constant 0 : index
    %288 = vector.load %arg11[%c704, %c0_199] : memref<784x64xf32, #tpu.memory_space<vmem>>, vector<16x64xf32>
    %289 = arith.truncf %288 : vector<16x64xf32> to vector<16x64xbf16>
    %c44 = arith.constant 44 : index
    %c0_200 = arith.constant 0 : index
    %c0_201 = arith.constant 0 : index
    %290 = vector.load %arg8[%c44, %c0_200, %c0_201] : memref<49x64x128xbf16, #tpu.memory_space<vmem>>, vector<1x64x128xbf16>
    %291 = vector.shape_cast %290 : vector<1x64x128xbf16> to vector<64x128xbf16>
    %cst_202 = arith.constant dense<0.000000e+00> : vector<16x128xf32>
    %292 = tpu.matmul %289, %291, %cst_202 {dimension_numbers = #tpu.dot_dimension_numbers<[1], [0], [0], [1], [0, 0, 1, 1], [], []>} : vector<16x64xbf16>, vector<64x128xbf16>, vector<16x128xf32> -> vector<16x128xf32>
    %293 = arith.addf %287, %292 : vector<16x128xf32>
    %c720 = arith.constant 720 : index
    %c0_203 = arith.constant 0 : index
    %294 = vector.load %arg11[%c720, %c0_203] : memref<784x64xf32, #tpu.memory_space<vmem>>, vector<16x64xf32>
    %295 = arith.truncf %294 : vector<16x64xf32> to vector<16x64xbf16>
    %c45 = arith.constant 45 : index
    %c0_204 = arith.constant 0 : index
    %c0_205 = arith.constant 0 : index
    %296 = vector.load %arg8[%c45, %c0_204, %c0_205] : memref<49x64x128xbf16, #tpu.memory_space<vmem>>, vector<1x64x128xbf16>
    %297 = vector.shape_cast %296 : vector<1x64x128xbf16> to vector<64x128xbf16>
    %cst_206 = arith.constant dense<0.000000e+00> : vector<16x128xf32>
    %298 = tpu.matmul %295, %297, %cst_206 {dimension_numbers = #tpu.dot_dimension_numbers<[1], [0], [0], [1], [0, 0, 1, 1], [], []>} : vector<16x64xbf16>, vector<64x128xbf16>, vector<16x128xf32> -> vector<16x128xf32>
    %299 = arith.addf %293, %298 : vector<16x128xf32>
    %c736 = arith.constant 736 : index
    %c0_207 = arith.constant 0 : index
    %300 = vector.load %arg11[%c736, %c0_207] : memref<784x64xf32, #tpu.memory_space<vmem>>, vector<16x64xf32>
    %301 = arith.truncf %300 : vector<16x64xf32> to vector<16x64xbf16>
    %c46 = arith.constant 46 : index
    %c0_208 = arith.constant 0 : index
    %c0_209 = arith.constant 0 : index
    %302 = vector.load %arg8[%c46, %c0_208, %c0_209] : memref<49x64x128xbf16, #tpu.memory_space<vmem>>, vector<1x64x128xbf16>
    %303 = vector.shape_cast %302 : vector<1x64x128xbf16> to vector<64x128xbf16>
    %cst_210 = arith.constant dense<0.000000e+00> : vector<16x128xf32>
    %304 = tpu.matmul %301, %303, %cst_210 {dimension_numbers = #tpu.dot_dimension_numbers<[1], [0], [0], [1], [0, 0, 1, 1], [], []>} : vector<16x64xbf16>, vector<64x128xbf16>, vector<16x128xf32> -> vector<16x128xf32>
    %305 = arith.addf %299, %304 : vector<16x128xf32>
    %c752 = arith.constant 752 : index
    %c0_211 = arith.constant 0 : index
    %306 = vector.load %arg11[%c752, %c0_211] : memref<784x64xf32, #tpu.memory_space<vmem>>, vector<16x64xf32>
    %307 = arith.truncf %306 : vector<16x64xf32> to vector<16x64xbf16>
    %c47 = arith.constant 47 : index
    %c0_212 = arith.constant 0 : index
    %c0_213 = arith.constant 0 : index
    %308 = vector.load %arg8[%c47, %c0_212, %c0_213] : memref<49x64x128xbf16, #tpu.memory_space<vmem>>, vector<1x64x128xbf16>
    %309 = vector.shape_cast %308 : vector<1x64x128xbf16> to vector<64x128xbf16>
    %cst_214 = arith.constant dense<0.000000e+00> : vector<16x128xf32>
    %310 = tpu.matmul %307, %309, %cst_214 {dimension_numbers = #tpu.dot_dimension_numbers<[1], [0], [0], [1], [0, 0, 1, 1], [], []>} : vector<16x64xbf16>, vector<64x128xbf16>, vector<16x128xf32> -> vector<16x128xf32>
    %311 = arith.addf %305, %310 : vector<16x128xf32>
    %c768 = arith.constant 768 : index
    %c0_215 = arith.constant 0 : index
    %312 = vector.load %arg11[%c768, %c0_215] : memref<784x64xf32, #tpu.memory_space<vmem>>, vector<16x64xf32>
    %313 = arith.truncf %312 : vector<16x64xf32> to vector<16x64xbf16>
    %c48_216 = arith.constant 48 : index
    %c0_217 = arith.constant 0 : index
    %c0_218 = arith.constant 0 : index
    %314 = vector.load %arg8[%c48_216, %c0_217, %c0_218] : memref<49x64x128xbf16, #tpu.memory_space<vmem>>, vector<1x64x128xbf16>
    %315 = vector.shape_cast %314 : vector<1x64x128xbf16> to vector<64x128xbf16>
    %cst_219 = arith.constant dense<0.000000e+00> : vector<16x128xf32>
    %316 = tpu.matmul %313, %315, %cst_219 {dimension_numbers = #tpu.dot_dimension_numbers<[1], [0], [0], [1], [0, 0, 1, 1], [], []>} : vector<16x64xbf16>, vector<64x128xbf16>, vector<16x128xf32> -> vector<16x128xf32>
    %317 = arith.addf %311, %316 : vector<16x128xf32>
    %c0_220 = arith.constant 0 : index
    %c0_221 = arith.constant 0 : index
    %318 = vector.load %arg9[%c0_220, %c0_221] : memref<1x128xf32, #tpu.memory_space<vmem>>, vector<1x128xf32>
    %319 = vector.broadcast %318 : vector<1x128xf32> to vector<16x128xf32>
    %320 = arith.addf %317, %319 : vector<16x128xf32>
    %c0_222 = arith.constant 0 : index
    %c0_223 = arith.constant 0 : index
    %321 = vector.load %arg10[%c0_222, %c0_223] : memref<16x128xf32, #tpu.memory_space<vmem>>, vector<16x128xf32>
    tpu.vector_store %arg10[%c0_222, %c0_223], %320 {strides = array<i32>} : memref<16x128xf32, #tpu.memory_space<vmem>>, vector<16x128xf32>,
    return
  }
  func.func @transform_0(%arg0: i32) -> (i32, i32) {
    %c0_i32 = arith.constant 0 : i32
    %c0_i32_0 = arith.constant 0 : i32
    return %arg0, %c0_i32 : i32, i32
  }
  func.func @transform_1(%arg0: i32) -> (i32, i32) {
    %c0_i32 = arith.constant 0 : i32
    %c0_i32_0 = arith.constant 0 : i32
    %c0_i32_1 = arith.constant 0 : i32
    return %c0_i32, %c0_i32_0 : i32, i32
  }
  func.func @transform_2(%arg0: i32) -> (i32, i32) {
    %c0_i32 = arith.constant 0 : i32
    %c0_i32_0 = arith.constant 0 : i32
    %c0_i32_1 = arith.constant 0 : i32
    return %c0_i32, %c0_i32_0 : i32, i32
  }
  func.func @transform_3(%arg0: i32) -> (i32, i32) {
    %c0_i32 = arith.constant 0 : i32
    %c0_i32_0 = arith.constant 0 : i32
    %c0_i32_1 = arith.constant 0 : i32
    return %c0_i32, %c0_i32_0 : i32, i32
  }
  func.func @transform_4(%arg0: i32) -> (i32, i32) {
    %c0_i32 = arith.constant 0 : i32
    %c0_i32_0 = arith.constant 0 : i32
    %c0_i32_1 = arith.constant 0 : i32
    return %c0_i32, %c0_i32_0 : i32, i32
  }
  func.func @transform_5(%arg0: i32) -> (i32, i32) {
    %c0_i32 = arith.constant 0 : i32
    %c0_i32_0 = arith.constant 0 : i32
    %c0_i32_1 = arith.constant 0 : i32
    return %c0_i32, %c0_i32_0 : i32, i32
  }
  func.func @transform_6(%arg0: i32) -> (i32, i32) {
    %c0_i32 = arith.constant 0 : i32
    %c0_i32_0 = arith.constant 0 : i32
    %c0_i32_1 = arith.constant 0 : i32
    return %c0_i32, %c0_i32_0 : i32, i32
  }
  func.func @transform_7(%arg0: i32) -> (i32, i32, i32) {
    %c0_i32 = arith.constant 0 : i32
    %c0_i32_0 = arith.constant 0 : i32
    %c0_i32_1 = arith.constant 0 : i32
    %c0_i32_2 = arith.constant 0 : i32
    return %c0_i32, %c0_i32_0, %c0_i32_1 : i32, i32, i32
  }
  func.func @transform_8(%arg0: i32) -> (i32, i32) {
    %c0_i32 = arith.constant 0 : i32
    %c0_i32_0 = arith.constant 0 : i32
    %c0_i32_1 = arith.constant 0 : i32
    return %c0_i32, %c0_i32_0 : i32, i32
  }
  func.func @transform_9(%arg0: i32) -> (i32, i32) {
    %c0_i32 = arith.constant 0 : i32
    %c0_i32_0 = arith.constant 0 : i32
    return %arg0, %c0_i32 : i32, i32
  }
}

</mosaic_0001>

<llo_original>
// kernel: resnet_visual_encoder.1
$region0: #{resnet_visual_encoder.1}
  #allocation0 [shape = 'u32[]', space=smem, size = 0x4, offset = 0x4, fixed_abs, tag = 'smem constant byte address 0x4 - core index']
  #allocation1 [shape = 'u32[144,128]{1,0:T(1,128)}', space=vmem, size = 0x12000, scoped, tag = 'internal scratch']
  #allocation2 [shape = 'f32[784,64]{1,0:T(8,128)}', space=vmem, size = 0x62000, scoped, tag = 'scratch operand']
  %s0 = inlined_call_operand.vmem [shape: bf16[784,512], index: 0, kind: input, shape index: {}]
  %s1 = inlined_call_operand.vmem [shape: bf16[512,256], index: 1, kind: input, shape index: {}]
  %s2 = inlined_call_operand.vmem [shape: f32[1,256], index: 2, kind: input, shape index: {}]
  %s3 = inlined_call_operand.vmem [shape: f32[1,256], index: 3, kind: input, shape index: {}]
  %s4 = inlined_call_operand.vmem [shape: bf16[256,64], index: 4, kind: input, shape index: {}]
  %s5 = inlined_call_operand.vmem [shape: f32[1,64], index: 5, kind: input, shape index: {}]
  %s6 = inlined_call_operand.vmem [shape: f32[1,64], index: 6, kind: input, shape index: {}]
  %s7 = inlined_call_operand.vmem [shape: bf16[49,64,128], index: 7, kind: input, shape index: {}]
  %s8 = inlined_call_operand.vmem [shape: f32[1,128], index: 8, kind: input, shape index: {}]
  %s9 = inlined_call_operand.vmem [shape: f32[16,128], index: 9, kind: output, shape index: {}]
  %s10 = sld [smem:[#allocation0]]
  $region46: #{resnet_visual_encoder.1} parent=0
    _
  %s12 = ssub.s32 1, %s10
  %s13 = scalar_select 0, %s12, %s10
  // Predicated region
  $region2: #{resnet_visual_encoder.1} parent=0 // pred_check
    _
  $region3: #{resnet_visual_encoder.1} parent=0 // pred_check_branch
    %15 = sbr.rel (0) target = $region5
  $region4: #{resnet_visual_encoder.1} parent=0 // pred_region
    _
  $region5: #{resnet_visual_encoder.1} parent=0 // pred_fallthru
    _
  // Predicated region
  $region6: #{resnet_visual_encoder.1} parent=0 // pred_check
    _
  $region7: #{resnet_visual_encoder.1} parent=0 // pred_check_branch
    %17 = sbr.rel (0) target = $region9
  $region8: #{resnet_visual_encoder.1} parent=0 // pred_region
    _
  $region9: #{resnet_visual_encoder.1} parent=0 // pred_fallthru
    _
  // Predicated region
  $region10: #{resnet_visual_encoder.1} parent=0 // pred_check
    _
  $region11: #{resnet_visual_encoder.1} parent=0 // pred_check_branch
    %19 = sbr.rel (0) target = $region13
  $region12: #{resnet_visual_encoder.1} parent=0 // pred_region
    _
  $region13: #{resnet_visual_encoder.1} parent=0 // pred_fallthru
    _
  // Predicated region
  $region14: #{resnet_visual_encoder.1} parent=0 // pred_check
    _
  $region15: #{resnet_visual_encoder.1} parent=0 // pred_check_branch
    %21 = sbr.rel (0) target = $region17
  $region16: #{resnet_visual_encoder.1} parent=0 // pred_region
    _
  $region17: #{resnet_visual_encoder.1} parent=0 // pred_fallthru
    _
  // Predicated region
  $region18: #{resnet_visual_encoder.1} parent=0 // pred_check
    _
  $region19: #{resnet_visual_encoder.1} parent=0 // pred_check_branch
    %23 = sbr.rel (0) target = $region21
  $region20: #{resnet_visual_encoder.1} parent=0 // pred_region
    _
  $region21: #{resnet_visual_encoder.1} parent=0 // pred_fallthru
    _
  // Predicated region
  $region22: #{resnet_visual_encoder.1} parent=0 // pred_check
    _
  $region23: #{resnet_visual_encoder.1} parent=0 // pred_check_branch
    %25 = sbr.rel (0) target = $region25
  $region24: #{resnet_visual_encoder.1} parent=0 // pred_region
    _
  $region25: #{resnet_visual_encoder.1} parent=0 // pred_fallthru
    _
  // Predicated region
  $region26: #{resnet_visual_encoder.1} parent=0 // pred_check
    _
  $region27: #{resnet_visual_encoder.1} parent=0 // pred_check_branch
    %27 = sbr.rel (0) target = $region29
  $region28: #{resnet_visual_encoder.1} parent=0 // pred_region
    _
  $region29: #{resnet_visual_encoder.1} parent=0 // pred_fallthru
    _
  // Predicated region
  $region30: #{resnet_visual_encoder.1} parent=0 // pred_check
    _
  $region31: #{resnet_visual_encoder.1} parent=0 // pred_check_branch
    %29 = sbr.rel (0) target = $region33
  $region32: #{resnet_visual_encoder.1} parent=0 // pred_region
    _
  $region33: #{resnet_visual_encoder.1} parent=0 // pred_fallthru
    _
  // Predicated region
  $region34: #{resnet_visual_encoder.1} parent=0 // pred_check
    _
  $region35: #{resnet_visual_encoder.1} parent=0 // pred_check_branch
    %31 = sbr.rel (0) target = $region37
  $region36: #{resnet_visual_encoder.1} parent=0 // pred_region
    _
  $region37: #{resnet_visual_encoder.1} parent=0 // pred_fallthru
    _
  %v33 = vld [vmem:[%s0] sm:$0xff]
  %v34 = vld [vmem:[%s0 + $0x8] sm:$0xff]
  %v35 = vld [vmem:[%s0 + $0x10] sm:$0xff]
  %v36 = vld [vmem:[%s0 + $0x18] sm:$0xff]
  %v37 = vld [vmem:[%s0 + $0x20] sm:$0xff]
  %v38 = vld [vmem:[%s0 + $0x28] sm:$0xff]
  %v39 = vld [vmem:[%s0 + $0x30] sm:$0xff]
  %v40 = vld [vmem:[%s0 + $0x38] sm:$0xff]
  %v41 = vld [vmem:[%s0 + $0x40] sm:$0xff]
  %v42 = vld [vmem:[%s0 + $0x48] sm:$0xff]
  %v43 = vld [vmem:[%s0 + $0x50] sm:$0xff]
  %v44 = vld [vmem:[%s0 + $0x58] sm:$0xff]
  %v45 = vld [vmem:[%s0 + $0x60] sm:$0xff]
  %v46 = vld [vmem:[%s0 + $0x68] sm:$0xff]
  %v47 = vld [vmem:[%s0 + $0x70] sm:$0xff]
  %v48 = vld [vmem:[%s0 + $0x78] sm:$0xff]
  %v49 = vld [vmem:[%s0 + $0x80] sm:$0xff]
  %v50 = vld [vmem:[%s0 + $0x88] sm:$0xff]
  %v51 = vld [vmem:[%s0 + $0x90] sm:$0xff]
  %v52 = vld [vmem:[%s0 + $0x98] sm:$0xff]
  %v53 = vld [vmem:[%s0 + $0xa0] sm:$0xff]
  %v54 = vld [vmem:[%s0 + $0xa8] sm:$0xff]
  %v55 = vld [vmem:[%s0 + $0xb0] sm:$0xff]
  %v56 = vld [vmem:[%s0 + $0xb8] sm:$0xff]
  %v57 = vld [vmem:[%s0 + $0xc0] sm:$0xff]
  %v58 = vld [vmem:[%s0 + $0xc8] sm:$0xff]
  %v59 = vld [vmem:[%s0 + $0xd0] sm:$0xff]
  %v60 = vld [vmem:[%s0 + $0xd8] sm:$0xff]
  %v61 = vld [vmem:[%s0 + $0xe0] sm:$0xff]
  %v62 = vld [vmem:[%s0 + $0xe8] sm:$0xff]
  %v63 = vld [vmem:[%s0 + $0xf0] sm:$0xff]
  %v64 = vld [vmem:[%s0 + $0xf8] sm:$0xff]
  %v65 = vld [vmem:[%s0 + $0x100] sm:$0xff]
  %v66 = vld [vmem:[%s0 + $0x108] sm:$0xff]
  %v67 = vld [vmem:[%s0 + $0x110] sm:$0xff]
  %v68 = vld [vmem:[%s0 + $0x118] sm:$0xff]
  %v69 = vld [vmem:[%s0 + $0x120] sm:$0xff]
  %v70 = vld [vmem:[%s0 + $0x128] sm:$0xff]
  %v71 = vld [vmem:[%s0 + $0x130] sm:$0xff]
  %v72 = vld [vmem:[%s0 + $0x138] sm:$0xff]
  %v73 = vld [vmem:[%s0 + $0x140] sm:$0xff]
  %v74 = vld [vmem:[%s0 + $0x148] sm:$0xff]
  %v75 = vld [vmem:[%s0 + $0x150] sm:$0xff]
  %v76 = vld [vmem:[%s0 + $0x158] sm:$0xff]
  %v77 = vld [vmem:[%s0 + $0x160] sm:$0xff]
  %v78 = vld [vmem:[%s0 + $0x168] sm:$0xff]
  %v79 = vld [vmem:[%s0 + $0x170] sm:$0xff]
  %v80 = vld [vmem:[%s0 + $0x178] sm:$0xff]
  %v81 = vld [vmem:[%s0 + $0x180] sm:$0xff]
  %v82 = vld [vmem:[%s0 + $0x188] sm:$0xff]
  %v83 = vld [vmem:[%s0 + $0x190] sm:$0xff]
  %v84 = vld [vmem:[%s0 + $0x198] sm:$0xff]
  %v85 = vld [vmem:[%s0 + $0x1a0] sm:$0xff]
  %v86 = vld [vmem:[%s0 + $0x1a8] sm:$0xff]
  %v87 = vld [vmem:[%s0 + $0x1b0] sm:$0xff]
  %v88 = vld [vmem:[%s0 + $0x1b8] sm:$0xff]
  %v89 = vld [vmem:[%s0 + $0x1c0] sm:$0xff]
  %v90 = vld [vmem:[%s0 + $0x1c8] sm:$0xff]
  %v91 = vld [vmem:[%s0 + $0x1d0] sm:$0xff]
  %v92 = vld [vmem:[%s0 + $0x1d8] sm:$0xff]
  %v93 = vld [vmem:[%s0 + $0x1e0] sm:$0xff]
  %v94 = vld [vmem:[%s0 + $0x1e8] sm:$0xff]
  %v95 = vld [vmem:[%s0 + $0x1f0] sm:$0xff]
  %v96 = vld [vmem:[%s0 + $0x1f8] sm:$0xff]
  %v97 = vld [vmem:[%s0 + $0x200] sm:$0xff]
  %v98 = vld [vmem:[%s0 + $0x208] sm:$0xff]
  %v99 = vld [vmem:[%s0 + $0x210] sm:$0xff]
  %v100 = vld [vmem:[%s0 + $0x218] sm:$0xff]
  %v101 = vld [vmem:[%s0 + $0x220] sm:$0xff]
  %v102 = vld [vmem:[%s0 + $0x228] sm:$0xff]
  %v103 = vld [vmem:[%s0 + $0x230] sm:$0xff]
  %v104 = vld [vmem:[%s0 + $0x238] sm:$0xff]
  %v105 = vld [vmem:[%s0 + $0x240] sm:$0xff]
  %v106 = vld [vmem:[%s0 + $0x248] sm:$0xff]
  %v107 = vld [vmem:[%s0 + $0x250] sm:$0xff]
  %v108 = vld [vmem:[%s0 + $0x258] sm:$0xff]
  %v109 = vld [vmem:[%s0 + $0x260] sm:$0xff]
  %v110 = vld [vmem:[%s0 + $0x268] sm:$0xff]
  %v111 = vld [vmem:[%s0 + $0x270] sm:$0xff]
  %v112 = vld [vmem:[%s0 + $0x278] sm:$0xff]
  %v113 = vld [vmem:[%s0 + $0x280] sm:$0xff]
  %v114 = vld [vmem:[%s0 + $0x288] sm:$0xff]
  %v115 = vld [vmem:[%s0 + $0x290] sm:$0xff]
  %v116 = vld [vmem:[%s0 + $0x298] sm:$0xff]
  %v117 = vld [vmem:[%s0 + $0x2a0] sm:$0xff]
  %v118 = vld [vmem:[%s0 + $0x2a8] sm:$0xff]
  %v119 = vld [vmem:[%s0 + $0x2b0] sm:$0xff]
  %v120 = vld [vmem:[%s0 + $0x2b8] sm:$0xff]
  %v121 = vld [vmem:[%s0 + $0x2c0] sm:$0xff]
  %v122 = vld [vmem:[%s0 + $0x2c8] sm:$0xff]
  %v123 = vld [vmem:[%s0 + $0x2d0] sm:$0xff]
  %v124 = vld [vmem:[%s0 + $0x2d8] sm:$0xff]
  %v125 = vld [vmem:[%s0 + $0x2e0] sm:$0xff]
  %v126 = vld [vmem:[%s0 + $0x2e8] sm:$0xff]
  %v127 = vld [vmem:[%s0 + $0x2f0] sm:$0xff]
  %v128 = vld [vmem:[%s0 + $0x2f8] sm:$0xff]
  %v129 = vld [vmem:[%s0 + $0x300] sm:$0xff]
  %v130 = vld [vmem:[%s0 + $0x308] sm:$0xff]
  %v131 = vld [vmem:[%s0 + $0x310] sm:$0xff]
  %v132 = vld [vmem:[%s0 + $0x318] sm:$0xff]
  %v133 = vld [vmem:[%s0 + $0x320] sm:$0xff]
  %v134 = vld [vmem:[%s0 + $0x328] sm:$0xff]
  %v135 = vld [vmem:[%s0 + $0x330] sm:$0xff]
  %v136 = vld [vmem:[%s0 + $0x338] sm:$0xff]
  %v137 = vld [vmem:[%s0 + $0x340] sm:$0xff]
  %v138 = vld [vmem:[%s0 + $0x348] sm:$0xff]
  %v139 = vld [vmem:[%s0 + $0x350] sm:$0xff]
  %v140 = vld [vmem:[%s0 + $0x358] sm:$0xff]
  %v141 = vld [vmem:[%s0 + $0x360] sm:$0xff]
  %v142 = vld [vmem:[%s0 + $0x368] sm:$0xff]
  %v143 = vld [vmem:[%s0 + $0x370] sm:$0xff]
  %v144 = vld [vmem:[%s0 + $0x378] sm:$0xff]
  %v145 = vld [vmem:[%s0 + $0x380] sm:$0xff]
  %v146 = vld [vmem:[%s0 + $0x388] sm:$0xff]
  %v147 = vld [vmem:[%s0 + $0x390] sm:$0xff]
  %v148 = vld [vmem:[%s0 + $0x398] sm:$0xff]
  %v149 = vld [vmem:[%s0 + $0x3a0] sm:$0xff]
  %v150 = vld [vmem:[%s0 + $0x3a8] sm:$0xff]
  %v151 = vld [vmem:[%s0 + $0x3b0] sm:$0xff]
  %v152 = vld [vmem:[%s0 + $0x3b8] sm:$0xff]
  %v153 = vld [vmem:[%s0 + $0x3c0] sm:$0xff]
  %v154 = vld [vmem:[%s0 + $0x3c8] sm:$0xff]
  %v155 = vld [vmem:[%s0 + $0x3d0] sm:$0xff]
  %v156 = vld [vmem:[%s0 + $0x3d8] sm:$0xff]
  %v157 = vld [vmem:[%s0 + $0x3e0] sm:$0xff]
  %v158 = vld [vmem:[%s0 + $0x3e8] sm:$0xff]
  %v159 = vld [vmem:[%s0 + $0x3f0] sm:$0xff]
  %v160 = vld [vmem:[%s0 + $0x3f8] sm:$0xff]
  %v161 = vld [vmem:[%s0 + $0x400] sm:$0xff]
  %v162 = vld [vmem:[%s0 + $0x408] sm:$0xff]
  %v163 = vld [vmem:[%s0 + $0x410] sm:$0xff]
  %v164 = vld [vmem:[%s0 + $0x418] sm:$0xff]
  %v165 = vld [vmem:[%s0 + $0x420] sm:$0xff]
  %v166 = vld [vmem:[%s0 + $0x428] sm:$0xff]
  %v167 = vld [vmem:[%s0 + $0x430] sm:$0xff]
  %v168 = vld [vmem:[%s0 + $0x438] sm:$0xff]
  %v169 = vld [vmem:[%s0 + $0x440] sm:$0xff]
  %v170 = vld [vmem:[%s0 + $0x448] sm:$0xff]
  %v171 = vld [vmem:[%s0 + $0x450] sm:$0xff]
  %v172 = vld [vmem:[%s0 + $0x458] sm:$0xff]
  %v173 = vld [vmem:[%s0 + $0x460] sm:$0xff]
  %v174 = vld [vmem:[%s0 + $0x468] sm:$0xff]
  %v175 = vld [vmem:[%s0 + $0x470] sm:$0xff]
  %v176 = vld [vmem:[%s0 + $0x478] sm:$0xff]
  %v177 = vld [vmem:[%s0 + $0x480] sm:$0xff]
  %v178 = vld [vmem:[%s0 + $0x488] sm:$0xff]
  %v179 = vld [vmem:[%s0 + $0x490] sm:$0xff]
  %v180 = vld [vmem:[%s0 + $0x498] sm:$0xff]
  %v181 = vld [vmem:[%s0 + $0x4a0] sm:$0xff]
  %v182 = vld [vmem:[%s0 + $0x4a8] sm:$0xff]
  %v183 = vld [vmem:[%s0 + $0x4b0] sm:$0xff]
  %v184 = vld [vmem:[%s0 + $0x4b8] sm:$0xff]
  %v185 = vld [vmem:[%s0 + $0x4c0] sm:$0xff]
  %v186 = vld [vmem:[%s0 + $0x4c8] sm:$0xff]
  %v187 = vld [vmem:[%s0 + $0x4d0] sm:$0xff]
  %v188 = vld [vmem:[%s0 + $0x4d8] sm:$0xff]
  %v189 = vld [vmem:[%s0 + $0x4e0] sm:$0xff]
  %v190 = vld [vmem:[%s0 + $0x4e8] sm:$0xff]
  %v191 = vld [vmem:[%s0 + $0x4f0] sm:$0xff]
  %v192 = vld [vmem:[%s0 + $0x4f8] sm:$0xff]
  %v193 = vld [vmem:[%s0 + $0x500] sm:$0xff]
  %v194 = vld [vmem:[%s0 + $0x508] sm:$0xff]
  %v195 = vld [vmem:[%s0 + $0x510] sm:$0xff]
  %v196 = vld [vmem:[%s0 + $0x518] sm:$0xff]
  %v197 = vld [vmem:[%s0 + $0x520] sm:$0xff]
  %v198 = vld [vmem:[%s0 + $0x528] sm:$0xff]
  %v199 = vld [vmem:[%s0 + $0x530] sm:$0xff]
  %v200 = vld [vmem:[%s0 + $0x538] sm:$0xff]
  %v201 = vld [vmem:[%s0 + $0x540] sm:$0xff]
  %v202 = vld [vmem:[%s0 + $0x548] sm:$0xff]
  %v203 = vld [vmem:[%s0 + $0x550] sm:$0xff]
  %v204 = vld [vmem:[%s0 + $0x558] sm:$0xff]
  %v205 = vld [vmem:[%s0 + $0x560] sm:$0xff]
  %v206 = vld [vmem:[%s0 + $0x568] sm:$0xff]
  %v207 = vld [vmem:[%s0 + $0x570] sm:$0xff]
  %v208 = vld [vmem:[%s0 + $0x578] sm:$0xff]
  %v209 = vld [vmem:[%s0 + $0x580] sm:$0xff]
  %v210 = vld [vmem:[%s0 + $0x588] sm:$0xff]
  %v211 = vld [vmem:[%s0 + $0x590] sm:$0xff]
  %v212 = vld [vmem:[%s0 + $0x598] sm:$0xff]
  %v213 = vld [vmem:[%s0 + $0x5a0] sm:$0xff]
  %v214 = vld [vmem:[%s0 + $0x5a8] sm:$0xff]
  %v215 = vld [vmem:[%s0 + $0x5b0] sm:$0xff]
  %v216 = vld [vmem:[%s0 + $0x5b8] sm:$0xff]
  %v217 = vld [vmem:[%s0 + $0x5c0] sm:$0xff]
  %v218 = vld [vmem:[%s0 + $0x5c8] sm:$0xff]
  %v219 = vld [vmem:[%s0 + $0x5d0] sm:$0xff]
  %v220 = vld [vmem:[%s0 + $0x5d8] sm:$0xff]
  %v221 = vld [vmem:[%s0 + $0x5e0] sm:$0xff]
  %v222 = vld [vmem:[%s0 + $0x5e8] sm:$0xff]
  %v223 = vld [vmem:[%s0 + $0x5f0] sm:$0xff]
  %v224 = vld [vmem:[%s0 + $0x5f8] sm:$0xff]
  %v225 = vld [vmem:[%s0 + $0x600] sm:$0xff]
  %v226 = vld [vmem:[%s0 + $0x608] sm:$0xff]
  %v227 = vld [vmem:[%s0 + $0x610] sm:$0xff]
  %v228 = vld [vmem:[%s0 + $0x618] sm:$0xff]
  %v229 = vld [vmem:[%s1] sm:$0xff]
  %v230 = vld [vmem:[%s1 + $0x8] sm:$0xff]
  %v231 = vld [vmem:[%s1 + $0x10] sm:$0xff]
  %v232 = vld [vmem:[%s1 + $0x18] sm:$0xff]
  %v233 = vld [vmem:[%s1 + $0x20] sm:$0xff]
  %v234 = vld [vmem:[%s1 + $0x28] sm:$0xff]
  %v235 = vld [vmem:[%s1 + $0x30] sm:$0xff]
  %v236 = vld [vmem:[%s1 + $0x38] sm:$0xff]
  %v237 = vld [vmem:[%s1 + $0x40] sm:$0xff]
  %v238 = vld [vmem:[%s1 + $0x48] sm:$0xff]
  %v239 = vld [vmem:[%s1 + $0x50] sm:$0xff]
  %v240 = vld [vmem:[%s1 + $0x58] sm:$0xff]
  %v241 = vld [vmem:[%s1 + $0x60] sm:$0xff]
  %v242 = vld [vmem:[%s1 + $0x68] sm:$0xff]
  %v243 = vld [vmem:[%s1 + $0x70] sm:$0xff]
  %v244 = vld [vmem:[%s1 + $0x78] sm:$0xff]
  %v245 = vld [vmem:[%s1 + $0x80] sm:$0xff]
  %v246 = vld [vmem:[%s1 + $0x88] sm:$0xff]
  %v247 = vld [vmem:[%s1 + $0x90] sm:$0xff]
  %v248 = vld [vmem:[%s1 + $0x98] sm:$0xff]
  %v249 = vld [vmem:[%s1 + $0xa0] sm:$0xff]
  %v250 = vld [vmem:[%s1 + $0xa8] sm:$0xff]
  %v251 = vld [vmem:[%s1 + $0xb0] sm:$0xff]
  %v252 = vld [vmem:[%s1 + $0xb8] sm:$0xff]
  %v253 = vld [vmem:[%s1 + $0xc0] sm:$0xff]
  %v254 = vld [vmem:[%s1 + $0xc8] sm:$0xff]
  %v255 = vld [vmem:[%s1 + $0xd0] sm:$0xff]
  %v256 = vld [vmem:[%s1 + $0xd8] sm:$0xff]
  %v257 = vld [vmem:[%s1 + $0xe0] sm:$0xff]
  %v258 = vld [vmem:[%s1 + $0xe8] sm:$0xff]
  %v259 = vld [vmem:[%s1 + $0xf0] sm:$0xff]
  %v260 = vld [vmem:[%s1 + $0xf8] sm:$0xff]
  %v261 = vld [vmem:[%s1 + $0x100] sm:$0xff]
  %v262 = vld [vmem:[%s1 + $0x108] sm:$0xff]
  %v263 = vld [vmem:[%s1 + $0x110] sm:$0xff]
  %v264 = vld [vmem:[%s1 + $0x118] sm:$0xff]
  %v265 = vld [vmem:[%s1 + $0x120] sm:$0xff]
  %v266 = vld [vmem:[%s1 + $0x128] sm:$0xff]
  %v267 = vld [vmem:[%s1 + $0x130] sm:$0xff]
  %v268 = vld [vmem:[%s1 + $0x138] sm:$0xff]
  %v269 = vld [vmem:[%s1 + $0x140] sm:$0xff]
  %v270 = vld [vmem:[%s1 + $0x148] sm:$0xff]
  %v271 = vld [vmem:[%s1 + $0x150] sm:$0xff]
  %v272 = vld [vmem:[%s1 + $0x158] sm:$0xff]
  %v273 = vld [vmem:[%s1 + $0x160] sm:$0xff]
  %v274 = vld [vmem:[%s1 + $0x168] sm:$0xff]
  %v275 = vld [vmem:[%s1 + $0x170] sm:$0xff]
  %v276 = vld [vmem:[%s1 + $0x178] sm:$0xff]
  %v277 = vld [vmem:[%s1 + $0x180] sm:$0xff]
  %v278 = vld [vmem:[%s1 + $0x188] sm:$0xff]
  %v279 = vld [vmem:[%s1 + $0x190] sm:$0xff]
  %v280 = vld [vmem:[%s1 + $0x198] sm:$0xff]
  %v281 = vld [vmem:[%s1 + $0x1a0] sm:$0xff]
  %v282 = vld [vmem:[%s1 + $0x1a8] sm:$0xff]
  %v283 = vld [vmem:[%s1 + $0x1b0] sm:$0xff]
  %v284 = vld [vmem:[%s1 + $0x1b8] sm:$0xff]
  %v285 = vld [vmem:[%s1 + $0x1c0] sm:$0xff]
  %v286 = vld [vmem:[%s1 + $0x1c8] sm:$0xff]
  %v287 = vld [vmem:[%s1 + $0x1d0] sm:$0xff]
  %v288 = vld [vmem:[%s1 + $0x1d8] sm:$0xff]
  %v289 = vld [vmem:[%s1 + $0x1e0] sm:$0xff]
  %v290 = vld [vmem:[%s1 + $0x1e8] sm:$0xff]
  %v291 = vld [vmem:[%s1 + $0x1f0] sm:$0xff]
  %v292 = vld [vmem:[%s1 + $0x1f8] sm:$0xff]
  %v489 = vunpack.c.l.b16 %v33
  %v490 = vunpack.c.h.b16 %v33
  %v491 = vunpack.c.l.b16 %v34
  %v492 = vunpack.c.h.b16 %v34
  %v493 = vunpack.c.l.b16 %v35
  %v494 = vunpack.c.h.b16 %v35
  %v495 = vunpack.c.l.b16 %v36
  %v496 = vunpack.c.h.b16 %v36
  %v497 = vunpack.c.l.b16 %v37
  %v498 = vunpack.c.h.b16 %v37
  %v499 = vunpack.c.l.b16 %v38
  %v500 = vunpack.c.h.b16 %v38
  %v501 = vunpack.c.l.b16 %v39
  %v502 = vunpack.c.h.b16 %v39
  %v503 = vunpack.c.l.b16 %v40
  %v504 = vunpack.c.h.b16 %v40
  %v505 = vunpack.c.l.b16 %v41
  %v506 = vunpack.c.h.b16 %v41
  %v507 = vunpack.c.l.b16 %v42
  %v508 = vunpack.c.h.b16 %v42
  %v509 = vunpack.c.l.b16 %v43
  %v510 = vunpack.c.h.b16 %v43
  %v511 = vunpack.c.l.b16 %v44
  %v512 = vunpack.c.h.b16 %v44
  %v513 = vunpack.c.l.b16 %v45
  %v514 = vunpack.c.h.b16 %v45
  %v515 = vunpack.c.l.b16 %v46
  %v516 = vunpack.c.h.b16 %v46
  %v517 = vunpack.c.l.b16 %v47
  %v518 = vunpack.c.h.b16 %v47
  %v519 = vunpack.c.l.b16 %v48
  %v520 = vunpack.c.h.b16 %v48
  %v521 = vunpack.c.l.b16 %v49
  %v522 = vunpack.c.h.b16 %v49
  %v523 = vunpack.c.l.b16 %v50
  %v524 = vunpack.c.h.b16 %v50
  %v525 = vunpack.c.l.b16 %v51
  %v526 = vunpack.c.h.b16 %v51
  %v527 = vunpack.c.l.b16 %v52
  %v528 = vunpack.c.h.b16 %v52
  %v529 = vunpack.c.l.b16 %v53
  %v530 = vunpack.c.h.b16 %v53
  %v531 = vunpack.c.l.b16 %v54
  %v532 = vunpack.c.h.b16 %v54
  %v533 = vunpack.c.l.b16 %v55
  %v534 = vunpack.c.h.b16 %v55
  %v535 = vunpack.c.l.b16 %v56
  %v536 = vunpack.c.h.b16 %v56
  %v537 = vunpack.c.l.b16 %v57
  %v538 = vunpack.c.h.b16 %v57
  %v539 = vunpack.c.l.b16 %v58
  %v540 = vunpack.c.h.b16 %v58
  %v541 = vunpack.c.l.b16 %v59
  %v542 = vunpack.c.h.b16 %v59
  %v543 = vunpack.c.l.b16 %v60
  %v544 = vunpack.c.h.b16 %v60
  %v545 = vunpack.c.l.b16 %v61
  %v546 = vunpack.c.h.b16 %v61
  %v547 = vunpack.c.l.b16 %v62
  %v548 = vunpack.c.h.b16 %v62
  %v549 = vunpack.c.l.b16 %v63
  %v550 = vunpack.c.h.b16 %v63
  %v551 = vunpack.c.l.b16 %v64
  %v552 = vunpack.c.h.b16 %v64
  %v553 = vunpack.c.l.b16 %v65
  %v554 = vunpack.c.h.b16 %v65
  %v555 = vunpack.c.l.b16 %v66
  %v556 = vunpack.c.h.b16 %v66
  %v557 = vunpack.c.l.b16 %v67
  %v558 = vunpack.c.h.b16 %v67
  %v559 = vunpack.c.l.b16 %v68
  %v560 = vunpack.c.h.b16 %v68
  %v561 = vunpack.c.l.b16 %v69
  %v562 = vunpack.c.h.b16 %v69
  %v563 = vunpack.c.l.b16 %v70
  %v564 = vunpack.c.h.b16 %v70
  %v565 = vunpack.c.l.b16 %v71
  %v566 = vunpack.c.h.b16 %v71
  %v567 = vunpack.c.l.b16 %v72
  %v568 = vunpack.c.h.b16 %v72
  %v569 = vunpack.c.l.b16 %v73
  %v570 = vunpack.c.h.b16 %v73
  %v571 = vunpack.c.l.b16 %v74
  %v572 = vunpack.c.h.b16 %v74
  %v573 = vunpack.c.l.b16 %v75
  %v574 = vunpack.c.h.b16 %v75
  %v575 = vunpack.c.l.b16 %v76
  %v576 = vunpack.c.h.b16 %v76
  %v577 = vunpack.c.l.b16 %v77
  %v578 = vunpack.c.h.b16 %v77
  %v579 = vunpack.c.l.b16 %v78
  %v580 = vunpack.c.h.b16 %v78
  %v581 = vunpack.c.l.b16 %v79
  %v582 = vunpack.c.h.b16 %v79
  %v583 = vunpack.c.l.b16 %v80
  %v584 = vunpack.c.h.b16 %v80
  %v585 = vunpack.c.l.b16 %v81
  %v586 = vunpack.c.h.b16 %v81
  %v587 = vunpack.c.l.b16 %v82
  %v588 = vunpack.c.h.b16 %v82
  %v589 = vunpack.c.l.b16 %v83
  %v590 = vunpack.c.h.b16 %v83
  %v591 = vunpack.c.l.b16 %v84
  %v592 = vunpack.c.h.b16 %v84
  %v593 = vunpack.c.l.b16 %v85
  %v594 = vunpack.c.h.b16 %v85
  %v595 = vunpack.c.l.b16 %v86
  %v596 = vunpack.c.h.b16 %v86
  %v597 = vunpack.c.l.b16 %v87
  %v598 = vunpack.c.h.b16 %v87
  %v599 = vunpack.c.l.b16 %v88
  %v600 = vunpack.c.h.b16 %v88
  %v601 = vunpack.c.l.b16 %v89
  %v602 = vunpack.c.h.b16 %v89
  %v603 = vunpack.c.l.b16 %v90
  %v604 = vunpack.c.h.b16 %v90
  %v605 = vunpack.c.l.b16 %v91
  %v606 = vunpack.c.h.b16 %v91
  %v607 = vunpack.c.l.b16 %v92
  %v608 = vunpack.c.h.b16 %v92
  %v609 = vunpack.c.l.b16 %v93
  %v610 = vunpack.c.h.b16 %v93
  %v611 = vunpack.c.l.b16 %v94
  %v612 = vunpack.c.h.b16 %v94
  %v613 = vunpack.c.l.b16 %v95
  %v614 = vunpack.c.h.b16 %v95
  %v615 = vunpack.c.l.b16 %v96
  %v616 = vunpack.c.h.b16 %v96
  %v617 = vunpack.c.l.b16 %v97
  %v618 = vunpack.c.h.b16 %v97
  %v619 = vunpack.c.l.b16 %v98
  %v620 = vunpack.c.h.b16 %v98
  %v621 = vunpack.c.l.b16 %v99
  %v622 = vunpack.c.h.b16 %v99
  %v623 = vunpack.c.l.b16 %v100
  %v624 = vunpack.c.h.b16 %v100
  %v625 = vunpack.c.l.b16 %v101
  %v626 = vunpack.c.h.b16 %v101
  %v627 = vunpack.c.l.b16 %v102
  %v628 = vunpack.c.h.b16 %v102
  %v629 = vunpack.c.l.b16 %v103
  %v630 = vunpack.c.h.b16 %v103
  %v631 = vunpack.c.l.b16 %v104
  %v632 = vunpack.c.h.b16 %v104
  %v633 = vunpack.c.l.b16 %v105
  %v634 = vunpack.c.h.b16 %v105
  %v635 = vunpack.c.l.b16 %v106
  %v636 = vunpack.c.h.b16 %v106
  %v637 = vunpack.c.l.b16 %v107
  %v638 = vunpack.c.h.b16 %v107
  %v639 = vunpack.c.l.b16 %v108
  %v640 = vunpack.c.h.b16 %v108
  %v641 = vunpack.c.l.b16 %v109
  %v642 = vunpack.c.h.b16 %v109
  %v643 = vunpack.c.l.b16 %v110
  %v644 = vunpack.c.h.b16 %v110
  %v645 = vunpack.c.l.b16 %v111
  %v646 = vunpack.c.h.b16 %v111
  %v647 = vunpack.c.l.b16 %v112
  %v648 = vunpack.c.h.b16 %v112
  %v649 = vunpack.c.l.b16 %v113
  %v650 = vunpack.c.h.b16 %v113
  %v651 = vunpack.c.l.b16 %v114
  %v652 = vunpack.c.h.b16 %v114
  %v653 = vunpack.c.l.b16 %v115
  %v654 = vunpack.c.h.b16 %v115
  %v655 = vunpack.c.l.b16 %v116
  %v656 = vunpack.c.h.b16 %v116
  %v657 = vunpack.c.l.b16 %v117
  %v658 = vunpack.c.h.b16 %v117
  %v659 = vunpack.c.l.b16 %v118
  %v660 = vunpack.c.h.b16 %v118
  %v661 = vunpack.c.l.b16 %v119
  %v662 = vunpack.c.h.b16 %v119
  %v663 = vunpack.c.l.b16 %v120
  %v664 = vunpack.c.h.b16 %v120
  %v665 = vunpack.c.l.b16 %v121
  %v666 = vunpack.c.h.b16 %v121
  %v667 = vunpack.c.l.b16 %v122
  %v668 = vunpack.c.h.b16 %v122
  %v669 = vunpack.c.l.b16 %v123
  %v670 = vunpack.c.h.b16 %v123
  %v671 = vunpack.c.l.b16 %v124
  %v672 = vunpack.c.h.b16 %v124
  %v673 = vunpack.c.l.b16 %v125
  %v674 = vunpack.c.h.b16 %v125
  %v675 = vunpack.c.l.b16 %v126
  %v676 = vunpack.c.h.b16 %v126
  %v677 = vunpack.c.l.b16 %v127
  %v678 = vunpack.c.h.b16 %v127
  %v679 = vunpack.c.l.b16 %v128
  %v680 = vunpack.c.h.b16 %v128
  %v681 = vunpack.c.l.b16 %v129
  %v682 = vunpack.c.h.b16 %v129
  %v683 = vunpack.c.l.b16 %v130
  %v684 = vunpack.c.h.b16 %v130
  %v685 = vunpack.c.l.b16 %v131
  %v686 = vunpack.c.h.b16 %v131
  %v687 = vunpack.c.l.b16 %v132
  %v688 = vunpack.c.h.b16 %v132
  %v689 = vunpack.c.l.b16 %v133
  %v690 = vunpack.c.h.b16 %v133
  %v691 = vunpack.c.l.b16 %v134
  %v692 = vunpack.c.h.b16 %v134
  %v693 = vunpack.c.l.b16 %v135
  %v694 = vunpack.c.h.b16 %v135
  %v695 = vunpack.c.l.b16 %v136
  %v696 = vunpack.c.h.b16 %v136
  %v697 = vunpack.c.l.b16 %v137
  %v698 = vunpack.c.h.b16 %v137
  %v699 = vunpack.c.l.b16 %v138
  %v700 = vunpack.c.h.b16 %v138
  %v701 = vunpack.c.l.b16 %v139
  %v702 = vunpack.c.h.b16 %v139
  %v703 = vunpack.c.l.b16 %v140
  %v704 = vunpack.c.h.b16 %v140
  %v705 = vunpack.c.l.b16 %v141
  %v706 = vunpack.c.h.b16 %v141
  %v707 = vunpack.c.l.b16 %v142
  %v708 = vunpack.c.h.b16 %v142
  %v709 = vunpack.c.l.b16 %v143
  %v710 = vunpack.c.h.b16 %v143
  %v711 = vunpack.c.l.b16 %v144
  %v712 = vunpack.c.h.b16 %v144
  %v713 = vunpack.c.l.b16 %v145
  %v714 = vunpack.c.h.b16 %v145
  %v715 = vunpack.c.l.b16 %v146
  %v716 = vunpack.c.h.b16 %v146
  %v717 = vunpack.c.l.b16 %v147
  %v718 = vunpack.c.h.b16 %v147
  %v719 = vunpack.c.l.b16 %v148
  %v720 = vunpack.c.h.b16 %v148
  %v721 = vunpack.c.l.b16 %v149
  %v722 = vunpack.c.h.b16 %v149
  %v723 = vunpack.c.l.b16 %v150
  %v724 = vunpack.c.h.b16 %v150
  %v725 = vunpack.c.l.b16 %v151
  %v726 = vunpack.c.h.b16 %v151
  %v727 = vunpack.c.l.b16 %v152
  %v728 = vunpack.c.h.b16 %v152
  %v729 = vunpack.c.l.b16 %v153
  %v730 = vunpack.c.h.b16 %v153
  %v731 = vunpack.c.l.b16 %v154
  %v732 = vunpack.c.h.b16 %v154
  %v733 = vunpack.c.l.b16 %v155
  %v734 = vunpack.c.h.b16 %v155
  %v735 = vunpack.c.l.b16 %v156
  %v736 = vunpack.c.h.b16 %v156
  %v737 = vunpack.c.l.b16 %v157
  %v738 = vunpack.c.h.b16 %v157
  %v739 = vunpack.c.l.b16 %v158
  %v740 = vunpack.c.h.b16 %v158
  %v741 = vunpack.c.l.b16 %v159
  %v742 = vunpack.c.h.b16 %v159
  %v743 = vunpack.c.l.b16 %v160
  %v744 = vunpack.c.h.b16 %v160
  %v745 = vunpack.c.l.b16 %v161
  %v746 = vunpack.c.h.b16 %v161
  %v747 = vunpack.c.l.b16 %v162
  %v748 = vunpack.c.h.b16 %v162
  %v749 = vunpack.c.l.b16 %v163
  %v750 = vunpack.c.h.b16 %v163
  %v751 = vunpack.c.l.b16 %v164
  %v752 = vunpack.c.h.b16 %v164
  %v753 = vunpack.c.l.b16 %v165
  %v754 = vunpack.c.h.b16 %v165
  %v755 = vunpack.c.l.b16 %v166
  %v756 = vunpack.c.h.b16 %v166
  %v757 = vunpack.c.l.b16 %v167
  %v758 = vunpack.c.h.b16 %v167
  %v759 = vunpack.c.l.b16 %v168
  %v760 = vunpack.c.h.b16 %v168
  %v761 = vunpack.c.l.b16 %v169
  %v762 = vunpack.c.h.b16 %v169
  %v763 = vunpack.c.l.b16 %v170
  %v764 = vunpack.c.h.b16 %v170
  %v765 = vunpack.c.l.b16 %v171
  %v766 = vunpack.c.h.b16 %v171
  %v767 = vunpack.c.l.b16 %v172
  %v768 = vunpack.c.h.b16 %v172
  %v769 = vunpack.c.l.b16 %v173
  %v770 = vunpack.c.h.b16 %v173
  %v771 = vunpack.c.l.b16 %v174
  %v772 = vunpack.c.h.b16 %v174
  %v773 = vunpack.c.l.b16 %v175
  %v774 = vunpack.c.h.b16 %v175
  %v775 = vunpack.c.l.b16 %v176
  %v776 = vunpack.c.h.b16 %v176
  %v777 = vunpack.c.l.b16 %v177
  %v778 = vunpack.c.h.b16 %v177
  %v779 = vunpack.c.l.b16 %v178
  %v780 = vunpack.c.h.b16 %v178
  %v781 = vunpack.c.l.b16 %v179
  %v782 = vunpack.c.h.b16 %v179
  %v783 = vunpack.c.l.b16 %v180
  %v784 = vunpack.c.h.b16 %v180
  %v785 = vunpack.c.l.b16 %v181
  %v786 = vunpack.c.h.b16 %v181
  %v787 = vunpack.c.l.b16 %v182
  %v788 = vunpack.c.h.b16 %v182
  %v789 = vunpack.c.l.b16 %v183
  %v790 = vunpack.c.h.b16 %v183
  %v791 = vunpack.c.l.b16 %v184
  %v792 = vunpack.c.h.b16 %v184
  %v793 = vunpack.c.l.b16 %v185
  %v794 = vunpack.c.h.b16 %v185
  %v795 = vunpack.c.l.b16 %v186
  %v796 = vunpack.c.h.b16 %v186
  %v797 = vunpack.c.l.b16 %v187
  %v798 = vunpack.c.h.b16 %v187
  %v799 = vunpack.c.l.b16 %v188
  %v800 = vunpack.c.h.b16 %v188
  %v801 = vunpack.c.l.b16 %v189
  %v802 = vunpack.c.h.b16 %v189
  %v803 = vunpack.c.l.b16 %v190
  %v804 = vunpack.c.h.b16 %v190
  %v805 = vunpack.c.l.b16 %v191
  %v806 = vunpack.c.h.b16 %v191
  %v807 = vunpack.c.l.b16 %v192
  %v808 = vunpack.c.h.b16 %v192
  %v809 = vunpack.c.l.b16 %v193
  %v810 = vunpack.c.h.b16 %v193
  %v811 = vunpack.c.l.b16 %v194
  %v812 = vunpack.c.h.b16 %v194
  %v813 = vunpack.c.l.b16 %v195
  %v814 = vunpack.c.h.b16 %v195
  %v815 = vunpack.c.l.b16 %v196
  %v816 = vunpack.c.h.b16 %v196
  %v817 = vunpack.c.l.b16 %v197
  %v818 = vunpack.c.h.b16 %v197
  %v819 = vunpack.c.l.b16 %v198
  %v820 = vunpack.c.h.b16 %v198
  %v821 = vunpack.c.l.b16 %v199
  %v822 = vunpack.c.h.b16 %v199
  %v823 = vunpack.c.l.b16 %v200
  %v824 = vunpack.c.h.b16 %v200
  %v825 = vunpack.c.l.b16 %v201
  %v826 = vunpack.c.h.b16 %v201
  %v827 = vunpack.c.l.b16 %v202
  %v828 = vunpack.c.h.b16 %v202
  %v829 = vunpack.c.l.b16 %v203
  %v830 = vunpack.c.h.b16 %v203
  %v831 = vunpack.c.l.b16 %v204
  %v832 = vunpack.c.h.b16 %v204
  %v833 = vunpack.c.l.b16 %v205
  %v834 = vunpack.c.h.b16 %v205
  %v835 = vunpack.c.l.b16 %v206
  %v836 = vunpack.c.h.b16 %v206
  %v837 = vunpack.c.l.b16 %v207
  %v838 = vunpack.c.h.b16 %v207
  %v839 = vunpack.c.l.b16 %v208
  %v840 = vunpack.c.h.b16 %v208
  %v841 = vunpack.c.l.b16 %v209
  %v842 = vunpack.c.h.b16 %v209
  %v843 = vunpack.c.l.b16 %v210
  %v844 = vunpack.c.h.b16 %v210
  %v845 = vunpack.c.l.b16 %v211
  %v846 = vunpack.c.h.b16 %v211
  %v847 = vunpack.c.l.b16 %v212
  %v848 = vunpack.c.h.b16 %v212
  %v849 = vunpack.c.l.b16 %v213
  %v850 = vunpack.c.h.b16 %v213
  %v851 = vunpack.c.l.b16 %v214
  %v852 = vunpack.c.h.b16 %v214
  %v853 = vunpack.c.l.b16 %v215
  %v854 = vunpack.c.h.b16 %v215
  %v855 = vunpack.c.l.b16 %v216
  %v856 = vunpack.c.h.b16 %v216
  %v857 = vunpack.c.l.b16 %v217
  %v858 = vunpack.c.h.b16 %v217
  %v859 = vunpack.c.l.b16 %v218
  %v860 = vunpack.c.h.b16 %v218
  %v861 = vunpack.c.l.b16 %v219
  %v862 = vunpack.c.h.b16 %v219
  %v863 = vunpack.c.l.b16 %v220
  %v864 = vunpack.c.h.b16 %v220
  %v865 = vunpack.c.l.b16 %v221
  %v866 = vunpack.c.h.b16 %v221
  %v867 = vunpack.c.l.b16 %v222
  %v868 = vunpack.c.h.b16 %v222
  %v869 = vunpack.c.l.b16 %v223
  %v870 = vunpack.c.h.b16 %v223
  %v871 = vunpack.c.l.b16 %v224
  %v872 = vunpack.c.h.b16 %v224
  %v873 = vunpack.c.l.b16 %v225
  %v874 = vunpack.c.h.b16 %v225
  %v875 = vunpack.c.l.b16 %v226
  %v876 = vunpack.c.h.b16 %v226
  %v877 = vunpack.c.l.b16 %v227
  %v878 = vunpack.c.h.b16 %v227
  %v879 = vunpack.c.l.b16 %v228
  %v880 = vunpack.c.h.b16 %v228
  %v881 = vpack.c.b16 %v493, %v489
  %v882 = vpack.c.b16 %v494, %v490
  %v883 = vpack.c.b16 %v495, %v491
  %v884 = vpack.c.b16 %v496, %v492
  %v885 = vpack.c.b16 %v501, %v497
  %v886 = vpack.c.b16 %v502, %v498
  %v887 = vpack.c.b16 %v503, %v499
  %v888 = vpack.c.b16 %v504, %v500
  %v889 = vpack.c.b16 %v509, %v505
  %v890 = vpack.c.b16 %v510, %v506
  %v891 = vpack.c.b16 %v511, %v507
  %v892 = vpack.c.b16 %v512, %v508
  %v893 = vpack.c.b16 %v517, %v513
  %v894 = vpack.c.b16 %v518, %v514
  %v895 = vpack.c.b16 %v519, %v515
  %v896 = vpack.c.b16 %v520, %v516
  %v897 = vpack.c.b16 %v525, %v521
  %v898 = vpack.c.b16 %v526, %v522
  %v899 = vpack.c.b16 %v527, %v523
  %v900 = vpack.c.b16 %v528, %v524
  %v901 = vpack.c.b16 %v533, %v529
  %v902 = vpack.c.b16 %v534, %v530
  %v903 = vpack.c.b16 %v535, %v531
  %v904 = vpack.c.b16 %v536, %v532
  %v905 = vpack.c.b16 %v541, %v537
  %v906 = vpack.c.b16 %v542, %v538
  %v907 = vpack.c.b16 %v543, %v539
  %v908 = vpack.c.b16 %v544, %v540
  %v909 = vpack.c.b16 %v549, %v545
  %v910 = vpack.c.b16 %v550, %v546
  %v911 = vpack.c.b16 %v551, %v547
  %v912 = vpack.c.b16 %v552, %v548
  %v913 = vpack.c.b16 %v557, %v553
  %v914 = vpack.c.b16 %v558, %v554
  %v915 = vpack.c.b16 %v559, %v555
  %v916 = vpack.c.b16 %v560, %v556
  %v917 = vpack.c.b16 %v565, %v561
  %v918 = vpack.c.b16 %v566, %v562
  %v919 = vpack.c.b16 %v567, %v563
  %v920 = vpack.c.b16 %v568, %v564
  %v921 = vpack.c.b16 %v573, %v569
  %v922 = vpack.c.b16 %v574, %v570
  %v923 = vpack.c.b16 %v575, %v571
  %v924 = vpack.c.b16 %v576, %v572
  %v925 = vpack.c.b16 %v581, %v577
  %v926 = vpack.c.b16 %v582, %v578
  %v927 = vpack.c.b16 %v583, %v579
  %v928 = vpack.c.b16 %v584, %v580
  %v929 = vpack.c.b16 %v589, %v585
  %v930 = vpack.c.b16 %v590, %v586
  %v931 = vpack.c.b16 %v591, %v587
  %v932 = vpack.c.b16 %v592, %v588
  %v933 = vpack.c.b16 %v597, %v593
  %v934 = vpack.c.b16 %v598, %v594
  %v935 = vpack.c.b16 %v599, %v595
  %v936 = vpack.c.b16 %v600, %v596
  %v937 = vpack.c.b16 %v605, %v601
  %v938 = vpack.c.b16 %v606, %v602
  %v939 = vpack.c.b16 %v607, %v603
  %v940 = vpack.c.b16 %v608, %v604
  %v941 = vpack.c.b16 %v613, %v609
  %v942 = vpack.c.b16 %v614, %v610
  %v943 = vpack.c.b16 %v615, %v611
  %v944 = vpack.c.b16 %v616, %v612
  %v945 = vpack.c.b16 %v621, %v617
  %v946 = vpack.c.b16 %v622, %v618
  %v947 = vpack.c.b16 %v623, %v619
  %v948 = vpack.c.b16 %v624, %v620
  %v949 = vpack.c.b16 %v629, %v625
  %v950 = vpack.c.b16 %v630, %v626
  %v951 = vpack.c.b16 %v631, %v627
  %v952 = vpack.c.b16 %v632, %v628
  %v953 = vpack.c.b16 %v637, %v633
  %v954 = vpack.c.b16 %v638, %v634
  %v955 = vpack.c.b16 %v639, %v635
  %v956 = vpack.c.b16 %v640, %v636
  %v957 = vpack.c.b16 %v645, %v641
  %v958 = vpack.c.b16 %v646, %v642
  %v959 = vpack.c.b16 %v647, %v643
  %v960 = vpack.c.b16 %v648, %v644
  %v961 = vpack.c.b16 %v653, %v649
  %v962 = vpack.c.b16 %v654, %v650
  %v963 = vpack.c.b16 %v655, %v651
  %v964 = vpack.c.b16 %v656, %v652
  %v965 = vpack.c.b16 %v661, %v657
  %v966 = vpack.c.b16 %v662, %v658
  %v967 = vpack.c.b16 %v663, %v659
  %v968 = vpack.c.b16 %v664, %v660
  %v969 = vpack.c.b16 %v669, %v665
  %v970 = vpack.c.b16 %v670, %v666
  %v971 = vpack.c.b16 %v671, %v667
  %v972 = vpack.c.b16 %v672, %v668
  %v973 = vpack.c.b16 %v677, %v673
  %v974 = vpack.c.b16 %v678, %v674
  %v975 = vpack.c.b16 %v679, %v675
  %v976 = vpack.c.b16 %v680, %v676
  %v977 = vpack.c.b16 %v685, %v681
  %v978 = vpack.c.b16 %v686, %v682
  %v979 = vpack.c.b16 %v687, %v683
  %v980 = vpack.c.b16 %v688, %v684
  %v981 = vpack.c.b16 %v693, %v689
  %v982 = vpack.c.b16 %v694, %v690
  %v983 = vpack.c.b16 %v695, %v691
  %v984 = vpack.c.b16 %v696, %v692
  %v985 = vpack.c.b16 %v701, %v697
  %v986 = vpack.c.b16 %v702, %v698
  %v987 = vpack.c.b16 %v703, %v699
  %v988 = vpack.c.b16 %v704, %v700
  %v989 = vpack.c.b16 %v709, %v705
  %v990 = vpack.c.b16 %v710, %v706
  %v991 = vpack.c.b16 %v711, %v707
  %v992 = vpack.c.b16 %v712, %v708
  %v993 = vpack.c.b16 %v717, %v713
  %v994 = vpack.c.b16 %v718, %v714
  %v995 = vpack.c.b16 %v719, %v715
  %v996 = vpack.c.b16 %v720, %v716
  %v997 = vpack.c.b16 %v725, %v721
  %v998 = vpack.c.b16 %v726, %v722
  %v999 = vpack.c.b16 %v727, %v723
  %v1000 = vpack.c.b16 %v728, %v724
  %v1001 = vpack.c.b16 %v733, %v729
  %v1002 = vpack.c.b16 %v734, %v730
  %v1003 = vpack.c.b16 %v735, %v731
  %v1004 = vpack.c.b16 %v736, %v732
  %v1005 = vpack.c.b16 %v741, %v737
  %v1006 = vpack.c.b16 %v742, %v738
  %v1007 = vpack.c.b16 %v743, %v739
  %v1008 = vpack.c.b16 %v744, %v740
  %v1009 = vpack.c.b16 %v749, %v745
  %v1010 = vpack.c.b16 %v750, %v746
  %v1011 = vpack.c.b16 %v751, %v747
  %v1012 = vpack.c.b16 %v752, %v748
  %v1013 = vpack.c.b16 %v757, %v753
  %v1014 = vpack.c.b16 %v758, %v754
  %v1015 = vpack.c.b16 %v759, %v755
  %v1016 = vpack.c.b16 %v760, %v756
  %v1017 = vpack.c.b16 %v765, %v761
  %v1018 = vpack.c.b16 %v766, %v762
  %v1019 = vpack.c.b16 %v767, %v763
  %v1020 = vpack.c.b16 %v768, %v764
  %v1021 = vpack.c.b16 %v773, %v769
  %v1022 = vpack.c.b16 %v774, %v770
  %v1023 = vpack.c.b16 %v775, %v771
  %v1024 = vpack.c.b16 %v776, %v772
  %v1025 = vpack.c.b16 %v781, %v777
  %v1026 = vpack.c.b16 %v782, %v778
  %v1027 = vpack.c.b16 %v783, %v779
  %v1028 = vpack.c.b16 %v784, %v780
  %v1029 = vpack.c.b16 %v789, %v785
  %v1030 = vpack.c.b16 %v790, %v786
  %v1031 = vpack.c.b16 %v791, %v787
  %v1032 = vpack.c.b16 %v792, %v788
  %v1033 = vpack.c.b16 %v797, %v793
  %v1034 = vpack.c.b16 %v798, %v794
  %v1035 = vpack.c.b16 %v799, %v795
  %v1036 = vpack.c.b16 %v800, %v796
  %v1037 = vpack.c.b16 %v805, %v801
  %v1038 = vpack.c.b16 %v806, %v802
  %v1039 = vpack.c.b16 %v807, %v803
  %v1040 = vpack.c.b16 %v808, %v804
  %v1041 = vpack.c.b16 %v813, %v809
  %v1042 = vpack.c.b16 %v814, %v810
  %v1043 = vpack.c.b16 %v815, %v811
  %v1044 = vpack.c.b16 %v816, %v812
  %v1045 = vpack.c.b16 %v821, %v817
  %v1046 = vpack.c.b16 %v822, %v818
  %v1047 = vpack.c.b16 %v823, %v819
  %v1048 = vpack.c.b16 %v824, %v820
  %v1049 = vpack.c.b16 %v829, %v825
  %v1050 = vpack.c.b16 %v830, %v826
  %v1051 = vpack.c.b16 %v831, %v827
  %v1052 = vpack.c.b16 %v832, %v828
  %v1053 = vpack.c.b16 %v837, %v833
  %v1054 = vpack.c.b16 %v838, %v834
  %v1055 = vpack.c.b16 %v839, %v835
  %v1056 = vpack.c.b16 %v840, %v836
  %v1057 = vpack.c.b16 %v845, %v841
  %v1058 = vpack.c.b16 %v846, %v842
  %v1059 = vpack.c.b16 %v847, %v843
  %v1060 = vpack.c.b16 %v848, %v844
  %v1061 = vpack.c.b16 %v853, %v849
  %v1062 = vpack.c.b16 %v854, %v850
  %v1063 = vpack.c.b16 %v855, %v851
  %v1064 = vpack.c.b16 %v856, %v852
  %v1065 = vpack.c.b16 %v861, %v857
  %v1066 = vpack.c.b16 %v862, %v858
  %v1067 = vpack.c.b16 %v863, %v859
  %v1068 = vpack.c.b16 %v864, %v860
  %v1069 = vpack.c.b16 %v869, %v865
  %v1070 = vpack.c.b16 %v870, %v866
  %v1071 = vpack.c.b16 %v871, %v867
  %v1072 = vpack.c.b16 %v872, %v868
  %v1073 = vpack.c.b16 %v877, %v873
  %v1074 = vpack.c.b16 %v878, %v874
  %v1075 = vpack.c.b16 %v879, %v875
  %v1076 = vpack.c.b16 %v880, %v876
  %v1337 = vunpack.c.l.b16 %v229
  %v1338 = vunpack.c.h.b16 %v229
  %v1339 = vunpack.c.l.b16 %v230
  %v1340 = vunpack.c.h.b16 %v230
  %v1341 = vunpack.c.l.b16 %v231
  %v1342 = vunpack.c.h.b16 %v231
  %v1343 = vunpack.c.l.b16 %v232
  %v1344 = vunpack.c.h.b16 %v232
  %v1345 = vunpack.c.l.b16 %v233
  %v1346 = vunpack.c.h.b16 %v233
  %v1347 = vunpack.c.l.b16 %v234
  %v1348 = vunpack.c.h.b16 %v234
  %v1349 = vunpack.c.l.b16 %v235
  %v1350 = vunpack.c.h.b16 %v235
  %v1351 = vunpack.c.l.b16 %v236
  %v1352 = vunpack.c.h.b16 %v236
  %v1353 = vunpack.c.l.b16 %v237
  %v1354 = vunpack.c.h.b16 %v237
  %v1355 = vunpack.c.l.b16 %v238
  %v1356 = vunpack.c.h.b16 %v238
  %v1357 = vunpack.c.l.b16 %v239
  %v1358 = vunpack.c.h.b16 %v239
  %v1359 = vunpack.c.l.b16 %v240
  %v1360 = vunpack.c.h.b16 %v240
  %v1361 = vunpack.c.l.b16 %v241
  %v1362 = vunpack.c.h.b16 %v241
  %v1363 = vunpack.c.l.b16 %v242
  %v1364 = vunpack.c.h.b16 %v242
  %v1365 = vunpack.c.l.b16 %v243
  %v1366 = vunpack.c.h.b16 %v243
  %v1367 = vunpack.c.l.b16 %v244
  %v1368 = vunpack.c.h.b16 %v244
  %v1369 = vunpack.c.l.b16 %v245
  %v1370 = vunpack.c.h.b16 %v245
  %v1371 = vunpack.c.l.b16 %v246
  %v1372 = vunpack.c.h.b16 %v246
  %v1373 = vunpack.c.l.b16 %v247
  %v1374 = vunpack.c.h.b16 %v247
  %v1375 = vunpack.c.l.b16 %v248
  %v1376 = vunpack.c.h.b16 %v248
  %v1377 = vunpack.c.l.b16 %v249
  %v1378 = vunpack.c.h.b16 %v249
  %v1379 = vunpack.c.l.b16 %v250
  %v1380 = vunpack.c.h.b16 %v250
  %v1381 = vunpack.c.l.b16 %v251
  %v1382 = vunpack.c.h.b16 %v251
  %v1383 = vunpack.c.l.b16 %v252
  %v1384 = vunpack.c.h.b16 %v252
  %v1385 = vunpack.c.l.b16 %v253
  %v1386 = vunpack.c.h.b16 %v253
  %v1387 = vunpack.c.l.b16 %v254
  %v1388 = vunpack.c.h.b16 %v254
  %v1389 = vunpack.c.l.b16 %v255
  %v1390 = vunpack.c.h.b16 %v255
  %v1391 = vunpack.c.l.b16 %v256
  %v1392 = vunpack.c.h.b16 %v256
  %v1393 = vunpack.c.l.b16 %v257
  %v1394 = vunpack.c.h.b16 %v257
  %v1395 = vunpack.c.l.b16 %v258
  %v1396 = vunpack.c.h.b16 %v258
  %v1397 = vunpack.c.l.b16 %v259
  %v1398 = vunpack.c.h.b16 %v259
  %v1399 = vunpack.c.l.b16 %v260
  %v1400 = vunpack.c.h.b16 %v260
  %v1401 = vunpack.c.l.b16 %v261
  %v1402 = vunpack.c.h.b16 %v261
  %v1403 = vunpack.c.l.b16 %v262
  %v1404 = vunpack.c.h.b16 %v262
  %v1405 = vunpack.c.l.b16 %v263
  %v1406 = vunpack.c.h.b16 %v263
  %v1407 = vunpack.c.l.b16 %v264
  %v1408 = vunpack.c.h.b16 %v264
  %v1409 = vunpack.c.l.b16 %v265
  %v1410 = vunpack.c.h.b16 %v265
  %v1411 = vunpack.c.l.b16 %v266
  %v1412 = vunpack.c.h.b16 %v266
  %v1413 = vunpack.c.l.b16 %v267
  %v1414 = vunpack.c.h.b16 %v267
  %v1415 = vunpack.c.l.b16 %v268
  %v1416 = vunpack.c.h.b16 %v268
  %v1417 = vunpack.c.l.b16 %v269
  %v1418 = vunpack.c.h.b16 %v269
  %v1419 = vunpack.c.l.b16 %v270
  %v1420 = vunpack.c.h.b16 %v270
  %v1421 = vunpack.c.l.b16 %v271
  %v1422 = vunpack.c.h.b16 %v271
  %v1423 = vunpack.c.l.b16 %v272
  %v1424 = vunpack.c.h.b16 %v272
  %v1425 = vunpack.c.l.b16 %v273
  %v1426 = vunpack.c.h.b16 %v273
  %v1427 = vunpack.c.l.b16 %v274
  %v1428 = vunpack.c.h.b16 %v274
  %v1429 = vunpack.c.l.b16 %v275
  %v1430 = vunpack.c.h.b16 %v275
  %v1431 = vunpack.c.l.b16 %v276
  %v1432 = vunpack.c.h.b16 %v276
  %v1433 = vunpack.c.l.b16 %v277
  %v1434 = vunpack.c.h.b16 %v277
  %v1435 = vunpack.c.l.b16 %v278
  %v1436 = vunpack.c.h.b16 %v278
  %v1437 = vunpack.c.l.b16 %v279
  %v1438 = vunpack.c.h.b16 %v279
  %v1439 = vunpack.c.l.b16 %v280
  %v1440 = vunpack.c.h.b16 %v280
  %v1441 = vunpack.c.l.b16 %v281
  %v1442 = vunpack.c.h.b16 %v281
  %v1443 = vunpack.c.l.b16 %v282
  %v1444 = vunpack.c.h.b16 %v282
  %v1445 = vunpack.c.l.b16 %v283
  %v1446 = vunpack.c.h.b16 %v283
  %v1447 = vunpack.c.l.b16 %v284
  %v1448 = vunpack.c.h.b16 %v284
  %v1449 = vunpack.c.l.b16 %v285
  %v1450 = vunpack.c.h.b16 %v285
  %v1451 = vunpack.c.l.b16 %v286
  %v1452 = vunpack.c.h.b16 %v286
  %v1453 = vunpack.c.l.b16 %v287
  %v1454 = vunpack.c.h.b16 %v287
  %v1455 = vunpack.c.l.b16 %v288
  %v1456 = vunpack.c.h.b16 %v288
  %v1457 = vunpack.c.l.b16 %v289
  %v1458 = vunpack.c.h.b16 %v289
  %v1459 = vunpack.c.l.b16 %v290
  %v1460 = vunpack.c.h.b16 %v290
  %v1461 = vunpack.c.l.b16 %v291
  %v1462 = vunpack.c.h.b16 %v291
  %v1463 = vunpack.c.l.b16 %v292
  %v1464 = vunpack.c.h.b16 %v292
  %v1465 = vpack.c.b16 %v1339, %v1337
  %v1466 = vpack.c.b16 %v1340, %v1338
  %v1467 = vpack.c.b16 %v1343, %v1341
  %v1468 = vpack.c.b16 %v1344, %v1342
  %v1469 = vpack.c.b16 %v1347, %v1345
  %v1470 = vpack.c.b16 %v1348, %v1346
  %v1471 = vpack.c.b16 %v1351, %v1349
  %v1472 = vpack.c.b16 %v1352, %v1350
  %v1473 = vpack.c.b16 %v1355, %v1353
  %v1474 = vpack.c.b16 %v1356, %v1354
  %v1475 = vpack.c.b16 %v1359, %v1357
  %v1476 = vpack.c.b16 %v1360, %v1358
  %v1477 = vpack.c.b16 %v1363, %v1361
  %v1478 = vpack.c.b16 %v1364, %v1362
  %v1479 = vpack.c.b16 %v1367, %v1365
  %v1480 = vpack.c.b16 %v1368, %v1366
  %v1481 = vpack.c.b16 %v1371, %v1369
  %v1482 = vpack.c.b16 %v1372, %v1370
  %v1483 = vpack.c.b16 %v1375, %v1373
  %v1484 = vpack.c.b16 %v1376, %v1374
  %v1485 = vpack.c.b16 %v1379, %v1377
  %v1486 = vpack.c.b16 %v1380, %v1378
  %v1487 = vpack.c.b16 %v1383, %v1381
  %v1488 = vpack.c.b16 %v1384, %v1382
  %v1489 = vpack.c.b16 %v1387, %v1385
  %v1490 = vpack.c.b16 %v1388, %v1386
  %v1491 = vpack.c.b16 %v1391, %v1389
  %v1492 = vpack.c.b16 %v1392, %v1390
  %v1493 = vpack.c.b16 %v1395, %v1393
  %v1494 = vpack.c.b16 %v1396, %v1394
  %v1495 = vpack.c.b16 %v1399, %v1397
  %v1496 = vpack.c.b16 %v1400, %v1398
  %v1497 = vpack.c.b16 %v1403, %v1401
  %v1498 = vpack.c.b16 %v1404, %v1402
  %v1499 = vpack.c.b16 %v1407, %v1405
  %v1500 = vpack.c.b16 %v1408, %v1406
  %v1501 = vpack.c.b16 %v1411, %v1409
  %v1502 = vpack.c.b16 %v1412, %v1410
  %v1503 = vpack.c.b16 %v1415, %v1413
  %v1504 = vpack.c.b16 %v1416, %v1414
  %v1505 = vpack.c.b16 %v1419, %v1417
  %v1506 = vpack.c.b16 %v1420, %v1418
  %v1507 = vpack.c.b16 %v1423, %v1421
  %v1508 = vpack.c.b16 %v1424, %v1422
  %v1509 = vpack.c.b16 %v1427, %v1425
  %v1510 = vpack.c.b16 %v1428, %v1426
  %v1511 = vpack.c.b16 %v1431, %v1429
  %v1512 = vpack.c.b16 %v1432, %v1430
  %v1513 = vpack.c.b16 %v1435, %v1433
  %v1514 = vpack.c.b16 %v1436, %v1434
  %v1515 = vpack.c.b16 %v1439, %v1437
  %v1516 = vpack.c.b16 %v1440, %v1438
  %v1517 = vpack.c.b16 %v1443, %v1441
  %v1518 = vpack.c.b16 %v1444, %v1442
  %v1519 = vpack.c.b16 %v1447, %v1445
  %v1520 = vpack.c.b16 %v1448, %v1446
  %v1521 = vpack.c.b16 %v1451, %v1449
  %v1522 = vpack.c.b16 %v1452, %v1450
  %v1523 = vpack.c.b16 %v1455, %v1453
  %v1524 = vpack.c.b16 %v1456, %v1454
  %v1525 = vpack.c.b16 %v1459, %v1457
  %v1526 = vpack.c.b16 %v1460, %v1458
  %v1527 = vpack.c.b16 %v1463, %v1461
  %v1528 = vpack.c.b16 %v1464, %v1462
  %1593 = vmatprep.subr.bf16.mxu0 %v1480
  %1594 = vmatpush1.bf16.msra.mxu0 %v1479
  %1595 = vmatprep.subr.bf16.mxu0 %v1478
  %1596 = vmatpush1.bf16.msra.mxu0 %v1477
  %1597 = vmatprep.subr.bf16.mxu0 %v1476
  %1598 = vmatpush1.bf16.msra.mxu0 %v1475
  %1599 = vmatprep.subr.bf16.mxu0 %v1474
  %1600 = vmatpush1.bf16.msra.mxu0 %v1473
  %1601 = vmatprep.subr.bf16.mxu0 %v1472
  %1602 = vmatpush1.bf16.msra.mxu0 %v1471
  %1603 = vmatprep.subr.bf16.mxu0 %v1470
  %1604 = vmatpush1.bf16.msra.mxu0 %v1469
  %1605 = vmatprep.subr.bf16.mxu0 %v1468
  %1606 = vmatpush1.bf16.msra.mxu0 %v1467
  %1607 = vmatprep.subr.bf16.mxu0 %v1466
  %1608 = vmatpush1.bf16.msra.mxu0 %v1465
  %1609 = vmatprep.subr.bf16.mxu0 %v1496
  %1610 = vmatpush2.bf16.msra.mxu0 %v1495
  %1611 = vmatprep.subr.bf16.mxu0 %v1494
  %1612 = vmatpush2.bf16.msra.mxu0 %v1493
  %1613 = vmatprep.subr.bf16.mxu0 %v1492
  %1614 = vmatpush2.bf16.msra.mxu0 %v1491
  %1615 = vmatprep.subr.bf16.mxu0 %v1490
  %1616 = vmatpush2.bf16.msra.mxu0 %v1489
  %1617 = vmatprep.subr.bf16.mxu0 %v1488
  %1618 = vmatpush2.bf16.msra.mxu0 %v1487
  %1619 = vmatprep.subr.bf16.mxu0 %v1486
  %1620 = vmatpush2.bf16.msra.mxu0 %v1485
  %1621 = vmatprep.subr.bf16.mxu0 %v1484
  %1622 = vmatpush2.bf16.msra.mxu0 %v1483
  %1623 = vmatprep.subr.bf16.mxu0 %v1482
  %1624 = vmatpush2.bf16.msra.mxu0 %v1481
  %1625 = vmatprep.mubr.bf16.mxu0 %v882
  %1626 = vmatmul.mubr.bf16.gmra.mxu0 %v881
  %v1627 = vpop.f32.mrf.mxu0
  %v1628 = vadd.f32 0.0, %v1627
  %v1629 = vpop.f32.mrf.mxu0
  %v1630 = vadd.f32 0.0, %v1629
  %v1631 = vpop.f32.mrf.mxu0
  %v1632 = vadd.f32 0.0, %v1631
  %v1633 = vpop.f32.mrf.mxu0
  %v1634 = vadd.f32 0.0, %v1633
  %1635 = vmatprep.mubr.bf16.mxu0 %v886
  %1636 = vmatmul.mubr.bf16.gmra.mxu0 %v885
  %v1637 = vpop.f32.mrf.mxu0
  %v1638 = vadd.f32 0.0, %v1637
  %v1639 = vpop.f32.mrf.mxu0
  %v1640 = vadd.f32 0.0, %v1639
  %v1641 = vpop.f32.mrf.mxu0
  %v1642 = vadd.f32 0.0, %v1641
  %v1643 = vpop.f32.mrf.mxu0
  %v1644 = vadd.f32 0.0, %v1643
  %1645 = vmatprep.mubr.bf16.mxu0 %v890
  %1646 = vmatmul.mubr.bf16.gmra.mxu0 %v889
  %v1647 = vpop.f32.mrf.mxu0
  %v1648 = vadd.f32 0.0, %v1647
  %v1649 = vpop.f32.mrf.mxu0
  %v1650 = vadd.f32 0.0, %v1649
  %v1651 = vpop.f32.mrf.mxu0
  %v1652 = vadd.f32 0.0, %v1651
  %v1653 = vpop.f32.mrf.mxu0
  %v1654 = vadd.f32 0.0, %v1653
  %1655 = vmatprep.mubr.bf16.mxu0 %v894
  %1656 = vmatmul.mubr.bf16.gmra.mxu0 %v893
  %v1657 = vpop.f32.mrf.mxu0
  %v1658 = vadd.f32 0.0, %v1657
  %v1659 = vpop.f32.mrf.mxu0
  %v1660 = vadd.f32 0.0, %v1659
  %v1661 = vpop.f32.mrf.mxu0
  %v1662 = vadd.f32 0.0, %v1661
  %v1663 = vpop.f32.mrf.mxu0
  %v1664 = vadd.f32 0.0, %v1663
  %1665 = vmatprep.mubr.bf16.mxu0 %v898
  %1666 = vmatmul.mubr.bf16.gmra.mxu0 %v897
  %v1667 = vpop.f32.mrf.mxu0
  %v1668 = vadd.f32 0.0, %v1667
  %v1669 = vpop.f32.mrf.mxu0
  %v1670 = vadd.f32 0.0, %v1669
  %v1671 = vpop.f32.mrf.mxu0
  %v1672 = vadd.f32 0.0, %v1671
  %v1673 = vpop.f32.mrf.mxu0
  %v1674 = vadd.f32 0.0, %v1673
  %1675 = vmatprep.mubr.bf16.mxu0 %v902
  %1676 = vmatmul.mubr.bf16.gmra.mxu0 %v901
  %v1677 = vpop.f32.mrf.mxu0
  %v1678 = vadd.f32 0.0, %v1677
  %v1679 = vpop.f32.mrf.mxu0
  %v1680 = vadd.f32 0.0, %v1679
  %v1681 = vpop.f32.mrf.mxu0
  %v1682 = vadd.f32 0.0, %v1681
  %v1683 = vpop.f32.mrf.mxu0
  %v1684 = vadd.f32 0.0, %v1683
  %1685 = vmatprep.mubr.bf16.mxu0 %v906
  %1686 = vmatmul.mubr.bf16.gmra.mxu0 %v905
  %v1687 = vpop.f32.mrf.mxu0
  %v1688 = vadd.f32 0.0, %v1687
  %v1689 = vpop.f32.mrf.mxu0
  %v1690 = vadd.f32 0.0, %v1689
  %v1691 = vpop.f32.mrf.mxu0
  %v1692 = vadd.f32 0.0, %v1691
  %v1693 = vpop.f32.mrf.mxu0
  %v1694 = vadd.f32 0.0, %v1693
  %1695 = vmatprep.mubr.bf16.mxu0 %v910
  %1696 = vmatmul.mubr.bf16.gmra.mxu0 %v909
  %v1697 = vpop.f32.mrf.mxu0
  %v1698 = vadd.f32 0.0, %v1697
  %v1699 = vpop.f32.mrf.mxu0
  %v1700 = vadd.f32 0.0, %v1699
  %v1701 = vpop.f32.mrf.mxu0
  %v1702 = vadd.f32 0.0, %v1701
  %v1703 = vpop.f32.mrf.mxu0
  %v1704 = vadd.f32 0.0, %v1703
  %1705 = vmatprep.mubr.bf16.mxu0 %v914
  %1706 = vmatmul.mubr.bf16.gmra.mxu0 %v913
  %v1707 = vpop.f32.mrf.mxu0
  %v1708 = vadd.f32 0.0, %v1707
  %v1709 = vpop.f32.mrf.mxu0
  %v1710 = vadd.f32 0.0, %v1709
  %v1711 = vpop.f32.mrf.mxu0
  %v1712 = vadd.f32 0.0, %v1711
  %v1713 = vpop.f32.mrf.mxu0
  %v1714 = vadd.f32 0.0, %v1713
  %1715 = vmatprep.mubr.bf16.mxu0 %v918
  %1716 = vmatmul.mubr.bf16.gmra.mxu0 %v917
  %v1717 = vpop.f32.mrf.mxu0
  %v1718 = vadd.f32 0.0, %v1717
  %v1719 = vpop.f32.mrf.mxu0
  %v1720 = vadd.f32 0.0, %v1719
  %v1721 = vpop.f32.mrf.mxu0
  %v1722 = vadd.f32 0.0, %v1721
  %v1723 = vpop.f32.mrf.mxu0
  %v1724 = vadd.f32 0.0, %v1723
  %1725 = vmatprep.mubr.bf16.mxu0 %v922
  %1726 = vmatmul.mubr.bf16.gmra.mxu0 %v921
  %v1727 = vpop.f32.mrf.mxu0
  %v1728 = vadd.f32 0.0, %v1727
  %v1729 = vpop.f32.mrf.mxu0
  %v1730 = vadd.f32 0.0, %v1729
  %v1731 = vpop.f32.mrf.mxu0
  %v1732 = vadd.f32 0.0, %v1731
  %v1733 = vpop.f32.mrf.mxu0
  %v1734 = vadd.f32 0.0, %v1733
  %1735 = vmatprep.mubr.bf16.mxu0 %v926
  %1736 = vmatmul.mubr.bf16.gmra.mxu0 %v925
  %v1737 = vpop.f32.mrf.mxu0
  %v1738 = vadd.f32 0.0, %v1737
  %v1739 = vpop.f32.mrf.mxu0
  %v1740 = vadd.f32 0.0, %v1739
  %v1741 = vpop.f32.mrf.mxu0
  %v1742 = vadd.f32 0.0, %v1741
  %v1743 = vpop.f32.mrf.mxu0
  %v1744 = vadd.f32 0.0, %v1743
  %1745 = vmatprep.mubr.bf16.mxu0 %v930
  %1746 = vmatmul.mubr.bf16.gmra.mxu0 %v929
  %v1747 = vpop.f32.mrf.mxu0
  %v1748 = vadd.f32 0.0, %v1747
  %v1749 = vpop.f32.mrf.mxu0
  %v1750 = vadd.f32 0.0, %v1749
  %v1751 = vpop.f32.mrf.mxu0
  %v1752 = vadd.f32 0.0, %v1751
  %v1753 = vpop.f32.mrf.mxu0
  %v1754 = vadd.f32 0.0, %v1753
  %1755 = vmatprep.mubr.bf16.mxu0 %v934
  %1756 = vmatmul.mubr.bf16.gmra.mxu0 %v933
  %v1757 = vpop.f32.mrf.mxu0
  %v1758 = vadd.f32 0.0, %v1757
  %v1759 = vpop.f32.mrf.mxu0
  %v1760 = vadd.f32 0.0, %v1759
  %v1761 = vpop.f32.mrf.mxu0
  %v1762 = vadd.f32 0.0, %v1761
  %v1763 = vpop.f32.mrf.mxu0
  %v1764 = vadd.f32 0.0, %v1763
  %1765 = vmatprep.mubr.bf16.mxu0 %v938
  %1766 = vmatmul.mubr.bf16.gmra.mxu0 %v937
  %v1767 = vpop.f32.mrf.mxu0
  %v1768 = vadd.f32 0.0, %v1767
  %v1769 = vpop.f32.mrf.mxu0
  %v1770 = vadd.f32 0.0, %v1769
  %v1771 = vpop.f32.mrf.mxu0
  %v1772 = vadd.f32 0.0, %v1771
  %v1773 = vpop.f32.mrf.mxu0
  %v1774 = vadd.f32 0.0, %v1773
  %1775 = vmatprep.mubr.bf16.mxu0 %v942
  %1776 = vmatmul.mubr.bf16.gmra.mxu0 %v941
  %v1777 = vpop.f32.mrf.mxu0
  %v1778 = vadd.f32 0.0, %v1777
  %v1779 = vpop.f32.mrf.mxu0
  %v1780 = vadd.f32 0.0, %v1779
  %v1781 = vpop.f32.mrf.mxu0
  %v1782 = vadd.f32 0.0, %v1781
  %v1783 = vpop.f32.mrf.mxu0
  %v1784 = vadd.f32 0.0, %v1783
  %1785 = vmatprep.mubr.bf16.mxu0 %v946
  %1786 = vmatmul.mubr.bf16.gmra.mxu0 %v945
  %v1787 = vpop.f32.mrf.mxu0
  %v1788 = vadd.f32 0.0, %v1787
  %v1789 = vpop.f32.mrf.mxu0
  %v1790 = vadd.f32 0.0, %v1789
  %v1791 = vpop.f32.mrf.mxu0
  %v1792 = vadd.f32 0.0, %v1791
  %v1793 = vpop.f32.mrf.mxu0
  %v1794 = vadd.f32 0.0, %v1793
  %1795 = vmatprep.mubr.bf16.mxu0 %v950
  %1796 = vmatmul.mubr.bf16.gmra.mxu0 %v949
  %v1797 = vpop.f32.mrf.mxu0
  %v1798 = vadd.f32 0.0, %v1797
  %v1799 = vpop.f32.mrf.mxu0
  %v1800 = vadd.f32 0.0, %v1799
  %v1801 = vpop.f32.mrf.mxu0
  %v1802 = vadd.f32 0.0, %v1801
  %v1803 = vpop.f32.mrf.mxu0
  %v1804 = vadd.f32 0.0, %v1803
  %1805 = vmatprep.mubr.bf16.mxu0 %v954
  %1806 = vmatmul.mubr.bf16.gmra.mxu0 %v953
  %v1807 = vpop.f32.mrf.mxu0
  %v1808 = vadd.f32 0.0, %v1807
  %v1809 = vpop.f32.mrf.mxu0
  %v1810 = vadd.f32 0.0, %v1809
  %v1811 = vpop.f32.mrf.mxu0
  %v1812 = vadd.f32 0.0, %v1811
  %v1813 = vpop.f32.mrf.mxu0
  %v1814 = vadd.f32 0.0, %v1813
  %1815 = vmatprep.mubr.bf16.mxu0 %v958
  %1816 = vmatmul.mubr.bf16.gmra.mxu0 %v957
  %v1817 = vpop.f32.mrf.mxu0
  %v1818 = vadd.f32 0.0, %v1817
  %v1819 = vpop.f32.mrf.mxu0
  %v1820 = vadd.f32 0.0, %v1819
  %v1821 = vpop.f32.mrf.mxu0
  %v1822 = vadd.f32 0.0, %v1821
  %v1823 = vpop.f32.mrf.mxu0
  %v1824 = vadd.f32 0.0, %v1823
  %1825 = vmatprep.mubr.bf16.mxu0 %v962
  %1826 = vmatmul.mubr.bf16.gmra.mxu0 %v961
  %v1827 = vpop.f32.mrf.mxu0
  %v1828 = vadd.f32 0.0, %v1827
  %v1829 = vpop.f32.mrf.mxu0
  %v1830 = vadd.f32 0.0, %v1829
  %v1831 = vpop.f32.mrf.mxu0
  %v1832 = vadd.f32 0.0, %v1831
  %v1833 = vpop.f32.mrf.mxu0
  %v1834 = vadd.f32 0.0, %v1833
  %1835 = vmatprep.mubr.bf16.mxu0 %v966
  %1836 = vmatmul.mubr.bf16.gmra.mxu0 %v965
  %v1837 = vpop.f32.mrf.mxu0
  %v1838 = vadd.f32 0.0, %v1837
  %v1839 = vpop.f32.mrf.mxu0
  %v1840 = vadd.f32 0.0, %v1839
  %v1841 = vpop.f32.mrf.mxu0
  %v1842 = vadd.f32 0.0, %v1841
  %v1843 = vpop.f32.mrf.mxu0
  %v1844 = vadd.f32 0.0, %v1843
  %1845 = vmatprep.mubr.bf16.mxu0 %v970
  %1846 = vmatmul.mubr.bf16.gmra.mxu0 %v969
  %v1847 = vpop.f32.mrf.mxu0
  %v1848 = vadd.f32 0.0, %v1847
  %v1849 = vpop.f32.mrf.mxu0
  %v1850 = vadd.f32 0.0, %v1849
  %v1851 = vpop.f32.mrf.mxu0
  %v1852 = vadd.f32 0.0, %v1851
  %v1853 = vpop.f32.mrf.mxu0
  %v1854 = vadd.f32 0.0, %v1853
  %1855 = vmatprep.mubr.bf16.mxu0 %v974
  %1856 = vmatmul.mubr.bf16.gmra.mxu0 %v973
  %v1857 = vpop.f32.mrf.mxu0
  %v1858 = vadd.f32 0.0, %v1857
  %v1859 = vpop.f32.mrf.mxu0
  %v1860 = vadd.f32 0.0, %v1859
  %v1861 = vpop.f32.mrf.mxu0
  %v1862 = vadd.f32 0.0, %v1861
  %v1863 = vpop.f32.mrf.mxu0
  %v1864 = vadd.f32 0.0, %v1863
  %1865 = vmatprep.mubr.bf16.mxu0 %v978
  %1866 = vmatmul.mubr.bf16.gmra.mxu0 %v977
  %v1867 = vpop.f32.mrf.mxu0
  %v1868 = vadd.f32 0.0, %v1867
  %v1869 = vpop.f32.mrf.mxu0
  %v1870 = vadd.f32 0.0, %v1869
  %v1871 = vpop.f32.mrf.mxu0
  %v1872 = vadd.f32 0.0, %v1871
  %v1873 = vpop.f32.mrf.mxu0
  %v1874 = vadd.f32 0.0, %v1873
  %1875 = vmatprep.mubr.bf16.mxu0 %v982
  %1876 = vmatmul.mubr.bf16.gmra.mxu0 %v981
  %v1877 = vpop.f32.mrf.mxu0
  %v1878 = vadd.f32 0.0, %v1877
  %v1879 = vpop.f32.mrf.mxu0
  %v1880 = vadd.f32 0.0, %v1879
  %v1881 = vpop.f32.mrf.mxu0
  %v1882 = vadd.f32 0.0, %v1881
  %v1883 = vpop.f32.mrf.mxu0
  %v1884 = vadd.f32 0.0, %v1883
  %1885 = vmatprep.mubr.bf16.mxu0 %v986
  %1886 = vmatmul.mubr.bf16.gmra.mxu0 %v985
  %v1887 = vpop.f32.mrf.mxu0
  %v1888 = vadd.f32 0.0, %v1887
  %v1889 = vpop.f32.mrf.mxu0
  %v1890 = vadd.f32 0.0, %v1889
  %v1891 = vpop.f32.mrf.mxu0
  %v1892 = vadd.f32 0.0, %v1891
  %v1893 = vpop.f32.mrf.mxu0
  %v1894 = vadd.f32 0.0, %v1893
  %1895 = vmatprep.mubr.bf16.mxu0 %v990
  %1896 = vmatmul.mubr.bf16.gmra.mxu0 %v989
  %v1897 = vpop.f32.mrf.mxu0
  %v1898 = vadd.f32 0.0, %v1897
  %v1899 = vpop.f32.mrf.mxu0
  %v1900 = vadd.f32 0.0, %v1899
  %v1901 = vpop.f32.mrf.mxu0
  %v1902 = vadd.f32 0.0, %v1901
  %v1903 = vpop.f32.mrf.mxu0
  %v1904 = vadd.f32 0.0, %v1903
  %1905 = vmatprep.mubr.bf16.mxu0 %v994
  %1906 = vmatmul.mubr.bf16.gmra.mxu0 %v993
  %v1907 = vpop.f32.mrf.mxu0
  %v1908 = vadd.f32 0.0, %v1907
  %v1909 = vpop.f32.mrf.mxu0
  %v1910 = vadd.f32 0.0, %v1909
  %v1911 = vpop.f32.mrf.mxu0
  %v1912 = vadd.f32 0.0, %v1911
  %v1913 = vpop.f32.mrf.mxu0
  %v1914 = vadd.f32 0.0, %v1913
  %1915 = vmatprep.mubr.bf16.mxu0 %v998
  %1916 = vmatmul.mubr.bf16.gmra.mxu0 %v997
  %v1917 = vpop.f32.mrf.mxu0
  %v1918 = vadd.f32 0.0, %v1917
  %v1919 = vpop.f32.mrf.mxu0
  %v1920 = vadd.f32 0.0, %v1919
  %v1921 = vpop.f32.mrf.mxu0
  %v1922 = vadd.f32 0.0, %v1921
  %v1923 = vpop.f32.mrf.mxu0
  %v1924 = vadd.f32 0.0, %v1923
  %1925 = vmatprep.mubr.bf16.mxu0 %v1002
  %1926 = vmatmul.mubr.bf16.gmra.mxu0 %v1001
  %v1927 = vpop.f32.mrf.mxu0
  %v1928 = vadd.f32 0.0, %v1927
  %v1929 = vpop.f32.mrf.mxu0
  %v1930 = vadd.f32 0.0, %v1929
  %v1931 = vpop.f32.mrf.mxu0
  %v1932 = vadd.f32 0.0, %v1931
  %v1933 = vpop.f32.mrf.mxu0
  %v1934 = vadd.f32 0.0, %v1933
  %1935 = vmatprep.mubr.bf16.mxu0 %v1006
  %1936 = vmatmul.mubr.bf16.gmra.mxu0 %v1005
  %v1937 = vpop.f32.mrf.mxu0
  %v1938 = vadd.f32 0.0, %v1937
  %v1939 = vpop.f32.mrf.mxu0
  %v1940 = vadd.f32 0.0, %v1939
  %v1941 = vpop.f32.mrf.mxu0
  %v1942 = vadd.f32 0.0, %v1941
  %v1943 = vpop.f32.mrf.mxu0
  %v1944 = vadd.f32 0.0, %v1943
  %1945 = vmatprep.mubr.bf16.mxu0 %v1010
  %1946 = vmatmul.mubr.bf16.gmra.mxu0 %v1009
  %v1947 = vpop.f32.mrf.mxu0
  %v1948 = vadd.f32 0.0, %v1947
  %v1949 = vpop.f32.mrf.mxu0
  %v1950 = vadd.f32 0.0, %v1949
  %v1951 = vpop.f32.mrf.mxu0
  %v1952 = vadd.f32 0.0, %v1951
  %v1953 = vpop.f32.mrf.mxu0
  %v1954 = vadd.f32 0.0, %v1953
  %1955 = vmatprep.mubr.bf16.mxu0 %v1014
  %1956 = vmatmul.mubr.bf16.gmra.mxu0 %v1013
  %v1957 = vpop.f32.mrf.mxu0
  %v1958 = vadd.f32 0.0, %v1957
  %v1959 = vpop.f32.mrf.mxu0
  %v1960 = vadd.f32 0.0, %v1959
  %v1961 = vpop.f32.mrf.mxu0
  %v1962 = vadd.f32 0.0, %v1961
  %v1963 = vpop.f32.mrf.mxu0
  %v1964 = vadd.f32 0.0, %v1963
  %1965 = vmatprep.mubr.bf16.mxu0 %v1018
  %1966 = vmatmul.mubr.bf16.gmra.mxu0 %v1017
  %v1967 = vpop.f32.mrf.mxu0
  %v1968 = vadd.f32 0.0, %v1967
  %v1969 = vpop.f32.mrf.mxu0
  %v1970 = vadd.f32 0.0, %v1969
  %v1971 = vpop.f32.mrf.mxu0
  %v1972 = vadd.f32 0.0, %v1971
  %v1973 = vpop.f32.mrf.mxu0
  %v1974 = vadd.f32 0.0, %v1973
  %1975 = vmatprep.mubr.bf16.mxu0 %v1022
  %1976 = vmatmul.mubr.bf16.gmra.mxu0 %v1021
  %v1977 = vpop.f32.mrf.mxu0
  %v1978 = vadd.f32 0.0, %v1977
  %v1979 = vpop.f32.mrf.mxu0
  %v1980 = vadd.f32 0.0, %v1979
  %v1981 = vpop.f32.mrf.mxu0
  %v1982 = vadd.f32 0.0, %v1981
  %v1983 = vpop.f32.mrf.mxu0
  %v1984 = vadd.f32 0.0, %v1983
  %1985 = vmatprep.mubr.bf16.mxu0 %v1026
  %1986 = vmatmul.mubr.bf16.gmra.mxu0 %v1025
  %v1987 = vpop.f32.mrf.mxu0
  %v1988 = vadd.f32 0.0, %v1987
  %v1989 = vpop.f32.mrf.mxu0
  %v1990 = vadd.f32 0.0, %v1989
  %v1991 = vpop.f32.mrf.mxu0
  %v1992 = vadd.f32 0.0, %v1991
  %v1993 = vpop.f32.mrf.mxu0
  %v1994 = vadd.f32 0.0, %v1993
  %1995 = vmatprep.mubr.bf16.mxu0 %v1030
  %1996 = vmatmul.mubr.bf16.gmra.mxu0 %v1029
  %v1997 = vpop.f32.mrf.mxu0
  %v1998 = vadd.f32 0.0, %v1997
  %v1999 = vpop.f32.mrf.mxu0
  %v2000 = vadd.f32 0.0, %v1999
  %v2001 = vpop.f32.mrf.mxu0
  %v2002 = vadd.f32 0.0, %v2001
  %v2003 = vpop.f32.mrf.mxu0
  %v2004 = vadd.f32 0.0, %v2003
  %2005 = vmatprep.mubr.bf16.mxu0 %v1034
  %2006 = vmatmul.mubr.bf16.gmra.mxu0 %v1033
  %v2007 = vpop.f32.mrf.mxu0
  %v2008 = vadd.f32 0.0, %v2007
  %v2009 = vpop.f32.mrf.mxu0
  %v2010 = vadd.f32 0.0, %v2009
  %v2011 = vpop.f32.mrf.mxu0
  %v2012 = vadd.f32 0.0, %v2011
  %v2013 = vpop.f32.mrf.mxu0
  %v2014 = vadd.f32 0.0, %v2013
  %2015 = vmatprep.mubr.bf16.mxu0 %v1038
  %2016 = vmatmul.mubr.bf16.gmra.mxu0 %v1037
  %v2017 = vpop.f32.mrf.mxu0
  %v2018 = vadd.f32 0.0, %v2017
  %v2019 = vpop.f32.mrf.mxu0
  %v2020 = vadd.f32 0.0, %v2019
  %v2021 = vpop.f32.mrf.mxu0
  %v2022 = vadd.f32 0.0, %v2021
  %v2023 = vpop.f32.mrf.mxu0
  %v2024 = vadd.f32 0.0, %v2023
  %2025 = vmatprep.mubr.bf16.mxu0 %v1042
  %2026 = vmatmul.mubr.bf16.gmra.mxu0 %v1041
  %v2027 = vpop.f32.mrf.mxu0
  %v2028 = vadd.f32 0.0, %v2027
  %v2029 = vpop.f32.mrf.mxu0
  %v2030 = vadd.f32 0.0, %v2029
  %v2031 = vpop.f32.mrf.mxu0
  %v2032 = vadd.f32 0.0, %v2031
  %v2033 = vpop.f32.mrf.mxu0
  %v2034 = vadd.f32 0.0, %v2033
  %2035 = vmatprep.mubr.bf16.mxu0 %v1046
  %2036 = vmatmul.mubr.bf16.gmra.mxu0 %v1045
  %v2037 = vpop.f32.mrf.mxu0
  %v2038 = vadd.f32 0.0, %v2037
  %v2039 = vpop.f32.mrf.mxu0
  %v2040 = vadd.f32 0.0, %v2039
  %v2041 = vpop.f32.mrf.mxu0
  %v2042 = vadd.f32 0.0, %v2041
  %v2043 = vpop.f32.mrf.mxu0
  %v2044 = vadd.f32 0.0, %v2043
  %2045 = vmatprep.mubr.bf16.mxu0 %v1050
  %2046 = vmatmul.mubr.bf16.gmra.mxu0 %v1049
  %v2047 = vpop.f32.mrf.mxu0
  %v2048 = vadd.f32 0.0, %v2047
  %v2049 = vpop.f32.mrf.mxu0
  %v2050 = vadd.f32 0.0, %v2049
  %v2051 = vpop.f32.mrf.mxu0
  %v2052 = vadd.f32 0.0, %v2051
  %v2053 = vpop.f32.mrf.mxu0
  %v2054 = vadd.f32 0.0, %v2053
  %2055 = vmatprep.mubr.bf16.mxu0 %v1054
  %2056 = vmatmul.mubr.bf16.gmra.mxu0 %v1053
  %v2057 = vpop.f32.mrf.mxu0
  %v2058 = vadd.f32 0.0, %v2057
  %v2059 = vpop.f32.mrf.mxu0
  %v2060 = vadd.f32 0.0, %v2059
  %v2061 = vpop.f32.mrf.mxu0
  %v2062 = vadd.f32 0.0, %v2061
  %v2063 = vpop.f32.mrf.mxu0
  %v2064 = vadd.f32 0.0, %v2063
  %2065 = vmatprep.mubr.bf16.mxu0 %v1058
  %2066 = vmatmul.mubr.bf16.gmra.mxu0 %v1057
  %v2067 = vpop.f32.mrf.mxu0
  %v2068 = vadd.f32 0.0, %v2067
  %v2069 = vpop.f32.mrf.mxu0
  %v2070 = vadd.f32 0.0, %v2069
  %v2071 = vpop.f32.mrf.mxu0
  %v2072 = vadd.f32 0.0, %v2071
  %v2073 = vpop.f32.mrf.mxu0
  %v2074 = vadd.f32 0.0, %v2073
  %2075 = vmatprep.mubr.bf16.mxu0 %v1062
  %2076 = vmatmul.mubr.bf16.gmra.mxu0 %v1061
  %v2077 = vpop.f32.mrf.mxu0
  %v2078 = vadd.f32 0.0, %v2077
  %v2079 = vpop.f32.mrf.mxu0
  %v2080 = vadd.f32 0.0, %v2079
  %v2081 = vpop.f32.mrf.mxu0
  %v2082 = vadd.f32 0.0, %v2081
  %v2083 = vpop.f32.mrf.mxu0
  %v2084 = vadd.f32 0.0, %v2083
  %2085 = vmatprep.mubr.bf16.mxu0 %v1066
  %2086 = vmatmul.mubr.bf16.gmra.mxu0 %v1065
  %v2087 = vpop.f32.mrf.mxu0
  %v2088 = vadd.f32 0.0, %v2087
  %v2089 = vpop.f32.mrf.mxu0
  %v2090 = vadd.f32 0.0, %v2089
  %v2091 = vpop.f32.mrf.mxu0
  %v2092 = vadd.f32 0.0, %v2091
  %v2093 = vpop.f32.mrf.mxu0
  %v2094 = vadd.f32 0.0, %v2093
  %2095 = vmatprep.mubr.bf16.mxu0 %v1070
  %2096 = vmatmul.mubr.bf16.gmra.mxu0 %v1069
  %v2097 = vpop.f32.mrf.mxu0
  %v2098 = vadd.f32 0.0, %v2097
  %v2099 = vpop.f32.mrf.mxu0
  %v2100 = vadd.f32 0.0, %v2099
  %v2101 = vpop.f32.mrf.mxu0
  %v2102 = vadd.f32 0.0, %v2101
  %v2103 = vpop.f32.mrf.mxu0
  %v2104 = vadd.f32 0.0, %v2103
  %2105 = vmatprep.mubr.bf16.mxu0 %v1074
  %2106 = vmatmul.mubr.bf16.gmra.mxu0 %v1073
  %v2107 = vpop.f32.mrf.mxu0
  %v2108 = vadd.f32 0.0, %v2107
  %v2109 = vpop.f32.mrf.mxu0
  %v2110 = vadd.f32 0.0, %v2109
  %v2111 = vpop.f32.mrf.mxu0
  %v2112 = vadd.f32 0.0, %v2111
  %v2113 = vpop.f32.mrf.mxu0
  %v2114 = vadd.f32 0.0, %v2113
  %2115 = vdwg.mxu0
  %2116 = vmatprep.subr.bf16.mxu0 %v1512
  %2117 = vmatpush1.bf16.msra.mxu0 %v1511
  %2118 = vmatprep.subr.bf16.mxu0 %v1510
  %2119 = vmatpush1.bf16.msra.mxu0 %v1509
  %2120 = vmatprep.subr.bf16.mxu0 %v1508
  %2121 = vmatpush1.bf16.msra.mxu0 %v1507
  %2122 = vmatprep.subr.bf16.mxu0 %v1506
  %2123 = vmatpush1.bf16.msra.mxu0 %v1505
  %2124 = vmatprep.subr.bf16.mxu0 %v1504
  %2125 = vmatpush1.bf16.msra.mxu0 %v1503
  %2126 = vmatprep.subr.bf16.mxu0 %v1502
  %2127 = vmatpush1.bf16.msra.mxu0 %v1501
  %2128 = vmatprep.subr.bf16.mxu0 %v1500
  %2129 = vmatpush1.bf16.msra.mxu0 %v1499
  %2130 = vmatprep.subr.bf16.mxu0 %v1498
  %2131 = vmatpush1.bf16.msra.mxu0 %v1497
  %2132 = vmatprep.subr.bf16.mxu0 %v1528
  %2133 = vmatpush2.bf16.msra.mxu0 %v1527
  %2134 = vmatprep.subr.bf16.mxu0 %v1526
  %2135 = vmatpush2.bf16.msra.mxu0 %v1525
  %2136 = vmatprep.subr.bf16.mxu0 %v1524
  %2137 = vmatpush2.bf16.msra.mxu0 %v1523
  %2138 = vmatprep.subr.bf16.mxu0 %v1522
  %2139 = vmatpush2.bf16.msra.mxu0 %v1521
  %2140 = vmatprep.subr.bf16.mxu0 %v1520
  %2141 = vmatpush2.bf16.msra.mxu0 %v1519
  %2142 = vmatprep.subr.bf16.mxu0 %v1518
  %2143 = vmatpush2.bf16.msra.mxu0 %v1517
  %2144 = vmatprep.subr.bf16.mxu0 %v1516
  %2145 = vmatpush2.bf16.msra.mxu0 %v1515
  %2146 = vmatprep.subr.bf16.mxu0 %v1514
  %2147 = vmatpush2.bf16.msra.mxu0 %v1513
  %2148 = vmatprep.mubr.bf16.mxu0 %v884
  %2149 = vmatmul.mubr.bf16.gmra.mxu0 %v883
  %v2150 = vpop.f32.mrf.mxu0
  %v2151 = vadd.f32 %v1628, %v2150
  %v2152 = vpop.f32.mrf.mxu0
  %v2153 = vadd.f32 %v1630, %v2152
  %v2154 = vpop.f32.mrf.mxu0
  %v2155 = vadd.f32 %v1632, %v2154
  %v2156 = vpop.f32.mrf.mxu0
  %v2157 = vadd.f32 %v1634, %v2156
  %2158 = vmatprep.mubr.bf16.mxu0 %v888
  %2159 = vmatmul.mubr.bf16.gmra.mxu0 %v887
  %v2160 = vpop.f32.mrf.mxu0
  %v2161 = vadd.f32 %v1638, %v2160
  %v2162 = vpop.f32.mrf.mxu0
  %v2163 = vadd.f32 %v1640, %v2162
  %v2164 = vpop.f32.mrf.mxu0
  %v2165 = vadd.f32 %v1642, %v2164
  %v2166 = vpop.f32.mrf.mxu0
  %v2167 = vadd.f32 %v1644, %v2166
  %2168 = vmatprep.mubr.bf16.mxu0 %v892
  %2169 = vmatmul.mubr.bf16.gmra.mxu0 %v891
  %v2170 = vpop.f32.mrf.mxu0
  %v2171 = vadd.f32 %v1648, %v2170
  %v2172 = vpop.f32.mrf.mxu0
  %v2173 = vadd.f32 %v1650, %v2172
  %v2174 = vpop.f32.mrf.mxu0
  %v2175 = vadd.f32 %v1652, %v2174
  %v2176 = vpop.f32.mrf.mxu0
  %v2177 = vadd.f32 %v1654, %v2176
  %2178 = vmatprep.mubr.bf16.mxu0 %v896
  %2179 = vmatmul.mubr.bf16.gmra.mxu0 %v895
  %v2180 = vpop.f32.mrf.mxu0
  %v2181 = vadd.f32 %v1658, %v2180
  %v2182 = vpop.f32.mrf.mxu0
  %v2183 = vadd.f32 %v1660, %v2182
  %v2184 = vpop.f32.mrf.mxu0
  %v2185 = vadd.f32 %v1662, %v2184
  %v2186 = vpop.f32.mrf.mxu0
  %v2187 = vadd.f32 %v1664, %v2186
  %2188 = vmatprep.mubr.bf16.mxu0 %v900
  %2189 = vmatmul.mubr.bf16.gmra.mxu0 %v899
  %v2190 = vpop.f32.mrf.mxu0
  %v2191 = vadd.f32 %v1668, %v2190
  %v2192 = vpop.f32.mrf.mxu0
  %v2193 = vadd.f32 %v1670, %v2192
  %v2194 = vpop.f32.mrf.mxu0
  %v2195 = vadd.f32 %v1672, %v2194
  %v2196 = vpop.f32.mrf.mxu0
  %v2197 = vadd.f32 %v1674, %v2196
  %2198 = vmatprep.mubr.bf16.mxu0 %v904
  %2199 = vmatmul.mubr.bf16.gmra.mxu0 %v903
  %v2200 = vpop.f32.mrf.mxu0
  %v2201 = vadd.f32 %v1678, %v2200
  %v2202 = vpop.f32.mrf.mxu0
  %v2203 = vadd.f32 %v1680, %v2202
  %v2204 = vpop.f32.mrf.mxu0
  %v2205 = vadd.f32 %v1682, %v2204
  %v2206 = vpop.f32.mrf.mxu0
  %v2207 = vadd.f32 %v1684, %v2206
  %2208 = vmatprep.mubr.bf16.mxu0 %v908
  %2209 = vmatmul.mubr.bf16.gmra.mxu0 %v907
  %v2210 = vpop.f32.mrf.mxu0
  %v2211 = vadd.f32 %v1688, %v2210
  %v2212 = vpop.f32.mrf.mxu0
  %v2213 = vadd.f32 %v1690, %v2212
  %v2214 = vpop.f32.mrf.mxu0
  %v2215 = vadd.f32 %v1692, %v2214
  %v2216 = vpop.f32.mrf.mxu0
  %v2217 = vadd.f32 %v1694, %v2216
  %2218 = vmatprep.mubr.bf16.mxu0 %v912
  %2219 = vmatmul.mubr.bf16.gmra.mxu0 %v911
  %v2220 = vpop.f32.mrf.mxu0
  %v2221 = vadd.f32 %v1698, %v2220
  %v2222 = vpop.f32.mrf.mxu0
  %v2223 = vadd.f32 %v1700, %v2222
  %v2224 = vpop.f32.mrf.mxu0
  %v2225 = vadd.f32 %v1702, %v2224
  %v2226 = vpop.f32.mrf.mxu0
  %v2227 = vadd.f32 %v1704, %v2226
  %2228 = vmatprep.mubr.bf16.mxu0 %v916
  %2229 = vmatmul.mubr.bf16.gmra.mxu0 %v915
  %v2230 = vpop.f32.mrf.mxu0
  %v2231 = vadd.f32 %v1708, %v2230
  %v2232 = vpop.f32.mrf.mxu0
  %v2233 = vadd.f32 %v1710, %v2232
  %v2234 = vpop.f32.mrf.mxu0
  %v2235 = vadd.f32 %v1712, %v2234
  %v2236 = vpop.f32.mrf.mxu0
  %v2237 = vadd.f32 %v1714, %v2236
  %2238 = vmatprep.mubr.bf16.mxu0 %v920
  %2239 = vmatmul.mubr.bf16.gmra.mxu0 %v919
  %v2240 = vpop.f32.mrf.mxu0
  %v2241 = vadd.f32 %v1718, %v2240
  %v2242 = vpop.f32.mrf.mxu0
  %v2243 = vadd.f32 %v1720, %v2242
  %v2244 = vpop.f32.mrf.mxu0
  %v2245 = vadd.f32 %v1722, %v2244
  %v2246 = vpop.f32.mrf.mxu0
  %v2247 = vadd.f32 %v1724, %v2246
  %2248 = vmatprep.mubr.bf16.mxu0 %v924
  %2249 = vmatmul.mubr.bf16.gmra.mxu0 %v923
  %v2250 = vpop.f32.mrf.mxu0
  %v2251 = vadd.f32 %v1728, %v2250
  %v2252 = vpop.f32.mrf.mxu0
  %v2253 = vadd.f32 %v1730, %v2252
  %v2254 = vpop.f32.mrf.mxu0
  %v2255 = vadd.f32 %v1732, %v2254
  %v2256 = vpop.f32.mrf.mxu0
  %v2257 = vadd.f32 %v1734, %v2256
  %2258 = vmatprep.mubr.bf16.mxu0 %v928
  %2259 = vmatmul.mubr.bf16.gmra.mxu0 %v927
  %v2260 = vpop.f32.mrf.mxu0
  %v2261 = vadd.f32 %v1738, %v2260
  %v2262 = vpop.f32.mrf.mxu0
  %v2263 = vadd.f32 %v1740, %v2262
  %v2264 = vpop.f32.mrf.mxu0
  %v2265 = vadd.f32 %v1742, %v2264
  %v2266 = vpop.f32.mrf.mxu0
  %v2267 = vadd.f32 %v1744, %v2266
  %2268 = vmatprep.mubr.bf16.mxu0 %v932
  %2269 = vmatmul.mubr.bf16.gmra.mxu0 %v931
  %v2270 = vpop.f32.mrf.mxu0
  %v2271 = vadd.f32 %v1748, %v2270
  %v2272 = vpop.f32.mrf.mxu0
  %v2273 = vadd.f32 %v1750, %v2272
  %v2274 = vpop.f32.mrf.mxu0
  %v2275 = vadd.f32 %v1752, %v2274
  %v2276 = vpop.f32.mrf.mxu0
  %v2277 = vadd.f32 %v1754, %v2276
  %2278 = vmatprep.mubr.bf16.mxu0 %v936
  %2279 = vmatmul.mubr.bf16.gmra.mxu0 %v935
  %v2280 = vpop.f32.mrf.mxu0
  %v2281 = vadd.f32 %v1758, %v2280
  %v2282 = vpop.f32.mrf.mxu0
  %v2283 = vadd.f32 %v1760, %v2282
  %v2284 = vpop.f32.mrf.mxu0
  %v2285 = vadd.f32 %v1762, %v2284
  %v2286 = vpop.f32.mrf.mxu0
  %v2287 = vadd.f32 %v1764, %v2286
  %2288 = vmatprep.mubr.bf16.mxu0 %v940
  %2289 = vmatmul.mubr.bf16.gmra.mxu0 %v939
  %v2290 = vpop.f32.mrf.mxu0
  %v2291 = vadd.f32 %v1768, %v2290
  %v2292 = vpop.f32.mrf.mxu0
  %v2293 = vadd.f32 %v1770, %v2292
  %v2294 = vpop.f32.mrf.mxu0
  %v2295 = vadd.f32 %v1772, %v2294
  %v2296 = vpop.f32.mrf.mxu0
  %v2297 = vadd.f32 %v1774, %v2296
  %2298 = vmatprep.mubr.bf16.mxu0 %v944
  %2299 = vmatmul.mubr.bf16.gmra.mxu0 %v943
  %v2300 = vpop.f32.mrf.mxu0
  %v2301 = vadd.f32 %v1778, %v2300
  %v2302 = vpop.f32.mrf.mxu0
  %v2303 = vadd.f32 %v1780, %v2302
  %v2304 = vpop.f32.mrf.mxu0
  %v2305 = vadd.f32 %v1782, %v2304
  %v2306 = vpop.f32.mrf.mxu0
  %v2307 = vadd.f32 %v1784, %v2306
  %2308 = vmatprep.mubr.bf16.mxu0 %v948
  %2309 = vmatmul.mubr.bf16.gmra.mxu0 %v947
  %v2310 = vpop.f32.mrf.mxu0
  %v2311 = vadd.f32 %v1788, %v2310
  %v2312 = vpop.f32.mrf.mxu0
  %v2313 = vadd.f32 %v1790, %v2312
  %v2314 = vpop.f32.mrf.mxu0
  %v2315 = vadd.f32 %v1792, %v2314
  %v2316 = vpop.f32.mrf.mxu0
  %v2317 = vadd.f32 %v1794, %v2316
  %2318 = vmatprep.mubr.bf16.mxu0 %v952
  %2319 = vmatmul.mubr.bf16.gmra.mxu0 %v951
  %v2320 = vpop.f32.mrf.mxu0
  %v2321 = vadd.f32 %v1798, %v2320
  %v2322 = vpop.f32.mrf.mxu0
  %v2323 = vadd.f32 %v1800, %v2322
  %v2324 = vpop.f32.mrf.mxu0
  %v2325 = vadd.f32 %v1802, %v2324
  %v2326 = vpop.f32.mrf.mxu0
  %v2327 = vadd.f32 %v1804, %v2326
  %2328 = vmatprep.mubr.bf16.mxu0 %v956
  %2329 = vmatmul.mubr.bf16.gmra.mxu0 %v955
  %v2330 = vpop.f32.mrf.mxu0
  %v2331 = vadd.f32 %v1808, %v2330
  %v2332 = vpop.f32.mrf.mxu0
  %v2333 = vadd.f32 %v1810, %v2332
  %v2334 = vpop.f32.mrf.mxu0
  %v2335 = vadd.f32 %v1812, %v2334
  %v2336 = vpop.f32.mrf.mxu0
  %v2337 = vadd.f32 %v1814, %v2336
  %2338 = vmatprep.mubr.bf16.mxu0 %v960
  %2339 = vmatmul.mubr.bf16.gmra.mxu0 %v959
  %v2340 = vpop.f32.mrf.mxu0
  %v2341 = vadd.f32 %v1818, %v2340
  %v2342 = vpop.f32.mrf.mxu0
  %v2343 = vadd.f32 %v1820, %v2342
  %v2344 = vpop.f32.mrf.mxu0
  %v2345 = vadd.f32 %v1822, %v2344
  %v2346 = vpop.f32.mrf.mxu0
  %v2347 = vadd.f32 %v1824, %v2346
  %2348 = vmatprep.mubr.bf16.mxu0 %v964
  %2349 = vmatmul.mubr.bf16.gmra.mxu0 %v963
  %v2350 = vpop.f32.mrf.mxu0
  %v2351 = vadd.f32 %v1828, %v2350
  %v2352 = vpop.f32.mrf.mxu0
  %v2353 = vadd.f32 %v1830, %v2352
  %v2354 = vpop.f32.mrf.mxu0
  %v2355 = vadd.f32 %v1832, %v2354
  %v2356 = vpop.f32.mrf.mxu0
  %v2357 = vadd.f32 %v1834, %v2356
  %2358 = vmatprep.mubr.bf16.mxu0 %v968
  %2359 = vmatmul.mubr.bf16.gmra.mxu0 %v967
  %v2360 = vpop.f32.mrf.mxu0
  %v2361 = vadd.f32 %v1838, %v2360
  %v2362 = vpop.f32.mrf.mxu0
  %v2363 = vadd.f32 %v1840, %v2362
  %v2364 = vpop.f32.mrf.mxu0
  %v2365 = vadd.f32 %v1842, %v2364
  %v2366 = vpop.f32.mrf.mxu0
  %v2367 = vadd.f32 %v1844, %v2366
  %2368 = vmatprep.mubr.bf16.mxu0 %v972
  %2369 = vmatmul.mubr.bf16.gmra.mxu0 %v971
  %v2370 = vpop.f32.mrf.mxu0
  %v2371 = vadd.f32 %v1848, %v2370
  %v2372 = vpop.f32.mrf.mxu0
  %v2373 = vadd.f32 %v1850, %v2372
  %v2374 = vpop.f32.mrf.mxu0
  %v2375 = vadd.f32 %v1852, %v2374
  %v2376 = vpop.f32.mrf.mxu0
  %v2377 = vadd.f32 %v1854, %v2376
  %2378 = vmatprep.mubr.bf16.mxu0 %v976
  %2379 = vmatmul.mubr.bf16.gmra.mxu0 %v975
  %v2380 = vpop.f32.mrf.mxu0
  %v2381 = vadd.f32 %v1858, %v2380
  %v2382 = vpop.f32.mrf.mxu0
  %v2383 = vadd.f32 %v1860, %v2382
  %v2384 = vpop.f32.mrf.mxu0
  %v2385 = vadd.f32 %v1862, %v2384
  %v2386 = vpop.f32.mrf.mxu0
  %v2387 = vadd.f32 %v1864, %v2386
  %2388 = vmatprep.mubr.bf16.mxu0 %v980
  %2389 = vmatmul.mubr.bf16.gmra.mxu0 %v979
  %v2390 = vpop.f32.mrf.mxu0
  %v2391 = vadd.f32 %v1868, %v2390
  %v2392 = vpop.f32.mrf.mxu0
  %v2393 = vadd.f32 %v1870, %v2392
  %v2394 = vpop.f32.mrf.mxu0
  %v2395 = vadd.f32 %v1872, %v2394
  %v2396 = vpop.f32.mrf.mxu0
  %v2397 = vadd.f32 %v1874, %v2396
  %2398 = vmatprep.mubr.bf16.mxu0 %v984
  %2399 = vmatmul.mubr.bf16.gmra.mxu0 %v983
  %v2400 = vpop.f32.mrf.mxu0
  %v2401 = vadd.f32 %v1878, %v2400
  %v2402 = vpop.f32.mrf.mxu0
  %v2403 = vadd.f32 %v1880, %v2402
  %v2404 = vpop.f32.mrf.mxu0
  %v2405 = vadd.f32 %v1882, %v2404
  %v2406 = vpop.f32.mrf.mxu0
  %v2407 = vadd.f32 %v1884, %v2406
  %2408 = vmatprep.mubr.bf16.mxu0 %v988
  %2409 = vmatmul.mubr.bf16.gmra.mxu0 %v987
  %v2410 = vpop.f32.mrf.mxu0
  %v2411 = vadd.f32 %v1888, %v2410
  %v2412 = vpop.f32.mrf.mxu0
  %v2413 = vadd.f32 %v1890, %v2412
  %v2414 = vpop.f32.mrf.mxu0
  %v2415 = vadd.f32 %v1892, %v2414
  %v2416 = vpop.f32.mrf.mxu0
  %v2417 = vadd.f32 %v1894, %v2416
  %2418 = vmatprep.mubr.bf16.mxu0 %v992
  %2419 = vmatmul.mubr.bf16.gmra.mxu0 %v991
  %v2420 = vpop.f32.mrf.mxu0
  %v2421 = vadd.f32 %v1898, %v2420
  %v2422 = vpop.f32.mrf.mxu0
  %v2423 = vadd.f32 %v1900, %v2422
  %v2424 = vpop.f32.mrf.mxu0
  %v2425 = vadd.f32 %v1902, %v2424
  %v2426 = vpop.f32.mrf.mxu0
  %v2427 = vadd.f32 %v1904, %v2426
  %2428 = vmatprep.mubr.bf16.mxu0 %v996
  %2429 = vmatmul.mubr.bf16.gmra.mxu0 %v995
  %v2430 = vpop.f32.mrf.mxu0
  %v2431 = vadd.f32 %v1908, %v2430
  %v2432 = vpop.f32.mrf.mxu0
  %v2433 = vadd.f32 %v1910, %v2432
  %v2434 = vpop.f32.mrf.mxu0
  %v2435 = vadd.f32 %v1912, %v2434
  %v2436 = vpop.f32.mrf.mxu0
  %v2437 = vadd.f32 %v1914, %v2436
  %2438 = vmatprep.mubr.bf16.mxu0 %v1000
  %2439 = vmatmul.mubr.bf16.gmra.mxu0 %v999
  %v2440 = vpop.f32.mrf.mxu0
  %v2441 = vadd.f32 %v1918, %v2440
  %v2442 = vpop.f32.mrf.mxu0
  %v2443 = vadd.f32 %v1920, %v2442
  %v2444 = vpop.f32.mrf.mxu0
  %v2445 = vadd.f32 %v1922, %v2444
  %v2446 = vpop.f32.mrf.mxu0
  %v2447 = vadd.f32 %v1924, %v2446
  %2448 = vmatprep.mubr.bf16.mxu0 %v1004
  %2449 = vmatmul.mubr.bf16.gmra.mxu0 %v1003
  %v2450 = vpop.f32.mrf.mxu0
  %v2451 = vadd.f32 %v1928, %v2450
  %v2452 = vpop.f32.mrf.mxu0
  %v2453 = vadd.f32 %v1930, %v2452
  %v2454 = vpop.f32.mrf.mxu0
  %v2455 = vadd.f32 %v1932, %v2454
  %v2456 = vpop.f32.mrf.mxu0
  %v2457 = vadd.f32 %v1934, %v2456
  %2458 = vmatprep.mubr.bf16.mxu0 %v1008
  %2459 = vmatmul.mubr.bf16.gmra.mxu0 %v1007
  %v2460 = vpop.f32.mrf.mxu0
  %v2461 = vadd.f32 %v1938, %v2460
  %v2462 = vpop.f32.mrf.mxu0
  %v2463 = vadd.f32 %v1940, %v2462
  %v2464 = vpop.f32.mrf.mxu0
  %v2465 = vadd.f32 %v1942, %v2464
  %v2466 = vpop.f32.mrf.mxu0
  %v2467 = vadd.f32 %v1944, %v2466
  %2468 = vmatprep.mubr.bf16.mxu0 %v1012
  %2469 = vmatmul.mubr.bf16.gmra.mxu0 %v1011
  %v2470 = vpop.f32.mrf.mxu0
  %v2471 = vadd.f32 %v1948, %v2470
  %v2472 = vpop.f32.mrf.mxu0
  %v2473 = vadd.f32 %v1950, %v2472
  %v2474 = vpop.f32.mrf.mxu0
  %v2475 = vadd.f32 %v1952, %v2474
  %v2476 = vpop.f32.mrf.mxu0
  %v2477 = vadd.f32 %v1954, %v2476
  %2478 = vmatprep.mubr.bf16.mxu0 %v1016
  %2479 = vmatmul.mubr.bf16.gmra.mxu0 %v1015
  %v2480 = vpop.f32.mrf.mxu0
  %v2481 = vadd.f32 %v1958, %v2480
  %v2482 = vpop.f32.mrf.mxu0
  %v2483 = vadd.f32 %v1960, %v2482
  %v2484 = vpop.f32.mrf.mxu0
  %v2485 = vadd.f32 %v1962, %v2484
  %v2486 = vpop.f32.mrf.mxu0
  %v2487 = vadd.f32 %v1964, %v2486
  %2488 = vmatprep.mubr.bf16.mxu0 %v1020
  %2489 = vmatmul.mubr.bf16.gmra.mxu0 %v1019
  %v2490 = vpop.f32.mrf.mxu0
  %v2491 = vadd.f32 %v1968, %v2490
  %v2492 = vpop.f32.mrf.mxu0
  %v2493 = vadd.f32 %v1970, %v2492
  %v2494 = vpop.f32.mrf.mxu0
  %v2495 = vadd.f32 %v1972, %v2494
  %v2496 = vpop.f32.mrf.mxu0
  %v2497 = vadd.f32 %v1974, %v2496
  %2498 = vmatprep.mubr.bf16.mxu0 %v1024
  %2499 = vmatmul.mubr.bf16.gmra.mxu0 %v1023
  %v2500 = vpop.f32.mrf.mxu0
  %v2501 = vadd.f32 %v1978, %v2500
  %v2502 = vpop.f32.mrf.mxu0
  %v2503 = vadd.f32 %v1980, %v2502
  %v2504 = vpop.f32.mrf.mxu0
  %v2505 = vadd.f32 %v1982, %v2504
  %v2506 = vpop.f32.mrf.mxu0
  %v2507 = vadd.f32 %v1984, %v2506
  %2508 = vmatprep.mubr.bf16.mxu0 %v1028
  %2509 = vmatmul.mubr.bf16.gmra.mxu0 %v1027
  %v2510 = vpop.f32.mrf.mxu0
  %v2511 = vadd.f32 %v1988, %v2510
  %v2512 = vpop.f32.mrf.mxu0
  %v2513 = vadd.f32 %v1990, %v2512
  %v2514 = vpop.f32.mrf.mxu0
  %v2515 = vadd.f32 %v1992, %v2514
  %v2516 = vpop.f32.mrf.mxu0
  %v2517 = vadd.f32 %v1994, %v2516
  %2518 = vmatprep.mubr.bf16.mxu0 %v1032
  %2519 = vmatmul.mubr.bf16.gmra.mxu0 %v1031
  %v2520 = vpop.f32.mrf.mxu0
  %v2521 = vadd.f32 %v1998, %v2520
  %v2522 = vpop.f32.mrf.mxu0
  %v2523 = vadd.f32 %v2000, %v2522
  %v2524 = vpop.f32.mrf.mxu0
  %v2525 = vadd.f32 %v2002, %v2524
  %v2526 = vpop.f32.mrf.mxu0
  %v2527 = vadd.f32 %v2004, %v2526
  %2528 = vmatprep.mubr.bf16.mxu0 %v1036
  %2529 = vmatmul.mubr.bf16.gmra.mxu0 %v1035
  %v2530 = vpop.f32.mrf.mxu0
  %v2531 = vadd.f32 %v2008, %v2530
  %v2532 = vpop.f32.mrf.mxu0
  %v2533 = vadd.f32 %v2010, %v2532
  %v2534 = vpop.f32.mrf.mxu0
  %v2535 = vadd.f32 %v2012, %v2534
  %v2536 = vpop.f32.mrf.mxu0
  %v2537 = vadd.f32 %v2014, %v2536
  %2538 = vmatprep.mubr.bf16.mxu0 %v1040
  %2539 = vmatmul.mubr.bf16.gmra.mxu0 %v1039
  %v2540 = vpop.f32.mrf.mxu0
  %v2541 = vadd.f32 %v2018, %v2540
  %v2542 = vpop.f32.mrf.mxu0
  %v2543 = vadd.f32 %v2020, %v2542
  %v2544 = vpop.f32.mrf.mxu0
  %v2545 = vadd.f32 %v2022, %v2544
  %v2546 = vpop.f32.mrf.mxu0
  %v2547 = vadd.f32 %v2024, %v2546
  %2548 = vmatprep.mubr.bf16.mxu0 %v1044
  %2549 = vmatmul.mubr.bf16.gmra.mxu0 %v1043
  %v2550 = vpop.f32.mrf.mxu0
  %v2551 = vadd.f32 %v2028, %v2550
  %v2552 = vpop.f32.mrf.mxu0
  %v2553 = vadd.f32 %v2030, %v2552
  %v2554 = vpop.f32.mrf.mxu0
  %v2555 = vadd.f32 %v2032, %v2554
  %v2556 = vpop.f32.mrf.mxu0
  %v2557 = vadd.f32 %v2034, %v2556
  %2558 = vmatprep.mubr.bf16.mxu0 %v1048
  %2559 = vmatmul.mubr.bf16.gmra.mxu0 %v1047
  %v2560 = vpop.f32.mrf.mxu0
  %v2561 = vadd.f32 %v2038, %v2560
  %v2562 = vpop.f32.mrf.mxu0
  %v2563 = vadd.f32 %v2040, %v2562
  %v2564 = vpop.f32.mrf.mxu0
  %v2565 = vadd.f32 %v2042, %v2564
  %v2566 = vpop.f32.mrf.mxu0
  %v2567 = vadd.f32 %v2044, %v2566
  %2568 = vmatprep.mubr.bf16.mxu0 %v1052
  %2569 = vmatmul.mubr.bf16.gmra.mxu0 %v1051
  %v2570 = vpop.f32.mrf.mxu0
  %v2571 = vadd.f32 %v2048, %v2570
  %v2572 = vpop.f32.mrf.mxu0
  %v2573 = vadd.f32 %v2050, %v2572
  %v2574 = vpop.f32.mrf.mxu0
  %v2575 = vadd.f32 %v2052, %v2574
  %v2576 = vpop.f32.mrf.mxu0
  %v2577 = vadd.f32 %v2054, %v2576
  %2578 = vmatprep.mubr.bf16.mxu0 %v1056
  %2579 = vmatmul.mubr.bf16.gmra.mxu0 %v1055
  %v2580 = vpop.f32.mrf.mxu0
  %v2581 = vadd.f32 %v2058, %v2580
  %v2582 = vpop.f32.mrf.mxu0
  %v2583 = vadd.f32 %v2060, %v2582
  %v2584 = vpop.f32.mrf.mxu0
  %v2585 = vadd.f32 %v2062, %v2584
  %v2586 = vpop.f32.mrf.mxu0
  %v2587 = vadd.f32 %v2064, %v2586
  %2588 = vmatprep.mubr.bf16.mxu0 %v1060
  %2589 = vmatmul.mubr.bf16.gmra.mxu0 %v1059
  %v2590 = vpop.f32.mrf.mxu0
  %v2591 = vadd.f32 %v2068, %v2590
  %v2592 = vpop.f32.mrf.mxu0
  %v2593 = vadd.f32 %v2070, %v2592
  %v2594 = vpop.f32.mrf.mxu0
  %v2595 = vadd.f32 %v2072, %v2594
  %v2596 = vpop.f32.mrf.mxu0
  %v2597 = vadd.f32 %v2074, %v2596
  %2598 = vmatprep.mubr.bf16.mxu0 %v1064
  %2599 = vmatmul.mubr.bf16.gmra.mxu0 %v1063
  %v2600 = vpop.f32.mrf.mxu0
  %v2601 = vadd.f32 %v2078, %v2600
  %v2602 = vpop.f32.mrf.mxu0
  %v2603 = vadd.f32 %v2080, %v2602
  %v2604 = vpop.f32.mrf.mxu0
  %v2605 = vadd.f32 %v2082, %v2604
  %v2606 = vpop.f32.mrf.mxu0
  %v2607 = vadd.f32 %v2084, %v2606
  %2608 = vmatprep.mubr.bf16.mxu0 %v1068
  %2609 = vmatmul.mubr.bf16.gmra.mxu0 %v1067
  %v2610 = vpop.f32.mrf.mxu0
  %v2611 = vadd.f32 %v2088, %v2610
  %v2612 = vpop.f32.mrf.mxu0
  %v2613 = vadd.f32 %v2090, %v2612
  %v2614 = vpop.f32.mrf.mxu0
  %v2615 = vadd.f32 %v2092, %v2614
  %v2616 = vpop.f32.mrf.mxu0
  %v2617 = vadd.f32 %v2094, %v2616
  %2618 = vmatprep.mubr.bf16.mxu0 %v1072
  %2619 = vmatmul.mubr.bf16.gmra.mxu0 %v1071
  %v2620 = vpop.f32.mrf.mxu0
  %v2621 = vadd.f32 %v2098, %v2620
  %v2622 = vpop.f32.mrf.mxu0
  %v2623 = vadd.f32 %v2100, %v2622
  %v2624 = vpop.f32.mrf.mxu0
  %v2625 = vadd.f32 %v2102, %v2624
  %v2626 = vpop.f32.mrf.mxu0
  %v2627 = vadd.f32 %v2104, %v2626
  %2628 = vmatprep.mubr.bf16.mxu0 %v1076
  %2629 = vmatmul.mubr.bf16.gmra.mxu0 %v1075
  %v2630 = vpop.f32.mrf.mxu0
  %v2631 = vadd.f32 %v2108, %v2630
  %v2632 = vpop.f32.mrf.mxu0
  %v2633 = vadd.f32 %v2110, %v2632
  %v2634 = vpop.f32.mrf.mxu0
  %v2635 = vadd.f32 %v2112, %v2634
  %v2636 = vpop.f32.mrf.mxu0
  %v2637 = vadd.f32 %v2114, %v2636
  %2638 = vdwg.mxu0
  %v2639 = vld [vmem:[%s2] sm:$0x3]
  %v2641 = vlaneseq
  %v2642 = vshrl.u32 %v2641, 7
  %v2643 = vsub.s32 0, %v2642
  %v2644 = vrot.slane %v2639, %v2643
  %v2645 = vlaneseq
  %v2646 = vshrl.u32 %v2645, 7
  %v2647 = vsub.s32 1, %v2646
  %v2648 = vrot.slane %v2639, %v2647
  %v2651 = vmul.f32 %v2151, %v2644
  %v2652 = vmul.f32 %v2153, %v2648
  %v2653 = vmul.f32 %v2155, %v2644
  %v2654 = vmul.f32 %v2157, %v2648
  %v2655 = vmul.f32 %v2161, %v2644
  %v2656 = vmul.f32 %v2163, %v2648
  %v2657 = vmul.f32 %v2165, %v2644
  %v2658 = vmul.f32 %v2167, %v2648
  %v2659 = vmul.f32 %v2171, %v2644
  %v2660 = vmul.f32 %v2173, %v2648
  %v2661 = vmul.f32 %v2175, %v2644
  %v2662 = vmul.f32 %v2177, %v2648
  %v2663 = vmul.f32 %v2181, %v2644
  %v2664 = vmul.f32 %v2183, %v2648
  %v2665 = vmul.f32 %v2185, %v2644
  %v2666 = vmul.f32 %v2187, %v2648
  %v2667 = vmul.f32 %v2191, %v2644
  %v2668 = vmul.f32 %v2193, %v2648
  %v2669 = vmul.f32 %v2195, %v2644
  %v2670 = vmul.f32 %v2197, %v2648
  %v2671 = vmul.f32 %v2201, %v2644
  %v2672 = vmul.f32 %v2203, %v2648
  %v2673 = vmul.f32 %v2205, %v2644
  %v2674 = vmul.f32 %v2207, %v2648
  %v2675 = vmul.f32 %v2211, %v2644
  %v2676 = vmul.f32 %v2213, %v2648
  %v2677 = vmul.f32 %v2215, %v2644
  %v2678 = vmul.f32 %v2217, %v2648
  %v2679 = vmul.f32 %v2221, %v2644
  %v2680 = vmul.f32 %v2223, %v2648
  %v2681 = vmul.f32 %v2225, %v2644
  %v2682 = vmul.f32 %v2227, %v2648
  %v2683 = vmul.f32 %v2231, %v2644
  %v2684 = vmul.f32 %v2233, %v2648
  %v2685 = vmul.f32 %v2235, %v2644
  %v2686 = vmul.f32 %v2237, %v2648
  %v2687 = vmul.f32 %v2241, %v2644
  %v2688 = vmul.f32 %v2243, %v2648
  %v2689 = vmul.f32 %v2245, %v2644
  %v2690 = vmul.f32 %v2247, %v2648
  %v2691 = vmul.f32 %v2251, %v2644
  %v2692 = vmul.f32 %v2253, %v2648
  %v2693 = vmul.f32 %v2255, %v2644
  %v2694 = vmul.f32 %v2257, %v2648
  %v2695 = vmul.f32 %v2261, %v2644
  %v2696 = vmul.f32 %v2263, %v2648
  %v2697 = vmul.f32 %v2265, %v2644
  %v2698 = vmul.f32 %v2267, %v2648
  %v2699 = vmul.f32 %v2271, %v2644
  %v2700 = vmul.f32 %v2273, %v2648
  %v2701 = vmul.f32 %v2275, %v2644
  %v2702 = vmul.f32 %v2277, %v2648
  %v2703 = vmul.f32 %v2281, %v2644
  %v2704 = vmul.f32 %v2283, %v2648
  %v2705 = vmul.f32 %v2285, %v2644
  %v2706 = vmul.f32 %v2287, %v2648
  %v2707 = vmul.f32 %v2291, %v2644
  %v2708 = vmul.f32 %v2293, %v2648
  %v2709 = vmul.f32 %v2295, %v2644
  %v2710 = vmul.f32 %v2297, %v2648
  %v2711 = vmul.f32 %v2301, %v2644
  %v2712 = vmul.f32 %v2303, %v2648
  %v2713 = vmul.f32 %v2305, %v2644
  %v2714 = vmul.f32 %v2307, %v2648
  %v2715 = vmul.f32 %v2311, %v2644
  %v2716 = vmul.f32 %v2313, %v2648
  %v2717 = vmul.f32 %v2315, %v2644
  %v2718 = vmul.f32 %v2317, %v2648
  %v2719 = vmul.f32 %v2321, %v2644
  %v2720 = vmul.f32 %v2323, %v2648
  %v2721 = vmul.f32 %v2325, %v2644
  %v2722 = vmul.f32 %v2327, %v2648
  %v2723 = vmul.f32 %v2331, %v2644
  %v2724 = vmul.f32 %v2333, %v2648
  %v2725 = vmul.f32 %v2335, %v2644
  %v2726 = vmul.f32 %v2337, %v2648
  %v2727 = vmul.f32 %v2341, %v2644
  %v2728 = vmul.f32 %v2343, %v2648
  %v2729 = vmul.f32 %v2345, %v2644
  %v2730 = vmul.f32 %v2347, %v2648
  %v2731 = vmul.f32 %v2351, %v2644
  %v2732 = vmul.f32 %v2353, %v2648
  %v2733 = vmul.f32 %v2355, %v2644
  %v2734 = vmul.f32 %v2357, %v2648
  %v2735 = vmul.f32 %v2361, %v2644
  %v2736 = vmul.f32 %v2363, %v2648
  %v2737 = vmul.f32 %v2365, %v2644
  %v2738 = vmul.f32 %v2367, %v2648
  %v2739 = vmul.f32 %v2371, %v2644
  %v2740 = vmul.f32 %v2373, %v2648
  %v2741 = vmul.f32 %v2375, %v2644
  %v2742 = vmul.f32 %v2377, %v2648
  %v2743 = vmul.f32 %v2381, %v2644
  %v2744 = vmul.f32 %v2383, %v2648
  %v2745 = vmul.f32 %v2385, %v2644
  %v2746 = vmul.f32 %v2387, %v2648
  %v2747 = vmul.f32 %v2391, %v2644
  %v2748 = vmul.f32 %v2393, %v2648
  %v2749 = vmul.f32 %v2395, %v2644
  %v2750 = vmul.f32 %v2397, %v2648
  %v2751 = vmul.f32 %v2401, %v2644
  %v2752 = vmul.f32 %v2403, %v2648
  %v2753 = vmul.f32 %v2405, %v2644
  %v2754 = vmul.f32 %v2407, %v2648
  %v2755 = vmul.f32 %v2411, %v2644
  %v2756 = vmul.f32 %v2413, %v2648
  %v2757 = vmul.f32 %v2415, %v2644
  %v2758 = vmul.f32 %v2417, %v2648
  %v2759 = vmul.f32 %v2421, %v2644
  %v2760 = vmul.f32 %v2423, %v2648
  %v2761 = vmul.f32 %v2425, %v2644
  %v2762 = vmul.f32 %v2427, %v2648
  %v2763 = vmul.f32 %v2431, %v2644
  %v2764 = vmul.f32 %v2433, %v2648
  %v2765 = vmul.f32 %v2435, %v2644
  %v2766 = vmul.f32 %v2437, %v2648
  %v2767 = vmul.f32 %v2441, %v2644
  %v2768 = vmul.f32 %v2443, %v2648
  %v2769 = vmul.f32 %v2445, %v2644
  %v2770 = vmul.f32 %v2447, %v2648
  %v2771 = vmul.f32 %v2451, %v2644
  %v2772 = vmul.f32 %v2453, %v2648
  %v2773 = vmul.f32 %v2455, %v2644
  %v2774 = vmul.f32 %v2457, %v2648
  %v2775 = vmul.f32 %v2461, %v2644
  %v2776 = vmul.f32 %v2463, %v2648
  %v2777 = vmul.f32 %v2465, %v2644
  %v2778 = vmul.f32 %v2467, %v2648
  %v2779 = vmul.f32 %v2471, %v2644
  %v2780 = vmul.f32 %v2473, %v2648
  %v2781 = vmul.f32 %v2475, %v2644
  %v2782 = vmul.f32 %v2477, %v2648
  %v2783 = vmul.f32 %v2481, %v2644
  %v2784 = vmul.f32 %v2483, %v2648
  %v2785 = vmul.f32 %v2485, %v2644
  %v2786 = vmul.f32 %v2487, %v2648
  %v2787 = vmul.f32 %v2491, %v2644
  %v2788 = vmul.f32 %v2493, %v2648
  %v2789 = vmul.f32 %v2495, %v2644
  %v2790 = vmul.f32 %v2497, %v2648
  %v2791 = vmul.f32 %v2501, %v2644
  %v2792 = vmul.f32 %v2503, %v2648
  %v2793 = vmul.f32 %v2505, %v2644
  %v2794 = vmul.f32 %v2507, %v2648
  %v2795 = vmul.f32 %v2511, %v2644
  %v2796 = vmul.f32 %v2513, %v2648
  %v2797 = vmul.f32 %v2515, %v2644
  %v2798 = vmul.f32 %v2517, %v2648
  %v2799 = vmul.f32 %v2521, %v2644
  %v2800 = vmul.f32 %v2523, %v2648
  %v2801 = vmul.f32 %v2525, %v2644
  %v2802 = vmul.f32 %v2527, %v2648
  %v2803 = vmul.f32 %v2531, %v2644
  %v2804 = vmul.f32 %v2533, %v2648
  %v2805 = vmul.f32 %v2535, %v2644
  %v2806 = vmul.f32 %v2537, %v2648
  %v2807 = vmul.f32 %v2541, %v2644
  %v2808 = vmul.f32 %v2543, %v2648
  %v2809 = vmul.f32 %v2545, %v2644
  %v2810 = vmul.f32 %v2547, %v2648
  %v2811 = vmul.f32 %v2551, %v2644
  %v2812 = vmul.f32 %v2553, %v2648
  %v2813 = vmul.f32 %v2555, %v2644
  %v2814 = vmul.f32 %v2557, %v2648
  %v2815 = vmul.f32 %v2561, %v2644
  %v2816 = vmul.f32 %v2563, %v2648
  %v2817 = vmul.f32 %v2565, %v2644
  %v2818 = vmul.f32 %v2567, %v2648
  %v2819 = vmul.f32 %v2571, %v2644
  %v2820 = vmul.f32 %v2573, %v2648
  %v2821 = vmul.f32 %v2575, %v2644
  %v2822 = vmul.f32 %v2577, %v2648
  %v2823 = vmul.f32 %v2581, %v2644
  %v2824 = vmul.f32 %v2583, %v2648
  %v2825 = vmul.f32 %v2585, %v2644
  %v2826 = vmul.f32 %v2587, %v2648
  %v2827 = vmul.f32 %v2591, %v2644
  %v2828 = vmul.f32 %v2593, %v2648
  %v2829 = vmul.f32 %v2595, %v2644
  %v2830 = vmul.f32 %v2597, %v2648
  %v2831 = vmul.f32 %v2601, %v2644
  %v2832 = vmul.f32 %v2603, %v2648
  %v2833 = vmul.f32 %v2605, %v2644
  %v2834 = vmul.f32 %v2607, %v2648
  %v2835 = vmul.f32 %v2611, %v2644
  %v2836 = vmul.f32 %v2613, %v2648
  %v2837 = vmul.f32 %v2615, %v2644
  %v2838 = vmul.f32 %v2617, %v2648
  %v2839 = vmul.f32 %v2621, %v2644
  %v2840 = vmul.f32 %v2623, %v2648
  %v2841 = vmul.f32 %v2625, %v2644
  %v2842 = vmul.f32 %v2627, %v2648
  %v2843 = vmul.f32 %v2631, %v2644
  %v2844 = vmul.f32 %v2633, %v2648
  %v2845 = vmul.f32 %v2635, %v2644
  %v2846 = vmul.f32 %v2637, %v2648
  %v2847 = vld [vmem:[%s3] sm:$0x3]
  %v2849 = vlaneseq
  %v2850 = vshrl.u32 %v2849, 7
  %v2851 = vsub.s32 0, %v2850
  %v2852 = vrot.slane %v2847, %v2851
  %v2853 = vlaneseq
  %v2854 = vshrl.u32 %v2853, 7
  %v2855 = vsub.s32 1, %v2854
  %v2856 = vrot.slane %v2847, %v2855
  %v2859 = vadd.f32 %v2651, %v2852
  %v2860 = vadd.f32 %v2652, %v2856
  %v2861 = vadd.f32 %v2653, %v2852
  %v2862 = vadd.f32 %v2654, %v2856
  %v2863 = vadd.f32 %v2655, %v2852
  %v2864 = vadd.f32 %v2656, %v2856
  %v2865 = vadd.f32 %v2657, %v2852
  %v2866 = vadd.f32 %v2658, %v2856
  %v2867 = vadd.f32 %v2659, %v2852
  %v2868 = vadd.f32 %v2660, %v2856
  %v2869 = vadd.f32 %v2661, %v2852
  %v2870 = vadd.f32 %v2662, %v2856
  %v2871 = vadd.f32 %v2663, %v2852
  %v2872 = vadd.f32 %v2664, %v2856
  %v2873 = vadd.f32 %v2665, %v2852
  %v2874 = vadd.f32 %v2666, %v2856
  %v2875 = vadd.f32 %v2667, %v2852
  %v2876 = vadd.f32 %v2668, %v2856
  %v2877 = vadd.f32 %v2669, %v2852
  %v2878 = vadd.f32 %v2670, %v2856
  %v2879 = vadd.f32 %v2671, %v2852
  %v2880 = vadd.f32 %v2672, %v2856
  %v2881 = vadd.f32 %v2673, %v2852
  %v2882 = vadd.f32 %v2674, %v2856
  %v2883 = vadd.f32 %v2675, %v2852
  %v2884 = vadd.f32 %v2676, %v2856
  %v2885 = vadd.f32 %v2677, %v2852
  %v2886 = vadd.f32 %v2678, %v2856
  %v2887 = vadd.f32 %v2679, %v2852
  %v2888 = vadd.f32 %v2680, %v2856
  %v2889 = vadd.f32 %v2681, %v2852
  %v2890 = vadd.f32 %v2682, %v2856
  %v2891 = vadd.f32 %v2683, %v2852
  %v2892 = vadd.f32 %v2684, %v2856
  %v2893 = vadd.f32 %v2685, %v2852
  %v2894 = vadd.f32 %v2686, %v2856
  %v2895 = vadd.f32 %v2687, %v2852
  %v2896 = vadd.f32 %v2688, %v2856
  %v2897 = vadd.f32 %v2689, %v2852
  %v2898 = vadd.f32 %v2690, %v2856
  %v2899 = vadd.f32 %v2691, %v2852
  %v2900 = vadd.f32 %v2692, %v2856
  %v2901 = vadd.f32 %v2693, %v2852
  %v2902 = vadd.f32 %v2694, %v2856
  %v2903 = vadd.f32 %v2695, %v2852
  %v2904 = vadd.f32 %v2696, %v2856
  %v2905 = vadd.f32 %v2697, %v2852
  %v2906 = vadd.f32 %v2698, %v2856
  %v2907 = vadd.f32 %v2699, %v2852
  %v2908 = vadd.f32 %v2700, %v2856
  %v2909 = vadd.f32 %v2701, %v2852
  %v2910 = vadd.f32 %v2702, %v2856
  %v2911 = vadd.f32 %v2703, %v2852
  %v2912 = vadd.f32 %v2704, %v2856
  %v2913 = vadd.f32 %v2705, %v2852
  %v2914 = vadd.f32 %v2706, %v2856
  %v2915 = vadd.f32 %v2707, %v2852
  %v2916 = vadd.f32 %v2708, %v2856
  %v2917 = vadd.f32 %v2709, %v2852
  %v2918 = vadd.f32 %v2710, %v2856
  %v2919 = vadd.f32 %v2711, %v2852
  %v2920 = vadd.f32 %v2712, %v2856
  %v2921 = vadd.f32 %v2713, %v2852
  %v2922 = vadd.f32 %v2714, %v2856
  %v2923 = vadd.f32 %v2715, %v2852
  %v2924 = vadd.f32 %v2716, %v2856
  %v2925 = vadd.f32 %v2717, %v2852
  %v2926 = vadd.f32 %v2718, %v2856
  %v2927 = vadd.f32 %v2719, %v2852
  %v2928 = vadd.f32 %v2720, %v2856
  %v2929 = vadd.f32 %v2721, %v2852
  %v2930 = vadd.f32 %v2722, %v2856
  %v2931 = vadd.f32 %v2723, %v2852
  %v2932 = vadd.f32 %v2724, %v2856
  %v2933 = vadd.f32 %v2725, %v2852
  %v2934 = vadd.f32 %v2726, %v2856
  %v2935 = vadd.f32 %v2727, %v2852
  %v2936 = vadd.f32 %v2728, %v2856
  %v2937 = vadd.f32 %v2729, %v2852
  %v2938 = vadd.f32 %v2730, %v2856
  %v2939 = vadd.f32 %v2731, %v2852
  %v2940 = vadd.f32 %v2732, %v2856
  %v2941 = vadd.f32 %v2733, %v2852
  %v2942 = vadd.f32 %v2734, %v2856
  %v2943 = vadd.f32 %v2735, %v2852
  %v2944 = vadd.f32 %v2736, %v2856
  %v2945 = vadd.f32 %v2737, %v2852
  %v2946 = vadd.f32 %v2738, %v2856
  %v2947 = vadd.f32 %v2739, %v2852
  %v2948 = vadd.f32 %v2740, %v2856
  %v2949 = vadd.f32 %v2741, %v2852
  %v2950 = vadd.f32 %v2742, %v2856
  %v2951 = vadd.f32 %v2743, %v2852
  %v2952 = vadd.f32 %v2744, %v2856
  %v2953 = vadd.f32 %v2745, %v2852
  %v2954 = vadd.f32 %v2746, %v2856
  %v2955 = vadd.f32 %v2747, %v2852
  %v2956 = vadd.f32 %v2748, %v2856
  %v2957 = vadd.f32 %v2749, %v2852
  %v2958 = vadd.f32 %v2750, %v2856
  %v2959 = vadd.f32 %v2751, %v2852
  %v2960 = vadd.f32 %v2752, %v2856
  %v2961 = vadd.f32 %v2753, %v2852
  %v2962 = vadd.f32 %v2754, %v2856
  %v2963 = vadd.f32 %v2755, %v2852
  %v2964 = vadd.f32 %v2756, %v2856
  %v2965 = vadd.f32 %v2757, %v2852
  %v2966 = vadd.f32 %v2758, %v2856
  %v2967 = vadd.f32 %v2759, %v2852
  %v2968 = vadd.f32 %v2760, %v2856
  %v2969 = vadd.f32 %v2761, %v2852
  %v2970 = vadd.f32 %v2762, %v2856
  %v2971 = vadd.f32 %v2763, %v2852
  %v2972 = vadd.f32 %v2764, %v2856
  %v2973 = vadd.f32 %v2765, %v2852
  %v2974 = vadd.f32 %v2766, %v2856
  %v2975 = vadd.f32 %v2767, %v2852
  %v2976 = vadd.f32 %v2768, %v2856
  %v2977 = vadd.f32 %v2769, %v2852
  %v2978 = vadd.f32 %v2770, %v2856
  %v2979 = vadd.f32 %v2771, %v2852
  %v2980 = vadd.f32 %v2772, %v2856
  %v2981 = vadd.f32 %v2773, %v2852
  %v2982 = vadd.f32 %v2774, %v2856
  %v2983 = vadd.f32 %v2775, %v2852
  %v2984 = vadd.f32 %v2776, %v2856
  %v2985 = vadd.f32 %v2777, %v2852
  %v2986 = vadd.f32 %v2778, %v2856
  %v2987 = vadd.f32 %v2779, %v2852
  %v2988 = vadd.f32 %v2780, %v2856
  %v2989 = vadd.f32 %v2781, %v2852
  %v2990 = vadd.f32 %v2782, %v2856
  %v2991 = vadd.f32 %v2783, %v2852
  %v2992 = vadd.f32 %v2784, %v2856
  %v2993 = vadd.f32 %v2785, %v2852
  %v2994 = vadd.f32 %v2786, %v2856
  %v2995 = vadd.f32 %v2787, %v2852
  %v2996 = vadd.f32 %v2788, %v2856
  %v2997 = vadd.f32 %v2789, %v2852
  %v2998 = vadd.f32 %v2790, %v2856
  %v2999 = vadd.f32 %v2791, %v2852
  %v3000 = vadd.f32 %v2792, %v2856
  %v3001 = vadd.f32 %v2793, %v2852
  %v3002 = vadd.f32 %v2794, %v2856
  %v3003 = vadd.f32 %v2795, %v2852
  %v3004 = vadd.f32 %v2796, %v2856
  %v3005 = vadd.f32 %v2797, %v2852
  %v3006 = vadd.f32 %v2798, %v2856
  %v3007 = vadd.f32 %v2799, %v2852
  %v3008 = vadd.f32 %v2800, %v2856
  %v3009 = vadd.f32 %v2801, %v2852
  %v3010 = vadd.f32 %v2802, %v2856
  %v3011 = vadd.f32 %v2803, %v2852
  %v3012 = vadd.f32 %v2804, %v2856
  %v3013 = vadd.f32 %v2805, %v2852
  %v3014 = vadd.f32 %v2806, %v2856
  %v3015 = vadd.f32 %v2807, %v2852
  %v3016 = vadd.f32 %v2808, %v2856
  %v3017 = vadd.f32 %v2809, %v2852
  %v3018 = vadd.f32 %v2810, %v2856
  %v3019 = vadd.f32 %v2811, %v2852
  %v3020 = vadd.f32 %v2812, %v2856
  %v3021 = vadd.f32 %v2813, %v2852
  %v3022 = vadd.f32 %v2814, %v2856
  %v3023 = vadd.f32 %v2815, %v2852
  %v3024 = vadd.f32 %v2816, %v2856
  %v3025 = vadd.f32 %v2817, %v2852
  %v3026 = vadd.f32 %v2818, %v2856
  %v3027 = vadd.f32 %v2819, %v2852
  %v3028 = vadd.f32 %v2820, %v2856
  %v3029 = vadd.f32 %v2821, %v2852
  %v3030 = vadd.f32 %v2822, %v2856
  %v3031 = vadd.f32 %v2823, %v2852
  %v3032 = vadd.f32 %v2824, %v2856
  %v3033 = vadd.f32 %v2825, %v2852
  %v3034 = vadd.f32 %v2826, %v2856
  %v3035 = vadd.f32 %v2827, %v2852
  %v3036 = vadd.f32 %v2828, %v2856
  %v3037 = vadd.f32 %v2829, %v2852
  %v3038 = vadd.f32 %v2830, %v2856
  %v3039 = vadd.f32 %v2831, %v2852
  %v3040 = vadd.f32 %v2832, %v2856
  %v3041 = vadd.f32 %v2833, %v2852
  %v3042 = vadd.f32 %v2834, %v2856
  %v3043 = vadd.f32 %v2835, %v2852
  %v3044 = vadd.f32 %v2836, %v2856
  %v3045 = vadd.f32 %v2837, %v2852
  %v3046 = vadd.f32 %v2838, %v2856
  %v3047 = vadd.f32 %v2839, %v2852
  %v3048 = vadd.f32 %v2840, %v2856
  %v3049 = vadd.f32 %v2841, %v2852
  %v3050 = vadd.f32 %v2842, %v2856
  %v3051 = vadd.f32 %v2843, %v2852
  %v3052 = vadd.f32 %v2844, %v2856
  %v3053 = vadd.f32 %v2845, %v2852
  %v3054 = vadd.f32 %v2846, %v2856
  %v3055 = vmax.f32 %v2859, 0.0
  %v3056 = vmax.f32 %v2860, 0.0
  %v3057 = vmax.f32 %v2861, 0.0
  %v3058 = vmax.f32 %v2862, 0.0
  %v3059 = vmax.f32 %v2863, 0.0
  %v3060 = vmax.f32 %v2864, 0.0
  %v3061 = vmax.f32 %v2865, 0.0
  %v3062 = vmax.f32 %v2866, 0.0
  %v3063 = vmax.f32 %v2867, 0.0
  %v3064 = vmax.f32 %v2868, 0.0
  %v3065 = vmax.f32 %v2869, 0.0
  %v3066 = vmax.f32 %v2870, 0.0
  %v3067 = vmax.f32 %v2871, 0.0
  %v3068 = vmax.f32 %v2872, 0.0
  %v3069 = vmax.f32 %v2873, 0.0
  %v3070 = vmax.f32 %v2874, 0.0
  %v3071 = vmax.f32 %v2875, 0.0
  %v3072 = vmax.f32 %v2876, 0.0
  %v3073 = vmax.f32 %v2877, 0.0
  %v3074 = vmax.f32 %v2878, 0.0
  %v3075 = vmax.f32 %v2879, 0.0
  %v3076 = vmax.f32 %v2880, 0.0
  %v3077 = vmax.f32 %v2881, 0.0
  %v3078 = vmax.f32 %v2882, 0.0
  %v3079 = vmax.f32 %v2883, 0.0
  %v3080 = vmax.f32 %v2884, 0.0
  %v3081 = vmax.f32 %v2885, 0.0
  %v3082 = vmax.f32 %v2886, 0.0
  %v3083 = vmax.f32 %v2887, 0.0
  %v3084 = vmax.f32 %v2888, 0.0
  %v3085 = vmax.f32 %v2889, 0.0
  %v3086 = vmax.f32 %v2890, 0.0
  %v3087 = vmax.f32 %v2891, 0.0
  %v3088 = vmax.f32 %v2892, 0.0
  %v3089 = vmax.f32 %v2893, 0.0
  %v3090 = vmax.f32 %v2894, 0.0
  %v3091 = vmax.f32 %v2895, 0.0
  %v3092 = vmax.f32 %v2896, 0.0
  %v3093 = vmax.f32 %v2897, 0.0
  %v3094 = vmax.f32 %v2898, 0.0
  %v3095 = vmax.f32 %v2899, 0.0
  %v3096 = vmax.f32 %v2900, 0.0
  %v3097 = vmax.f32 %v2901, 0.0
  %v3098 = vmax.f32 %v2902, 0.0
  %v3099 = vmax.f32 %v2903, 0.0
  %v3100 = vmax.f32 %v2904, 0.0
  %v3101 = vmax.f32 %v2905, 0.0
  %v3102 = vmax.f32 %v2906, 0.0
  %v3103 = vmax.f32 %v2907, 0.0
  %v3104 = vmax.f32 %v2908, 0.0
  %v3105 = vmax.f32 %v2909, 0.0
  %v3106 = vmax.f32 %v2910, 0.0
  %v3107 = vmax.f32 %v2911, 0.0
  %v3108 = vmax.f32 %v2912, 0.0
  %v3109 = vmax.f32 %v2913, 0.0
  %v3110 = vmax.f32 %v2914, 0.0
  %v3111 = vmax.f32 %v2915, 0.0
  %v3112 = vmax.f32 %v2916, 0.0
  %v3113 = vmax.f32 %v2917, 0.0
  %v3114 = vmax.f32 %v2918, 0.0
  %v3115 = vmax.f32 %v2919, 0.0
  %v3116 = vmax.f32 %v2920, 0.0
  %v3117 = vmax.f32 %v2921, 0.0
  %v3118 = vmax.f32 %v2922, 0.0
  %v3119 = vmax.f32 %v2923, 0.0
  %v3120 = vmax.f32 %v2924, 0.0
  %v3121 = vmax.f32 %v2925, 0.0
  %v3122 = vmax.f32 %v2926, 0.0
  %v3123 = vmax.f32 %v2927, 0.0
  %v3124 = vmax.f32 %v2928, 0.0
  %v3125 = vmax.f32 %v2929, 0.0
  %v3126 = vmax.f32 %v2930, 0.0
  %v3127 = vmax.f32 %v2931, 0.0
  %v3128 = vmax.f32 %v2932, 0.0
  %v3129 = vmax.f32 %v2933, 0.0
  %v3130 = vmax.f32 %v2934, 0.0
  %v3131 = vmax.f32 %v2935, 0.0
  %v3132 = vmax.f32 %v2936, 0.0
  %v3133 = vmax.f32 %v2937, 0.0
  %v3134 = vmax.f32 %v2938, 0.0
  %v3135 = vmax.f32 %v2939, 0.0
  %v3136 = vmax.f32 %v2940, 0.0
  %v3137 = vmax.f32 %v2941, 0.0
  %v3138 = vmax.f32 %v2942, 0.0
  %v3139 = vmax.f32 %v2943, 0.0
  %v3140 = vmax.f32 %v2944, 0.0
  %v3141 = vmax.f32 %v2945, 0.0
  %v3142 = vmax.f32 %v2946, 0.0
  %v3143 = vmax.f32 %v2947, 0.0
  %v3144 = vmax.f32 %v2948, 0.0
  %v3145 = vmax.f32 %v2949, 0.0
  %v3146 = vmax.f32 %v2950, 0.0
  %v3147 = vmax.f32 %v2951, 0.0
  %v3148 = vmax.f32 %v2952, 0.0
  %v3149 = vmax.f32 %v2953, 0.0
  %v3150 = vmax.f32 %v2954, 0.0
  %v3151 = vmax.f32 %v2955, 0.0
  %v3152 = vmax.f32 %v2956, 0.0
  %v3153 = vmax.f32 %v2957, 0.0
  %v3154 = vmax.f32 %v2958, 0.0
  %v3155 = vmax.f32 %v2959, 0.0
  %v3156 = vmax.f32 %v2960, 0.0
  %v3157 = vmax.f32 %v2961, 0.0
  %v3158 = vmax.f32 %v2962, 0.0
  %v3159 = vmax.f32 %v2963, 0.0
  %v3160 = vmax.f32 %v2964, 0.0
  %v3161 = vmax.f32 %v2965, 0.0
  %v3162 = vmax.f32 %v2966, 0.0
  %v3163 = vmax.f32 %v2967, 0.0
  %v3164 = vmax.f32 %v2968, 0.0
  %v3165 = vmax.f32 %v2969, 0.0
  %v3166 = vmax.f32 %v2970, 0.0
  %v3167 = vmax.f32 %v2971, 0.0
  %v3168 = vmax.f32 %v2972, 0.0
  %v3169 = vmax.f32 %v2973, 0.0
  %v3170 = vmax.f32 %v2974, 0.0
  %v3171 = vmax.f32 %v2975, 0.0
  %v3172 = vmax.f32 %v2976, 0.0
  %v3173 = vmax.f32 %v2977, 0.0
  %v3174 = vmax.f32 %v2978, 0.0
  %v3175 = vmax.f32 %v2979, 0.0
  %v3176 = vmax.f32 %v2980, 0.0
  %v3177 = vmax.f32 %v2981, 0.0
  %v3178 = vmax.f32 %v2982, 0.0
  %v3179 = vmax.f32 %v2983, 0.0
  %v3180 = vmax.f32 %v2984, 0.0
  %v3181 = vmax.f32 %v2985, 0.0
  %v3182 = vmax.f32 %v2986, 0.0
  %v3183 = vmax.f32 %v2987, 0.0
  %v3184 = vmax.f32 %v2988, 0.0
  %v3185 = vmax.f32 %v2989, 0.0
  %v3186 = vmax.f32 %v2990, 0.0
  %v3187 = vmax.f32 %v2991, 0.0
  %v3188 = vmax.f32 %v2992, 0.0
  %v3189 = vmax.f32 %v2993, 0.0
  %v3190 = vmax.f32 %v2994, 0.0
  %v3191 = vmax.f32 %v2995, 0.0
  %v3192 = vmax.f32 %v2996, 0.0
  %v3193 = vmax.f32 %v2997, 0.0
  %v3194 = vmax.f32 %v2998, 0.0
  %v3195 = vmax.f32 %v2999, 0.0
  %v3196 = vmax.f32 %v3000, 0.0
  %v3197 = vmax.f32 %v3001, 0.0
  %v3198 = vmax.f32 %v3002, 0.0
  %v3199 = vmax.f32 %v3003, 0.0
  %v3200 = vmax.f32 %v3004, 0.0
  %v3201 = vmax.f32 %v3005, 0.0
  %v3202 = vmax.f32 %v3006, 0.0
  %v3203 = vmax.f32 %v3007, 0.0
  %v3204 = vmax.f32 %v3008, 0.0
  %v3205 = vmax.f32 %v3009, 0.0
  %v3206 = vmax.f32 %v3010, 0.0
  %v3207 = vmax.f32 %v3011, 0.0
  %v3208 = vmax.f32 %v3012, 0.0
  %v3209 = vmax.f32 %v3013, 0.0
  %v3210 = vmax.f32 %v3014, 0.0
  %v3211 = vmax.f32 %v3015, 0.0
  %v3212 = vmax.f32 %v3016, 0.0
  %v3213 = vmax.f32 %v3017, 0.0
  %v3214 = vmax.f32 %v3018, 0.0
  %v3215 = vmax.f32 %v3019, 0.0
  %v3216 = vmax.f32 %v3020, 0.0
  %v3217 = vmax.f32 %v3021, 0.0
  %v3218 = vmax.f32 %v3022, 0.0
  %v3219 = vmax.f32 %v3023, 0.0
  %v3220 = vmax.f32 %v3024, 0.0
  %v3221 = vmax.f32 %v3025, 0.0
  %v3222 = vmax.f32 %v3026, 0.0
  %v3223 = vmax.f32 %v3027, 0.0
  %v3224 = vmax.f32 %v3028, 0.0
  %v3225 = vmax.f32 %v3029, 0.0
  %v3226 = vmax.f32 %v3030, 0.0
  %v3227 = vmax.f32 %v3031, 0.0
  %v3228 = vmax.f32 %v3032, 0.0
  %v3229 = vmax.f32 %v3033, 0.0
  %v3230 = vmax.f32 %v3034, 0.0
  %v3231 = vmax.f32 %v3035, 0.0
  %v3232 = vmax.f32 %v3036, 0.0
  %v3233 = vmax.f32 %v3037, 0.0
  %v3234 = vmax.f32 %v3038, 0.0
  %v3235 = vmax.f32 %v3039, 0.0
  %v3236 = vmax.f32 %v3040, 0.0
  %v3237 = vmax.f32 %v3041, 0.0
  %v3238 = vmax.f32 %v3042, 0.0
  %v3239 = vmax.f32 %v3043, 0.0
  %v3240 = vmax.f32 %v3044, 0.0
  %v3241 = vmax.f32 %v3045, 0.0
  %v3242 = vmax.f32 %v3046, 0.0
  %v3243 = vmax.f32 %v3047, 0.0
  %v3244 = vmax.f32 %v3048, 0.0
  %v3245 = vmax.f32 %v3049, 0.0
  %v3246 = vmax.f32 %v3050, 0.0
  %v3247 = vmax.f32 %v3051, 0.0
  %v3248 = vmax.f32 %v3052, 0.0
  %v3249 = vmax.f32 %v3053, 0.0
  %v3250 = vmax.f32 %v3054, 0.0
  %v3251 = vpack.c.bf16 %v3057, %v3055
  %v3252 = vpack.c.bf16 %v3058, %v3056
  %v3253 = vpack.c.bf16 %v3061, %v3059
  %v3254 = vpack.c.bf16 %v3062, %v3060
  %v3255 = vpack.c.bf16 %v3065, %v3063
  %v3256 = vpack.c.bf16 %v3066, %v3064
  %v3257 = vpack.c.bf16 %v3069, %v3067
  %v3258 = vpack.c.bf16 %v3070, %v3068
  %v3259 = vpack.c.bf16 %v3073, %v3071
  %v3260 = vpack.c.bf16 %v3074, %v3072
  %v3261 = vpack.c.bf16 %v3077, %v3075
  %v3262 = vpack.c.bf16 %v3078, %v3076
  %v3263 = vpack.c.bf16 %v3081, %v3079
  %v3264 = vpack.c.bf16 %v3082, %v3080
  %v3265 = vpack.c.bf16 %v3085, %v3083
  %v3266 = vpack.c.bf16 %v3086, %v3084
  %v3267 = vpack.c.bf16 %v3089, %v3087
  %v3268 = vpack.c.bf16 %v3090, %v3088
  %v3269 = vpack.c.bf16 %v3093, %v3091
  %v3270 = vpack.c.bf16 %v3094, %v3092
  %v3271 = vpack.c.bf16 %v3097, %v3095
  %v3272 = vpack.c.bf16 %v3098, %v3096
  %v3273 = vpack.c.bf16 %v3101, %v3099
  %v3274 = vpack.c.bf16 %v3102, %v3100
  %v3275 = vpack.c.bf16 %v3105, %v3103
  %v3276 = vpack.c.bf16 %v3106, %v3104
  %v3277 = vpack.c.bf16 %v3109, %v3107
  %v3278 = vpack.c.bf16 %v3110, %v3108
  %v3279 = vpack.c.bf16 %v3113, %v3111
  %v3280 = vpack.c.bf16 %v3114, %v3112
  %v3281 = vpack.c.bf16 %v3117, %v3115
  %v3282 = vpack.c.bf16 %v3118, %v3116
  %v3283 = vpack.c.bf16 %v3121, %v3119
  %v3284 = vpack.c.bf16 %v3122, %v3120
  %v3285 = vpack.c.bf16 %v3125, %v3123
  %v3286 = vpack.c.bf16 %v3126, %v3124
  %v3287 = vpack.c.bf16 %v3129, %v3127
  %v3288 = vpack.c.bf16 %v3130, %v3128
  %v3289 = vpack.c.bf16 %v3133, %v3131
  %v3290 = vpack.c.bf16 %v3134, %v3132
  %v3291 = vpack.c.bf16 %v3137, %v3135
  %v3292 = vpack.c.bf16 %v3138, %v3136
  %v3293 = vpack.c.bf16 %v3141, %v3139
  %v3294 = vpack.c.bf16 %v3142, %v3140
  %v3295 = vpack.c.bf16 %v3145, %v3143
  %v3296 = vpack.c.bf16 %v3146, %v3144
  %v3297 = vpack.c.bf16 %v3149, %v3147
  %v3298 = vpack.c.bf16 %v3150, %v3148
  %v3299 = vpack.c.bf16 %v3153, %v3151
  %v3300 = vpack.c.bf16 %v3154, %v3152
  %v3301 = vpack.c.bf16 %v3157, %v3155
  %v3302 = vpack.c.bf16 %v3158, %v3156
  %v3303 = vpack.c.bf16 %v3161, %v3159
  %v3304 = vpack.c.bf16 %v3162, %v3160
  %v3305 = vpack.c.bf16 %v3165, %v3163
  %v3306 = vpack.c.bf16 %v3166, %v3164
  %v3307 = vpack.c.bf16 %v3169, %v3167
  %v3308 = vpack.c.bf16 %v3170, %v3168
  %v3309 = vpack.c.bf16 %v3173, %v3171
  %v3310 = vpack.c.bf16 %v3174, %v3172
  %v3311 = vpack.c.bf16 %v3177, %v3175
  %v3312 = vpack.c.bf16 %v3178, %v3176
  %v3313 = vpack.c.bf16 %v3181, %v3179
  %v3314 = vpack.c.bf16 %v3182, %v3180
  %v3315 = vpack.c.bf16 %v3185, %v3183
  %v3316 = vpack.c.bf16 %v3186, %v3184
  %v3317 = vpack.c.bf16 %v3189, %v3187
  %v3318 = vpack.c.bf16 %v3190, %v3188
  %v3319 = vpack.c.bf16 %v3193, %v3191
  %v3320 = vpack.c.bf16 %v3194, %v3192
  %v3321 = vpack.c.bf16 %v3197, %v3195
  %v3322 = vpack.c.bf16 %v3198, %v3196
  %v3323 = vpack.c.bf16 %v3201, %v3199
  %v3324 = vpack.c.bf16 %v3202, %v3200
  %v3325 = vpack.c.bf16 %v3205, %v3203
  %v3326 = vpack.c.bf16 %v3206, %v3204
  %v3327 = vpack.c.bf16 %v3209, %v3207
  %v3328 = vpack.c.bf16 %v3210, %v3208
  %v3329 = vpack.c.bf16 %v3213, %v3211
  %v3330 = vpack.c.bf16 %v3214, %v3212
  %v3331 = vpack.c.bf16 %v3217, %v3215
  %v3332 = vpack.c.bf16 %v3218, %v3216
  %v3333 = vpack.c.bf16 %v3221, %v3219
  %v3334 = vpack.c.bf16 %v3222, %v3220
  %v3335 = vpack.c.bf16 %v3225, %v3223
  %v3336 = vpack.c.bf16 %v3226, %v3224
  %v3337 = vpack.c.bf16 %v3229, %v3227
  %v3338 = vpack.c.bf16 %v3230, %v3228
  %v3339 = vpack.c.bf16 %v3233, %v3231
  %v3340 = vpack.c.bf16 %v3234, %v3232
  %v3341 = vpack.c.bf16 %v3237, %v3235
  %v3342 = vpack.c.bf16 %v3238, %v3236
  %v3343 = vpack.c.bf16 %v3241, %v3239
  %v3344 = vpack.c.bf16 %v3242, %v3240
  %v3345 = vpack.c.bf16 %v3245, %v3243
  %v3346 = vpack.c.bf16 %v3246, %v3244
  %v3347 = vpack.c.bf16 %v3249, %v3247
  %v3348 = vpack.c.bf16 %v3250, %v3248
  %v3349 = vld [vmem:[%s4] sm:$0xf]
  %v3350 = vld [vmem:[%s4 + $0x4] sm:$0xf]
  %v3351 = vld [vmem:[%s4 + $0x8] sm:$0xf]
  %v3352 = vld [vmem:[%s4 + $0xc] sm:$0xf]
  %v3353 = vld [vmem:[%s4 + $0x10] sm:$0xf]
  %v3354 = vld [vmem:[%s4 + $0x14] sm:$0xf]
  %v3355 = vld [vmem:[%s4 + $0x18] sm:$0xf]
  %v3356 = vld [vmem:[%s4 + $0x1c] sm:$0xf]
  %v3357 = vld [vmem:[%s4 + $0x20] sm:$0xf]
  %v3358 = vld [vmem:[%s4 + $0x24] sm:$0xf]
  %v3359 = vld [vmem:[%s4 + $0x28] sm:$0xf]
  %v3360 = vld [vmem:[%s4 + $0x2c] sm:$0xf]
  %v3361 = vld [vmem:[%s4 + $0x30] sm:$0xf]
  %v3362 = vld [vmem:[%s4 + $0x34] sm:$0xf]
  %v3363 = vld [vmem:[%s4 + $0x38] sm:$0xf]
  %v3364 = vld [vmem:[%s4 + $0x3c] sm:$0xf]
  %v3365 = vld [vmem:[%s4 + $0x40] sm:$0xf]
  %v3366 = vld [vmem:[%s4 + $0x44] sm:$0xf]
  %v3367 = vld [vmem:[%s4 + $0x48] sm:$0xf]
  %v3368 = vld [vmem:[%s4 + $0x4c] sm:$0xf]
  %v3369 = vld [vmem:[%s4 + $0x50] sm:$0xf]
  %v3370 = vld [vmem:[%s4 + $0x54] sm:$0xf]
  %v3371 = vld [vmem:[%s4 + $0x58] sm:$0xf]
  %v3372 = vld [vmem:[%s4 + $0x5c] sm:$0xf]
  %v3373 = vld [vmem:[%s4 + $0x60] sm:$0xf]
  %v3374 = vld [vmem:[%s4 + $0x64] sm:$0xf]
  %v3375 = vld [vmem:[%s4 + $0x68] sm:$0xf]
  %v3376 = vld [vmem:[%s4 + $0x6c] sm:$0xf]
  %v3377 = vld [vmem:[%s4 + $0x70] sm:$0xf]
  %v3378 = vld [vmem:[%s4 + $0x74] sm:$0xf]
  %v3379 = vld [vmem:[%s4 + $0x78] sm:$0xf]
  %v3380 = vld [vmem:[%s4 + $0x7c] sm:$0xf]
  %v3413 = vunpack.c.l.b16 %v3349
  %v3414 = vunpack.c.l.b16 %v3350
  %v3415 = vunpack.c.l.b16 %v3351
  %v3416 = vunpack.c.l.b16 %v3352
  %v3417 = vunpack.c.l.b16 %v3353
  %v3418 = vunpack.c.l.b16 %v3354
  %v3419 = vunpack.c.l.b16 %v3355
  %v3420 = vunpack.c.l.b16 %v3356
  %v3421 = vunpack.c.l.b16 %v3357
  %v3422 = vunpack.c.l.b16 %v3358
  %v3423 = vunpack.c.l.b16 %v3359
  %v3424 = vunpack.c.l.b16 %v3360
  %v3425 = vunpack.c.l.b16 %v3361
  %v3426 = vunpack.c.l.b16 %v3362
  %v3427 = vunpack.c.l.b16 %v3363
  %v3428 = vunpack.c.l.b16 %v3364
  %v3429 = vunpack.c.l.b16 %v3365
  %v3430 = vunpack.c.l.b16 %v3366
  %v3431 = vunpack.c.l.b16 %v3367
  %v3432 = vunpack.c.l.b16 %v3368
  %v3433 = vunpack.c.l.b16 %v3369
  %v3434 = vunpack.c.l.b16 %v3370
  %v3435 = vunpack.c.l.b16 %v3371
  %v3436 = vunpack.c.l.b16 %v3372
  %v3437 = vunpack.c.l.b16 %v3373
  %v3438 = vunpack.c.l.b16 %v3374
  %v3439 = vunpack.c.l.b16 %v3375
  %v3440 = vunpack.c.l.b16 %v3376
  %v3441 = vunpack.c.l.b16 %v3377
  %v3442 = vunpack.c.l.b16 %v3378
  %v3443 = vunpack.c.l.b16 %v3379
  %v3444 = vunpack.c.l.b16 %v3380
  %v3445 = vpack.c.b16 %v3414, %v3413
  %v3446 = vpack.c.b16 %v3416, %v3415
  %v3447 = vpack.c.b16 %v3418, %v3417
  %v3448 = vpack.c.b16 %v3420, %v3419
  %v3449 = vpack.c.b16 %v3422, %v3421
  %v3450 = vpack.c.b16 %v3424, %v3423
  %v3451 = vpack.c.b16 %v3426, %v3425
  %v3452 = vpack.c.b16 %v3428, %v3427
  %v3453 = vpack.c.b16 %v3430, %v3429
  %v3454 = vpack.c.b16 %v3432, %v3431
  %v3455 = vpack.c.b16 %v3434, %v3433
  %v3456 = vpack.c.b16 %v3436, %v3435
  %v3457 = vpack.c.b16 %v3438, %v3437
  %v3458 = vpack.c.b16 %v3440, %v3439
  %v3459 = vpack.c.b16 %v3442, %v3441
  %v3460 = vpack.c.b16 %v3444, %v3443
  %3477 = vmatprep.subr.bf16.mxu0 0
  %3478 = vmatpush1.bf16.msra.mxu0 %v3452
  %3479 = vmatprep.subr.bf16.mxu0 0
  %3480 = vmatpush1.bf16.msra.mxu0 %v3451
  %3481 = vmatprep.subr.bf16.mxu0 0
  %3482 = vmatpush1.bf16.msra.mxu0 %v3450
  %3483 = vmatprep.subr.bf16.mxu0 0
  %3484 = vmatpush1.bf16.msra.mxu0 %v3449
  %3485 = vmatprep.subr.bf16.mxu0 0
  %3486 = vmatpush1.bf16.msra.mxu0 %v3448
  %3487 = vmatprep.subr.bf16.mxu0 0
  %3488 = vmatpush1.bf16.msra.mxu0 %v3447
  %3489 = vmatprep.subr.bf16.mxu0 0
  %3490 = vmatpush1.bf16.msra.mxu0 %v3446
  %3491 = vmatprep.subr.bf16.mxu0 0
  %3492 = vmatpush1.bf16.msra.mxu0 %v3445
  %3493 = vmatprep.subr.bf16.mxu0 0
  %3494 = vmatpush2.bf16.msra.mxu0 %v3460
  %3495 = vmatprep.subr.bf16.mxu0 0
  %3496 = vmatpush2.bf16.msra.mxu0 %v3459
  %3497 = vmatprep.subr.bf16.mxu0 0
  %3498 = vmatpush2.bf16.msra.mxu0 %v3458
  %3499 = vmatprep.subr.bf16.mxu0 0
  %3500 = vmatpush2.bf16.msra.mxu0 %v3457
  %3501 = vmatprep.subr.bf16.mxu0 0
  %3502 = vmatpush2.bf16.msra.mxu0 %v3456
  %3503 = vmatprep.subr.bf16.mxu0 0
  %3504 = vmatpush2.bf16.msra.mxu0 %v3455
  %3505 = vmatprep.subr.bf16.mxu0 0
  %3506 = vmatpush2.bf16.msra.mxu0 %v3454
  %3507 = vmatprep.subr.bf16.mxu0 0
  %3508 = vmatpush2.bf16.msra.mxu0 %v3453
  %3509 = vmatprep.mubr.bf16.mxu0 %v3252
  %3510 = vmatmul.mubr.bf16.gmra.mxu0 %v3251
  %v3511 = vpop.f32.mrf.mxu0
  %v3512 = vadd.f32 0.0, %v3511
  %v3513 = vpop.f32.mrf.mxu0
  %v3514 = vpop.f32.mrf.mxu0
  %v3515 = vadd.f32 0.0, %v3514
  %v3516 = vpop.f32.mrf.mxu0
  %3517 = vmatprep.mubr.bf16.mxu0 %v3254
  %3518 = vmatmul.mubr.bf16.gmra.mxu0 %v3253
  %v3519 = vpop.f32.mrf.mxu0
  %v3520 = vadd.f32 0.0, %v3519
  %v3521 = vpop.f32.mrf.mxu0
  %v3522 = vpop.f32.mrf.mxu0
  %v3523 = vadd.f32 0.0, %v3522
  %v3524 = vpop.f32.mrf.mxu0
  %3525 = vmatprep.mubr.bf16.mxu0 %v3256
  %3526 = vmatmul.mubr.bf16.gmra.mxu0 %v3255
  %v3527 = vpop.f32.mrf.mxu0
  %v3528 = vadd.f32 0.0, %v3527
  %v3529 = vpop.f32.mrf.mxu0
  %v3530 = vpop.f32.mrf.mxu0
  %v3531 = vadd.f32 0.0, %v3530
  %v3532 = vpop.f32.mrf.mxu0
  %3533 = vmatprep.mubr.bf16.mxu0 %v3258
  %3534 = vmatmul.mubr.bf16.gmra.mxu0 %v3257
  %v3535 = vpop.f32.mrf.mxu0
  %v3536 = vadd.f32 0.0, %v3535
  %v3537 = vpop.f32.mrf.mxu0
  %v3538 = vpop.f32.mrf.mxu0
  %v3539 = vadd.f32 0.0, %v3538
  %v3540 = vpop.f32.mrf.mxu0
  %3541 = vmatprep.mubr.bf16.mxu0 %v3260
  %3542 = vmatmul.mubr.bf16.gmra.mxu0 %v3259
  %v3543 = vpop.f32.mrf.mxu0
  %v3544 = vadd.f32 0.0, %v3543
  %v3545 = vpop.f32.mrf.mxu0
  %v3546 = vpop.f32.mrf.mxu0
  %v3547 = vadd.f32 0.0, %v3546
  %v3548 = vpop.f32.mrf.mxu0
  %3549 = vmatprep.mubr.bf16.mxu0 %v3262
  %3550 = vmatmul.mubr.bf16.gmra.mxu0 %v3261
  %v3551 = vpop.f32.mrf.mxu0
  %v3552 = vadd.f32 0.0, %v3551
  %v3553 = vpop.f32.mrf.mxu0
  %v3554 = vpop.f32.mrf.mxu0
  %v3555 = vadd.f32 0.0, %v3554
  %v3556 = vpop.f32.mrf.mxu0
  %3557 = vmatprep.mubr.bf16.mxu0 %v3264
  %3558 = vmatmul.mubr.bf16.gmra.mxu0 %v3263
  %v3559 = vpop.f32.mrf.mxu0
  %v3560 = vadd.f32 0.0, %v3559
  %v3561 = vpop.f32.mrf.mxu0
  %v3562 = vpop.f32.mrf.mxu0
  %v3563 = vadd.f32 0.0, %v3562
  %v3564 = vpop.f32.mrf.mxu0
  %3565 = vmatprep.mubr.bf16.mxu0 %v3266
  %3566 = vmatmul.mubr.bf16.gmra.mxu0 %v3265
  %v3567 = vpop.f32.mrf.mxu0
  %v3568 = vadd.f32 0.0, %v3567
  %v3569 = vpop.f32.mrf.mxu0
  %v3570 = vpop.f32.mrf.mxu0
  %v3571 = vadd.f32 0.0, %v3570
  %v3572 = vpop.f32.mrf.mxu0
  %3573 = vmatprep.mubr.bf16.mxu0 %v3268
  %3574 = vmatmul.mubr.bf16.gmra.mxu0 %v3267
  %v3575 = vpop.f32.mrf.mxu0
  %v3576 = vadd.f32 0.0, %v3575
  %v3577 = vpop.f32.mrf.mxu0
  %v3578 = vpop.f32.mrf.mxu0
  %v3579 = vadd.f32 0.0, %v3578
  %v3580 = vpop.f32.mrf.mxu0
  %3581 = vmatprep.mubr.bf16.mxu0 %v3270
  %3582 = vmatmul.mubr.bf16.gmra.mxu0 %v3269
  %v3583 = vpop.f32.mrf.mxu0
  %v3584 = vadd.f32 0.0, %v3583
  %v3585 = vpop.f32.mrf.mxu0
  %v3586 = vpop.f32.mrf.mxu0
  %v3587 = vadd.f32 0.0, %v3586
  %v3588 = vpop.f32.mrf.mxu0
  %3589 = vmatprep.mubr.bf16.mxu0 %v3272
  %3590 = vmatmul.mubr.bf16.gmra.mxu0 %v3271
  %v3591 = vpop.f32.mrf.mxu0
  %v3592 = vadd.f32 0.0, %v3591
  %v3593 = vpop.f32.mrf.mxu0
  %v3594 = vpop.f32.mrf.mxu0
  %v3595 = vadd.f32 0.0, %v3594
  %v3596 = vpop.f32.mrf.mxu0
  %3597 = vmatprep.mubr.bf16.mxu0 %v3274
  %3598 = vmatmul.mubr.bf16.gmra.mxu0 %v3273
  %v3599 = vpop.f32.mrf.mxu0
  %v3600 = vadd.f32 0.0, %v3599
  %v3601 = vpop.f32.mrf.mxu0
  %v3602 = vpop.f32.mrf.mxu0
  %v3603 = vadd.f32 0.0, %v3602
  %v3604 = vpop.f32.mrf.mxu0
  %3605 = vmatprep.mubr.bf16.mxu0 %v3276
  %3606 = vmatmul.mubr.bf16.gmra.mxu0 %v3275
  %v3607 = vpop.f32.mrf.mxu0
  %v3608 = vadd.f32 0.0, %v3607
  %v3609 = vpop.f32.mrf.mxu0
  %v3610 = vpop.f32.mrf.mxu0
  %v3611 = vadd.f32 0.0, %v3610
  %v3612 = vpop.f32.mrf.mxu0
  %3613 = vmatprep.mubr.bf16.mxu0 %v3278
  %3614 = vmatmul.mubr.bf16.gmra.mxu0 %v3277
  %v3615 = vpop.f32.mrf.mxu0
  %v3616 = vadd.f32 0.0, %v3615
  %v3617 = vpop.f32.mrf.mxu0
  %v3618 = vpop.f32.mrf.mxu0
  %v3619 = vadd.f32 0.0, %v3618
  %v3620 = vpop.f32.mrf.mxu0
  %3621 = vmatprep.mubr.bf16.mxu0 %v3280
  %3622 = vmatmul.mubr.bf16.gmra.mxu0 %v3279
  %v3623 = vpop.f32.mrf.mxu0
  %v3624 = vadd.f32 0.0, %v3623
  %v3625 = vpop.f32.mrf.mxu0
  %v3626 = vpop.f32.mrf.mxu0
  %v3627 = vadd.f32 0.0, %v3626
  %v3628 = vpop.f32.mrf.mxu0
  %3629 = vmatprep.mubr.bf16.mxu0 %v3282
  %3630 = vmatmul.mubr.bf16.gmra.mxu0 %v3281
  %v3631 = vpop.f32.mrf.mxu0
  %v3632 = vadd.f32 0.0, %v3631
  %v3633 = vpop.f32.mrf.mxu0
  %v3634 = vpop.f32.mrf.mxu0
  %v3635 = vadd.f32 0.0, %v3634
  %v3636 = vpop.f32.mrf.mxu0
  %3637 = vmatprep.mubr.bf16.mxu0 %v3284
  %3638 = vmatmul.mubr.bf16.gmra.mxu0 %v3283
  %v3639 = vpop.f32.mrf.mxu0
  %v3640 = vadd.f32 0.0, %v3639
  %v3641 = vpop.f32.mrf.mxu0
  %v3642 = vpop.f32.mrf.mxu0
  %v3643 = vadd.f32 0.0, %v3642
  %v3644 = vpop.f32.mrf.mxu0
  %3645 = vmatprep.mubr.bf16.mxu0 %v3286
  %3646 = vmatmul.mubr.bf16.gmra.mxu0 %v3285
  %v3647 = vpop.f32.mrf.mxu0
  %v3648 = vadd.f32 0.0, %v3647
  %v3649 = vpop.f32.mrf.mxu0
  %v3650 = vpop.f32.mrf.mxu0
  %v3651 = vadd.f32 0.0, %v3650
  %v3652 = vpop.f32.mrf.mxu0
  %3653 = vmatprep.mubr.bf16.mxu0 %v3288
  %3654 = vmatmul.mubr.bf16.gmra.mxu0 %v3287
  %v3655 = vpop.f32.mrf.mxu0
  %v3656 = vadd.f32 0.0, %v3655
  %v3657 = vpop.f32.mrf.mxu0
  %v3658 = vpop.f32.mrf.mxu0
  %v3659 = vadd.f32 0.0, %v3658
  %v3660 = vpop.f32.mrf.mxu0
  %3661 = vmatprep.mubr.bf16.mxu0 %v3290
  %3662 = vmatmul.mubr.bf16.gmra.mxu0 %v3289
  %v3663 = vpop.f32.mrf.mxu0
  %v3664 = vadd.f32 0.0, %v3663
  %v3665 = vpop.f32.mrf.mxu0
  %v3666 = vpop.f32.mrf.mxu0
  %v3667 = vadd.f32 0.0, %v3666
  %v3668 = vpop.f32.mrf.mxu0
  %3669 = vmatprep.mubr.bf16.mxu0 %v3292
  %3670 = vmatmul.mubr.bf16.gmra.mxu0 %v3291
  %v3671 = vpop.f32.mrf.mxu0
  %v3672 = vadd.f32 0.0, %v3671
  %v3673 = vpop.f32.mrf.mxu0
  %v3674 = vpop.f32.mrf.mxu0
  %v3675 = vadd.f32 0.0, %v3674
  %v3676 = vpop.f32.mrf.mxu0
  %3677 = vmatprep.mubr.bf16.mxu0 %v3294
  %3678 = vmatmul.mubr.bf16.gmra.mxu0 %v3293
  %v3679 = vpop.f32.mrf.mxu0
  %v3680 = vadd.f32 0.0, %v3679
  %v3681 = vpop.f32.mrf.mxu0
  %v3682 = vpop.f32.mrf.mxu0
  %v3683 = vadd.f32 0.0, %v3682
  %v3684 = vpop.f32.mrf.mxu0
  %3685 = vmatprep.mubr.bf16.mxu0 %v3296
  %3686 = vmatmul.mubr.bf16.gmra.mxu0 %v3295
  %v3687 = vpop.f32.mrf.mxu0
  %v3688 = vadd.f32 0.0, %v3687
  %v3689 = vpop.f32.mrf.mxu0
  %v3690 = vpop.f32.mrf.mxu0
  %v3691 = vadd.f32 0.0, %v3690
  %v3692 = vpop.f32.mrf.mxu0
  %3693 = vmatprep.mubr.bf16.mxu0 %v3298
  %3694 = vmatmul.mubr.bf16.gmra.mxu0 %v3297
  %v3695 = vpop.f32.mrf.mxu0
  %v3696 = vadd.f32 0.0, %v3695
  %v3697 = vpop.f32.mrf.mxu0
  %v3698 = vpop.f32.mrf.mxu0
  %v3699 = vadd.f32 0.0, %v3698
  %v3700 = vpop.f32.mrf.mxu0
  %3701 = vmatprep.mubr.bf16.mxu0 %v3300
  %3702 = vmatmul.mubr.bf16.gmra.mxu0 %v3299
  %v3703 = vpop.f32.mrf.mxu0
  %v3704 = vadd.f32 0.0, %v3703
  %v3705 = vpop.f32.mrf.mxu0
  %v3706 = vpop.f32.mrf.mxu0
  %v3707 = vadd.f32 0.0, %v3706
  %v3708 = vpop.f32.mrf.mxu0
  %3709 = vmatprep.mubr.bf16.mxu0 %v3302
  %3710 = vmatmul.mubr.bf16.gmra.mxu0 %v3301
  %v3711 = vpop.f32.mrf.mxu0
  %v3712 = vadd.f32 0.0, %v3711
  %v3713 = vpop.f32.mrf.mxu0
  %v3714 = vpop.f32.mrf.mxu0
  %v3715 = vadd.f32 0.0, %v3714
  %v3716 = vpop.f32.mrf.mxu0
  %3717 = vmatprep.mubr.bf16.mxu0 %v3304
  %3718 = vmatmul.mubr.bf16.gmra.mxu0 %v3303
  %v3719 = vpop.f32.mrf.mxu0
  %v3720 = vadd.f32 0.0, %v3719
  %v3721 = vpop.f32.mrf.mxu0
  %v3722 = vpop.f32.mrf.mxu0
  %v3723 = vadd.f32 0.0, %v3722
  %v3724 = vpop.f32.mrf.mxu0
  %3725 = vmatprep.mubr.bf16.mxu0 %v3306
  %3726 = vmatmul.mubr.bf16.gmra.mxu0 %v3305
  %v3727 = vpop.f32.mrf.mxu0
  %v3728 = vadd.f32 0.0, %v3727
  %v3729 = vpop.f32.mrf.mxu0
  %v3730 = vpop.f32.mrf.mxu0
  %v3731 = vadd.f32 0.0, %v3730
  %v3732 = vpop.f32.mrf.mxu0
  %3733 = vmatprep.mubr.bf16.mxu0 %v3308
  %3734 = vmatmul.mubr.bf16.gmra.mxu0 %v3307
  %v3735 = vpop.f32.mrf.mxu0
  %v3736 = vadd.f32 0.0, %v3735
  %v3737 = vpop.f32.mrf.mxu0
  %v3738 = vpop.f32.mrf.mxu0
  %v3739 = vadd.f32 0.0, %v3738
  %v3740 = vpop.f32.mrf.mxu0
  %3741 = vmatprep.mubr.bf16.mxu0 %v3310
  %3742 = vmatmul.mubr.bf16.gmra.mxu0 %v3309
  %v3743 = vpop.f32.mrf.mxu0
  %v3744 = vadd.f32 0.0, %v3743
  %v3745 = vpop.f32.mrf.mxu0
  %v3746 = vpop.f32.mrf.mxu0
  %v3747 = vadd.f32 0.0, %v3746
  %v3748 = vpop.f32.mrf.mxu0
  %3749 = vmatprep.mubr.bf16.mxu0 %v3312
  %3750 = vmatmul.mubr.bf16.gmra.mxu0 %v3311
  %v3751 = vpop.f32.mrf.mxu0
  %v3752 = vadd.f32 0.0, %v3751
  %v3753 = vpop.f32.mrf.mxu0
  %v3754 = vpop.f32.mrf.mxu0
  %v3755 = vadd.f32 0.0, %v3754
  %v3756 = vpop.f32.mrf.mxu0
  %3757 = vmatprep.mubr.bf16.mxu0 %v3314
  %3758 = vmatmul.mubr.bf16.gmra.mxu0 %v3313
  %v3759 = vpop.f32.mrf.mxu0
  %v3760 = vadd.f32 0.0, %v3759
  %v3761 = vpop.f32.mrf.mxu0
  %v3762 = vpop.f32.mrf.mxu0
  %v3763 = vadd.f32 0.0, %v3762
  %v3764 = vpop.f32.mrf.mxu0
  %3765 = vmatprep.mubr.bf16.mxu0 %v3316
  %3766 = vmatmul.mubr.bf16.gmra.mxu0 %v3315
  %v3767 = vpop.f32.mrf.mxu0
  %v3768 = vadd.f32 0.0, %v3767
  %v3769 = vpop.f32.mrf.mxu0
  %v3770 = vpop.f32.mrf.mxu0
  %v3771 = vadd.f32 0.0, %v3770
  %v3772 = vpop.f32.mrf.mxu0
  %3773 = vmatprep.mubr.bf16.mxu0 %v3318
  %3774 = vmatmul.mubr.bf16.gmra.mxu0 %v3317
  %v3775 = vpop.f32.mrf.mxu0
  %v3776 = vadd.f32 0.0, %v3775
  %v3777 = vpop.f32.mrf.mxu0
  %v3778 = vpop.f32.mrf.mxu0
  %v3779 = vadd.f32 0.0, %v3778
  %v3780 = vpop.f32.mrf.mxu0
  %3781 = vmatprep.mubr.bf16.mxu0 %v3320
  %3782 = vmatmul.mubr.bf16.gmra.mxu0 %v3319
  %v3783 = vpop.f32.mrf.mxu0
  %v3784 = vadd.f32 0.0, %v3783
  %v3785 = vpop.f32.mrf.mxu0
  %v3786 = vpop.f32.mrf.mxu0
  %v3787 = vadd.f32 0.0, %v3786
  %v3788 = vpop.f32.mrf.mxu0
  %3789 = vmatprep.mubr.bf16.mxu0 %v3322
  %3790 = vmatmul.mubr.bf16.gmra.mxu0 %v3321
  %v3791 = vpop.f32.mrf.mxu0
  %v3792 = vadd.f32 0.0, %v3791
  %v3793 = vpop.f32.mrf.mxu0
  %v3794 = vpop.f32.mrf.mxu0
  %v3795 = vadd.f32 0.0, %v3794
  %v3796 = vpop.f32.mrf.mxu0
  %3797 = vmatprep.mubr.bf16.mxu0 %v3324
  %3798 = vmatmul.mubr.bf16.gmra.mxu0 %v3323
  %v3799 = vpop.f32.mrf.mxu0
  %v3800 = vadd.f32 0.0, %v3799
  %v3801 = vpop.f32.mrf.mxu0
  %v3802 = vpop.f32.mrf.mxu0
  %v3803 = vadd.f32 0.0, %v3802
  %v3804 = vpop.f32.mrf.mxu0
  %3805 = vmatprep.mubr.bf16.mxu0 %v3326
  %3806 = vmatmul.mubr.bf16.gmra.mxu0 %v3325
  %v3807 = vpop.f32.mrf.mxu0
  %v3808 = vadd.f32 0.0, %v3807
  %v3809 = vpop.f32.mrf.mxu0
  %v3810 = vpop.f32.mrf.mxu0
  %v3811 = vadd.f32 0.0, %v3810
  %v3812 = vpop.f32.mrf.mxu0
  %3813 = vmatprep.mubr.bf16.mxu0 %v3328
  %3814 = vmatmul.mubr.bf16.gmra.mxu0 %v3327
  %v3815 = vpop.f32.mrf.mxu0
  %v3816 = vadd.f32 0.0, %v3815
  %v3817 = vpop.f32.mrf.mxu0
  %v3818 = vpop.f32.mrf.mxu0
  %v3819 = vadd.f32 0.0, %v3818
  %v3820 = vpop.f32.mrf.mxu0
  %3821 = vmatprep.mubr.bf16.mxu0 %v3330
  %3822 = vmatmul.mubr.bf16.gmra.mxu0 %v3329
  %v3823 = vpop.f32.mrf.mxu0
  %v3824 = vadd.f32 0.0, %v3823
  %v3825 = vpop.f32.mrf.mxu0
  %v3826 = vpop.f32.mrf.mxu0
  %v3827 = vadd.f32 0.0, %v3826
  %v3828 = vpop.f32.mrf.mxu0
  %3829 = vmatprep.mubr.bf16.mxu0 %v3332
  %3830 = vmatmul.mubr.bf16.gmra.mxu0 %v3331
  %v3831 = vpop.f32.mrf.mxu0
  %v3832 = vadd.f32 0.0, %v3831
  %v3833 = vpop.f32.mrf.mxu0
  %v3834 = vpop.f32.mrf.mxu0
  %v3835 = vadd.f32 0.0, %v3834
  %v3836 = vpop.f32.mrf.mxu0
  %3837 = vmatprep.mubr.bf16.mxu0 %v3334
  %3838 = vmatmul.mubr.bf16.gmra.mxu0 %v3333
  %v3839 = vpop.f32.mrf.mxu0
  %v3840 = vadd.f32 0.0, %v3839
  %v3841 = vpop.f32.mrf.mxu0
  %v3842 = vpop.f32.mrf.mxu0
  %v3843 = vadd.f32 0.0, %v3842
  %v3844 = vpop.f32.mrf.mxu0
  %3845 = vmatprep.mubr.bf16.mxu0 %v3336
  %3846 = vmatmul.mubr.bf16.gmra.mxu0 %v3335
  %v3847 = vpop.f32.mrf.mxu0
  %v3848 = vadd.f32 0.0, %v3847
  %v3849 = vpop.f32.mrf.mxu0
  %v3850 = vpop.f32.mrf.mxu0
  %v3851 = vadd.f32 0.0, %v3850
  %v3852 = vpop.f32.mrf.mxu0
  %3853 = vmatprep.mubr.bf16.mxu0 %v3338
  %3854 = vmatmul.mubr.bf16.gmra.mxu0 %v3337
  %v3855 = vpop.f32.mrf.mxu0
  %v3856 = vadd.f32 0.0, %v3855
  %v3857 = vpop.f32.mrf.mxu0
  %v3858 = vpop.f32.mrf.mxu0
  %v3859 = vadd.f32 0.0, %v3858
  %v3860 = vpop.f32.mrf.mxu0
  %3861 = vmatprep.mubr.bf16.mxu0 %v3340
  %3862 = vmatmul.mubr.bf16.gmra.mxu0 %v3339
  %v3863 = vpop.f32.mrf.mxu0
  %v3864 = vadd.f32 0.0, %v3863
  %v3865 = vpop.f32.mrf.mxu0
  %v3866 = vpop.f32.mrf.mxu0
  %v3867 = vadd.f32 0.0, %v3866
  %v3868 = vpop.f32.mrf.mxu0
  %3869 = vmatprep.mubr.bf16.mxu0 %v3342
  %3870 = vmatmul.mubr.bf16.gmra.mxu0 %v3341
  %v3871 = vpop.f32.mrf.mxu0
  %v3872 = vadd.f32 0.0, %v3871
  %v3873 = vpop.f32.mrf.mxu0
  %v3874 = vpop.f32.mrf.mxu0
  %v3875 = vadd.f32 0.0, %v3874
  %v3876 = vpop.f32.mrf.mxu0
  %3877 = vmatprep.mubr.bf16.mxu0 %v3344
  %3878 = vmatmul.mubr.bf16.gmra.mxu0 %v3343
  %v3879 = vpop.f32.mrf.mxu0
  %v3880 = vadd.f32 0.0, %v3879
  %v3881 = vpop.f32.mrf.mxu0
  %v3882 = vpop.f32.mrf.mxu0
  %v3883 = vadd.f32 0.0, %v3882
  %v3884 = vpop.f32.mrf.mxu0
  %3885 = vmatprep.mubr.bf16.mxu0 %v3346
  %3886 = vmatmul.mubr.bf16.gmra.mxu0 %v3345
  %v3887 = vpop.f32.mrf.mxu0
  %v3888 = vadd.f32 0.0, %v3887
  %v3889 = vpop.f32.mrf.mxu0
  %v3890 = vpop.f32.mrf.mxu0
  %v3891 = vadd.f32 0.0, %v3890
  %v3892 = vpop.f32.mrf.mxu0
  %3893 = vmatprep.mubr.bf16.mxu0 %v3348
  %3894 = vmatmul.mubr.bf16.gmra.mxu0 %v3347
  %v3895 = vpop.f32.mrf.mxu0
  %v3896 = vadd.f32 0.0, %v3895
  %v3897 = vpop.f32.mrf.mxu0
  %v3898 = vpop.f32.mrf.mxu0
  %v3899 = vadd.f32 0.0, %v3898
  %v3900 = vpop.f32.mrf.mxu0
  %3901 = vdwg.mxu0
  %v3902 = vld [vmem:[%s5] sm:$0x1]
  %v3904 = vlaneseq
  %v3905 = vshrl.u32 %v3904, 7
  %v3906 = vsub.s32 0, %v3905
  %v3907 = vrot.slane %v3902, %v3906
  %v3909 = vmul.f32 %v3512, %v3907
  %v3910 = vmul.f32 %v3515, %v3907
  %v3911 = vmul.f32 %v3520, %v3907
  %v3912 = vmul.f32 %v3523, %v3907
  %v3913 = vmul.f32 %v3528, %v3907
  %v3914 = vmul.f32 %v3531, %v3907
  %v3915 = vmul.f32 %v3536, %v3907
  %v3916 = vmul.f32 %v3539, %v3907
  %v3917 = vmul.f32 %v3544, %v3907
  %v3918 = vmul.f32 %v3547, %v3907
  %v3919 = vmul.f32 %v3552, %v3907
  %v3920 = vmul.f32 %v3555, %v3907
  %v3921 = vmul.f32 %v3560, %v3907
  %v3922 = vmul.f32 %v3563, %v3907
  %v3923 = vmul.f32 %v3568, %v3907
  %v3924 = vmul.f32 %v3571, %v3907
  %v3925 = vmul.f32 %v3576, %v3907
  %v3926 = vmul.f32 %v3579, %v3907
  %v3927 = vmul.f32 %v3584, %v3907
  %v3928 = vmul.f32 %v3587, %v3907
  %v3929 = vmul.f32 %v3592, %v3907
  %v3930 = vmul.f32 %v3595, %v3907
  %v3931 = vmul.f32 %v3600, %v3907
  %v3932 = vmul.f32 %v3603, %v3907
  %v3933 = vmul.f32 %v3608, %v3907
  %v3934 = vmul.f32 %v3611, %v3907
  %v3935 = vmul.f32 %v3616, %v3907
  %v3936 = vmul.f32 %v3619, %v3907
  %v3937 = vmul.f32 %v3624, %v3907
  %v3938 = vmul.f32 %v3627, %v3907
  %v3939 = vmul.f32 %v3632, %v3907
  %v3940 = vmul.f32 %v3635, %v3907
  %v3941 = vmul.f32 %v3640, %v3907
  %v3942 = vmul.f32 %v3643, %v3907
  %v3943 = vmul.f32 %v3648, %v3907
  %v3944 = vmul.f32 %v3651, %v3907
  %v3945 = vmul.f32 %v3656, %v3907
  %v3946 = vmul.f32 %v3659, %v3907
  %v3947 = vmul.f32 %v3664, %v3907
  %v3948 = vmul.f32 %v3667, %v3907
  %v3949 = vmul.f32 %v3672, %v3907
  %v3950 = vmul.f32 %v3675, %v3907
  %v3951 = vmul.f32 %v3680, %v3907
  %v3952 = vmul.f32 %v3683, %v3907
  %v3953 = vmul.f32 %v3688, %v3907
  %v3954 = vmul.f32 %v3691, %v3907
  %v3955 = vmul.f32 %v3696, %v3907
  %v3956 = vmul.f32 %v3699, %v3907
  %v3957 = vmul.f32 %v3704, %v3907
  %v3958 = vmul.f32 %v3707, %v3907
  %v3959 = vmul.f32 %v3712, %v3907
  %v3960 = vmul.f32 %v3715, %v3907
  %v3961 = vmul.f32 %v3720, %v3907
  %v3962 = vmul.f32 %v3723, %v3907
  %v3963 = vmul.f32 %v3728, %v3907
  %v3964 = vmul.f32 %v3731, %v3907
  %v3965 = vmul.f32 %v3736, %v3907
  %v3966 = vmul.f32 %v3739, %v3907
  %v3967 = vmul.f32 %v3744, %v3907
  %v3968 = vmul.f32 %v3747, %v3907
  %v3969 = vmul.f32 %v3752, %v3907
  %v3970 = vmul.f32 %v3755, %v3907
  %v3971 = vmul.f32 %v3760, %v3907
  %v3972 = vmul.f32 %v3763, %v3907
  %v3973 = vmul.f32 %v3768, %v3907
  %v3974 = vmul.f32 %v3771, %v3907
  %v3975 = vmul.f32 %v3776, %v3907
  %v3976 = vmul.f32 %v3779, %v3907
  %v3977 = vmul.f32 %v3784, %v3907
  %v3978 = vmul.f32 %v3787, %v3907
  %v3979 = vmul.f32 %v3792, %v3907
  %v3980 = vmul.f32 %v3795, %v3907
  %v3981 = vmul.f32 %v3800, %v3907
  %v3982 = vmul.f32 %v3803, %v3907
  %v3983 = vmul.f32 %v3808, %v3907
  %v3984 = vmul.f32 %v3811, %v3907
  %v3985 = vmul.f32 %v3816, %v3907
  %v3986 = vmul.f32 %v3819, %v3907
  %v3987 = vmul.f32 %v3824, %v3907
  %v3988 = vmul.f32 %v3827, %v3907
  %v3989 = vmul.f32 %v3832, %v3907
  %v3990 = vmul.f32 %v3835, %v3907
  %v3991 = vmul.f32 %v3840, %v3907
  %v3992 = vmul.f32 %v3843, %v3907
  %v3993 = vmul.f32 %v3848, %v3907
  %v3994 = vmul.f32 %v3851, %v3907
  %v3995 = vmul.f32 %v3856, %v3907
  %v3996 = vmul.f32 %v3859, %v3907
  %v3997 = vmul.f32 %v3864, %v3907
  %v3998 = vmul.f32 %v3867, %v3907
  %v3999 = vmul.f32 %v3872, %v3907
  %v4000 = vmul.f32 %v3875, %v3907
  %v4001 = vmul.f32 %v3880, %v3907
  %v4002 = vmul.f32 %v3883, %v3907
  %v4003 = vmul.f32 %v3888, %v3907
  %v4004 = vmul.f32 %v3891, %v3907
  %v4005 = vmul.f32 %v3896, %v3907
  %v4006 = vmul.f32 %v3899, %v3907
  %v4007 = vld [vmem:[%s6] sm:$0x1]
  %v4009 = vlaneseq
  %v4010 = vshrl.u32 %v4009, 7
  %v4011 = vsub.s32 0, %v4010
  %v4012 = vrot.slane %v4007, %v4011
  %v4014 = vadd.f32 %v3909, %v4012
  %v4015 = vadd.f32 %v3910, %v4012
  %v4016 = vadd.f32 %v3911, %v4012
  %v4017 = vadd.f32 %v3912, %v4012
  %v4018 = vadd.f32 %v3913, %v4012
  %v4019 = vadd.f32 %v3914, %v4012
  %v4020 = vadd.f32 %v3915, %v4012
  %v4021 = vadd.f32 %v3916, %v4012
  %v4022 = vadd.f32 %v3917, %v4012
  %v4023 = vadd.f32 %v3918, %v4012
  %v4024 = vadd.f32 %v3919, %v4012
  %v4025 = vadd.f32 %v3920, %v4012
  %v4026 = vadd.f32 %v3921, %v4012
  %v4027 = vadd.f32 %v3922, %v4012
  %v4028 = vadd.f32 %v3923, %v4012
  %v4029 = vadd.f32 %v3924, %v4012
  %v4030 = vadd.f32 %v3925, %v4012
  %v4031 = vadd.f32 %v3926, %v4012
  %v4032 = vadd.f32 %v3927, %v4012
  %v4033 = vadd.f32 %v3928, %v4012
  %v4034 = vadd.f32 %v3929, %v4012
  %v4035 = vadd.f32 %v3930, %v4012
  %v4036 = vadd.f32 %v3931, %v4012
  %v4037 = vadd.f32 %v3932, %v4012
  %v4038 = vadd.f32 %v3933, %v4012
  %v4039 = vadd.f32 %v3934, %v4012
  %v4040 = vadd.f32 %v3935, %v4012
  %v4041 = vadd.f32 %v3936, %v4012
  %v4042 = vadd.f32 %v3937, %v4012
  %v4043 = vadd.f32 %v3938, %v4012
  %v4044 = vadd.f32 %v3939, %v4012
  %v4045 = vadd.f32 %v3940, %v4012
  %v4046 = vadd.f32 %v3941, %v4012
  %v4047 = vadd.f32 %v3942, %v4012
  %v4048 = vadd.f32 %v3943, %v4012
  %v4049 = vadd.f32 %v3944, %v4012
  %v4050 = vadd.f32 %v3945, %v4012
  %v4051 = vadd.f32 %v3946, %v4012
  %v4052 = vadd.f32 %v3947, %v4012
  %v4053 = vadd.f32 %v3948, %v4012
  %v4054 = vadd.f32 %v3949, %v4012
  %v4055 = vadd.f32 %v3950, %v4012
  %v4056 = vadd.f32 %v3951, %v4012
  %v4057 = vadd.f32 %v3952, %v4012
  %v4058 = vadd.f32 %v3953, %v4012
  %v4059 = vadd.f32 %v3954, %v4012
  %v4060 = vadd.f32 %v3955, %v4012
  %v4061 = vadd.f32 %v3956, %v4012
  %v4062 = vadd.f32 %v3957, %v4012
  %v4063 = vadd.f32 %v3958, %v4012
  %v4064 = vadd.f32 %v3959, %v4012
  %v4065 = vadd.f32 %v3960, %v4012
  %v4066 = vadd.f32 %v3961, %v4012
  %v4067 = vadd.f32 %v3962, %v4012
  %v4068 = vadd.f32 %v3963, %v4012
  %v4069 = vadd.f32 %v3964, %v4012
  %v4070 = vadd.f32 %v3965, %v4012
  %v4071 = vadd.f32 %v3966, %v4012
  %v4072 = vadd.f32 %v3967, %v4012
  %v4073 = vadd.f32 %v3968, %v4012
  %v4074 = vadd.f32 %v3969, %v4012
  %v4075 = vadd.f32 %v3970, %v4012
  %v4076 = vadd.f32 %v3971, %v4012
  %v4077 = vadd.f32 %v3972, %v4012
  %v4078 = vadd.f32 %v3973, %v4012
  %v4079 = vadd.f32 %v3974, %v4012
  %v4080 = vadd.f32 %v3975, %v4012
  %v4081 = vadd.f32 %v3976, %v4012
  %v4082 = vadd.f32 %v3977, %v4012
  %v4083 = vadd.f32 %v3978, %v4012
  %v4084 = vadd.f32 %v3979, %v4012
  %v4085 = vadd.f32 %v3980, %v4012
  %v4086 = vadd.f32 %v3981, %v4012
  %v4087 = vadd.f32 %v3982, %v4012
  %v4088 = vadd.f32 %v3983, %v4012
  %v4089 = vadd.f32 %v3984, %v4012
  %v4090 = vadd.f32 %v3985, %v4012
  %v4091 = vadd.f32 %v3986, %v4012
  %v4092 = vadd.f32 %v3987, %v4012
  %v4093 = vadd.f32 %v3988, %v4012
  %v4094 = vadd.f32 %v3989, %v4012
  %v4095 = vadd.f32 %v3990, %v4012
  %v4096 = vadd.f32 %v3991, %v4012
  %v4097 = vadd.f32 %v3992, %v4012
  %v4098 = vadd.f32 %v3993, %v4012
  %v4099 = vadd.f32 %v3994, %v4012
  %v4100 = vadd.f32 %v3995, %v4012
  %v4101 = vadd.f32 %v3996, %v4012
  %v4102 = vadd.f32 %v3997, %v4012
  %v4103 = vadd.f32 %v3998, %v4012
  %v4104 = vadd.f32 %v3999, %v4012
  %v4105 = vadd.f32 %v4000, %v4012
  %v4106 = vadd.f32 %v4001, %v4012
  %v4107 = vadd.f32 %v4002, %v4012
  %v4108 = vadd.f32 %v4003, %v4012
  %v4109 = vadd.f32 %v4004, %v4012
  %v4110 = vadd.f32 %v4005, %v4012
  %v4111 = vadd.f32 %v4006, %v4012
  %v4112 = vmax.f32 %v4014, 0.0
  %v4113 = vmax.f32 %v4015, 0.0
  %v4114 = vmax.f32 %v4016, 0.0
  %v4115 = vmax.f32 %v4017, 0.0
  %v4116 = vmax.f32 %v4018, 0.0
  %v4117 = vmax.f32 %v4019, 0.0
  %v4118 = vmax.f32 %v4020, 0.0
  %v4119 = vmax.f32 %v4021, 0.0
  %v4120 = vmax.f32 %v4022, 0.0
  %v4121 = vmax.f32 %v4023, 0.0
  %v4122 = vmax.f32 %v4024, 0.0
  %v4123 = vmax.f32 %v4025, 0.0
  %v4124 = vmax.f32 %v4026, 0.0
  %v4125 = vmax.f32 %v4027, 0.0
  %v4126 = vmax.f32 %v4028, 0.0
  %v4127 = vmax.f32 %v4029, 0.0
  %v4128 = vmax.f32 %v4030, 0.0
  %v4129 = vmax.f32 %v4031, 0.0
  %v4130 = vmax.f32 %v4032, 0.0
  %v4131 = vmax.f32 %v4033, 0.0
  %v4132 = vmax.f32 %v4034, 0.0
  %v4133 = vmax.f32 %v4035, 0.0
  %v4134 = vmax.f32 %v4036, 0.0
  %v4135 = vmax.f32 %v4037, 0.0
  %v4136 = vmax.f32 %v4038, 0.0
  %v4137 = vmax.f32 %v4039, 0.0
  %v4138 = vmax.f32 %v4040, 0.0
  %v4139 = vmax.f32 %v4041, 0.0
  %v4140 = vmax.f32 %v4042, 0.0
  %v4141 = vmax.f32 %v4043, 0.0
  %v4142 = vmax.f32 %v4044, 0.0
  %v4143 = vmax.f32 %v4045, 0.0
  %v4144 = vmax.f32 %v4046, 0.0
  %v4145 = vmax.f32 %v4047, 0.0
  %v4146 = vmax.f32 %v4048, 0.0
  %v4147 = vmax.f32 %v4049, 0.0
  %v4148 = vmax.f32 %v4050, 0.0
  %v4149 = vmax.f32 %v4051, 0.0
  %v4150 = vmax.f32 %v4052, 0.0
  %v4151 = vmax.f32 %v4053, 0.0
  %v4152 = vmax.f32 %v4054, 0.0
  %v4153 = vmax.f32 %v4055, 0.0
  %v4154 = vmax.f32 %v4056, 0.0
  %v4155 = vmax.f32 %v4057, 0.0
  %v4156 = vmax.f32 %v4058, 0.0
  %v4157 = vmax.f32 %v4059, 0.0
  %v4158 = vmax.f32 %v4060, 0.0
  %v4159 = vmax.f32 %v4061, 0.0
  %v4160 = vmax.f32 %v4062, 0.0
  %v4161 = vmax.f32 %v4063, 0.0
  %v4162 = vmax.f32 %v4064, 0.0
  %v4163 = vmax.f32 %v4065, 0.0
  %v4164 = vmax.f32 %v4066, 0.0
  %v4165 = vmax.f32 %v4067, 0.0
  %v4166 = vmax.f32 %v4068, 0.0
  %v4167 = vmax.f32 %v4069, 0.0
  %v4168 = vmax.f32 %v4070, 0.0
  %v4169 = vmax.f32 %v4071, 0.0
  %v4170 = vmax.f32 %v4072, 0.0
  %v4171 = vmax.f32 %v4073, 0.0
  %v4172 = vmax.f32 %v4074, 0.0
  %v4173 = vmax.f32 %v4075, 0.0
  %v4174 = vmax.f32 %v4076, 0.0
  %v4175 = vmax.f32 %v4077, 0.0
  %v4176 = vmax.f32 %v4078, 0.0
  %v4177 = vmax.f32 %v4079, 0.0
  %v4178 = vmax.f32 %v4080, 0.0
  %v4179 = vmax.f32 %v4081, 0.0
  %v4180 = vmax.f32 %v4082, 0.0
  %v4181 = vmax.f32 %v4083, 0.0
  %v4182 = vmax.f32 %v4084, 0.0
  %v4183 = vmax.f32 %v4085, 0.0
  %v4184 = vmax.f32 %v4086, 0.0
  %v4185 = vmax.f32 %v4087, 0.0
  %v4186 = vmax.f32 %v4088, 0.0
  %v4187 = vmax.f32 %v4089, 0.0
  %v4188 = vmax.f32 %v4090, 0.0
  %v4189 = vmax.f32 %v4091, 0.0
  %v4190 = vmax.f32 %v4092, 0.0
  %v4191 = vmax.f32 %v4093, 0.0
  %v4192 = vmax.f32 %v4094, 0.0
  %v4193 = vmax.f32 %v4095, 0.0
  %v4194 = vmax.f32 %v4096, 0.0
  %v4195 = vmax.f32 %v4097, 0.0
  %v4196 = vmax.f32 %v4098, 0.0
  %v4197 = vmax.f32 %v4099, 0.0
  %v4198 = vmax.f32 %v4100, 0.0
  %v4199 = vmax.f32 %v4101, 0.0
  %v4200 = vmax.f32 %v4102, 0.0
  %v4201 = vmax.f32 %v4103, 0.0
  %v4202 = vmax.f32 %v4104, 0.0
  %v4203 = vmax.f32 %v4105, 0.0
  %v4204 = vmax.f32 %v4106, 0.0
  %v4205 = vmax.f32 %v4107, 0.0
  %v4206 = vmax.f32 %v4108, 0.0
  %v4207 = vmax.f32 %v4109, 0.0
  %v4208 = vmax.f32 %v4110, 0.0
  %v4209 = vmax.f32 %v4111, 0.0
  %vm4210 = vcmask 523264
  %4211 = vst.msk [vmem:[#allocation2] sm:$0xff] %vm4210, %v4112
  %4212 = vst.msk [vmem:[#allocation2 + $0x8] sm:$0xff] %vm4210, %v4113
  %4213 = vst.msk [vmem:[#allocation2 + $0x10] sm:$0xff] %vm4210, %v4114
  %4214 = vst.msk [vmem:[#allocation2 + $0x18] sm:$0xff] %vm4210, %v4115
  %4215 = vst.msk [vmem:[#allocation2 + $0x20] sm:$0xff] %vm4210, %v4116
  %4216 = vst.msk [vmem:[#allocation2 + $0x28] sm:$0xff] %vm4210, %v4117
  %4217 = vst.msk [vmem:[#allocation2 + $0x30] sm:$0xff] %vm4210, %v4118
  %4218 = vst.msk [vmem:[#allocation2 + $0x38] sm:$0xff] %vm4210, %v4119
  %4219 = vst.msk [vmem:[#allocation2 + $0x40] sm:$0xff] %vm4210, %v4120
  %4220 = vst.msk [vmem:[#allocation2 + $0x48] sm:$0xff] %vm4210, %v4121
  %4221 = vst.msk [vmem:[#allocation2 + $0x50] sm:$0xff] %vm4210, %v4122
  %4222 = vst.msk [vmem:[#allocation2 + $0x58] sm:$0xff] %vm4210, %v4123
  %4223 = vst.msk [vmem:[#allocation2 + $0x60] sm:$0xff] %vm4210, %v4124
  %4224 = vst.msk [vmem:[#allocation2 + $0x68] sm:$0xff] %vm4210, %v4125
  %4225 = vst.msk [vmem:[#allocation2 + $0x70] sm:$0xff] %vm4210, %v4126
  %4226 = vst.msk [vmem:[#allocation2 + $0x78] sm:$0xff] %vm4210, %v4127
  %4227 = vst.msk [vmem:[#allocation2 + $0x80] sm:$0xff] %vm4210, %v4128
  %4228 = vst.msk [vmem:[#allocation2 + $0x88] sm:$0xff] %vm4210, %v4129
  %4229 = vst.msk [vmem:[#allocation2 + $0x90] sm:$0xff] %vm4210, %v4130
  %4230 = vst.msk [vmem:[#allocation2 + $0x98] sm:$0xff] %vm4210, %v4131
  %4231 = vst.msk [vmem:[#allocation2 + $0xa0] sm:$0xff] %vm4210, %v4132
  %4232 = vst.msk [vmem:[#allocation2 + $0xa8] sm:$0xff] %vm4210, %v4133
  %4233 = vst.msk [vmem:[#allocation2 + $0xb0] sm:$0xff] %vm4210, %v4134
  %4234 = vst.msk [vmem:[#allocation2 + $0xb8] sm:$0xff] %vm4210, %v4135
  %4235 = vst.msk [vmem:[#allocation2 + $0xc0] sm:$0xff] %vm4210, %v4136
  %4236 = vst.msk [vmem:[#allocation2 + $0xc8] sm:$0xff] %vm4210, %v4137
  %4237 = vst.msk [vmem:[#allocation2 + $0xd0] sm:$0xff] %vm4210, %v4138
  %4238 = vst.msk [vmem:[#allocation2 + $0xd8] sm:$0xff] %vm4210, %v4139
  %4239 = vst.msk [vmem:[#allocation2 + $0xe0] sm:$0xff] %vm4210, %v4140
  %4240 = vst.msk [vmem:[#allocation2 + $0xe8] sm:$0xff] %vm4210, %v4141
  %4241 = vst.msk [vmem:[#allocation2 + $0xf0] sm:$0xff] %vm4210, %v4142
  %4242 = vst.msk [vmem:[#allocation2 + $0xf8] sm:$0xff] %vm4210, %v4143
  %4243 = vst.msk [vmem:[#allocation2 + $0x100] sm:$0xff] %vm4210, %v4144
  %4244 = vst.msk [vmem:[#allocation2 + $0x108] sm:$0xff] %vm4210, %v4145
  %4245 = vst.msk [vmem:[#allocation2 + $0x110] sm:$0xff] %vm4210, %v4146
  %4246 = vst.msk [vmem:[#allocation2 + $0x118] sm:$0xff] %vm4210, %v4147
  %4247 = vst.msk [vmem:[#allocation2 + $0x120] sm:$0xff] %vm4210, %v4148
  %4248 = vst.msk [vmem:[#allocation2 + $0x128] sm:$0xff] %vm4210, %v4149
  %4249 = vst.msk [vmem:[#allocation2 + $0x130] sm:$0xff] %vm4210, %v4150
  %4250 = vst.msk [vmem:[#allocation2 + $0x138] sm:$0xff] %vm4210, %v4151
  %4251 = vst.msk [vmem:[#allocation2 + $0x140] sm:$0xff] %vm4210, %v4152
  %4252 = vst.msk [vmem:[#allocation2 + $0x148] sm:$0xff] %vm4210, %v4153
  %4253 = vst.msk [vmem:[#allocation2 + $0x150] sm:$0xff] %vm4210, %v4154
  %4254 = vst.msk [vmem:[#allocation2 + $0x158] sm:$0xff] %vm4210, %v4155
  %4255 = vst.msk [vmem:[#allocation2 + $0x160] sm:$0xff] %vm4210, %v4156
  %4256 = vst.msk [vmem:[#allocation2 + $0x168] sm:$0xff] %vm4210, %v4157
  %4257 = vst.msk [vmem:[#allocation2 + $0x170] sm:$0xff] %vm4210, %v4158
  %4258 = vst.msk [vmem:[#allocation2 + $0x178] sm:$0xff] %vm4210, %v4159
  %4259 = vst.msk [vmem:[#allocation2 + $0x180] sm:$0xff] %vm4210, %v4160
  %4260 = vst.msk [vmem:[#allocation2 + $0x188] sm:$0xff] %vm4210, %v4161
  %4261 = vst.msk [vmem:[#allocation2 + $0x190] sm:$0xff] %vm4210, %v4162
  %4262 = vst.msk [vmem:[#allocation2 + $0x198] sm:$0xff] %vm4210, %v4163
  %4263 = vst.msk [vmem:[#allocation2 + $0x1a0] sm:$0xff] %vm4210, %v4164
  %4264 = vst.msk [vmem:[#allocation2 + $0x1a8] sm:$0xff] %vm4210, %v4165
  %4265 = vst.msk [vmem:[#allocation2 + $0x1b0] sm:$0xff] %vm4210, %v4166
  %4266 = vst.msk [vmem:[#allocation2 + $0x1b8] sm:$0xff] %vm4210, %v4167
  %4267 = vst.msk [vmem:[#allocation2 + $0x1c0] sm:$0xff] %vm4210, %v4168
  %4268 = vst.msk [vmem:[#allocation2 + $0x1c8] sm:$0xff] %vm4210, %v4169
  %4269 = vst.msk [vmem:[#allocation2 + $0x1d0] sm:$0xff] %vm4210, %v4170
  %4270 = vst.msk [vmem:[#allocation2 + $0x1d8] sm:$0xff] %vm4210, %v4171
  %4271 = vst.msk [vmem:[#allocation2 + $0x1e0] sm:$0xff] %vm4210, %v4172
  %4272 = vst.msk [vmem:[#allocation2 + $0x1e8] sm:$0xff] %vm4210, %v4173
  %4273 = vst.msk [vmem:[#allocation2 + $0x1f0] sm:$0xff] %vm4210, %v4174
  %4274 = vst.msk [vmem:[#allocation2 + $0x1f8] sm:$0xff] %vm4210, %v4175
  %4275 = vst.msk [vmem:[#allocation2 + $0x200] sm:$0xff] %vm4210, %v4176
  %4276 = vst.msk [vmem:[#allocation2 + $0x208] sm:$0xff] %vm4210, %v4177
  %4277 = vst.msk [vmem:[#allocation2 + $0x210] sm:$0xff] %vm4210, %v4178
  %4278 = vst.msk [vmem:[#allocation2 + $0x218] sm:$0xff] %vm4210, %v4179
  %4279 = vst.msk [vmem:[#allocation2 + $0x220] sm:$0xff] %vm4210, %v4180
  %4280 = vst.msk [vmem:[#allocation2 + $0x228] sm:$0xff] %vm4210, %v4181
  %4281 = vst.msk [vmem:[#allocation2 + $0x230] sm:$0xff] %vm4210, %v4182
  %4282 = vst.msk [vmem:[#allocation2 + $0x238] sm:$0xff] %vm4210, %v4183
  %4283 = vst.msk [vmem:[#allocation2 + $0x240] sm:$0xff] %vm4210, %v4184
  %4284 = vst.msk [vmem:[#allocation2 + $0x248] sm:$0xff] %vm4210, %v4185
  %4285 = vst.msk [vmem:[#allocation2 + $0x250] sm:$0xff] %vm4210, %v4186
  %4286 = vst.msk [vmem:[#allocation2 + $0x258] sm:$0xff] %vm4210, %v4187
  %4287 = vst.msk [vmem:[#allocation2 + $0x260] sm:$0xff] %vm4210, %v4188
  %4288 = vst.msk [vmem:[#allocation2 + $0x268] sm:$0xff] %vm4210, %v4189
  %4289 = vst.msk [vmem:[#allocation2 + $0x270] sm:$0xff] %vm4210, %v4190
  %4290 = vst.msk [vmem:[#allocation2 + $0x278] sm:$0xff] %vm4210, %v4191
  %4291 = vst.msk [vmem:[#allocation2 + $0x280] sm:$0xff] %vm4210, %v4192
  %4292 = vst.msk [vmem:[#allocation2 + $0x288] sm:$0xff] %vm4210, %v4193
  %4293 = vst.msk [vmem:[#allocation2 + $0x290] sm:$0xff] %vm4210, %v4194
  %4294 = vst.msk [vmem:[#allocation2 + $0x298] sm:$0xff] %vm4210, %v4195
  %4295 = vst.msk [vmem:[#allocation2 + $0x2a0] sm:$0xff] %vm4210, %v4196
  %4296 = vst.msk [vmem:[#allocation2 + $0x2a8] sm:$0xff] %vm4210, %v4197
  %4297 = vst.msk [vmem:[#allocation2 + $0x2b0] sm:$0xff] %vm4210, %v4198
  %4298 = vst.msk [vmem:[#allocation2 + $0x2b8] sm:$0xff] %vm4210, %v4199
  %4299 = vst.msk [vmem:[#allocation2 + $0x2c0] sm:$0xff] %vm4210, %v4200
  %4300 = vst.msk [vmem:[#allocation2 + $0x2c8] sm:$0xff] %vm4210, %v4201
  %4301 = vst.msk [vmem:[#allocation2 + $0x2d0] sm:$0xff] %vm4210, %v4202
  %4302 = vst.msk [vmem:[#allocation2 + $0x2d8] sm:$0xff] %vm4210, %v4203
  %4303 = vst.msk [vmem:[#allocation2 + $0x2e0] sm:$0xff] %vm4210, %v4204
  %4304 = vst.msk [vmem:[#allocation2 + $0x2e8] sm:$0xff] %vm4210, %v4205
  %4305 = vst.msk [vmem:[#allocation2 + $0x2f0] sm:$0xff] %vm4210, %v4206
  %4306 = vst.msk [vmem:[#allocation2 + $0x2f8] sm:$0xff] %vm4210, %v4207
  %4307 = vst.msk [vmem:[#allocation2 + $0x300] sm:$0xff] %vm4210, %v4208
  %4308 = vst.msk [vmem:[#allocation2 + $0x308] sm:$0xff] %vm4210, %v4209
  %v4309 = vld [vmem:[#allocation2] sm:$0xff]
  %v4310 = vld [vmem:[#allocation2 + $0x8] sm:$0xff]
  %v4311 = vpack.c.bf16 %v4310, %v4309
  %v4312 = vld [vmem:[%s7] sm:$0xf]
  %v4313 = vld [vmem:[%s7 + $0x4] sm:$0xf]
  %v4314 = vld [vmem:[%s7 + $0x8] sm:$0xf]
  %v4315 = vld [vmem:[%s7 + $0xc] sm:$0xf]
  %v4316 = vld [vmem:[%s7 + $0x10] sm:$0xf]
  %v4317 = vld [vmem:[%s7 + $0x14] sm:$0xf]
  %v4318 = vld [vmem:[%s7 + $0x18] sm:$0xf]
  %v4319 = vld [vmem:[%s7 + $0x1c] sm:$0xf]
  %v4320 = vld [vmem:[#allocation2 + $0x10] sm:$0xff]
  %v4321 = vld [vmem:[#allocation2 + $0x18] sm:$0xff]
  %v4322 = vpack.c.bf16 %v4321, %v4320
  %s4323 = scalar_lea.vmem %s7, 32
  %v4324 = vld [vmem:[%s4323] sm:$0xf]
  %v4325 = vld [vmem:[%s4323 + $0x4] sm:$0xf]
  %v4326 = vld [vmem:[%s4323 + $0x8] sm:$0xf]
  %v4327 = vld [vmem:[%s4323 + $0xc] sm:$0xf]
  %v4328 = vld [vmem:[%s4323 + $0x10] sm:$0xf]
  %v4329 = vld [vmem:[%s4323 + $0x14] sm:$0xf]
  %v4330 = vld [vmem:[%s4323 + $0x18] sm:$0xf]
  %v4331 = vld [vmem:[%s4323 + $0x1c] sm:$0xf]
  %v4340 = vunpack.c.l.b16 %v4324
  %v4341 = vunpack.c.l.b16 %v4325
  %v4342 = vunpack.c.l.b16 %v4326
  %v4343 = vunpack.c.l.b16 %v4327
  %v4344 = vunpack.c.l.b16 %v4328
  %v4345 = vunpack.c.l.b16 %v4329
  %v4346 = vunpack.c.l.b16 %v4330
  %v4347 = vunpack.c.l.b16 %v4331
  %v4348 = vpack.c.b16 %v4341, %v4340
  %v4349 = vpack.c.b16 %v4343, %v4342
  %v4350 = vpack.c.b16 %v4345, %v4344
  %v4351 = vpack.c.b16 %v4347, %v4346
  %v4357 = vsel %vm4210, %v4322, 0
  %4359 = vmatprep.subr.bf16.mxu0 0
  %4360 = vmatpush1.bf16.msra.mxu0 0
  %4361 = vmatprep.subr.bf16.mxu0 0
  %4362 = vmatpush1.bf16.msra.mxu0 0
  %4363 = vmatprep.subr.bf16.mxu0 0
  %4364 = vmatpush1.bf16.msra.mxu0 0
  %4365 = vmatprep.subr.bf16.mxu0 0
  %4366 = vmatpush1.bf16.msra.mxu0 0
  %4367 = vmatprep.subr.bf16.mxu0 0
  %4368 = vmatpush1.bf16.msra.mxu0 %v4351
  %4369 = vmatprep.subr.bf16.mxu0 0
  %4370 = vmatpush1.bf16.msra.mxu0 %v4350
  %4371 = vmatprep.subr.bf16.mxu0 0
  %4372 = vmatpush1.bf16.msra.mxu0 %v4349
  %4373 = vmatprep.subr.bf16.mxu0 0
  %4374 = vmatpush1.bf16.msra.mxu0 %v4348
  %4375 = vmatprep.subr.bf16.mxu0 0
  %4376 = vmatpush2.bf16.msra.mxu0 0
  %4377 = vmatprep.subr.bf16.mxu0 0
  %4378 = vmatpush2.bf16.msra.mxu0 0
  %4379 = vmatprep.subr.bf16.mxu0 0
  %4380 = vmatpush2.bf16.msra.mxu0 0
  %4381 = vmatprep.subr.bf16.mxu0 0
  %4382 = vmatpush2.bf16.msra.mxu0 0
  %4383 = vmatprep.subr.bf16.mxu0 0
  %4384 = vmatpush2.bf16.msra.mxu0 0
  %4385 = vmatprep.subr.bf16.mxu0 0
  %4386 = vmatpush2.bf16.msra.mxu0 0
  %4387 = vmatprep.subr.bf16.mxu0 0
  %4388 = vmatpush2.bf16.msra.mxu0 0
  %4389 = vmatprep.subr.bf16.mxu0 0
  %4390 = vmatpush2.bf16.msra.mxu0 0
  %4391 = vmatprep.mubr.bf16.mxu0 0
  %4392 = vmatmul.mubr.bf16.gmra.mxu0 %v4357
  %v4393 = vpop.f32.mrf.mxu0
  %v4394 = vadd.f32 0.0, %v4393
  %v4395 = vpop.f32.mrf.mxu0
  %v4396 = vpop.f32.mrf.mxu0
  %v4397 = vadd.f32 0.0, %v4396
  %v4398 = vpop.f32.mrf.mxu0
  %4399 = vdwg.mxu0
  %v4408 = vunpack.c.l.b16 %v4312
  %v4409 = vunpack.c.l.b16 %v4313
  %v4410 = vunpack.c.l.b16 %v4314
  %v4411 = vunpack.c.l.b16 %v4315
  %v4412 = vunpack.c.l.b16 %v4316
  %v4413 = vunpack.c.l.b16 %v4317
  %v4414 = vunpack.c.l.b16 %v4318
  %v4415 = vunpack.c.l.b16 %v4319
  %v4416 = vpack.c.b16 %v4409, %v4408
  %v4417 = vpack.c.b16 %v4411, %v4410
  %v4418 = vpack.c.b16 %v4413, %v4412
  %v4419 = vpack.c.b16 %v4415, %v4414
  %v4425 = vsel %vm4210, %v4311, 0
  %4427 = vmatprep.subr.bf16.mxu0 0
  %4428 = vmatpush1.bf16.msra.mxu0 0
  %4429 = vmatprep.subr.bf16.mxu0 0
  %4430 = vmatpush1.bf16.msra.mxu0 0
  %4431 = vmatprep.subr.bf16.mxu0 0
  %4432 = vmatpush1.bf16.msra.mxu0 0
  %4433 = vmatprep.subr.bf16.mxu0 0
  %4434 = vmatpush1.bf16.msra.mxu0 0
  %4435 = vmatprep.subr.bf16.mxu0 0
  %4436 = vmatpush1.bf16.msra.mxu0 %v4419
  %4437 = vmatprep.subr.bf16.mxu0 0
  %4438 = vmatpush1.bf16.msra.mxu0 %v4418
  %4439 = vmatprep.subr.bf16.mxu0 0
  %4440 = vmatpush1.bf16.msra.mxu0 %v4417
  %4441 = vmatprep.subr.bf16.mxu0 0
  %4442 = vmatpush1.bf16.msra.mxu0 %v4416
  %4443 = vmatprep.subr.bf16.mxu0 0
  %4444 = vmatpush2.bf16.msra.mxu0 0
  %4445 = vmatprep.subr.bf16.mxu0 0
  %4446 = vmatpush2.bf16.msra.mxu0 0
  %4447 = vmatprep.subr.bf16.mxu0 0
  %4448 = vmatpush2.bf16.msra.mxu0 0
  %4449 = vmatprep.subr.bf16.mxu0 0
  %4450 = vmatpush2.bf16.msra.mxu0 0
  %4451 = vmatprep.subr.bf16.mxu0 0
  %4452 = vmatpush2.bf16.msra.mxu0 0
  %4453 = vmatprep.subr.bf16.mxu0 0
  %4454 = vmatpush2.bf16.msra.mxu0 0
  %4455 = vmatprep.subr.bf16.mxu0 0
  %4456 = vmatpush2.bf16.msra.mxu0 0
  %4457 = vmatprep.subr.bf16.mxu0 0
  %4458 = vmatpush2.bf16.msra.mxu0 0
  %4459 = vmatprep.mubr.bf16.mxu0 0
  %4460 = vmatmul.mubr.bf16.gmra.mxu0 %v4425
  %v4461 = vpop.f32.mrf.mxu0
  %v4462 = vadd.f32 %v4394, %v4461
  %v4463 = vpop.f32.mrf.mxu0
  %v4464 = vpop.f32.mrf.mxu0
  %v4465 = vadd.f32 %v4397, %v4464
  %v4466 = vpop.f32.mrf.mxu0
  %4467 = vdwg.mxu0
  %v4468 = vld [vmem:[#allocation2 + $0x20] sm:$0xff]
  %v4469 = vld [vmem:[#allocation2 + $0x28] sm:$0xff]
  %v4470 = vpack.c.bf16 %v4469, %v4468
  %s4471 = scalar_lea.vmem %s7, 64
  %v4472 = vld [vmem:[%s4471] sm:$0xf]
  %v4473 = vld [vmem:[%s4471 + $0x4] sm:$0xf]
  %v4474 = vld [vmem:[%s4471 + $0x8] sm:$0xf]
  %v4475 = vld [vmem:[%s4471 + $0xc] sm:$0xf]
  %v4476 = vld [vmem:[%s4471 + $0x10] sm:$0xf]
  %v4477 = vld [vmem:[%s4471 + $0x14] sm:$0xf]
  %v4478 = vld [vmem:[%s4471 + $0x18] sm:$0xf]
  %v4479 = vld [vmem:[%s4471 + $0x1c] sm:$0xf]
  %v4488 = vunpack.c.l.b16 %v4472
  %v4489 = vunpack.c.l.b16 %v4473
  %v4490 = vunpack.c.l.b16 %v4474
  %v4491 = vunpack.c.l.b16 %v4475
  %v4492 = vunpack.c.l.b16 %v4476
  %v4493 = vunpack.c.l.b16 %v4477
  %v4494 = vunpack.c.l.b16 %v4478
  %v4495 = vunpack.c.l.b16 %v4479
  %v4496 = vpack.c.b16 %v4489, %v4488
  %v4497 = vpack.c.b16 %v4491, %v4490
  %v4498 = vpack.c.b16 %v4493, %v4492
  %v4499 = vpack.c.b16 %v4495, %v4494
  %v4505 = vsel %vm4210, %v4470, 0
  %4507 = vmatprep.subr.bf16.mxu0 0
  %4508 = vmatpush1.bf16.msra.mxu0 0
  %4509 = vmatprep.subr.bf16.mxu0 0
  %4510 = vmatpush1.bf16.msra.mxu0 0
  %4511 = vmatprep.subr.bf16.mxu0 0
  %4512 = vmatpush1.bf16.msra.mxu0 0
  %4513 = vmatprep.subr.bf16.mxu0 0
  %4514 = vmatpush1.bf16.msra.mxu0 0
  %4515 = vmatprep.subr.bf16.mxu0 0
  %4516 = vmatpush1.bf16.msra.mxu0 %v4499
  %4517 = vmatprep.subr.bf16.mxu0 0
  %4518 = vmatpush1.bf16.msra.mxu0 %v4498
  %4519 = vmatprep.subr.bf16.mxu0 0
  %4520 = vmatpush1.bf16.msra.mxu0 %v4497
  %4521 = vmatprep.subr.bf16.mxu0 0
  %4522 = vmatpush1.bf16.msra.mxu0 %v4496
  %4523 = vmatprep.subr.bf16.mxu0 0
  %4524 = vmatpush2.bf16.msra.mxu0 0
  %4525 = vmatprep.subr.bf16.mxu0 0
  %4526 = vmatpush2.bf16.msra.mxu0 0
  %4527 = vmatprep.subr.bf16.mxu0 0
  %4528 = vmatpush2.bf16.msra.mxu0 0
  %4529 = vmatprep.subr.bf16.mxu0 0
  %4530 = vmatpush2.bf16.msra.mxu0 0
  %4531 = vmatprep.subr.bf16.mxu0 0
  %4532 = vmatpush2.bf16.msra.mxu0 0
  %4533 = vmatprep.subr.bf16.mxu0 0
  %4534 = vmatpush2.bf16.msra.mxu0 0
  %4535 = vmatprep.subr.bf16.mxu0 0
  %4536 = vmatpush2.bf16.msra.mxu0 0
  %4537 = vmatprep.subr.bf16.mxu0 0
  %4538 = vmatpush2.bf16.msra.mxu0 0
  %4539 = vmatprep.mubr.bf16.mxu0 0
  %4540 = vmatmul.mubr.bf16.gmra.mxu0 %v4505
  %v4541 = vpop.f32.mrf.mxu0
  %v4542 = vadd.f32 0.0, %v4541
  %v4543 = vpop.f32.mrf.mxu0
  %v4544 = vpop.f32.mrf.mxu0
  %v4545 = vadd.f32 0.0, %v4544
  %v4546 = vpop.f32.mrf.mxu0
  %4547 = vdwg.mxu0
  %v4548 = vadd.f32 %v4462, %v4542
  %v4549 = vadd.f32 %v4465, %v4545
  %v4550 = vld [vmem:[#allocation2 + $0x30] sm:$0xff]
  %v4551 = vld [vmem:[#allocation2 + $0x38] sm:$0xff]
  %v4552 = vpack.c.bf16 %v4551, %v4550
  %s4553 = scalar_lea.vmem %s7, 96
  %v4554 = vld [vmem:[%s4553] sm:$0xf]
  %v4555 = vld [vmem:[%s4553 + $0x4] sm:$0xf]
  %v4556 = vld [vmem:[%s4553 + $0x8] sm:$0xf]
  %v4557 = vld [vmem:[%s4553 + $0xc] sm:$0xf]
  %v4558 = vld [vmem:[%s4553 + $0x10] sm:$0xf]
  %v4559 = vld [vmem:[%s4553 + $0x14] sm:$0xf]
  %v4560 = vld [vmem:[%s4553 + $0x18] sm:$0xf]
  %v4561 = vld [vmem:[%s4553 + $0x1c] sm:$0xf]
  %v4570 = vunpack.c.l.b16 %v4554
  %v4571 = vunpack.c.l.b16 %v4555
  %v4572 = vunpack.c.l.b16 %v4556
  %v4573 = vunpack.c.l.b16 %v4557
  %v4574 = vunpack.c.l.b16 %v4558
  %v4575 = vunpack.c.l.b16 %v4559
  %v4576 = vunpack.c.l.b16 %v4560
  %v4577 = vunpack.c.l.b16 %v4561
  %v4578 = vpack.c.b16 %v4571, %v4570
  %v4579 = vpack.c.b16 %v4573, %v4572
  %v4580 = vpack.c.b16 %v4575, %v4574
  %v4581 = vpack.c.b16 %v4577, %v4576
  %v4587 = vsel %vm4210, %v4552, 0
  %4589 = vmatprep.subr.bf16.mxu0 0
  %4590 = vmatpush1.bf16.msra.mxu0 0
  %4591 = vmatprep.subr.bf16.mxu0 0
  %4592 = vmatpush1.bf16.msra.mxu0 0
  %4593 = vmatprep.subr.bf16.mxu0 0
  %4594 = vmatpush1.bf16.msra.mxu0 0
  %4595 = vmatprep.subr.bf16.mxu0 0
  %4596 = vmatpush1.bf16.msra.mxu0 0
  %4597 = vmatprep.subr.bf16.mxu0 0
  %4598 = vmatpush1.bf16.msra.mxu0 %v4581
  %4599 = vmatprep.subr.bf16.mxu0 0
  %4600 = vmatpush1.bf16.msra.mxu0 %v4580
  %4601 = vmatprep.subr.bf16.mxu0 0
  %4602 = vmatpush1.bf16.msra.mxu0 %v4579
  %4603 = vmatprep.subr.bf16.mxu0 0
  %4604 = vmatpush1.bf16.msra.mxu0 %v4578
  %4605 = vmatprep.subr.bf16.mxu0 0
  %4606 = vmatpush2.bf16.msra.mxu0 0
  %4607 = vmatprep.subr.bf16.mxu0 0
  %4608 = vmatpush2.bf16.msra.mxu0 0
  %4609 = vmatprep.subr.bf16.mxu0 0
  %4610 = vmatpush2.bf16.msra.mxu0 0
  %4611 = vmatprep.subr.bf16.mxu0 0
  %4612 = vmatpush2.bf16.msra.mxu0 0
  %4613 = vmatprep.subr.bf16.mxu0 0
  %4614 = vmatpush2.bf16.msra.mxu0 0
  %4615 = vmatprep.subr.bf16.mxu0 0
  %4616 = vmatpush2.bf16.msra.mxu0 0
  %4617 = vmatprep.subr.bf16.mxu0 0
  %4618 = vmatpush2.bf16.msra.mxu0 0
  %4619 = vmatprep.subr.bf16.mxu0 0
  %4620 = vmatpush2.bf16.msra.mxu0 0
  %4621 = vmatprep.mubr.bf16.mxu0 0
  %4622 = vmatmul.mubr.bf16.gmra.mxu0 %v4587
  %v4623 = vpop.f32.mrf.mxu0
  %v4624 = vadd.f32 0.0, %v4623
  %v4625 = vpop.f32.mrf.mxu0
  %v4626 = vpop.f32.mrf.mxu0
  %v4627 = vadd.f32 0.0, %v4626
  %v4628 = vpop.f32.mrf.mxu0
  %4629 = vdwg.mxu0
  %v4630 = vadd.f32 %v4548, %v4624
  %v4631 = vadd.f32 %v4549, %v4627
  %v4632 = vld [vmem:[#allocation2 + $0x40] sm:$0xff]
  %v4633 = vld [vmem:[#allocation2 + $0x48] sm:$0xff]
  %v4634 = vpack.c.bf16 %v4633, %v4632
  %s4635 = scalar_lea.vmem %s7, 128
  %v4636 = vld [vmem:[%s4635] sm:$0xf]
  %v4637 = vld [vmem:[%s4635 + $0x4] sm:$0xf]
  %v4638 = vld [vmem:[%s4635 + $0x8] sm:$0xf]
  %v4639 = vld [vmem:[%s4635 + $0xc] sm:$0xf]
  %v4640 = vld [vmem:[%s4635 + $0x10] sm:$0xf]
  %v4641 = vld [vmem:[%s4635 + $0x14] sm:$0xf]
  %v4642 = vld [vmem:[%s4635 + $0x18] sm:$0xf]
  %v4643 = vld [vmem:[%s4635 + $0x1c] sm:$0xf]
  %v4652 = vunpack.c.l.b16 %v4636
  %v4653 = vunpack.c.l.b16 %v4637
  %v4654 = vunpack.c.l.b16 %v4638
  %v4655 = vunpack.c.l.b16 %v4639
  %v4656 = vunpack.c.l.b16 %v4640
  %v4657 = vunpack.c.l.b16 %v4641
  %v4658 = vunpack.c.l.b16 %v4642
  %v4659 = vunpack.c.l.b16 %v4643
  %v4660 = vpack.c.b16 %v4653, %v4652
  %v4661 = vpack.c.b16 %v4655, %v4654
  %v4662 = vpack.c.b16 %v4657, %v4656
  %v4663 = vpack.c.b16 %v4659, %v4658
  %v4669 = vsel %vm4210, %v4634, 0
  %4671 = vmatprep.subr.bf16.mxu0 0
  %4672 = vmatpush1.bf16.msra.mxu0 0
  %4673 = vmatprep.subr.bf16.mxu0 0
  %4674 = vmatpush1.bf16.msra.mxu0 0
  %4675 = vmatprep.subr.bf16.mxu0 0
  %4676 = vmatpush1.bf16.msra.mxu0 0
  %4677 = vmatprep.subr.bf16.mxu0 0
  %4678 = vmatpush1.bf16.msra.mxu0 0
  %4679 = vmatprep.subr.bf16.mxu0 0
  %4680 = vmatpush1.bf16.msra.mxu0 %v4663
  %4681 = vmatprep.subr.bf16.mxu0 0
  %4682 = vmatpush1.bf16.msra.mxu0 %v4662
  %4683 = vmatprep.subr.bf16.mxu0 0
  %4684 = vmatpush1.bf16.msra.mxu0 %v4661
  %4685 = vmatprep.subr.bf16.mxu0 0
  %4686 = vmatpush1.bf16.msra.mxu0 %v4660
  %4687 = vmatprep.subr.bf16.mxu0 0
  %4688 = vmatpush2.bf16.msra.mxu0 0
  %4689 = vmatprep.subr.bf16.mxu0 0
  %4690 = vmatpush2.bf16.msra.mxu0 0
  %4691 = vmatprep.subr.bf16.mxu0 0
  %4692 = vmatpush2.bf16.msra.mxu0 0
  %4693 = vmatprep.subr.bf16.mxu0 0
  %4694 = vmatpush2.bf16.msra.mxu0 0
  %4695 = vmatprep.subr.bf16.mxu0 0
  %4696 = vmatpush2.bf16.msra.mxu0 0
  %4697 = vmatprep.subr.bf16.mxu0 0
  %4698 = vmatpush2.bf16.msra.mxu0 0
  %4699 = vmatprep.subr.bf16.mxu0 0
  %4700 = vmatpush2.bf16.msra.mxu0 0
  %4701 = vmatprep.subr.bf16.mxu0 0
  %4702 = vmatpush2.bf16.msra.mxu0 0
  %4703 = vmatprep.mubr.bf16.mxu0 0
  %4704 = vmatmul.mubr.bf16.gmra.mxu0 %v4669
  %v4705 = vpop.f32.mrf.mxu0
  %v4706 = vadd.f32 0.0, %v4705
  %v4707 = vpop.f32.mrf.mxu0
  %v4708 = vpop.f32.mrf.mxu0
  %v4709 = vadd.f32 0.0, %v4708
  %v4710 = vpop.f32.mrf.mxu0
  %4711 = vdwg.mxu0
  %v4712 = vadd.f32 %v4630, %v4706
  %v4713 = vadd.f32 %v4631, %v4709
  %v4714 = vld [vmem:[#allocation2 + $0x50] sm:$0xff]
  %v4715 = vld [vmem:[#allocation2 + $0x58] sm:$0xff]
  %v4716 = vpack.c.bf16 %v4715, %v4714
  %s4717 = scalar_lea.vmem %s7, 160
  %v4718 = vld [vmem:[%s4717] sm:$0xf]
  %v4719 = vld [vmem:[%s4717 + $0x4] sm:$0xf]
  %v4720 = vld [vmem:[%s4717 + $0x8] sm:$0xf]
  %v4721 = vld [vmem:[%s4717 + $0xc] sm:$0xf]
  %v4722 = vld [vmem:[%s4717 + $0x10] sm:$0xf]
  %v4723 = vld [vmem:[%s4717 + $0x14] sm:$0xf]
  %v4724 = vld [vmem:[%s4717 + $0x18] sm:$0xf]
  %v4725 = vld [vmem:[%s4717 + $0x1c] sm:$0xf]
  %v4734 = vunpack.c.l.b16 %v4718
  %v4735 = vunpack.c.l.b16 %v4719
  %v4736 = vunpack.c.l.b16 %v4720
  %v4737 = vunpack.c.l.b16 %v4721
  %v4738 = vunpack.c.l.b16 %v4722
  %v4739 = vunpack.c.l.b16 %v4723
  %v4740 = vunpack.c.l.b16 %v4724
  %v4741 = vunpack.c.l.b16 %v4725
  %v4742 = vpack.c.b16 %v4735, %v4734
  %v4743 = vpack.c.b16 %v4737, %v4736
  %v4744 = vpack.c.b16 %v4739, %v4738
  %v4745 = vpack.c.b16 %v4741, %v4740
  %v4751 = vsel %vm4210, %v4716, 0
  %4753 = vmatprep.subr.bf16.mxu0 0
  %4754 = vmatpush1.bf16.msra.mxu0 0
  %4755 = vmatprep.subr.bf16.mxu0 0
  %4756 = vmatpush1.bf16.msra.mxu0 0
  %4757 = vmatprep.subr.bf16.mxu0 0
  %4758 = vmatpush1.bf16.msra.mxu0 0
  %4759 = vmatprep.subr.bf16.mxu0 0
  %4760 = vmatpush1.bf16.msra.mxu0 0
  %4761 = vmatprep.subr.bf16.mxu0 0
  %4762 = vmatpush1.bf16.msra.mxu0 %v4745
  %4763 = vmatprep.subr.bf16.mxu0 0
  %4764 = vmatpush1.bf16.msra.mxu0 %v4744
  %4765 = vmatprep.subr.bf16.mxu0 0
  %4766 = vmatpush1.bf16.msra.mxu0 %v4743
  %4767 = vmatprep.subr.bf16.mxu0 0
  %4768 = vmatpush1.bf16.msra.mxu0 %v4742
  %4769 = vmatprep.subr.bf16.mxu0 0
  %4770 = vmatpush2.bf16.msra.mxu0 0
  %4771 = vmatprep.subr.bf16.mxu0 0
  %4772 = vmatpush2.bf16.msra.mxu0 0
  %4773 = vmatprep.subr.bf16.mxu0 0
  %4774 = vmatpush2.bf16.msra.mxu0 0
  %4775 = vmatprep.subr.bf16.mxu0 0
  %4776 = vmatpush2.bf16.msra.mxu0 0
  %4777 = vmatprep.subr.bf16.mxu0 0
  %4778 = vmatpush2.bf16.msra.mxu0 0
  %4779 = vmatprep.subr.bf16.mxu0 0
  %4780 = vmatpush2.bf16.msra.mxu0 0
  %4781 = vmatprep.subr.bf16.mxu0 0
  %4782 = vmatpush2.bf16.msra.mxu0 0
  %4783 = vmatprep.subr.bf16.mxu0 0
  %4784 = vmatpush2.bf16.msra.mxu0 0
  %4785 = vmatprep.mubr.bf16.mxu0 0
  %4786 = vmatmul.mubr.bf16.gmra.mxu0 %v4751
  %v4787 = vpop.f32.mrf.mxu0
  %v4788 = vadd.f32 0.0, %v4787
  %v4789 = vpop.f32.mrf.mxu0
  %v4790 = vpop.f32.mrf.mxu0
  %v4791 = vadd.f32 0.0, %v4790
  %v4792 = vpop.f32.mrf.mxu0
  %4793 = vdwg.mxu0
  %v4794 = vadd.f32 %v4712, %v4788
  %v4795 = vadd.f32 %v4713, %v4791
  %v4796 = vld [vmem:[#allocation2 + $0x60] sm:$0xff]
  %v4797 = vld [vmem:[#allocation2 + $0x68] sm:$0xff]
  %v4798 = vpack.c.bf16 %v4797, %v4796
  %s4799 = scalar_lea.vmem %s7, 192
  %v4800 = vld [vmem:[%s4799] sm:$0xf]
  %v4801 = vld [vmem:[%s4799 + $0x4] sm:$0xf]
  %v4802 = vld [vmem:[%s4799 + $0x8] sm:$0xf]
  %v4803 = vld [vmem:[%s4799 + $0xc] sm:$0xf]
  %v4804 = vld [vmem:[%s4799 + $0x10] sm:$0xf]
  %v4805 = vld [vmem:[%s4799 + $0x14] sm:$0xf]
  %v4806 = vld [vmem:[%s4799 + $0x18] sm:$0xf]
  %v4807 = vld [vmem:[%s4799 + $0x1c] sm:$0xf]
  %v4816 = vunpack.c.l.b16 %v4800
  %v4817 = vunpack.c.l.b16 %v4801
  %v4818 = vunpack.c.l.b16 %v4802
  %v4819 = vunpack.c.l.b16 %v4803
  %v4820 = vunpack.c.l.b16 %v4804
  %v4821 = vunpack.c.l.b16 %v4805
  %v4822 = vunpack.c.l.b16 %v4806
  %v4823 = vunpack.c.l.b16 %v4807
  %v4824 = vpack.c.b16 %v4817, %v4816
  %v4825 = vpack.c.b16 %v4819, %v4818
  %v4826 = vpack.c.b16 %v4821, %v4820
  %v4827 = vpack.c.b16 %v4823, %v4822
  %v4833 = vsel %vm4210, %v4798, 0
  %4835 = vmatprep.subr.bf16.mxu0 0
  %4836 = vmatpush1.bf16.msra.mxu0 0
  %4837 = vmatprep.subr.bf16.mxu0 0
  %4838 = vmatpush1.bf16.msra.mxu0 0
  %4839 = vmatprep.subr.bf16.mxu0 0
  %4840 = vmatpush1.bf16.msra.mxu0 0
  %4841 = vmatprep.subr.bf16.mxu0 0
  %4842 = vmatpush1.bf16.msra.mxu0 0
  %4843 = vmatprep.subr.bf16.mxu0 0
  %4844 = vmatpush1.bf16.msra.mxu0 %v4827
  %4845 = vmatprep.subr.bf16.mxu0 0
  %4846 = vmatpush1.bf16.msra.mxu0 %v4826
  %4847 = vmatprep.subr.bf16.mxu0 0
  %4848 = vmatpush1.bf16.msra.mxu0 %v4825
  %4849 = vmatprep.subr.bf16.mxu0 0
  %4850 = vmatpush1.bf16.msra.mxu0 %v4824
  %4851 = vmatprep.subr.bf16.mxu0 0
  %4852 = vmatpush2.bf16.msra.mxu0 0
  %4853 = vmatprep.subr.bf16.mxu0 0
  %4854 = vmatpush2.bf16.msra.mxu0 0
  %4855 = vmatprep.subr.bf16.mxu0 0
  %4856 = vmatpush2.bf16.msra.mxu0 0
  %4857 = vmatprep.subr.bf16.mxu0 0
  %4858 = vmatpush2.bf16.msra.mxu0 0
  %4859 = vmatprep.subr.bf16.mxu0 0
  %4860 = vmatpush2.bf16.msra.mxu0 0
  %4861 = vmatprep.subr.bf16.mxu0 0
  %4862 = vmatpush2.bf16.msra.mxu0 0
  %4863 = vmatprep.subr.bf16.mxu0 0
  %4864 = vmatpush2.bf16.msra.mxu0 0
  %4865 = vmatprep.subr.bf16.mxu0 0
  %4866 = vmatpush2.bf16.msra.mxu0 0
  %4867 = vmatprep.mubr.bf16.mxu0 0
  %4868 = vmatmul.mubr.bf16.gmra.mxu0 %v4833
  %v4869 = vpop.f32.mrf.mxu0
  %v4870 = vadd.f32 0.0, %v4869
  %v4871 = vpop.f32.mrf.mxu0
  %v4872 = vpop.f32.mrf.mxu0
  %v4873 = vadd.f32 0.0, %v4872
  %v4874 = vpop.f32.mrf.mxu0
  %4875 = vdwg.mxu0
  %v4876 = vadd.f32 %v4794, %v4870
  %v4877 = vadd.f32 %v4795, %v4873
  %v4878 = vld [vmem:[#allocation2 + $0x70] sm:$0xff]
  %v4879 = vld [vmem:[#allocation2 + $0x78] sm:$0xff]
  %v4880 = vpack.c.bf16 %v4879, %v4878
  %s4881 = scalar_lea.vmem %s7, 224
  %v4882 = vld [vmem:[%s4881] sm:$0xf]
  %v4883 = vld [vmem:[%s4881 + $0x4] sm:$0xf]
  %v4884 = vld [vmem:[%s4881 + $0x8] sm:$0xf]
  %v4885 = vld [vmem:[%s4881 + $0xc] sm:$0xf]
  %v4886 = vld [vmem:[%s4881 + $0x10] sm:$0xf]
  %v4887 = vld [vmem:[%s4881 + $0x14] sm:$0xf]
  %v4888 = vld [vmem:[%s4881 + $0x18] sm:$0xf]
  %v4889 = vld [vmem:[%s4881 + $0x1c] sm:$0xf]
  %v4898 = vunpack.c.l.b16 %v4882
  %v4899 = vunpack.c.l.b16 %v4883
  %v4900 = vunpack.c.l.b16 %v4884
  %v4901 = vunpack.c.l.b16 %v4885
  %v4902 = vunpack.c.l.b16 %v4886
  %v4903 = vunpack.c.l.b16 %v4887
  %v4904 = vunpack.c.l.b16 %v4888
  %v4905 = vunpack.c.l.b16 %v4889
  %v4906 = vpack.c.b16 %v4899, %v4898
  %v4907 = vpack.c.b16 %v4901, %v4900
  %v4908 = vpack.c.b16 %v4903, %v4902
  %v4909 = vpack.c.b16 %v4905, %v4904
  %v4915 = vsel %vm4210, %v4880, 0
  %4917 = vmatprep.subr.bf16.mxu0 0
  %4918 = vmatpush1.bf16.msra.mxu0 0
  %4919 = vmatprep.subr.bf16.mxu0 0
  %4920 = vmatpush1.bf16.msra.mxu0 0
  %4921 = vmatprep.subr.bf16.mxu0 0
  %4922 = vmatpush1.bf16.msra.mxu0 0
  %4923 = vmatprep.subr.bf16.mxu0 0
  %4924 = vmatpush1.bf16.msra.mxu0 0
  %4925 = vmatprep.subr.bf16.mxu0 0
  %4926 = vmatpush1.bf16.msra.mxu0 %v4909
  %4927 = vmatprep.subr.bf16.mxu0 0
  %4928 = vmatpush1.bf16.msra.mxu0 %v4908
  %4929 = vmatprep.subr.bf16.mxu0 0
  %4930 = vmatpush1.bf16.msra.mxu0 %v4907
  %4931 = vmatprep.subr.bf16.mxu0 0
  %4932 = vmatpush1.bf16.msra.mxu0 %v4906
  %4933 = vmatprep.subr.bf16.mxu0 0
  %4934 = vmatpush2.bf16.msra.mxu0 0
  %4935 = vmatprep.subr.bf16.mxu0 0
  %4936 = vmatpush2.bf16.msra.mxu0 0
  %4937 = vmatprep.subr.bf16.mxu0 0
  %4938 = vmatpush2.bf16.msra.mxu0 0
  %4939 = vmatprep.subr.bf16.mxu0 0
  %4940 = vmatpush2.bf16.msra.mxu0 0
  %4941 = vmatprep.subr.bf16.mxu0 0
  %4942 = vmatpush2.bf16.msra.mxu0 0
  %4943 = vmatprep.subr.bf16.mxu0 0
  %4944 = vmatpush2.bf16.msra.mxu0 0
  %4945 = vmatprep.subr.bf16.mxu0 0
  %4946 = vmatpush2.bf16.msra.mxu0 0
  %4947 = vmatprep.subr.bf16.mxu0 0
  %4948 = vmatpush2.bf16.msra.mxu0 0
  %4949 = vmatprep.mubr.bf16.mxu0 0
  %4950 = vmatmul.mubr.bf16.gmra.mxu0 %v4915
  %v4951 = vpop.f32.mrf.mxu0
  %v4952 = vadd.f32 0.0, %v4951
  %v4953 = vpop.f32.mrf.mxu0
  %v4954 = vpop.f32.mrf.mxu0
  %v4955 = vadd.f32 0.0, %v4954
  %v4956 = vpop.f32.mrf.mxu0
  %4957 = vdwg.mxu0
  %v4958 = vadd.f32 %v4876, %v4952
  %v4959 = vadd.f32 %v4877, %v4955
  %v4960 = vld [vmem:[#allocation2 + $0x80] sm:$0xff]
  %v4961 = vld [vmem:[#allocation2 + $0x88] sm:$0xff]
  %v4962 = vpack.c.bf16 %v4961, %v4960
  %s4963 = scalar_lea.vmem %s7, 256
  %v4964 = vld [vmem:[%s4963] sm:$0xf]
  %v4965 = vld [vmem:[%s4963 + $0x4] sm:$0xf]
  %v4966 = vld [vmem:[%s4963 + $0x8] sm:$0xf]
  %v4967 = vld [vmem:[%s4963 + $0xc] sm:$0xf]
  %v4968 = vld [vmem:[%s4963 + $0x10] sm:$0xf]
  %v4969 = vld [vmem:[%s4963 + $0x14] sm:$0xf]
  %v4970 = vld [vmem:[%s4963 + $0x18] sm:$0xf]
  %v4971 = vld [vmem:[%s4963 + $0x1c] sm:$0xf]
  %v4980 = vunpack.c.l.b16 %v4964
  %v4981 = vunpack.c.l.b16 %v4965
  %v4982 = vunpack.c.l.b16 %v4966
  %v4983 = vunpack.c.l.b16 %v4967
  %v4984 = vunpack.c.l.b16 %v4968
  %v4985 = vunpack.c.l.b16 %v4969
  %v4986 = vunpack.c.l.b16 %v4970
  %v4987 = vunpack.c.l.b16 %v4971
  %v4988 = vpack.c.b16 %v4981, %v4980
  %v4989 = vpack.c.b16 %v4983, %v4982
  %v4990 = vpack.c.b16 %v4985, %v4984
  %v4991 = vpack.c.b16 %v4987, %v4986
  %v4997 = vsel %vm4210, %v4962, 0
  %4999 = vmatprep.subr.bf16.mxu0 0
  %5000 = vmatpush1.bf16.msra.mxu0 0
  %5001 = vmatprep.subr.bf16.mxu0 0
  %5002 = vmatpush1.bf16.msra.mxu0 0
  %5003 = vmatprep.subr.bf16.mxu0 0
  %5004 = vmatpush1.bf16.msra.mxu0 0
  %5005 = vmatprep.subr.bf16.mxu0 0
  %5006 = vmatpush1.bf16.msra.mxu0 0
  %5007 = vmatprep.subr.bf16.mxu0 0
  %5008 = vmatpush1.bf16.msra.mxu0 %v4991
  %5009 = vmatprep.subr.bf16.mxu0 0
  %5010 = vmatpush1.bf16.msra.mxu0 %v4990
  %5011 = vmatprep.subr.bf16.mxu0 0
  %5012 = vmatpush1.bf16.msra.mxu0 %v4989
  %5013 = vmatprep.subr.bf16.mxu0 0
  %5014 = vmatpush1.bf16.msra.mxu0 %v4988
  %5015 = vmatprep.subr.bf16.mxu0 0
  %5016 = vmatpush2.bf16.msra.mxu0 0
  %5017 = vmatprep.subr.bf16.mxu0 0
  %5018 = vmatpush2.bf16.msra.mxu0 0
  %5019 = vmatprep.subr.bf16.mxu0 0
  %5020 = vmatpush2.bf16.msra.mxu0 0
  %5021 = vmatprep.subr.bf16.mxu0 0
  %5022 = vmatpush2.bf16.msra.mxu0 0
  %5023 = vmatprep.subr.bf16.mxu0 0
  %5024 = vmatpush2.bf16.msra.mxu0 0
  %5025 = vmatprep.subr.bf16.mxu0 0
  %5026 = vmatpush2.bf16.msra.mxu0 0
  %5027 = vmatprep.subr.bf16.mxu0 0
  %5028 = vmatpush2.bf16.msra.mxu0 0
  %5029 = vmatprep.subr.bf16.mxu0 0
  %5030 = vmatpush2.bf16.msra.mxu0 0
  %5031 = vmatprep.mubr.bf16.mxu0 0
  %5032 = vmatmul.mubr.bf16.gmra.mxu0 %v4997
  %v5033 = vpop.f32.mrf.mxu0
  %v5034 = vadd.f32 0.0, %v5033
  %v5035 = vpop.f32.mrf.mxu0
  %v5036 = vpop.f32.mrf.mxu0
  %v5037 = vadd.f32 0.0, %v5036
  %v5038 = vpop.f32.mrf.mxu0
  %5039 = vdwg.mxu0
  %v5040 = vadd.f32 %v4958, %v5034
  %v5041 = vadd.f32 %v4959, %v5037
  %v5042 = vld [vmem:[#allocation2 + $0x90] sm:$0xff]
  %v5043 = vld [vmem:[#allocation2 + $0x98] sm:$0xff]
  %v5044 = vpack.c.bf16 %v5043, %v5042
  %s5045 = scalar_lea.vmem %s7, 288
  %v5046 = vld [vmem:[%s5045] sm:$0xf]
  %v5047 = vld [vmem:[%s5045 + $0x4] sm:$0xf]
  %v5048 = vld [vmem:[%s5045 + $0x8] sm:$0xf]
  %v5049 = vld [vmem:[%s5045 + $0xc] sm:$0xf]
  %v5050 = vld [vmem:[%s5045 + $0x10] sm:$0xf]
  %v5051 = vld [vmem:[%s5045 + $0x14] sm:$0xf]
  %v5052 = vld [vmem:[%s5045 + $0x18] sm:$0xf]
  %v5053 = vld [vmem:[%s5045 + $0x1c] sm:$0xf]
  %v5062 = vunpack.c.l.b16 %v5046
  %v5063 = vunpack.c.l.b16 %v5047
  %v5064 = vunpack.c.l.b16 %v5048
  %v5065 = vunpack.c.l.b16 %v5049
  %v5066 = vunpack.c.l.b16 %v5050
  %v5067 = vunpack.c.l.b16 %v5051
  %v5068 = vunpack.c.l.b16 %v5052
  %v5069 = vunpack.c.l.b16 %v5053
  %v5070 = vpack.c.b16 %v5063, %v5062
  %v5071 = vpack.c.b16 %v5065, %v5064
  %v5072 = vpack.c.b16 %v5067, %v5066
  %v5073 = vpack.c.b16 %v5069, %v5068
  %v5079 = vsel %vm4210, %v5044, 0
  %5081 = vmatprep.subr.bf16.mxu0 0
  %5082 = vmatpush1.bf16.msra.mxu0 0
  %5083 = vmatprep.subr.bf16.mxu0 0
  %5084 = vmatpush1.bf16.msra.mxu0 0
  %5085 = vmatprep.subr.bf16.mxu0 0
  %5086 = vmatpush1.bf16.msra.mxu0 0
  %5087 = vmatprep.subr.bf16.mxu0 0
  %5088 = vmatpush1.bf16.msra.mxu0 0
  %5089 = vmatprep.subr.bf16.mxu0 0
  %5090 = vmatpush1.bf16.msra.mxu0 %v5073
  %5091 = vmatprep.subr.bf16.mxu0 0
  %5092 = vmatpush1.bf16.msra.mxu0 %v5072
  %5093 = vmatprep.subr.bf16.mxu0 0
  %5094 = vmatpush1.bf16.msra.mxu0 %v5071
  %5095 = vmatprep.subr.bf16.mxu0 0
  %5096 = vmatpush1.bf16.msra.mxu0 %v5070
  %5097 = vmatprep.subr.bf16.mxu0 0
  %5098 = vmatpush2.bf16.msra.mxu0 0
  %5099 = vmatprep.subr.bf16.mxu0 0
  %5100 = vmatpush2.bf16.msra.mxu0 0
  %5101 = vmatprep.subr.bf16.mxu0 0
  %5102 = vmatpush2.bf16.msra.mxu0 0
  %5103 = vmatprep.subr.bf16.mxu0 0
  %5104 = vmatpush2.bf16.msra.mxu0 0
  %5105 = vmatprep.subr.bf16.mxu0 0
  %5106 = vmatpush2.bf16.msra.mxu0 0
  %5107 = vmatprep.subr.bf16.mxu0 0
  %5108 = vmatpush2.bf16.msra.mxu0 0
  %5109 = vmatprep.subr.bf16.mxu0 0
  %5110 = vmatpush2.bf16.msra.mxu0 0
  %5111 = vmatprep.subr.bf16.mxu0 0
  %5112 = vmatpush2.bf16.msra.mxu0 0
  %5113 = vmatprep.mubr.bf16.mxu0 0
  %5114 = vmatmul.mubr.bf16.gmra.mxu0 %v5079
  %v5115 = vpop.f32.mrf.mxu0
  %v5116 = vadd.f32 0.0, %v5115
  %v5117 = vpop.f32.mrf.mxu0
  %v5118 = vpop.f32.mrf.mxu0
  %v5119 = vadd.f32 0.0, %v5118
  %v5120 = vpop.f32.mrf.mxu0
  %5121 = vdwg.mxu0
  %v5122 = vadd.f32 %v5040, %v5116
  %v5123 = vadd.f32 %v5041, %v5119
  %v5124 = vld [vmem:[#allocation2 + $0xa0] sm:$0xff]
  %v5125 = vld [vmem:[#allocation2 + $0xa8] sm:$0xff]
  %v5126 = vpack.c.bf16 %v5125, %v5124
  %s5127 = scalar_lea.vmem %s7, 320
  %v5128 = vld [vmem:[%s5127] sm:$0xf]
  %v5129 = vld [vmem:[%s5127 + $0x4] sm:$0xf]
  %v5130 = vld [vmem:[%s5127 + $0x8] sm:$0xf]
  %v5131 = vld [vmem:[%s5127 + $0xc] sm:$0xf]
  %v5132 = vld [vmem:[%s5127 + $0x10] sm:$0xf]
  %v5133 = vld [vmem:[%s5127 + $0x14] sm:$0xf]
  %v5134 = vld [vmem:[%s5127 + $0x18] sm:$0xf]
  %v5135 = vld [vmem:[%s5127 + $0x1c] sm:$0xf]
  %v5144 = vunpack.c.l.b16 %v5128
  %v5145 = vunpack.c.l.b16 %v5129
  %v5146 = vunpack.c.l.b16 %v5130
  %v5147 = vunpack.c.l.b16 %v5131
  %v5148 = vunpack.c.l.b16 %v5132
  %v5149 = vunpack.c.l.b16 %v5133
  %v5150 = vunpack.c.l.b16 %v5134
  %v5151 = vunpack.c.l.b16 %v5135
  %v5152 = vpack.c.b16 %v5145, %v5144
  %v5153 = vpack.c.b16 %v5147, %v5146
  %v5154 = vpack.c.b16 %v5149, %v5148
  %v5155 = vpack.c.b16 %v5151, %v5150
  %v5161 = vsel %vm4210, %v5126, 0
  %5163 = vmatprep.subr.bf16.mxu0 0
  %5164 = vmatpush1.bf16.msra.mxu0 0
  %5165 = vmatprep.subr.bf16.mxu0 0
  %5166 = vmatpush1.bf16.msra.mxu0 0
  %5167 = vmatprep.subr.bf16.mxu0 0
  %5168 = vmatpush1.bf16.msra.mxu0 0
  %5169 = vmatprep.subr.bf16.mxu0 0
  %5170 = vmatpush1.bf16.msra.mxu0 0
  %5171 = vmatprep.subr.bf16.mxu0 0
  %5172 = vmatpush1.bf16.msra.mxu0 %v5155
  %5173 = vmatprep.subr.bf16.mxu0 0
  %5174 = vmatpush1.bf16.msra.mxu0 %v5154
  %5175 = vmatprep.subr.bf16.mxu0 0
  %5176 = vmatpush1.bf16.msra.mxu0 %v5153
  %5177 = vmatprep.subr.bf16.mxu0 0
  %5178 = vmatpush1.bf16.msra.mxu0 %v5152
  %5179 = vmatprep.subr.bf16.mxu0 0
  %5180 = vmatpush2.bf16.msra.mxu0 0
  %5181 = vmatprep.subr.bf16.mxu0 0
  %5182 = vmatpush2.bf16.msra.mxu0 0
  %5183 = vmatprep.subr.bf16.mxu0 0
  %5184 = vmatpush2.bf16.msra.mxu0 0
  %5185 = vmatprep.subr.bf16.mxu0 0
  %5186 = vmatpush2.bf16.msra.mxu0 0
  %5187 = vmatprep.subr.bf16.mxu0 0
  %5188 = vmatpush2.bf16.msra.mxu0 0
  %5189 = vmatprep.subr.bf16.mxu0 0
  %5190 = vmatpush2.bf16.msra.mxu0 0
  %5191 = vmatprep.subr.bf16.mxu0 0
  %5192 = vmatpush2.bf16.msra.mxu0 0
  %5193 = vmatprep.subr.bf16.mxu0 0
  %5194 = vmatpush2.bf16.msra.mxu0 0
  %5195 = vmatprep.mubr.bf16.mxu0 0
  %5196 = vmatmul.mubr.bf16.gmra.mxu0 %v5161
  %v5197 = vpop.f32.mrf.mxu0
  %v5198 = vadd.f32 0.0, %v5197
  %v5199 = vpop.f32.mrf.mxu0
  %v5200 = vpop.f32.mrf.mxu0
  %v5201 = vadd.f32 0.0, %v5200
  %v5202 = vpop.f32.mrf.mxu0
  %5203 = vdwg.mxu0
  %v5204 = vadd.f32 %v5122, %v5198
  %v5205 = vadd.f32 %v5123, %v5201
  %v5206 = vld [vmem:[#allocation2 + $0xb0] sm:$0xff]
  %v5207 = vld [vmem:[#allocation2 + $0xb8] sm:$0xff]
  %v5208 = vpack.c.bf16 %v5207, %v5206
  %s5209 = scalar_lea.vmem %s7, 352
  %v5210 = vld [vmem:[%s5209] sm:$0xf]
  %v5211 = vld [vmem:[%s5209 + $0x4] sm:$0xf]
  %v5212 = vld [vmem:[%s5209 + $0x8] sm:$0xf]
  %v5213 = vld [vmem:[%s5209 + $0xc] sm:$0xf]
  %v5214 = vld [vmem:[%s5209 + $0x10] sm:$0xf]
  %v5215 = vld [vmem:[%s5209 + $0x14] sm:$0xf]
  %v5216 = vld [vmem:[%s5209 + $0x18] sm:$0xf]
  %v5217 = vld [vmem:[%s5209 + $0x1c] sm:$0xf]
  %v5226 = vunpack.c.l.b16 %v5210
  %v5227 = vunpack.c.l.b16 %v5211
  %v5228 = vunpack.c.l.b16 %v5212
  %v5229 = vunpack.c.l.b16 %v5213
  %v5230 = vunpack.c.l.b16 %v5214
  %v5231 = vunpack.c.l.b16 %v5215
  %v5232 = vunpack.c.l.b16 %v5216
  %v5233 = vunpack.c.l.b16 %v5217
  %v5234 = vpack.c.b16 %v5227, %v5226
  %v5235 = vpack.c.b16 %v5229, %v5228
  %v5236 = vpack.c.b16 %v5231, %v5230
  %v5237 = vpack.c.b16 %v5233, %v5232
  %v5243 = vsel %vm4210, %v5208, 0
  %5245 = vmatprep.subr.bf16.mxu0 0
  %5246 = vmatpush1.bf16.msra.mxu0 0
  %5247 = vmatprep.subr.bf16.mxu0 0
  %5248 = vmatpush1.bf16.msra.mxu0 0
  %5249 = vmatprep.subr.bf16.mxu0 0
  %5250 = vmatpush1.bf16.msra.mxu0 0
  %5251 = vmatprep.subr.bf16.mxu0 0
  %5252 = vmatpush1.bf16.msra.mxu0 0
  %5253 = vmatprep.subr.bf16.mxu0 0
  %5254 = vmatpush1.bf16.msra.mxu0 %v5237
  %5255 = vmatprep.subr.bf16.mxu0 0
  %5256 = vmatpush1.bf16.msra.mxu0 %v5236
  %5257 = vmatprep.subr.bf16.mxu0 0
  %5258 = vmatpush1.bf16.msra.mxu0 %v5235
  %5259 = vmatprep.subr.bf16.mxu0 0
  %5260 = vmatpush1.bf16.msra.mxu0 %v5234
  %5261 = vmatprep.subr.bf16.mxu0 0
  %5262 = vmatpush2.bf16.msra.mxu0 0
  %5263 = vmatprep.subr.bf16.mxu0 0
  %5264 = vmatpush2.bf16.msra.mxu0 0
  %5265 = vmatprep.subr.bf16.mxu0 0
  %5266 = vmatpush2.bf16.msra.mxu0 0
  %5267 = vmatprep.subr.bf16.mxu0 0
  %5268 = vmatpush2.bf16.msra.mxu0 0
  %5269 = vmatprep.subr.bf16.mxu0 0
  %5270 = vmatpush2.bf16.msra.mxu0 0
  %5271 = vmatprep.subr.bf16.mxu0 0
  %5272 = vmatpush2.bf16.msra.mxu0 0
  %5273 = vmatprep.subr.bf16.mxu0 0
  %5274 = vmatpush2.bf16.msra.mxu0 0
  %5275 = vmatprep.subr.bf16.mxu0 0
  %5276 = vmatpush2.bf16.msra.mxu0 0
  %5277 = vmatprep.mubr.bf16.mxu0 0
  %5278 = vmatmul.mubr.bf16.gmra.mxu0 %v5243
  %v5279 = vpop.f32.mrf.mxu0
  %v5280 = vadd.f32 0.0, %v5279
  %v5281 = vpop.f32.mrf.mxu0
  %v5282 = vpop.f32.mrf.mxu0
  %v5283 = vadd.f32 0.0, %v5282
  %v5284 = vpop.f32.mrf.mxu0
  %5285 = vdwg.mxu0
  %v5286 = vadd.f32 %v5204, %v5280
  %v5287 = vadd.f32 %v5205, %v5283
  %v5288 = vld [vmem:[#allocation2 + $0xc0] sm:$0xff]
  %v5289 = vld [vmem:[#allocation2 + $0xc8] sm:$0xff]
  %v5290 = vpack.c.bf16 %v5289, %v5288
  %s5291 = scalar_lea.vmem %s7, 384
  %v5292 = vld [vmem:[%s5291] sm:$0xf]
  %v5293 = vld [vmem:[%s5291 + $0x4] sm:$0xf]
  %v5294 = vld [vmem:[%s5291 + $0x8] sm:$0xf]
  %v5295 = vld [vmem:[%s5291 + $0xc] sm:$0xf]
  %v5296 = vld [vmem:[%s5291 + $0x10] sm:$0xf]
  %v5297 = vld [vmem:[%s5291 + $0x14] sm:$0xf]
  %v5298 = vld [vmem:[%s5291 + $0x18] sm:$0xf]
  %v5299 = vld [vmem:[%s5291 + $0x1c] sm:$0xf]
  %v5308 = vunpack.c.l.b16 %v5292
  %v5309 = vunpack.c.l.b16 %v5293
  %v5310 = vunpack.c.l.b16 %v5294
  %v5311 = vunpack.c.l.b16 %v5295
  %v5312 = vunpack.c.l.b16 %v5296
  %v5313 = vunpack.c.l.b16 %v5297
  %v5314 = vunpack.c.l.b16 %v5298
  %v5315 = vunpack.c.l.b16 %v5299
  %v5316 = vpack.c.b16 %v5309, %v5308
  %v5317 = vpack.c.b16 %v5311, %v5310
  %v5318 = vpack.c.b16 %v5313, %v5312
  %v5319 = vpack.c.b16 %v5315, %v5314
  %v5325 = vsel %vm4210, %v5290, 0
  %5327 = vmatprep.subr.bf16.mxu0 0
  %5328 = vmatpush1.bf16.msra.mxu0 0
  %5329 = vmatprep.subr.bf16.mxu0 0
  %5330 = vmatpush1.bf16.msra.mxu0 0
  %5331 = vmatprep.subr.bf16.mxu0 0
  %5332 = vmatpush1.bf16.msra.mxu0 0
  %5333 = vmatprep.subr.bf16.mxu0 0
  %5334 = vmatpush1.bf16.msra.mxu0 0
  %5335 = vmatprep.subr.bf16.mxu0 0
  %5336 = vmatpush1.bf16.msra.mxu0 %v5319
  %5337 = vmatprep.subr.bf16.mxu0 0
  %5338 = vmatpush1.bf16.msra.mxu0 %v5318
  %5339 = vmatprep.subr.bf16.mxu0 0
  %5340 = vmatpush1.bf16.msra.mxu0 %v5317
  %5341 = vmatprep.subr.bf16.mxu0 0
  %5342 = vmatpush1.bf16.msra.mxu0 %v5316
  %5343 = vmatprep.subr.bf16.mxu0 0
  %5344 = vmatpush2.bf16.msra.mxu0 0
  %5345 = vmatprep.subr.bf16.mxu0 0
  %5346 = vmatpush2.bf16.msra.mxu0 0
  %5347 = vmatprep.subr.bf16.mxu0 0
  %5348 = vmatpush2.bf16.msra.mxu0 0
  %5349 = vmatprep.subr.bf16.mxu0 0
  %5350 = vmatpush2.bf16.msra.mxu0 0
  %5351 = vmatprep.subr.bf16.mxu0 0
  %5352 = vmatpush2.bf16.msra.mxu0 0
  %5353 = vmatprep.subr.bf16.mxu0 0
  %5354 = vmatpush2.bf16.msra.mxu0 0
  %5355 = vmatprep.subr.bf16.mxu0 0
  %5356 = vmatpush2.bf16.msra.mxu0 0
  %5357 = vmatprep.subr.bf16.mxu0 0
  %5358 = vmatpush2.bf16.msra.mxu0 0
  %5359 = vmatprep.mubr.bf16.mxu0 0
  %5360 = vmatmul.mubr.bf16.gmra.mxu0 %v5325
  %v5361 = vpop.f32.mrf.mxu0
  %v5362 = vadd.f32 0.0, %v5361
  %v5363 = vpop.f32.mrf.mxu0
  %v5364 = vpop.f32.mrf.mxu0
  %v5365 = vadd.f32 0.0, %v5364
  %v5366 = vpop.f32.mrf.mxu0
  %5367 = vdwg.mxu0
  %v5368 = vadd.f32 %v5286, %v5362
  %v5369 = vadd.f32 %v5287, %v5365
  %v5370 = vld [vmem:[#allocation2 + $0xd0] sm:$0xff]
  %v5371 = vld [vmem:[#allocation2 + $0xd8] sm:$0xff]
  %v5372 = vpack.c.bf16 %v5371, %v5370
  %s5373 = scalar_lea.vmem %s7, 416
  %v5374 = vld [vmem:[%s5373] sm:$0xf]
  %v5375 = vld [vmem:[%s5373 + $0x4] sm:$0xf]
  %v5376 = vld [vmem:[%s5373 + $0x8] sm:$0xf]
  %v5377 = vld [vmem:[%s5373 + $0xc] sm:$0xf]
  %v5378 = vld [vmem:[%s5373 + $0x10] sm:$0xf]
  %v5379 = vld [vmem:[%s5373 + $0x14] sm:$0xf]
  %v5380 = vld [vmem:[%s5373 + $0x18] sm:$0xf]
  %v5381 = vld [vmem:[%s5373 + $0x1c] sm:$0xf]
  %v5390 = vunpack.c.l.b16 %v5374
  %v5391 = vunpack.c.l.b16 %v5375
  %v5392 = vunpack.c.l.b16 %v5376
  %v5393 = vunpack.c.l.b16 %v5377
  %v5394 = vunpack.c.l.b16 %v5378
  %v5395 = vunpack.c.l.b16 %v5379
  %v5396 = vunpack.c.l.b16 %v5380
  %v5397 = vunpack.c.l.b16 %v5381
  %v5398 = vpack.c.b16 %v5391, %v5390
  %v5399 = vpack.c.b16 %v5393, %v5392
  %v5400 = vpack.c.b16 %v5395, %v5394
  %v5401 = vpack.c.b16 %v5397, %v5396
  %v5407 = vsel %vm4210, %v5372, 0
  %5409 = vmatprep.subr.bf16.mxu0 0
  %5410 = vmatpush1.bf16.msra.mxu0 0
  %5411 = vmatprep.subr.bf16.mxu0 0
  %5412 = vmatpush1.bf16.msra.mxu0 0
  %5413 = vmatprep.subr.bf16.mxu0 0
  %5414 = vmatpush1.bf16.msra.mxu0 0
  %5415 = vmatprep.subr.bf16.mxu0 0
  %5416 = vmatpush1.bf16.msra.mxu0 0
  %5417 = vmatprep.subr.bf16.mxu0 0
  %5418 = vmatpush1.bf16.msra.mxu0 %v5401
  %5419 = vmatprep.subr.bf16.mxu0 0
  %5420 = vmatpush1.bf16.msra.mxu0 %v5400
  %5421 = vmatprep.subr.bf16.mxu0 0
  %5422 = vmatpush1.bf16.msra.mxu0 %v5399
  %5423 = vmatprep.subr.bf16.mxu0 0
  %5424 = vmatpush1.bf16.msra.mxu0 %v5398
  %5425 = vmatprep.subr.bf16.mxu0 0
  %5426 = vmatpush2.bf16.msra.mxu0 0
  %5427 = vmatprep.subr.bf16.mxu0 0
  %5428 = vmatpush2.bf16.msra.mxu0 0
  %5429 = vmatprep.subr.bf16.mxu0 0
  %5430 = vmatpush2.bf16.msra.mxu0 0
  %5431 = vmatprep.subr.bf16.mxu0 0
  %5432 = vmatpush2.bf16.msra.mxu0 0
  %5433 = vmatprep.subr.bf16.mxu0 0
  %5434 = vmatpush2.bf16.msra.mxu0 0
  %5435 = vmatprep.subr.bf16.mxu0 0
  %5436 = vmatpush2.bf16.msra.mxu0 0
  %5437 = vmatprep.subr.bf16.mxu0 0
  %5438 = vmatpush2.bf16.msra.mxu0 0
  %5439 = vmatprep.subr.bf16.mxu0 0
  %5440 = vmatpush2.bf16.msra.mxu0 0
  %5441 = vmatprep.mubr.bf16.mxu0 0
  %5442 = vmatmul.mubr.bf16.gmra.mxu0 %v5407
  %v5443 = vpop.f32.mrf.mxu0
  %v5444 = vadd.f32 0.0, %v5443
  %v5445 = vpop.f32.mrf.mxu0
  %v5446 = vpop.f32.mrf.mxu0
  %v5447 = vadd.f32 0.0, %v5446
  %v5448 = vpop.f32.mrf.mxu0
  %5449 = vdwg.mxu0
  %v5450 = vadd.f32 %v5368, %v5444
  %v5451 = vadd.f32 %v5369, %v5447
  %v5452 = vld [vmem:[#allocation2 + $0xe0] sm:$0xff]
  %v5453 = vld [vmem:[#allocation2 + $0xe8] sm:$0xff]
  %v5454 = vpack.c.bf16 %v5453, %v5452
  %s5455 = scalar_lea.vmem %s7, 448
  %v5456 = vld [vmem:[%s5455] sm:$0xf]
  %v5457 = vld [vmem:[%s5455 + $0x4] sm:$0xf]
  %v5458 = vld [vmem:[%s5455 + $0x8] sm:$0xf]
  %v5459 = vld [vmem:[%s5455 + $0xc] sm:$0xf]
  %v5460 = vld [vmem:[%s5455 + $0x10] sm:$0xf]
  %v5461 = vld [vmem:[%s5455 + $0x14] sm:$0xf]
  %v5462 = vld [vmem:[%s5455 + $0x18] sm:$0xf]
  %v5463 = vld [vmem:[%s5455 + $0x1c] sm:$0xf]
  %v5472 = vunpack.c.l.b16 %v5456
  %v5473 = vunpack.c.l.b16 %v5457
  %v5474 = vunpack.c.l.b16 %v5458
  %v5475 = vunpack.c.l.b16 %v5459
  %v5476 = vunpack.c.l.b16 %v5460
  %v5477 = vunpack.c.l.b16 %v5461
  %v5478 = vunpack.c.l.b16 %v5462
  %v5479 = vunpack.c.l.b16 %v5463
  %v5480 = vpack.c.b16 %v5473, %v5472
  %v5481 = vpack.c.b16 %v5475, %v5474
  %v5482 = vpack.c.b16 %v5477, %v5476
  %v5483 = vpack.c.b16 %v5479, %v5478
  %v5489 = vsel %vm4210, %v5454, 0
  %5491 = vmatprep.subr.bf16.mxu0 0
  %5492 = vmatpush1.bf16.msra.mxu0 0
  %5493 = vmatprep.subr.bf16.mxu0 0
  %5494 = vmatpush1.bf16.msra.mxu0 0
  %5495 = vmatprep.subr.bf16.mxu0 0
  %5496 = vmatpush1.bf16.msra.mxu0 0
  %5497 = vmatprep.subr.bf16.mxu0 0
  %5498 = vmatpush1.bf16.msra.mxu0 0
  %5499 = vmatprep.subr.bf16.mxu0 0
  %5500 = vmatpush1.bf16.msra.mxu0 %v5483
  %5501 = vmatprep.subr.bf16.mxu0 0
  %5502 = vmatpush1.bf16.msra.mxu0 %v5482
  %5503 = vmatprep.subr.bf16.mxu0 0
  %5504 = vmatpush1.bf16.msra.mxu0 %v5481
  %5505 = vmatprep.subr.bf16.mxu0 0
  %5506 = vmatpush1.bf16.msra.mxu0 %v5480
  %5507 = vmatprep.subr.bf16.mxu0 0
  %5508 = vmatpush2.bf16.msra.mxu0 0
  %5509 = vmatprep.subr.bf16.mxu0 0
  %5510 = vmatpush2.bf16.msra.mxu0 0
  %5511 = vmatprep.subr.bf16.mxu0 0
  %5512 = vmatpush2.bf16.msra.mxu0 0
  %5513 = vmatprep.subr.bf16.mxu0 0
  %5514 = vmatpush2.bf16.msra.mxu0 0
  %5515 = vmatprep.subr.bf16.mxu0 0
  %5516 = vmatpush2.bf16.msra.mxu0 0
  %5517 = vmatprep.subr.bf16.mxu0 0
  %5518 = vmatpush2.bf16.msra.mxu0 0
  %5519 = vmatprep.subr.bf16.mxu0 0
  %5520 = vmatpush2.bf16.msra.mxu0 0
  %5521 = vmatprep.subr.bf16.mxu0 0
  %5522 = vmatpush2.bf16.msra.mxu0 0
  %5523 = vmatprep.mubr.bf16.mxu0 0
  %5524 = vmatmul.mubr.bf16.gmra.mxu0 %v5489
  %v5525 = vpop.f32.mrf.mxu0
  %v5526 = vadd.f32 0.0, %v5525
  %v5527 = vpop.f32.mrf.mxu0
  %v5528 = vpop.f32.mrf.mxu0
  %v5529 = vadd.f32 0.0, %v5528
  %v5530 = vpop.f32.mrf.mxu0
  %5531 = vdwg.mxu0
  %v5532 = vadd.f32 %v5450, %v5526
  %v5533 = vadd.f32 %v5451, %v5529
  %v5534 = vld [vmem:[#allocation2 + $0xf0] sm:$0xff]
  %v5535 = vld [vmem:[#allocation2 + $0xf8] sm:$0xff]
  %v5536 = vpack.c.bf16 %v5535, %v5534
  %s5537 = scalar_lea.vmem %s7, 480
  %v5538 = vld [vmem:[%s5537] sm:$0xf]
  %v5539 = vld [vmem:[%s5537 + $0x4] sm:$0xf]
  %v5540 = vld [vmem:[%s5537 + $0x8] sm:$0xf]
  %v5541 = vld [vmem:[%s5537 + $0xc] sm:$0xf]
  %v5542 = vld [vmem:[%s5537 + $0x10] sm:$0xf]
  %v5543 = vld [vmem:[%s5537 + $0x14] sm:$0xf]
  %v5544 = vld [vmem:[%s5537 + $0x18] sm:$0xf]
  %v5545 = vld [vmem:[%s5537 + $0x1c] sm:$0xf]
  %v5554 = vunpack.c.l.b16 %v5538
  %v5555 = vunpack.c.l.b16 %v5539
  %v5556 = vunpack.c.l.b16 %v5540
  %v5557 = vunpack.c.l.b16 %v5541
  %v5558 = vunpack.c.l.b16 %v5542
  %v5559 = vunpack.c.l.b16 %v5543
  %v5560 = vunpack.c.l.b16 %v5544
  %v5561 = vunpack.c.l.b16 %v5545
  %v5562 = vpack.c.b16 %v5555, %v5554
  %v5563 = vpack.c.b16 %v5557, %v5556
  %v5564 = vpack.c.b16 %v5559, %v5558
  %v5565 = vpack.c.b16 %v5561, %v5560
  %v5571 = vsel %vm4210, %v5536, 0
  %5573 = vmatprep.subr.bf16.mxu0 0
  %5574 = vmatpush1.bf16.msra.mxu0 0
  %5575 = vmatprep.subr.bf16.mxu0 0
  %5576 = vmatpush1.bf16.msra.mxu0 0
  %5577 = vmatprep.subr.bf16.mxu0 0
  %5578 = vmatpush1.bf16.msra.mxu0 0
  %5579 = vmatprep.subr.bf16.mxu0 0
  %5580 = vmatpush1.bf16.msra.mxu0 0
  %5581 = vmatprep.subr.bf16.mxu0 0
  %5582 = vmatpush1.bf16.msra.mxu0 %v5565
  %5583 = vmatprep.subr.bf16.mxu0 0
  %5584 = vmatpush1.bf16.msra.mxu0 %v5564
  %5585 = vmatprep.subr.bf16.mxu0 0
  %5586 = vmatpush1.bf16.msra.mxu0 %v5563
  %5587 = vmatprep.subr.bf16.mxu0 0
  %5588 = vmatpush1.bf16.msra.mxu0 %v5562
  %5589 = vmatprep.subr.bf16.mxu0 0
  %5590 = vmatpush2.bf16.msra.mxu0 0
  %5591 = vmatprep.subr.bf16.mxu0 0
  %5592 = vmatpush2.bf16.msra.mxu0 0
  %5593 = vmatprep.subr.bf16.mxu0 0
  %5594 = vmatpush2.bf16.msra.mxu0 0
  %5595 = vmatprep.subr.bf16.mxu0 0
  %5596 = vmatpush2.bf16.msra.mxu0 0
  %5597 = vmatprep.subr.bf16.mxu0 0
  %5598 = vmatpush2.bf16.msra.mxu0 0
  %5599 = vmatprep.subr.bf16.mxu0 0
  %5600 = vmatpush2.bf16.msra.mxu0 0
  %5601 = vmatprep.subr.bf16.mxu0 0
  %5602 = vmatpush2.bf16.msra.mxu0 0
  %5603 = vmatprep.subr.bf16.mxu0 0
  %5604 = vmatpush2.bf16.msra.mxu0 0
  %5605 = vmatprep.mubr.bf16.mxu0 0
  %5606 = vmatmul.mubr.bf16.gmra.mxu0 %v5571
  %v5607 = vpop.f32.mrf.mxu0
  %v5608 = vadd.f32 0.0, %v5607
  %v5609 = vpop.f32.mrf.mxu0
  %v5610 = vpop.f32.mrf.mxu0
  %v5611 = vadd.f32 0.0, %v5610
  %v5612 = vpop.f32.mrf.mxu0
  %5613 = vdwg.mxu0
  %v5614 = vadd.f32 %v5532, %v5608
  %v5615 = vadd.f32 %v5533, %v5611
  %v5616 = vld [vmem:[#allocation2 + $0x100] sm:$0xff]
  %v5617 = vld [vmem:[#allocation2 + $0x108] sm:$0xff]
  %v5618 = vpack.c.bf16 %v5617, %v5616
  %s5619 = scalar_lea.vmem %s7, 512
  %v5620 = vld [vmem:[%s5619] sm:$0xf]
  %v5621 = vld [vmem:[%s5619 + $0x4] sm:$0xf]
  %v5622 = vld [vmem:[%s5619 + $0x8] sm:$0xf]
  %v5623 = vld [vmem:[%s5619 + $0xc] sm:$0xf]
  %v5624 = vld [vmem:[%s5619 + $0x10] sm:$0xf]
  %v5625 = vld [vmem:[%s5619 + $0x14] sm:$0xf]
  %v5626 = vld [vmem:[%s5619 + $0x18] sm:$0xf]
  %v5627 = vld [vmem:[%s5619 + $0x1c] sm:$0xf]
  %v5636 = vunpack.c.l.b16 %v5620
  %v5637 = vunpack.c.l.b16 %v5621
  %v5638 = vunpack.c.l.b16 %v5622
  %v5639 = vunpack.c.l.b16 %v5623
  %v5640 = vunpack.c.l.b16 %v5624
  %v5641 = vunpack.c.l.b16 %v5625
  %v5642 = vunpack.c.l.b16 %v5626
  %v5643 = vunpack.c.l.b16 %v5627
  %v5644 = vpack.c.b16 %v5637, %v5636
  %v5645 = vpack.c.b16 %v5639, %v5638
  %v5646 = vpack.c.b16 %v5641, %v5640
  %v5647 = vpack.c.b16 %v5643, %v5642
  %v5653 = vsel %vm4210, %v5618, 0
  %5655 = vmatprep.subr.bf16.mxu0 0
  %5656 = vmatpush1.bf16.msra.mxu0 0
  %5657 = vmatprep.subr.bf16.mxu0 0
  %5658 = vmatpush1.bf16.msra.mxu0 0
  %5659 = vmatprep.subr.bf16.mxu0 0
  %5660 = vmatpush1.bf16.msra.mxu0 0
  %5661 = vmatprep.subr.bf16.mxu0 0
  %5662 = vmatpush1.bf16.msra.mxu0 0
  %5663 = vmatprep.subr.bf16.mxu0 0
  %5664 = vmatpush1.bf16.msra.mxu0 %v5647
  %5665 = vmatprep.subr.bf16.mxu0 0
  %5666 = vmatpush1.bf16.msra.mxu0 %v5646
  %5667 = vmatprep.subr.bf16.mxu0 0
  %5668 = vmatpush1.bf16.msra.mxu0 %v5645
  %5669 = vmatprep.subr.bf16.mxu0 0
  %5670 = vmatpush1.bf16.msra.mxu0 %v5644
  %5671 = vmatprep.subr.bf16.mxu0 0
  %5672 = vmatpush2.bf16.msra.mxu0 0
  %5673 = vmatprep.subr.bf16.mxu0 0
  %5674 = vmatpush2.bf16.msra.mxu0 0
  %5675 = vmatprep.subr.bf16.mxu0 0
  %5676 = vmatpush2.bf16.msra.mxu0 0
  %5677 = vmatprep.subr.bf16.mxu0 0
  %5678 = vmatpush2.bf16.msra.mxu0 0
  %5679 = vmatprep.subr.bf16.mxu0 0
  %5680 = vmatpush2.bf16.msra.mxu0 0
  %5681 = vmatprep.subr.bf16.mxu0 0
  %5682 = vmatpush2.bf16.msra.mxu0 0
  %5683 = vmatprep.subr.bf16.mxu0 0
  %5684 = vmatpush2.bf16.msra.mxu0 0
  %5685 = vmatprep.subr.bf16.mxu0 0
  %5686 = vmatpush2.bf16.msra.mxu0 0
  %5687 = vmatprep.mubr.bf16.mxu0 0
  %5688 = vmatmul.mubr.bf16.gmra.mxu0 %v5653
  %v5689 = vpop.f32.mrf.mxu0
  %v5690 = vadd.f32 0.0, %v5689
  %v5691 = vpop.f32.mrf.mxu0
  %v5692 = vpop.f32.mrf.mxu0
  %v5693 = vadd.f32 0.0, %v5692
  %v5694 = vpop.f32.mrf.mxu0
  %5695 = vdwg.mxu0
  %v5696 = vadd.f32 %v5614, %v5690
  %v5697 = vadd.f32 %v5615, %v5693
  %v5698 = vld [vmem:[#allocation2 + $0x110] sm:$0xff]
  %v5699 = vld [vmem:[#allocation2 + $0x118] sm:$0xff]
  %v5700 = vpack.c.bf16 %v5699, %v5698
  %s5701 = scalar_lea.vmem %s7, 544
  %v5702 = vld [vmem:[%s5701] sm:$0xf]
  %v5703 = vld [vmem:[%s5701 + $0x4] sm:$0xf]
  %v5704 = vld [vmem:[%s5701 + $0x8] sm:$0xf]
  %v5705 = vld [vmem:[%s5701 + $0xc] sm:$0xf]
  %v5706 = vld [vmem:[%s5701 + $0x10] sm:$0xf]
  %v5707 = vld [vmem:[%s5701 + $0x14] sm:$0xf]
  %v5708 = vld [vmem:[%s5701 + $0x18] sm:$0xf]
  %v5709 = vld [vmem:[%s5701 + $0x1c] sm:$0xf]
  %v5718 = vunpack.c.l.b16 %v5702
  %v5719 = vunpack.c.l.b16 %v5703
  %v5720 = vunpack.c.l.b16 %v5704
  %v5721 = vunpack.c.l.b16 %v5705
  %v5722 = vunpack.c.l.b16 %v5706
  %v5723 = vunpack.c.l.b16 %v5707
  %v5724 = vunpack.c.l.b16 %v5708
  %v5725 = vunpack.c.l.b16 %v5709
  %v5726 = vpack.c.b16 %v5719, %v5718
  %v5727 = vpack.c.b16 %v5721, %v5720
  %v5728 = vpack.c.b16 %v5723, %v5722
  %v5729 = vpack.c.b16 %v5725, %v5724
  %v5735 = vsel %vm4210, %v5700, 0
  %5737 = vmatprep.subr.bf16.mxu0 0
  %5738 = vmatpush1.bf16.msra.mxu0 0
  %5739 = vmatprep.subr.bf16.mxu0 0
  %5740 = vmatpush1.bf16.msra.mxu0 0
  %5741 = vmatprep.subr.bf16.mxu0 0
  %5742 = vmatpush1.bf16.msra.mxu0 0
  %5743 = vmatprep.subr.bf16.mxu0 0
  %5744 = vmatpush1.bf16.msra.mxu0 0
  %5745 = vmatprep.subr.bf16.mxu0 0
  %5746 = vmatpush1.bf16.msra.mxu0 %v5729
  %5747 = vmatprep.subr.bf16.mxu0 0
  %5748 = vmatpush1.bf16.msra.mxu0 %v5728
  %5749 = vmatprep.subr.bf16.mxu0 0
  %5750 = vmatpush1.bf16.msra.mxu0 %v5727
  %5751 = vmatprep.subr.bf16.mxu0 0
  %5752 = vmatpush1.bf16.msra.mxu0 %v5726
  %5753 = vmatprep.subr.bf16.mxu0 0
  %5754 = vmatpush2.bf16.msra.mxu0 0
  %5755 = vmatprep.subr.bf16.mxu0 0
  %5756 = vmatpush2.bf16.msra.mxu0 0
  %5757 = vmatprep.subr.bf16.mxu0 0
  %5758 = vmatpush2.bf16.msra.mxu0 0
  %5759 = vmatprep.subr.bf16.mxu0 0
  %5760 = vmatpush2.bf16.msra.mxu0 0
  %5761 = vmatprep.subr.bf16.mxu0 0
  %5762 = vmatpush2.bf16.msra.mxu0 0
  %5763 = vmatprep.subr.bf16.mxu0 0
  %5764 = vmatpush2.bf16.msra.mxu0 0
  %5765 = vmatprep.subr.bf16.mxu0 0
  %5766 = vmatpush2.bf16.msra.mxu0 0
  %5767 = vmatprep.subr.bf16.mxu0 0
  %5768 = vmatpush2.bf16.msra.mxu0 0
  %5769 = vmatprep.mubr.bf16.mxu0 0
  %5770 = vmatmul.mubr.bf16.gmra.mxu0 %v5735
  %v5771 = vpop.f32.mrf.mxu0
  %v5772 = vadd.f32 0.0, %v5771
  %v5773 = vpop.f32.mrf.mxu0
  %v5774 = vpop.f32.mrf.mxu0
  %v5775 = vadd.f32 0.0, %v5774
  %v5776 = vpop.f32.mrf.mxu0
  %5777 = vdwg.mxu0
  %v5778 = vadd.f32 %v5696, %v5772
  %v5779 = vadd.f32 %v5697, %v5775
  %v5780 = vld [vmem:[#allocation2 + $0x120] sm:$0xff]
  %v5781 = vld [vmem:[#allocation2 + $0x128] sm:$0xff]
  %v5782 = vpack.c.bf16 %v5781, %v5780
  %s5783 = scalar_lea.vmem %s7, 576
  %v5784 = vld [vmem:[%s5783] sm:$0xf]
  %v5785 = vld [vmem:[%s5783 + $0x4] sm:$0xf]
  %v5786 = vld [vmem:[%s5783 + $0x8] sm:$0xf]
  %v5787 = vld [vmem:[%s5783 + $0xc] sm:$0xf]
  %v5788 = vld [vmem:[%s5783 + $0x10] sm:$0xf]
  %v5789 = vld [vmem:[%s5783 + $0x14] sm:$0xf]
  %v5790 = vld [vmem:[%s5783 + $0x18] sm:$0xf]
  %v5791 = vld [vmem:[%s5783 + $0x1c] sm:$0xf]
  %v5800 = vunpack.c.l.b16 %v5784
  %v5801 = vunpack.c.l.b16 %v5785
  %v5802 = vunpack.c.l.b16 %v5786
  %v5803 = vunpack.c.l.b16 %v5787
  %v5804 = vunpack.c.l.b16 %v5788
  %v5805 = vunpack.c.l.b16 %v5789
  %v5806 = vunpack.c.l.b16 %v5790
  %v5807 = vunpack.c.l.b16 %v5791
  %v5808 = vpack.c.b16 %v5801, %v5800
  %v5809 = vpack.c.b16 %v5803, %v5802
  %v5810 = vpack.c.b16 %v5805, %v5804
  %v5811 = vpack.c.b16 %v5807, %v5806
  %v5817 = vsel %vm4210, %v5782, 0
  %5819 = vmatprep.subr.bf16.mxu0 0
  %5820 = vmatpush1.bf16.msra.mxu0 0
  %5821 = vmatprep.subr.bf16.mxu0 0
  %5822 = vmatpush1.bf16.msra.mxu0 0
  %5823 = vmatprep.subr.bf16.mxu0 0
  %5824 = vmatpush1.bf16.msra.mxu0 0
  %5825 = vmatprep.subr.bf16.mxu0 0
  %5826 = vmatpush1.bf16.msra.mxu0 0
  %5827 = vmatprep.subr.bf16.mxu0 0
  %5828 = vmatpush1.bf16.msra.mxu0 %v5811
  %5829 = vmatprep.subr.bf16.mxu0 0
  %5830 = vmatpush1.bf16.msra.mxu0 %v5810
  %5831 = vmatprep.subr.bf16.mxu0 0
  %5832 = vmatpush1.bf16.msra.mxu0 %v5809
  %5833 = vmatprep.subr.bf16.mxu0 0
  %5834 = vmatpush1.bf16.msra.mxu0 %v5808
  %5835 = vmatprep.subr.bf16.mxu0 0
  %5836 = vmatpush2.bf16.msra.mxu0 0
  %5837 = vmatprep.subr.bf16.mxu0 0
  %5838 = vmatpush2.bf16.msra.mxu0 0
  %5839 = vmatprep.subr.bf16.mxu0 0
  %5840 = vmatpush2.bf16.msra.mxu0 0
  %5841 = vmatprep.subr.bf16.mxu0 0
  %5842 = vmatpush2.bf16.msra.mxu0 0
  %5843 = vmatprep.subr.bf16.mxu0 0
  %5844 = vmatpush2.bf16.msra.mxu0 0
  %5845 = vmatprep.subr.bf16.mxu0 0
  %5846 = vmatpush2.bf16.msra.mxu0 0
  %5847 = vmatprep.subr.bf16.mxu0 0
  %5848 = vmatpush2.bf16.msra.mxu0 0
  %5849 = vmatprep.subr.bf16.mxu0 0
  %5850 = vmatpush2.bf16.msra.mxu0 0
  %5851 = vmatprep.mubr.bf16.mxu0 0
  %5852 = vmatmul.mubr.bf16.gmra.mxu0 %v5817
  %v5853 = vpop.f32.mrf.mxu0
  %v5854 = vadd.f32 0.0, %v5853
  %v5855 = vpop.f32.mrf.mxu0
  %v5856 = vpop.f32.mrf.mxu0
  %v5857 = vadd.f32 0.0, %v5856
  %v5858 = vpop.f32.mrf.mxu0
  %5859 = vdwg.mxu0
  %v5860 = vadd.f32 %v5778, %v5854
  %v5861 = vadd.f32 %v5779, %v5857
  %v5862 = vld [vmem:[#allocation2 + $0x130] sm:$0xff]
  %v5863 = vld [vmem:[#allocation2 + $0x138] sm:$0xff]
  %v5864 = vpack.c.bf16 %v5863, %v5862
  %s5865 = scalar_lea.vmem %s7, 608
  %v5866 = vld [vmem:[%s5865] sm:$0xf]
  %v5867 = vld [vmem:[%s5865 + $0x4] sm:$0xf]
  %v5868 = vld [vmem:[%s5865 + $0x8] sm:$0xf]
  %v5869 = vld [vmem:[%s5865 + $0xc] sm:$0xf]
  %v5870 = vld [vmem:[%s5865 + $0x10] sm:$0xf]
  %v5871 = vld [vmem:[%s5865 + $0x14] sm:$0xf]
  %v5872 = vld [vmem:[%s5865 + $0x18] sm:$0xf]
  %v5873 = vld [vmem:[%s5865 + $0x1c] sm:$0xf]
  %v5882 = vunpack.c.l.b16 %v5866
  %v5883 = vunpack.c.l.b16 %v5867
  %v5884 = vunpack.c.l.b16 %v5868
  %v5885 = vunpack.c.l.b16 %v5869
  %v5886 = vunpack.c.l.b16 %v5870
  %v5887 = vunpack.c.l.b16 %v5871
  %v5888 = vunpack.c.l.b16 %v5872
  %v5889 = vunpack.c.l.b16 %v5873
  %v5890 = vpack.c.b16 %v5883, %v5882
  %v5891 = vpack.c.b16 %v5885, %v5884
  %v5892 = vpack.c.b16 %v5887, %v5886
  %v5893 = vpack.c.b16 %v5889, %v5888
  %v5899 = vsel %vm4210, %v5864, 0
  %5901 = vmatprep.subr.bf16.mxu0 0
  %5902 = vmatpush1.bf16.msra.mxu0 0
  %5903 = vmatprep.subr.bf16.mxu0 0
  %5904 = vmatpush1.bf16.msra.mxu0 0
  %5905 = vmatprep.subr.bf16.mxu0 0
  %5906 = vmatpush1.bf16.msra.mxu0 0
  %5907 = vmatprep.subr.bf16.mxu0 0
  %5908 = vmatpush1.bf16.msra.mxu0 0
  %5909 = vmatprep.subr.bf16.mxu0 0
  %5910 = vmatpush1.bf16.msra.mxu0 %v5893
  %5911 = vmatprep.subr.bf16.mxu0 0
  %5912 = vmatpush1.bf16.msra.mxu0 %v5892
  %5913 = vmatprep.subr.bf16.mxu0 0
  %5914 = vmatpush1.bf16.msra.mxu0 %v5891
  %5915 = vmatprep.subr.bf16.mxu0 0
  %5916 = vmatpush1.bf16.msra.mxu0 %v5890
  %5917 = vmatprep.subr.bf16.mxu0 0
  %5918 = vmatpush2.bf16.msra.mxu0 0
  %5919 = vmatprep.subr.bf16.mxu0 0
  %5920 = vmatpush2.bf16.msra.mxu0 0
  %5921 = vmatprep.subr.bf16.mxu0 0
  %5922 = vmatpush2.bf16.msra.mxu0 0
  %5923 = vmatprep.subr.bf16.mxu0 0
  %5924 = vmatpush2.bf16.msra.mxu0 0
  %5925 = vmatprep.subr.bf16.mxu0 0
  %5926 = vmatpush2.bf16.msra.mxu0 0
  %5927 = vmatprep.subr.bf16.mxu0 0
  %5928 = vmatpush2.bf16.msra.mxu0 0
  %5929 = vmatprep.subr.bf16.mxu0 0
  %5930 = vmatpush2.bf16.msra.mxu0 0
  %5931 = vmatprep.subr.bf16.mxu0 0
  %5932 = vmatpush2.bf16.msra.mxu0 0
  %5933 = vmatprep.mubr.bf16.mxu0 0
  %5934 = vmatmul.mubr.bf16.gmra.mxu0 %v5899
  %v5935 = vpop.f32.mrf.mxu0
  %v5936 = vadd.f32 0.0, %v5935
  %v5937 = vpop.f32.mrf.mxu0
  %v5938 = vpop.f32.mrf.mxu0
  %v5939 = vadd.f32 0.0, %v5938
  %v5940 = vpop.f32.mrf.mxu0
  %5941 = vdwg.mxu0
  %v5942 = vadd.f32 %v5860, %v5936
  %v5943 = vadd.f32 %v5861, %v5939
  %v5944 = vld [vmem:[#allocation2 + $0x140] sm:$0xff]
  %v5945 = vld [vmem:[#allocation2 + $0x148] sm:$0xff]
  %v5946 = vpack.c.bf16 %v5945, %v5944
  %s5947 = scalar_lea.vmem %s7, 640
  %v5948 = vld [vmem:[%s5947] sm:$0xf]
  %v5949 = vld [vmem:[%s5947 + $0x4] sm:$0xf]
  %v5950 = vld [vmem:[%s5947 + $0x8] sm:$0xf]
  %v5951 = vld [vmem:[%s5947 + $0xc] sm:$0xf]
  %v5952 = vld [vmem:[%s5947 + $0x10] sm:$0xf]
  %v5953 = vld [vmem:[%s5947 + $0x14] sm:$0xf]
  %v5954 = vld [vmem:[%s5947 + $0x18] sm:$0xf]
  %v5955 = vld [vmem:[%s5947 + $0x1c] sm:$0xf]
  %v5964 = vunpack.c.l.b16 %v5948
  %v5965 = vunpack.c.l.b16 %v5949
  %v5966 = vunpack.c.l.b16 %v5950
  %v5967 = vunpack.c.l.b16 %v5951
  %v5968 = vunpack.c.l.b16 %v5952
  %v5969 = vunpack.c.l.b16 %v5953
  %v5970 = vunpack.c.l.b16 %v5954
  %v5971 = vunpack.c.l.b16 %v5955
  %v5972 = vpack.c.b16 %v5965, %v5964
  %v5973 = vpack.c.b16 %v5967, %v5966
  %v5974 = vpack.c.b16 %v5969, %v5968
  %v5975 = vpack.c.b16 %v5971, %v5970
  %v5981 = vsel %vm4210, %v5946, 0
  %5983 = vmatprep.subr.bf16.mxu0 0
  %5984 = vmatpush1.bf16.msra.mxu0 0
  %5985 = vmatprep.subr.bf16.mxu0 0
  %5986 = vmatpush1.bf16.msra.mxu0 0
  %5987 = vmatprep.subr.bf16.mxu0 0
  %5988 = vmatpush1.bf16.msra.mxu0 0
  %5989 = vmatprep.subr.bf16.mxu0 0
  %5990 = vmatpush1.bf16.msra.mxu0 0
  %5991 = vmatprep.subr.bf16.mxu0 0
  %5992 = vmatpush1.bf16.msra.mxu0 %v5975
  %5993 = vmatprep.subr.bf16.mxu0 0
  %5994 = vmatpush1.bf16.msra.mxu0 %v5974
  %5995 = vmatprep.subr.bf16.mxu0 0
  %5996 = vmatpush1.bf16.msra.mxu0 %v5973
  %5997 = vmatprep.subr.bf16.mxu0 0
  %5998 = vmatpush1.bf16.msra.mxu0 %v5972
  %5999 = vmatprep.subr.bf16.mxu0 0
  %6000 = vmatpush2.bf16.msra.mxu0 0
  %6001 = vmatprep.subr.bf16.mxu0 0
  %6002 = vmatpush2.bf16.msra.mxu0 0
  %6003 = vmatprep.subr.bf16.mxu0 0
  %6004 = vmatpush2.bf16.msra.mxu0 0
  %6005 = vmatprep.subr.bf16.mxu0 0
  %6006 = vmatpush2.bf16.msra.mxu0 0
  %6007 = vmatprep.subr.bf16.mxu0 0
  %6008 = vmatpush2.bf16.msra.mxu0 0
  %6009 = vmatprep.subr.bf16.mxu0 0
  %6010 = vmatpush2.bf16.msra.mxu0 0
  %6011 = vmatprep.subr.bf16.mxu0 0
  %6012 = vmatpush2.bf16.msra.mxu0 0
  %6013 = vmatprep.subr.bf16.mxu0 0
  %6014 = vmatpush2.bf16.msra.mxu0 0
  %6015 = vmatprep.mubr.bf16.mxu0 0
  %6016 = vmatmul.mubr.bf16.gmra.mxu0 %v5981
  %v6017 = vpop.f32.mrf.mxu0
  %v6018 = vadd.f32 0.0, %v6017
  %v6019 = vpop.f32.mrf.mxu0
  %v6020 = vpop.f32.mrf.mxu0
  %v6021 = vadd.f32 0.0, %v6020
  %v6022 = vpop.f32.mrf.mxu0
  %6023 = vdwg.mxu0
  %v6024 = vadd.f32 %v5942, %v6018
  %v6025 = vadd.f32 %v5943, %v6021
  %v6026 = vld [vmem:[#allocation2 + $0x150] sm:$0xff]
  %v6027 = vld [vmem:[#allocation2 + $0x158] sm:$0xff]
  %v6028 = vpack.c.bf16 %v6027, %v6026
  %s6029 = scalar_lea.vmem %s7, 672
  %v6030 = vld [vmem:[%s6029] sm:$0xf]
  %v6031 = vld [vmem:[%s6029 + $0x4] sm:$0xf]
  %v6032 = vld [vmem:[%s6029 + $0x8] sm:$0xf]
  %v6033 = vld [vmem:[%s6029 + $0xc] sm:$0xf]
  %v6034 = vld [vmem:[%s6029 + $0x10] sm:$0xf]
  %v6035 = vld [vmem:[%s6029 + $0x14] sm:$0xf]
  %v6036 = vld [vmem:[%s6029 + $0x18] sm:$0xf]
  %v6037 = vld [vmem:[%s6029 + $0x1c] sm:$0xf]
  %v6046 = vunpack.c.l.b16 %v6030
  %v6047 = vunpack.c.l.b16 %v6031
  %v6048 = vunpack.c.l.b16 %v6032
  %v6049 = vunpack.c.l.b16 %v6033
  %v6050 = vunpack.c.l.b16 %v6034
  %v6051 = vunpack.c.l.b16 %v6035
  %v6052 = vunpack.c.l.b16 %v6036
  %v6053 = vunpack.c.l.b16 %v6037
  %v6054 = vpack.c.b16 %v6047, %v6046
  %v6055 = vpack.c.b16 %v6049, %v6048
  %v6056 = vpack.c.b16 %v6051, %v6050
  %v6057 = vpack.c.b16 %v6053, %v6052
  %v6063 = vsel %vm4210, %v6028, 0
  %6065 = vmatprep.subr.bf16.mxu0 0
  %6066 = vmatpush1.bf16.msra.mxu0 0
  %6067 = vmatprep.subr.bf16.mxu0 0
  %6068 = vmatpush1.bf16.msra.mxu0 0
  %6069 = vmatprep.subr.bf16.mxu0 0
  %6070 = vmatpush1.bf16.msra.mxu0 0
  %6071 = vmatprep.subr.bf16.mxu0 0
  %6072 = vmatpush1.bf16.msra.mxu0 0
  %6073 = vmatprep.subr.bf16.mxu0 0
  %6074 = vmatpush1.bf16.msra.mxu0 %v6057
  %6075 = vmatprep.subr.bf16.mxu0 0
  %6076 = vmatpush1.bf16.msra.mxu0 %v6056
  %6077 = vmatprep.subr.bf16.mxu0 0
  %6078 = vmatpush1.bf16.msra.mxu0 %v6055
  %6079 = vmatprep.subr.bf16.mxu0 0
  %6080 = vmatpush1.bf16.msra.mxu0 %v6054
  %6081 = vmatprep.subr.bf16.mxu0 0
  %6082 = vmatpush2.bf16.msra.mxu0 0
  %6083 = vmatprep.subr.bf16.mxu0 0
  %6084 = vmatpush2.bf16.msra.mxu0 0
  %6085 = vmatprep.subr.bf16.mxu0 0
  %6086 = vmatpush2.bf16.msra.mxu0 0
  %6087 = vmatprep.subr.bf16.mxu0 0
  %6088 = vmatpush2.bf16.msra.mxu0 0
  %6089 = vmatprep.subr.bf16.mxu0 0
  %6090 = vmatpush2.bf16.msra.mxu0 0
  %6091 = vmatprep.subr.bf16.mxu0 0
  %6092 = vmatpush2.bf16.msra.mxu0 0
  %6093 = vmatprep.subr.bf16.mxu0 0
  %6094 = vmatpush2.bf16.msra.mxu0 0
  %6095 = vmatprep.subr.bf16.mxu0 0
  %6096 = vmatpush2.bf16.msra.mxu0 0
  %6097 = vmatprep.mubr.bf16.mxu0 0
  %6098 = vmatmul.mubr.bf16.gmra.mxu0 %v6063
  %v6099 = vpop.f32.mrf.mxu0
  %v6100 = vadd.f32 0.0, %v6099
  %v6101 = vpop.f32.mrf.mxu0
  %v6102 = vpop.f32.mrf.mxu0
  %v6103 = vadd.f32 0.0, %v6102
  %v6104 = vpop.f32.mrf.mxu0
  %6105 = vdwg.mxu0
  %v6106 = vadd.f32 %v6024, %v6100
  %v6107 = vadd.f32 %v6025, %v6103
  %v6108 = vld [vmem:[#allocation2 + $0x160] sm:$0xff]
  %v6109 = vld [vmem:[#allocation2 + $0x168] sm:$0xff]
  %v6110 = vpack.c.bf16 %v6109, %v6108
  %s6111 = scalar_lea.vmem %s7, 704
  %v6112 = vld [vmem:[%s6111] sm:$0xf]
  %v6113 = vld [vmem:[%s6111 + $0x4] sm:$0xf]
  %v6114 = vld [vmem:[%s6111 + $0x8] sm:$0xf]
  %v6115 = vld [vmem:[%s6111 + $0xc] sm:$0xf]
  %v6116 = vld [vmem:[%s6111 + $0x10] sm:$0xf]
  %v6117 = vld [vmem:[%s6111 + $0x14] sm:$0xf]
  %v6118 = vld [vmem:[%s6111 + $0x18] sm:$0xf]
  %v6119 = vld [vmem:[%s6111 + $0x1c] sm:$0xf]
  %v6128 = vunpack.c.l.b16 %v6112
  %v6129 = vunpack.c.l.b16 %v6113
  %v6130 = vunpack.c.l.b16 %v6114
  %v6131 = vunpack.c.l.b16 %v6115
  %v6132 = vunpack.c.l.b16 %v6116
  %v6133 = vunpack.c.l.b16 %v6117
  %v6134 = vunpack.c.l.b16 %v6118
  %v6135 = vunpack.c.l.b16 %v6119
  %v6136 = vpack.c.b16 %v6129, %v6128
  %v6137 = vpack.c.b16 %v6131, %v6130
  %v6138 = vpack.c.b16 %v6133, %v6132
  %v6139 = vpack.c.b16 %v6135, %v6134
  %v6145 = vsel %vm4210, %v6110, 0
  %6147 = vmatprep.subr.bf16.mxu0 0
  %6148 = vmatpush1.bf16.msra.mxu0 0
  %6149 = vmatprep.subr.bf16.mxu0 0
  %6150 = vmatpush1.bf16.msra.mxu0 0
  %6151 = vmatprep.subr.bf16.mxu0 0
  %6152 = vmatpush1.bf16.msra.mxu0 0
  %6153 = vmatprep.subr.bf16.mxu0 0
  %6154 = vmatpush1.bf16.msra.mxu0 0
  %6155 = vmatprep.subr.bf16.mxu0 0
  %6156 = vmatpush1.bf16.msra.mxu0 %v6139
  %6157 = vmatprep.subr.bf16.mxu0 0
  %6158 = vmatpush1.bf16.msra.mxu0 %v6138
  %6159 = vmatprep.subr.bf16.mxu0 0
  %6160 = vmatpush1.bf16.msra.mxu0 %v6137
  %6161 = vmatprep.subr.bf16.mxu0 0
  %6162 = vmatpush1.bf16.msra.mxu0 %v6136
  %6163 = vmatprep.subr.bf16.mxu0 0
  %6164 = vmatpush2.bf16.msra.mxu0 0
  %6165 = vmatprep.subr.bf16.mxu0 0
  %6166 = vmatpush2.bf16.msra.mxu0 0
  %6167 = vmatprep.subr.bf16.mxu0 0
  %6168 = vmatpush2.bf16.msra.mxu0 0
  %6169 = vmatprep.subr.bf16.mxu0 0
  %6170 = vmatpush2.bf16.msra.mxu0 0
  %6171 = vmatprep.subr.bf16.mxu0 0
  %6172 = vmatpush2.bf16.msra.mxu0 0
  %6173 = vmatprep.subr.bf16.mxu0 0
  %6174 = vmatpush2.bf16.msra.mxu0 0
  %6175 = vmatprep.subr.bf16.mxu0 0
  %6176 = vmatpush2.bf16.msra.mxu0 0
  %6177 = vmatprep.subr.bf16.mxu0 0
  %6178 = vmatpush2.bf16.msra.mxu0 0
  %6179 = vmatprep.mubr.bf16.mxu0 0
  %6180 = vmatmul.mubr.bf16.gmra.mxu0 %v6145
  %v6181 = vpop.f32.mrf.mxu0
  %v6182 = vadd.f32 0.0, %v6181
  %v6183 = vpop.f32.mrf.mxu0
  %v6184 = vpop.f32.mrf.mxu0
  %v6185 = vadd.f32 0.0, %v6184
  %v6186 = vpop.f32.mrf.mxu0
  %6187 = vdwg.mxu0
  %v6188 = vadd.f32 %v6106, %v6182
  %v6189 = vadd.f32 %v6107, %v6185
  %v6190 = vld [vmem:[#allocation2 + $0x170] sm:$0xff]
  %v6191 = vld [vmem:[#allocation2 + $0x178] sm:$0xff]
  %v6192 = vpack.c.bf16 %v6191, %v6190
  %s6193 = scalar_lea.vmem %s7, 736
  %v6194 = vld [vmem:[%s6193] sm:$0xf]
  %v6195 = vld [vmem:[%s6193 + $0x4] sm:$0xf]
  %v6196 = vld [vmem:[%s6193 + $0x8] sm:$0xf]
  %v6197 = vld [vmem:[%s6193 + $0xc] sm:$0xf]
  %v6198 = vld [vmem:[%s6193 + $0x10] sm:$0xf]
  %v6199 = vld [vmem:[%s6193 + $0x14] sm:$0xf]
  %v6200 = vld [vmem:[%s6193 + $0x18] sm:$0xf]
  %v6201 = vld [vmem:[%s6193 + $0x1c] sm:$0xf]
  %v6210 = vunpack.c.l.b16 %v6194
  %v6211 = vunpack.c.l.b16 %v6195
  %v6212 = vunpack.c.l.b16 %v6196
  %v6213 = vunpack.c.l.b16 %v6197
  %v6214 = vunpack.c.l.b16 %v6198
  %v6215 = vunpack.c.l.b16 %v6199
  %v6216 = vunpack.c.l.b16 %v6200
  %v6217 = vunpack.c.l.b16 %v6201
  %v6218 = vpack.c.b16 %v6211, %v6210
  %v6219 = vpack.c.b16 %v6213, %v6212
  %v6220 = vpack.c.b16 %v6215, %v6214
  %v6221 = vpack.c.b16 %v6217, %v6216
  %v6227 = vsel %vm4210, %v6192, 0
  %6229 = vmatprep.subr.bf16.mxu0 0
  %6230 = vmatpush1.bf16.msra.mxu0 0
  %6231 = vmatprep.subr.bf16.mxu0 0
  %6232 = vmatpush1.bf16.msra.mxu0 0
  %6233 = vmatprep.subr.bf16.mxu0 0
  %6234 = vmatpush1.bf16.msra.mxu0 0
  %6235 = vmatprep.subr.bf16.mxu0 0
  %6236 = vmatpush1.bf16.msra.mxu0 0
  %6237 = vmatprep.subr.bf16.mxu0 0
  %6238 = vmatpush1.bf16.msra.mxu0 %v6221
  %6239 = vmatprep.subr.bf16.mxu0 0
  %6240 = vmatpush1.bf16.msra.mxu0 %v6220
  %6241 = vmatprep.subr.bf16.mxu0 0
  %6242 = vmatpush1.bf16.msra.mxu0 %v6219
  %6243 = vmatprep.subr.bf16.mxu0 0
  %6244 = vmatpush1.bf16.msra.mxu0 %v6218
  %6245 = vmatprep.subr.bf16.mxu0 0
  %6246 = vmatpush2.bf16.msra.mxu0 0
  %6247 = vmatprep.subr.bf16.mxu0 0
  %6248 = vmatpush2.bf16.msra.mxu0 0
  %6249 = vmatprep.subr.bf16.mxu0 0
  %6250 = vmatpush2.bf16.msra.mxu0 0
  %6251 = vmatprep.subr.bf16.mxu0 0
  %6252 = vmatpush2.bf16.msra.mxu0 0
  %6253 = vmatprep.subr.bf16.mxu0 0
  %6254 = vmatpush2.bf16.msra.mxu0 0
  %6255 = vmatprep.subr.bf16.mxu0 0
  %6256 = vmatpush2.bf16.msra.mxu0 0
  %6257 = vmatprep.subr.bf16.mxu0 0
  %6258 = vmatpush2.bf16.msra.mxu0 0
  %6259 = vmatprep.subr.bf16.mxu0 0
  %6260 = vmatpush2.bf16.msra.mxu0 0
  %6261 = vmatprep.mubr.bf16.mxu0 0
  %6262 = vmatmul.mubr.bf16.gmra.mxu0 %v6227
  %v6263 = vpop.f32.mrf.mxu0
  %v6264 = vadd.f32 0.0, %v6263
  %v6265 = vpop.f32.mrf.mxu0
  %v6266 = vpop.f32.mrf.mxu0
  %v6267 = vadd.f32 0.0, %v6266
  %v6268 = vpop.f32.mrf.mxu0
  %6269 = vdwg.mxu0
  %v6270 = vadd.f32 %v6188, %v6264
  %v6271 = vadd.f32 %v6189, %v6267
  %v6272 = vld [vmem:[#allocation2 + $0x180] sm:$0xff]
  %v6273 = vld [vmem:[#allocation2 + $0x188] sm:$0xff]
  %v6274 = vpack.c.bf16 %v6273, %v6272
  %s6275 = scalar_lea.vmem %s7, 768
  %v6276 = vld [vmem:[%s6275] sm:$0xf]
  %v6277 = vld [vmem:[%s6275 + $0x4] sm:$0xf]
  %v6278 = vld [vmem:[%s6275 + $0x8] sm:$0xf]
  %v6279 = vld [vmem:[%s6275 + $0xc] sm:$0xf]
  %v6280 = vld [vmem:[%s6275 + $0x10] sm:$0xf]
  %v6281 = vld [vmem:[%s6275 + $0x14] sm:$0xf]
  %v6282 = vld [vmem:[%s6275 + $0x18] sm:$0xf]
  %v6283 = vld [vmem:[%s6275 + $0x1c] sm:$0xf]
  %v6292 = vunpack.c.l.b16 %v6276
  %v6293 = vunpack.c.l.b16 %v6277
  %v6294 = vunpack.c.l.b16 %v6278
  %v6295 = vunpack.c.l.b16 %v6279
  %v6296 = vunpack.c.l.b16 %v6280
  %v6297 = vunpack.c.l.b16 %v6281
  %v6298 = vunpack.c.l.b16 %v6282
  %v6299 = vunpack.c.l.b16 %v6283
  %v6300 = vpack.c.b16 %v6293, %v6292
  %v6301 = vpack.c.b16 %v6295, %v6294
  %v6302 = vpack.c.b16 %v6297, %v6296
  %v6303 = vpack.c.b16 %v6299, %v6298
  %v6309 = vsel %vm4210, %v6274, 0
  %6311 = vmatprep.subr.bf16.mxu0 0
  %6312 = vmatpush1.bf16.msra.mxu0 0
  %6313 = vmatprep.subr.bf16.mxu0 0
  %6314 = vmatpush1.bf16.msra.mxu0 0
  %6315 = vmatprep.subr.bf16.mxu0 0
  %6316 = vmatpush1.bf16.msra.mxu0 0
  %6317 = vmatprep.subr.bf16.mxu0 0
  %6318 = vmatpush1.bf16.msra.mxu0 0
  %6319 = vmatprep.subr.bf16.mxu0 0
  %6320 = vmatpush1.bf16.msra.mxu0 %v6303
  %6321 = vmatprep.subr.bf16.mxu0 0
  %6322 = vmatpush1.bf16.msra.mxu0 %v6302
  %6323 = vmatprep.subr.bf16.mxu0 0
  %6324 = vmatpush1.bf16.msra.mxu0 %v6301
  %6325 = vmatprep.subr.bf16.mxu0 0
  %6326 = vmatpush1.bf16.msra.mxu0 %v6300
  %6327 = vmatprep.subr.bf16.mxu0 0
  %6328 = vmatpush2.bf16.msra.mxu0 0
  %6329 = vmatprep.subr.bf16.mxu0 0
  %6330 = vmatpush2.bf16.msra.mxu0 0
  %6331 = vmatprep.subr.bf16.mxu0 0
  %6332 = vmatpush2.bf16.msra.mxu0 0
  %6333 = vmatprep.subr.bf16.mxu0 0
  %6334 = vmatpush2.bf16.msra.mxu0 0
  %6335 = vmatprep.subr.bf16.mxu0 0
  %6336 = vmatpush2.bf16.msra.mxu0 0
  %6337 = vmatprep.subr.bf16.mxu0 0
  %6338 = vmatpush2.bf16.msra.mxu0 0
  %6339 = vmatprep.subr.bf16.mxu0 0
  %6340 = vmatpush2.bf16.msra.mxu0 0
  %6341 = vmatprep.subr.bf16.mxu0 0
  %6342 = vmatpush2.bf16.msra.mxu0 0
  %6343 = vmatprep.mubr.bf16.mxu0 0
  %6344 = vmatmul.mubr.bf16.gmra.mxu0 %v6309
  %v6345 = vpop.f32.mrf.mxu0
  %v6346 = vadd.f32 0.0, %v6345
  %v6347 = vpop.f32.mrf.mxu0
  %v6348 = vpop.f32.mrf.mxu0
  %v6349 = vadd.f32 0.0, %v6348
  %v6350 = vpop.f32.mrf.mxu0
  %6351 = vdwg.mxu0
  %v6352 = vadd.f32 %v6270, %v6346
  %v6353 = vadd.f32 %v6271, %v6349
  %v6354 = vld [vmem:[#allocation2 + $0x190] sm:$0xff]
  %v6355 = vld [vmem:[#allocation2 + $0x198] sm:$0xff]
  %v6356 = vpack.c.bf16 %v6355, %v6354
  %s6357 = scalar_lea.vmem %s7, 800
  %v6358 = vld [vmem:[%s6357] sm:$0xf]
  %v6359 = vld [vmem:[%s6357 + $0x4] sm:$0xf]
  %v6360 = vld [vmem:[%s6357 + $0x8] sm:$0xf]
  %v6361 = vld [vmem:[%s6357 + $0xc] sm:$0xf]
  %v6362 = vld [vmem:[%s6357 + $0x10] sm:$0xf]
  %v6363 = vld [vmem:[%s6357 + $0x14] sm:$0xf]
  %v6364 = vld [vmem:[%s6357 + $0x18] sm:$0xf]
  %v6365 = vld [vmem:[%s6357 + $0x1c] sm:$0xf]
  %v6374 = vunpack.c.l.b16 %v6358
  %v6375 = vunpack.c.l.b16 %v6359
  %v6376 = vunpack.c.l.b16 %v6360
  %v6377 = vunpack.c.l.b16 %v6361
  %v6378 = vunpack.c.l.b16 %v6362
  %v6379 = vunpack.c.l.b16 %v6363
  %v6380 = vunpack.c.l.b16 %v6364
  %v6381 = vunpack.c.l.b16 %v6365
  %v6382 = vpack.c.b16 %v6375, %v6374
  %v6383 = vpack.c.b16 %v6377, %v6376
  %v6384 = vpack.c.b16 %v6379, %v6378
  %v6385 = vpack.c.b16 %v6381, %v6380
  %v6391 = vsel %vm4210, %v6356, 0
  %6393 = vmatprep.subr.bf16.mxu0 0
  %6394 = vmatpush1.bf16.msra.mxu0 0
  %6395 = vmatprep.subr.bf16.mxu0 0
  %6396 = vmatpush1.bf16.msra.mxu0 0
  %6397 = vmatprep.subr.bf16.mxu0 0
  %6398 = vmatpush1.bf16.msra.mxu0 0
  %6399 = vmatprep.subr.bf16.mxu0 0
  %6400 = vmatpush1.bf16.msra.mxu0 0
  %6401 = vmatprep.subr.bf16.mxu0 0
  %6402 = vmatpush1.bf16.msra.mxu0 %v6385
  %6403 = vmatprep.subr.bf16.mxu0 0
  %6404 = vmatpush1.bf16.msra.mxu0 %v6384
  %6405 = vmatprep.subr.bf16.mxu0 0
  %6406 = vmatpush1.bf16.msra.mxu0 %v6383
  %6407 = vmatprep.subr.bf16.mxu0 0
  %6408 = vmatpush1.bf16.msra.mxu0 %v6382
  %6409 = vmatprep.subr.bf16.mxu0 0
  %6410 = vmatpush2.bf16.msra.mxu0 0
  %6411 = vmatprep.subr.bf16.mxu0 0
  %6412 = vmatpush2.bf16.msra.mxu0 0
  %6413 = vmatprep.subr.bf16.mxu0 0
  %6414 = vmatpush2.bf16.msra.mxu0 0
  %6415 = vmatprep.subr.bf16.mxu0 0
  %6416 = vmatpush2.bf16.msra.mxu0 0
  %6417 = vmatprep.subr.bf16.mxu0 0
  %6418 = vmatpush2.bf16.msra.mxu0 0
  %6419 = vmatprep.subr.bf16.mxu0 0
  %6420 = vmatpush2.bf16.msra.mxu0 0
  %6421 = vmatprep.subr.bf16.mxu0 0
  %6422 = vmatpush2.bf16.msra.mxu0 0
  %6423 = vmatprep.subr.bf16.mxu0 0
  %6424 = vmatpush2.bf16.msra.mxu0 0
  %6425 = vmatprep.mubr.bf16.mxu0 0
  %6426 = vmatmul.mubr.bf16.gmra.mxu0 %v6391
  %v6427 = vpop.f32.mrf.mxu0
  %v6428 = vadd.f32 0.0, %v6427
  %v6429 = vpop.f32.mrf.mxu0
  %v6430 = vpop.f32.mrf.mxu0
  %v6431 = vadd.f32 0.0, %v6430
  %v6432 = vpop.f32.mrf.mxu0
  %6433 = vdwg.mxu0
  %v6434 = vadd.f32 %v6352, %v6428
  %v6435 = vadd.f32 %v6353, %v6431
  %v6436 = vld [vmem:[#allocation2 + $0x1a0] sm:$0xff]
  %v6437 = vld [vmem:[#allocation2 + $0x1a8] sm:$0xff]
  %v6438 = vpack.c.bf16 %v6437, %v6436
  %s6439 = scalar_lea.vmem %s7, 832
  %v6440 = vld [vmem:[%s6439] sm:$0xf]
  %v6441 = vld [vmem:[%s6439 + $0x4] sm:$0xf]
  %v6442 = vld [vmem:[%s6439 + $0x8] sm:$0xf]
  %v6443 = vld [vmem:[%s6439 + $0xc] sm:$0xf]
  %v6444 = vld [vmem:[%s6439 + $0x10] sm:$0xf]
  %v6445 = vld [vmem:[%s6439 + $0x14] sm:$0xf]
  %v6446 = vld [vmem:[%s6439 + $0x18] sm:$0xf]
  %v6447 = vld [vmem:[%s6439 + $0x1c] sm:$0xf]
  %v6456 = vunpack.c.l.b16 %v6440
  %v6457 = vunpack.c.l.b16 %v6441
  %v6458 = vunpack.c.l.b16 %v6442
  %v6459 = vunpack.c.l.b16 %v6443
  %v6460 = vunpack.c.l.b16 %v6444
  %v6461 = vunpack.c.l.b16 %v6445
  %v6462 = vunpack.c.l.b16 %v6446
  %v6463 = vunpack.c.l.b16 %v6447
  %v6464 = vpack.c.b16 %v6457, %v6456
  %v6465 = vpack.c.b16 %v6459, %v6458
  %v6466 = vpack.c.b16 %v6461, %v6460
  %v6467 = vpack.c.b16 %v6463, %v6462
  %v6473 = vsel %vm4210, %v6438, 0
  %6475 = vmatprep.subr.bf16.mxu0 0
  %6476 = vmatpush1.bf16.msra.mxu0 0
  %6477 = vmatprep.subr.bf16.mxu0 0
  %6478 = vmatpush1.bf16.msra.mxu0 0
  %6479 = vmatprep.subr.bf16.mxu0 0
  %6480 = vmatpush1.bf16.msra.mxu0 0
  %6481 = vmatprep.subr.bf16.mxu0 0
  %6482 = vmatpush1.bf16.msra.mxu0 0
  %6483 = vmatprep.subr.bf16.mxu0 0
  %6484 = vmatpush1.bf16.msra.mxu0 %v6467
  %6485 = vmatprep.subr.bf16.mxu0 0
  %6486 = vmatpush1.bf16.msra.mxu0 %v6466
  %6487 = vmatprep.subr.bf16.mxu0 0
  %6488 = vmatpush1.bf16.msra.mxu0 %v6465
  %6489 = vmatprep.subr.bf16.mxu0 0
  %6490 = vmatpush1.bf16.msra.mxu0 %v6464
  %6491 = vmatprep.subr.bf16.mxu0 0
  %6492 = vmatpush2.bf16.msra.mxu0 0
  %6493 = vmatprep.subr.bf16.mxu0 0
  %6494 = vmatpush2.bf16.msra.mxu0 0
  %6495 = vmatprep.subr.bf16.mxu0 0
  %6496 = vmatpush2.bf16.msra.mxu0 0
  %6497 = vmatprep.subr.bf16.mxu0 0
  %6498 = vmatpush2.bf16.msra.mxu0 0
  %6499 = vmatprep.subr.bf16.mxu0 0
  %6500 = vmatpush2.bf16.msra.mxu0 0
  %6501 = vmatprep.subr.bf16.mxu0 0
  %6502 = vmatpush2.bf16.msra.mxu0 0
  %6503 = vmatprep.subr.bf16.mxu0 0
  %6504 = vmatpush2.bf16.msra.mxu0 0
  %6505 = vmatprep.subr.bf16.mxu0 0
  %6506 = vmatpush2.bf16.msra.mxu0 0
  %6507 = vmatprep.mubr.bf16.mxu0 0
  %6508 = vmatmul.mubr.bf16.gmra.mxu0 %v6473
  %v6509 = vpop.f32.mrf.mxu0
  %v6510 = vadd.f32 0.0, %v6509
  %v6511 = vpop.f32.mrf.mxu0
  %v6512 = vpop.f32.mrf.mxu0
  %v6513 = vadd.f32 0.0, %v6512
  %v6514 = vpop.f32.mrf.mxu0
  %6515 = vdwg.mxu0
  %v6516 = vadd.f32 %v6434, %v6510
  %v6517 = vadd.f32 %v6435, %v6513
  %v6518 = vld [vmem:[#allocation2 + $0x1b0] sm:$0xff]
  %v6519 = vld [vmem:[#allocation2 + $0x1b8] sm:$0xff]
  %v6520 = vpack.c.bf16 %v6519, %v6518
  %s6521 = scalar_lea.vmem %s7, 864
  %v6522 = vld [vmem:[%s6521] sm:$0xf]
  %v6523 = vld [vmem:[%s6521 + $0x4] sm:$0xf]
  %v6524 = vld [vmem:[%s6521 + $0x8] sm:$0xf]
  %v6525 = vld [vmem:[%s6521 + $0xc] sm:$0xf]
  %v6526 = vld [vmem:[%s6521 + $0x10] sm:$0xf]
  %v6527 = vld [vmem:[%s6521 + $0x14] sm:$0xf]
  %v6528 = vld [vmem:[%s6521 + $0x18] sm:$0xf]
  %v6529 = vld [vmem:[%s6521 + $0x1c] sm:$0xf]
  %v6538 = vunpack.c.l.b16 %v6522
  %v6539 = vunpack.c.l.b16 %v6523
  %v6540 = vunpack.c.l.b16 %v6524
  %v6541 = vunpack.c.l.b16 %v6525
  %v6542 = vunpack.c.l.b16 %v6526
  %v6543 = vunpack.c.l.b16 %v6527
  %v6544 = vunpack.c.l.b16 %v6528
  %v6545 = vunpack.c.l.b16 %v6529
  %v6546 = vpack.c.b16 %v6539, %v6538
  %v6547 = vpack.c.b16 %v6541, %v6540
  %v6548 = vpack.c.b16 %v6543, %v6542
  %v6549 = vpack.c.b16 %v6545, %v6544
  %v6555 = vsel %vm4210, %v6520, 0
  %6557 = vmatprep.subr.bf16.mxu0 0
  %6558 = vmatpush1.bf16.msra.mxu0 0
  %6559 = vmatprep.subr.bf16.mxu0 0
  %6560 = vmatpush1.bf16.msra.mxu0 0
  %6561 = vmatprep.subr.bf16.mxu0 0
  %6562 = vmatpush1.bf16.msra.mxu0 0
  %6563 = vmatprep.subr.bf16.mxu0 0
  %6564 = vmatpush1.bf16.msra.mxu0 0
  %6565 = vmatprep.subr.bf16.mxu0 0
  %6566 = vmatpush1.bf16.msra.mxu0 %v6549
  %6567 = vmatprep.subr.bf16.mxu0 0
  %6568 = vmatpush1.bf16.msra.mxu0 %v6548
  %6569 = vmatprep.subr.bf16.mxu0 0
  %6570 = vmatpush1.bf16.msra.mxu0 %v6547
  %6571 = vmatprep.subr.bf16.mxu0 0
  %6572 = vmatpush1.bf16.msra.mxu0 %v6546
  %6573 = vmatprep.subr.bf16.mxu0 0
  %6574 = vmatpush2.bf16.msra.mxu0 0
  %6575 = vmatprep.subr.bf16.mxu0 0
  %6576 = vmatpush2.bf16.msra.mxu0 0
  %6577 = vmatprep.subr.bf16.mxu0 0
  %6578 = vmatpush2.bf16.msra.mxu0 0
  %6579 = vmatprep.subr.bf16.mxu0 0
  %6580 = vmatpush2.bf16.msra.mxu0 0
  %6581 = vmatprep.subr.bf16.mxu0 0
  %6582 = vmatpush2.bf16.msra.mxu0 0
  %6583 = vmatprep.subr.bf16.mxu0 0
  %6584 = vmatpush2.bf16.msra.mxu0 0
  %6585 = vmatprep.subr.bf16.mxu0 0
  %6586 = vmatpush2.bf16.msra.mxu0 0
  %6587 = vmatprep.subr.bf16.mxu0 0
  %6588 = vmatpush2.bf16.msra.mxu0 0
  %6589 = vmatprep.mubr.bf16.mxu0 0
  %6590 = vmatmul.mubr.bf16.gmra.mxu0 %v6555
  %v6591 = vpop.f32.mrf.mxu0
  %v6592 = vadd.f32 0.0, %v6591
  %v6593 = vpop.f32.mrf.mxu0
  %v6594 = vpop.f32.mrf.mxu0
  %v6595 = vadd.f32 0.0, %v6594
  %v6596 = vpop.f32.mrf.mxu0
  %6597 = vdwg.mxu0
  %v6598 = vadd.f32 %v6516, %v6592
  %v6599 = vadd.f32 %v6517, %v6595
  %v6600 = vld [vmem:[#allocation2 + $0x1c0] sm:$0xff]
  %v6601 = vld [vmem:[#allocation2 + $0x1c8] sm:$0xff]
  %v6602 = vpack.c.bf16 %v6601, %v6600
  %s6603 = scalar_lea.vmem %s7, 896
  %v6604 = vld [vmem:[%s6603] sm:$0xf]
  %v6605 = vld [vmem:[%s6603 + $0x4] sm:$0xf]
  %v6606 = vld [vmem:[%s6603 + $0x8] sm:$0xf]
  %v6607 = vld [vmem:[%s6603 + $0xc] sm:$0xf]
  %v6608 = vld [vmem:[%s6603 + $0x10] sm:$0xf]
  %v6609 = vld [vmem:[%s6603 + $0x14] sm:$0xf]
  %v6610 = vld [vmem:[%s6603 + $0x18] sm:$0xf]
  %v6611 = vld [vmem:[%s6603 + $0x1c] sm:$0xf]
  %v6620 = vunpack.c.l.b16 %v6604
  %v6621 = vunpack.c.l.b16 %v6605
  %v6622 = vunpack.c.l.b16 %v6606
  %v6623 = vunpack.c.l.b16 %v6607
  %v6624 = vunpack.c.l.b16 %v6608
  %v6625 = vunpack.c.l.b16 %v6609
  %v6626 = vunpack.c.l.b16 %v6610
  %v6627 = vunpack.c.l.b16 %v6611
  %v6628 = vpack.c.b16 %v6621, %v6620
  %v6629 = vpack.c.b16 %v6623, %v6622
  %v6630 = vpack.c.b16 %v6625, %v6624
  %v6631 = vpack.c.b16 %v6627, %v6626
  %v6637 = vsel %vm4210, %v6602, 0
  %6639 = vmatprep.subr.bf16.mxu0 0
  %6640 = vmatpush1.bf16.msra.mxu0 0
  %6641 = vmatprep.subr.bf16.mxu0 0
  %6642 = vmatpush1.bf16.msra.mxu0 0
  %6643 = vmatprep.subr.bf16.mxu0 0
  %6644 = vmatpush1.bf16.msra.mxu0 0
  %6645 = vmatprep.subr.bf16.mxu0 0
  %6646 = vmatpush1.bf16.msra.mxu0 0
  %6647 = vmatprep.subr.bf16.mxu0 0
  %6648 = vmatpush1.bf16.msra.mxu0 %v6631
  %6649 = vmatprep.subr.bf16.mxu0 0
  %6650 = vmatpush1.bf16.msra.mxu0 %v6630
  %6651 = vmatprep.subr.bf16.mxu0 0
  %6652 = vmatpush1.bf16.msra.mxu0 %v6629
  %6653 = vmatprep.subr.bf16.mxu0 0
  %6654 = vmatpush1.bf16.msra.mxu0 %v6628
  %6655 = vmatprep.subr.bf16.mxu0 0
  %6656 = vmatpush2.bf16.msra.mxu0 0
  %6657 = vmatprep.subr.bf16.mxu0 0
  %6658 = vmatpush2.bf16.msra.mxu0 0
  %6659 = vmatprep.subr.bf16.mxu0 0
  %6660 = vmatpush2.bf16.msra.mxu0 0
  %6661 = vmatprep.subr.bf16.mxu0 0
  %6662 = vmatpush2.bf16.msra.mxu0 0
  %6663 = vmatprep.subr.bf16.mxu0 0
  %6664 = vmatpush2.bf16.msra.mxu0 0
  %6665 = vmatprep.subr.bf16.mxu0 0
  %6666 = vmatpush2.bf16.msra.mxu0 0
  %6667 = vmatprep.subr.bf16.mxu0 0
  %6668 = vmatpush2.bf16.msra.mxu0 0
  %6669 = vmatprep.subr.bf16.mxu0 0
  %6670 = vmatpush2.bf16.msra.mxu0 0
  %6671 = vmatprep.mubr.bf16.mxu0 0
  %6672 = vmatmul.mubr.bf16.gmra.mxu0 %v6637
  %v6673 = vpop.f32.mrf.mxu0
  %v6674 = vadd.f32 0.0, %v6673
  %v6675 = vpop.f32.mrf.mxu0
  %v6676 = vpop.f32.mrf.mxu0
  %v6677 = vadd.f32 0.0, %v6676
  %v6678 = vpop.f32.mrf.mxu0
  %6679 = vdwg.mxu0
  %v6680 = vadd.f32 %v6598, %v6674
  %v6681 = vadd.f32 %v6599, %v6677
  %v6682 = vld [vmem:[#allocation2 + $0x1d0] sm:$0xff]
  %v6683 = vld [vmem:[#allocation2 + $0x1d8] sm:$0xff]
  %v6684 = vpack.c.bf16 %v6683, %v6682
  %s6685 = scalar_lea.vmem %s7, 928
  %v6686 = vld [vmem:[%s6685] sm:$0xf]
  %v6687 = vld [vmem:[%s6685 + $0x4] sm:$0xf]
  %v6688 = vld [vmem:[%s6685 + $0x8] sm:$0xf]
  %v6689 = vld [vmem:[%s6685 + $0xc] sm:$0xf]
  %v6690 = vld [vmem:[%s6685 + $0x10] sm:$0xf]
  %v6691 = vld [vmem:[%s6685 + $0x14] sm:$0xf]
  %v6692 = vld [vmem:[%s6685 + $0x18] sm:$0xf]
  %v6693 = vld [vmem:[%s6685 + $0x1c] sm:$0xf]
  %v6702 = vunpack.c.l.b16 %v6686
  %v6703 = vunpack.c.l.b16 %v6687
  %v6704 = vunpack.c.l.b16 %v6688
  %v6705 = vunpack.c.l.b16 %v6689
  %v6706 = vunpack.c.l.b16 %v6690
  %v6707 = vunpack.c.l.b16 %v6691
  %v6708 = vunpack.c.l.b16 %v6692
  %v6709 = vunpack.c.l.b16 %v6693
  %v6710 = vpack.c.b16 %v6703, %v6702
  %v6711 = vpack.c.b16 %v6705, %v6704
  %v6712 = vpack.c.b16 %v6707, %v6706
  %v6713 = vpack.c.b16 %v6709, %v6708
  %v6719 = vsel %vm4210, %v6684, 0
  %6721 = vmatprep.subr.bf16.mxu0 0
  %6722 = vmatpush1.bf16.msra.mxu0 0
  %6723 = vmatprep.subr.bf16.mxu0 0
  %6724 = vmatpush1.bf16.msra.mxu0 0
  %6725 = vmatprep.subr.bf16.mxu0 0
  %6726 = vmatpush1.bf16.msra.mxu0 0
  %6727 = vmatprep.subr.bf16.mxu0 0
  %6728 = vmatpush1.bf16.msra.mxu0 0
  %6729 = vmatprep.subr.bf16.mxu0 0
  %6730 = vmatpush1.bf16.msra.mxu0 %v6713
  %6731 = vmatprep.subr.bf16.mxu0 0
  %6732 = vmatpush1.bf16.msra.mxu0 %v6712
  %6733 = vmatprep.subr.bf16.mxu0 0
  %6734 = vmatpush1.bf16.msra.mxu0 %v6711
  %6735 = vmatprep.subr.bf16.mxu0 0
  %6736 = vmatpush1.bf16.msra.mxu0 %v6710
  %6737 = vmatprep.subr.bf16.mxu0 0
  %6738 = vmatpush2.bf16.msra.mxu0 0
  %6739 = vmatprep.subr.bf16.mxu0 0
  %6740 = vmatpush2.bf16.msra.mxu0 0
  %6741 = vmatprep.subr.bf16.mxu0 0
  %6742 = vmatpush2.bf16.msra.mxu0 0
  %6743 = vmatprep.subr.bf16.mxu0 0
  %6744 = vmatpush2.bf16.msra.mxu0 0
  %6745 = vmatprep.subr.bf16.mxu0 0
  %6746 = vmatpush2.bf16.msra.mxu0 0
  %6747 = vmatprep.subr.bf16.mxu0 0
  %6748 = vmatpush2.bf16.msra.mxu0 0
  %6749 = vmatprep.subr.bf16.mxu0 0
  %6750 = vmatpush2.bf16.msra.mxu0 0
  %6751 = vmatprep.subr.bf16.mxu0 0
  %6752 = vmatpush2.bf16.msra.mxu0 0
  %6753 = vmatprep.mubr.bf16.mxu0 0
  %6754 = vmatmul.mubr.bf16.gmra.mxu0 %v6719
  %v6755 = vpop.f32.mrf.mxu0
  %v6756 = vadd.f32 0.0, %v6755
  %v6757 = vpop.f32.mrf.mxu0
  %v6758 = vpop.f32.mrf.mxu0
  %v6759 = vadd.f32 0.0, %v6758
  %v6760 = vpop.f32.mrf.mxu0
  %6761 = vdwg.mxu0
  %v6762 = vadd.f32 %v6680, %v6756
  %v6763 = vadd.f32 %v6681, %v6759
  %v6764 = vld [vmem:[#allocation2 + $0x1e0] sm:$0xff]
  %v6765 = vld [vmem:[#allocation2 + $0x1e8] sm:$0xff]
  %v6766 = vpack.c.bf16 %v6765, %v6764
  %s6767 = scalar_lea.vmem %s7, 960
  %v6768 = vld [vmem:[%s6767] sm:$0xf]
  %v6769 = vld [vmem:[%s6767 + $0x4] sm:$0xf]
  %v6770 = vld [vmem:[%s6767 + $0x8] sm:$0xf]
  %v6771 = vld [vmem:[%s6767 + $0xc] sm:$0xf]
  %v6772 = vld [vmem:[%s6767 + $0x10] sm:$0xf]
  %v6773 = vld [vmem:[%s6767 + $0x14] sm:$0xf]
  %v6774 = vld [vmem:[%s6767 + $0x18] sm:$0xf]
  %v6775 = vld [vmem:[%s6767 + $0x1c] sm:$0xf]
  %v6784 = vunpack.c.l.b16 %v6768
  %v6785 = vunpack.c.l.b16 %v6769
  %v6786 = vunpack.c.l.b16 %v6770
  %v6787 = vunpack.c.l.b16 %v6771
  %v6788 = vunpack.c.l.b16 %v6772
  %v6789 = vunpack.c.l.b16 %v6773
  %v6790 = vunpack.c.l.b16 %v6774
  %v6791 = vunpack.c.l.b16 %v6775
  %v6792 = vpack.c.b16 %v6785, %v6784
  %v6793 = vpack.c.b16 %v6787, %v6786
  %v6794 = vpack.c.b16 %v6789, %v6788
  %v6795 = vpack.c.b16 %v6791, %v6790
  %v6801 = vsel %vm4210, %v6766, 0
  %6803 = vmatprep.subr.bf16.mxu0 0
  %6804 = vmatpush1.bf16.msra.mxu0 0
  %6805 = vmatprep.subr.bf16.mxu0 0
  %6806 = vmatpush1.bf16.msra.mxu0 0
  %6807 = vmatprep.subr.bf16.mxu0 0
  %6808 = vmatpush1.bf16.msra.mxu0 0
  %6809 = vmatprep.subr.bf16.mxu0 0
  %6810 = vmatpush1.bf16.msra.mxu0 0
  %6811 = vmatprep.subr.bf16.mxu0 0
  %6812 = vmatpush1.bf16.msra.mxu0 %v6795
  %6813 = vmatprep.subr.bf16.mxu0 0
  %6814 = vmatpush1.bf16.msra.mxu0 %v6794
  %6815 = vmatprep.subr.bf16.mxu0 0
  %6816 = vmatpush1.bf16.msra.mxu0 %v6793
  %6817 = vmatprep.subr.bf16.mxu0 0
  %6818 = vmatpush1.bf16.msra.mxu0 %v6792
  %6819 = vmatprep.subr.bf16.mxu0 0
  %6820 = vmatpush2.bf16.msra.mxu0 0
  %6821 = vmatprep.subr.bf16.mxu0 0
  %6822 = vmatpush2.bf16.msra.mxu0 0
  %6823 = vmatprep.subr.bf16.mxu0 0
  %6824 = vmatpush2.bf16.msra.mxu0 0
  %6825 = vmatprep.subr.bf16.mxu0 0
  %6826 = vmatpush2.bf16.msra.mxu0 0
  %6827 = vmatprep.subr.bf16.mxu0 0
  %6828 = vmatpush2.bf16.msra.mxu0 0
  %6829 = vmatprep.subr.bf16.mxu0 0
  %6830 = vmatpush2.bf16.msra.mxu0 0
  %6831 = vmatprep.subr.bf16.mxu0 0
  %6832 = vmatpush2.bf16.msra.mxu0 0
  %6833 = vmatprep.subr.bf16.mxu0 0
  %6834 = vmatpush2.bf16.msra.mxu0 0
  %6835 = vmatprep.mubr.bf16.mxu0 0
  %6836 = vmatmul.mubr.bf16.gmra.mxu0 %v6801
  %v6837 = vpop.f32.mrf.mxu0
  %v6838 = vadd.f32 0.0, %v6837
  %v6839 = vpop.f32.mrf.mxu0
  %v6840 = vpop.f32.mrf.mxu0
  %v6841 = vadd.f32 0.0, %v6840
  %v6842 = vpop.f32.mrf.mxu0
  %6843 = vdwg.mxu0
  %v6844 = vadd.f32 %v6762, %v6838
  %v6845 = vadd.f32 %v6763, %v6841
  %v6846 = vld [vmem:[#allocation2 + $0x1f0] sm:$0xff]
  %v6847 = vld [vmem:[#allocation2 + $0x1f8] sm:$0xff]
  %v6848 = vpack.c.bf16 %v6847, %v6846
  %s6849 = scalar_lea.vmem %s7, 992
  %v6850 = vld [vmem:[%s6849] sm:$0xf]
  %v6851 = vld [vmem:[%s6849 + $0x4] sm:$0xf]
  %v6852 = vld [vmem:[%s6849 + $0x8] sm:$0xf]
  %v6853 = vld [vmem:[%s6849 + $0xc] sm:$0xf]
  %v6854 = vld [vmem:[%s6849 + $0x10] sm:$0xf]
  %v6855 = vld [vmem:[%s6849 + $0x14] sm:$0xf]
  %v6856 = vld [vmem:[%s6849 + $0x18] sm:$0xf]
  %v6857 = vld [vmem:[%s6849 + $0x1c] sm:$0xf]
  %v6866 = vunpack.c.l.b16 %v6850
  %v6867 = vunpack.c.l.b16 %v6851
  %v6868 = vunpack.c.l.b16 %v6852
  %v6869 = vunpack.c.l.b16 %v6853
  %v6870 = vunpack.c.l.b16 %v6854
  %v6871 = vunpack.c.l.b16 %v6855
  %v6872 = vunpack.c.l.b16 %v6856
  %v6873 = vunpack.c.l.b16 %v6857
  %v6874 = vpack.c.b16 %v6867, %v6866
  %v6875 = vpack.c.b16 %v6869, %v6868
  %v6876 = vpack.c.b16 %v6871, %v6870
  %v6877 = vpack.c.b16 %v6873, %v6872
  %v6883 = vsel %vm4210, %v6848, 0
  %6885 = vmatprep.subr.bf16.mxu0 0
  %6886 = vmatpush1.bf16.msra.mxu0 0
  %6887 = vmatprep.subr.bf16.mxu0 0
  %6888 = vmatpush1.bf16.msra.mxu0 0
  %6889 = vmatprep.subr.bf16.mxu0 0
  %6890 = vmatpush1.bf16.msra.mxu0 0
  %6891 = vmatprep.subr.bf16.mxu0 0
  %6892 = vmatpush1.bf16.msra.mxu0 0
  %6893 = vmatprep.subr.bf16.mxu0 0
  %6894 = vmatpush1.bf16.msra.mxu0 %v6877
  %6895 = vmatprep.subr.bf16.mxu0 0
  %6896 = vmatpush1.bf16.msra.mxu0 %v6876
  %6897 = vmatprep.subr.bf16.mxu0 0
  %6898 = vmatpush1.bf16.msra.mxu0 %v6875
  %6899 = vmatprep.subr.bf16.mxu0 0
  %6900 = vmatpush1.bf16.msra.mxu0 %v6874
  %6901 = vmatprep.subr.bf16.mxu0 0
  %6902 = vmatpush2.bf16.msra.mxu0 0
  %6903 = vmatprep.subr.bf16.mxu0 0
  %6904 = vmatpush2.bf16.msra.mxu0 0
  %6905 = vmatprep.subr.bf16.mxu0 0
  %6906 = vmatpush2.bf16.msra.mxu0 0
  %6907 = vmatprep.subr.bf16.mxu0 0
  %6908 = vmatpush2.bf16.msra.mxu0 0
  %6909 = vmatprep.subr.bf16.mxu0 0
  %6910 = vmatpush2.bf16.msra.mxu0 0
  %6911 = vmatprep.subr.bf16.mxu0 0
  %6912 = vmatpush2.bf16.msra.mxu0 0
  %6913 = vmatprep.subr.bf16.mxu0 0
  %6914 = vmatpush2.bf16.msra.mxu0 0
  %6915 = vmatprep.subr.bf16.mxu0 0
  %6916 = vmatpush2.bf16.msra.mxu0 0
  %6917 = vmatprep.mubr.bf16.mxu0 0
  %6918 = vmatmul.mubr.bf16.gmra.mxu0 %v6883
  %v6919 = vpop.f32.mrf.mxu0
  %v6920 = vadd.f32 0.0, %v6919
  %v6921 = vpop.f32.mrf.mxu0
  %v6922 = vpop.f32.mrf.mxu0
  %v6923 = vadd.f32 0.0, %v6922
  %v6924 = vpop.f32.mrf.mxu0
  %6925 = vdwg.mxu0
  %v6926 = vadd.f32 %v6844, %v6920
  %v6927 = vadd.f32 %v6845, %v6923
  %v6928 = vld [vmem:[#allocation2 + $0x200] sm:$0xff]
  %v6929 = vld [vmem:[#allocation2 + $0x208] sm:$0xff]
  %v6930 = vpack.c.bf16 %v6929, %v6928
  %s6931 = scalar_lea.vmem %s7, 1024
  %v6932 = vld [vmem:[%s6931] sm:$0xf]
  %v6933 = vld [vmem:[%s6931 + $0x4] sm:$0xf]
  %v6934 = vld [vmem:[%s6931 + $0x8] sm:$0xf]
  %v6935 = vld [vmem:[%s6931 + $0xc] sm:$0xf]
  %v6936 = vld [vmem:[%s6931 + $0x10] sm:$0xf]
  %v6937 = vld [vmem:[%s6931 + $0x14] sm:$0xf]
  %v6938 = vld [vmem:[%s6931 + $0x18] sm:$0xf]
  %v6939 = vld [vmem:[%s6931 + $0x1c] sm:$0xf]
  %v6948 = vunpack.c.l.b16 %v6932
  %v6949 = vunpack.c.l.b16 %v6933
  %v6950 = vunpack.c.l.b16 %v6934
  %v6951 = vunpack.c.l.b16 %v6935
  %v6952 = vunpack.c.l.b16 %v6936
  %v6953 = vunpack.c.l.b16 %v6937
  %v6954 = vunpack.c.l.b16 %v6938
  %v6955 = vunpack.c.l.b16 %v6939
  %v6956 = vpack.c.b16 %v6949, %v6948
  %v6957 = vpack.c.b16 %v6951, %v6950
  %v6958 = vpack.c.b16 %v6953, %v6952
  %v6959 = vpack.c.b16 %v6955, %v6954
  %v6965 = vsel %vm4210, %v6930, 0
  %6967 = vmatprep.subr.bf16.mxu0 0
  %6968 = vmatpush1.bf16.msra.mxu0 0
  %6969 = vmatprep.subr.bf16.mxu0 0
  %6970 = vmatpush1.bf16.msra.mxu0 0
  %6971 = vmatprep.subr.bf16.mxu0 0
  %6972 = vmatpush1.bf16.msra.mxu0 0
  %6973 = vmatprep.subr.bf16.mxu0 0
  %6974 = vmatpush1.bf16.msra.mxu0 0
  %6975 = vmatprep.subr.bf16.mxu0 0
  %6976 = vmatpush1.bf16.msra.mxu0 %v6959
  %6977 = vmatprep.subr.bf16.mxu0 0
  %6978 = vmatpush1.bf16.msra.mxu0 %v6958
  %6979 = vmatprep.subr.bf16.mxu0 0
  %6980 = vmatpush1.bf16.msra.mxu0 %v6957
  %6981 = vmatprep.subr.bf16.mxu0 0
  %6982 = vmatpush1.bf16.msra.mxu0 %v6956
  %6983 = vmatprep.subr.bf16.mxu0 0
  %6984 = vmatpush2.bf16.msra.mxu0 0
  %6985 = vmatprep.subr.bf16.mxu0 0
  %6986 = vmatpush2.bf16.msra.mxu0 0
  %6987 = vmatprep.subr.bf16.mxu0 0
  %6988 = vmatpush2.bf16.msra.mxu0 0
  %6989 = vmatprep.subr.bf16.mxu0 0
  %6990 = vmatpush2.bf16.msra.mxu0 0
  %6991 = vmatprep.subr.bf16.mxu0 0
  %6992 = vmatpush2.bf16.msra.mxu0 0
  %6993 = vmatprep.subr.bf16.mxu0 0
  %6994 = vmatpush2.bf16.msra.mxu0 0
  %6995 = vmatprep.subr.bf16.mxu0 0
  %6996 = vmatpush2.bf16.msra.mxu0 0
  %6997 = vmatprep.subr.bf16.mxu0 0
  %6998 = vmatpush2.bf16.msra.mxu0 0
  %6999 = vmatprep.mubr.bf16.mxu0 0
  %7000 = vmatmul.mubr.bf16.gmra.mxu0 %v6965
  %v7001 = vpop.f32.mrf.mxu0
  %v7002 = vadd.f32 0.0, %v7001
  %v7003 = vpop.f32.mrf.mxu0
  %v7004 = vpop.f32.mrf.mxu0
  %v7005 = vadd.f32 0.0, %v7004
  %v7006 = vpop.f32.mrf.mxu0
  %7007 = vdwg.mxu0
  %v7008 = vadd.f32 %v6926, %v7002
  %v7009 = vadd.f32 %v6927, %v7005
  %v7010 = vld [vmem:[#allocation2 + $0x210] sm:$0xff]
  %v7011 = vld [vmem:[#allocation2 + $0x218] sm:$0xff]
  %v7012 = vpack.c.bf16 %v7011, %v7010
  %s7013 = scalar_lea.vmem %s7, 1056
  %v7014 = vld [vmem:[%s7013] sm:$0xf]
  %v7015 = vld [vmem:[%s7013 + $0x4] sm:$0xf]
  %v7016 = vld [vmem:[%s7013 + $0x8] sm:$0xf]
  %v7017 = vld [vmem:[%s7013 + $0xc] sm:$0xf]
  %v7018 = vld [vmem:[%s7013 + $0x10] sm:$0xf]
  %v7019 = vld [vmem:[%s7013 + $0x14] sm:$0xf]
  %v7020 = vld [vmem:[%s7013 + $0x18] sm:$0xf]
  %v7021 = vld [vmem:[%s7013 + $0x1c] sm:$0xf]
  %v7030 = vunpack.c.l.b16 %v7014
  %v7031 = vunpack.c.l.b16 %v7015
  %v7032 = vunpack.c.l.b16 %v7016
  %v7033 = vunpack.c.l.b16 %v7017
  %v7034 = vunpack.c.l.b16 %v7018
  %v7035 = vunpack.c.l.b16 %v7019
  %v7036 = vunpack.c.l.b16 %v7020
  %v7037 = vunpack.c.l.b16 %v7021
  %v7038 = vpack.c.b16 %v7031, %v7030
  %v7039 = vpack.c.b16 %v7033, %v7032
  %v7040 = vpack.c.b16 %v7035, %v7034
  %v7041 = vpack.c.b16 %v7037, %v7036
  %v7047 = vsel %vm4210, %v7012, 0
  %7049 = vmatprep.subr.bf16.mxu0 0
  %7050 = vmatpush1.bf16.msra.mxu0 0
  %7051 = vmatprep.subr.bf16.mxu0 0
  %7052 = vmatpush1.bf16.msra.mxu0 0
  %7053 = vmatprep.subr.bf16.mxu0 0
  %7054 = vmatpush1.bf16.msra.mxu0 0
  %7055 = vmatprep.subr.bf16.mxu0 0
  %7056 = vmatpush1.bf16.msra.mxu0 0
  %7057 = vmatprep.subr.bf16.mxu0 0
  %7058 = vmatpush1.bf16.msra.mxu0 %v7041
  %7059 = vmatprep.subr.bf16.mxu0 0
  %7060 = vmatpush1.bf16.msra.mxu0 %v7040
  %7061 = vmatprep.subr.bf16.mxu0 0
  %7062 = vmatpush1.bf16.msra.mxu0 %v7039
  %7063 = vmatprep.subr.bf16.mxu0 0
  %7064 = vmatpush1.bf16.msra.mxu0 %v7038
  %7065 = vmatprep.subr.bf16.mxu0 0
  %7066 = vmatpush2.bf16.msra.mxu0 0
  %7067 = vmatprep.subr.bf16.mxu0 0
  %7068 = vmatpush2.bf16.msra.mxu0 0
  %7069 = vmatprep.subr.bf16.mxu0 0
  %7070 = vmatpush2.bf16.msra.mxu0 0
  %7071 = vmatprep.subr.bf16.mxu0 0
  %7072 = vmatpush2.bf16.msra.mxu0 0
  %7073 = vmatprep.subr.bf16.mxu0 0
  %7074 = vmatpush2.bf16.msra.mxu0 0
  %7075 = vmatprep.subr.bf16.mxu0 0
  %7076 = vmatpush2.bf16.msra.mxu0 0
  %7077 = vmatprep.subr.bf16.mxu0 0
  %7078 = vmatpush2.bf16.msra.mxu0 0
  %7079 = vmatprep.subr.bf16.mxu0 0
  %7080 = vmatpush2.bf16.msra.mxu0 0
  %7081 = vmatprep.mubr.bf16.mxu0 0
  %7082 = vmatmul.mubr.bf16.gmra.mxu0 %v7047
  %v7083 = vpop.f32.mrf.mxu0
  %v7084 = vadd.f32 0.0, %v7083
  %v7085 = vpop.f32.mrf.mxu0
  %v7086 = vpop.f32.mrf.mxu0
  %v7087 = vadd.f32 0.0, %v7086
  %v7088 = vpop.f32.mrf.mxu0
  %7089 = vdwg.mxu0
  %v7090 = vadd.f32 %v7008, %v7084
  %v7091 = vadd.f32 %v7009, %v7087
  %v7092 = vld [vmem:[#allocation2 + $0x220] sm:$0xff]
  %v7093 = vld [vmem:[#allocation2 + $0x228] sm:$0xff]
  %v7094 = vpack.c.bf16 %v7093, %v7092
  %s7095 = scalar_lea.vmem %s7, 1088
  %v7096 = vld [vmem:[%s7095] sm:$0xf]
  %v7097 = vld [vmem:[%s7095 + $0x4] sm:$0xf]
  %v7098 = vld [vmem:[%s7095 + $0x8] sm:$0xf]
  %v7099 = vld [vmem:[%s7095 + $0xc] sm:$0xf]
  %v7100 = vld [vmem:[%s7095 + $0x10] sm:$0xf]
  %v7101 = vld [vmem:[%s7095 + $0x14] sm:$0xf]
  %v7102 = vld [vmem:[%s7095 + $0x18] sm:$0xf]
  %v7103 = vld [vmem:[%s7095 + $0x1c] sm:$0xf]
  %v7112 = vunpack.c.l.b16 %v7096
  %v7113 = vunpack.c.l.b16 %v7097
  %v7114 = vunpack.c.l.b16 %v7098
  %v7115 = vunpack.c.l.b16 %v7099
  %v7116 = vunpack.c.l.b16 %v7100
  %v7117 = vunpack.c.l.b16 %v7101
  %v7118 = vunpack.c.l.b16 %v7102
  %v7119 = vunpack.c.l.b16 %v7103
  %v7120 = vpack.c.b16 %v7113, %v7112
  %v7121 = vpack.c.b16 %v7115, %v7114
  %v7122 = vpack.c.b16 %v7117, %v7116
  %v7123 = vpack.c.b16 %v7119, %v7118
  %v7129 = vsel %vm4210, %v7094, 0
  %7131 = vmatprep.subr.bf16.mxu0 0
  %7132 = vmatpush1.bf16.msra.mxu0 0
  %7133 = vmatprep.subr.bf16.mxu0 0
  %7134 = vmatpush1.bf16.msra.mxu0 0
  %7135 = vmatprep.subr.bf16.mxu0 0
  %7136 = vmatpush1.bf16.msra.mxu0 0
  %7137 = vmatprep.subr.bf16.mxu0 0
  %7138 = vmatpush1.bf16.msra.mxu0 0
  %7139 = vmatprep.subr.bf16.mxu0 0
  %7140 = vmatpush1.bf16.msra.mxu0 %v7123
  %7141 = vmatprep.subr.bf16.mxu0 0
  %7142 = vmatpush1.bf16.msra.mxu0 %v7122
  %7143 = vmatprep.subr.bf16.mxu0 0
  %7144 = vmatpush1.bf16.msra.mxu0 %v7121
  %7145 = vmatprep.subr.bf16.mxu0 0
  %7146 = vmatpush1.bf16.msra.mxu0 %v7120
  %7147 = vmatprep.subr.bf16.mxu0 0
  %7148 = vmatpush2.bf16.msra.mxu0 0
  %7149 = vmatprep.subr.bf16.mxu0 0
  %7150 = vmatpush2.bf16.msra.mxu0 0
  %7151 = vmatprep.subr.bf16.mxu0 0
  %7152 = vmatpush2.bf16.msra.mxu0 0
  %7153 = vmatprep.subr.bf16.mxu0 0
  %7154 = vmatpush2.bf16.msra.mxu0 0
  %7155 = vmatprep.subr.bf16.mxu0 0
  %7156 = vmatpush2.bf16.msra.mxu0 0
  %7157 = vmatprep.subr.bf16.mxu0 0
  %7158 = vmatpush2.bf16.msra.mxu0 0
  %7159 = vmatprep.subr.bf16.mxu0 0
  %7160 = vmatpush2.bf16.msra.mxu0 0
  %7161 = vmatprep.subr.bf16.mxu0 0
  %7162 = vmatpush2.bf16.msra.mxu0 0
  %7163 = vmatprep.mubr.bf16.mxu0 0
  %7164 = vmatmul.mubr.bf16.gmra.mxu0 %v7129
  %v7165 = vpop.f32.mrf.mxu0
  %v7166 = vadd.f32 0.0, %v7165
  %v7167 = vpop.f32.mrf.mxu0
  %v7168 = vpop.f32.mrf.mxu0
  %v7169 = vadd.f32 0.0, %v7168
  %v7170 = vpop.f32.mrf.mxu0
  %7171 = vdwg.mxu0
  %v7172 = vadd.f32 %v7090, %v7166
  %v7173 = vadd.f32 %v7091, %v7169
  %v7174 = vld [vmem:[#allocation2 + $0x230] sm:$0xff]
  %v7175 = vld [vmem:[#allocation2 + $0x238] sm:$0xff]
  %v7176 = vpack.c.bf16 %v7175, %v7174
  %s7177 = scalar_lea.vmem %s7, 1120
  %v7178 = vld [vmem:[%s7177] sm:$0xf]
  %v7179 = vld [vmem:[%s7177 + $0x4] sm:$0xf]
  %v7180 = vld [vmem:[%s7177 + $0x8] sm:$0xf]
  %v7181 = vld [vmem:[%s7177 + $0xc] sm:$0xf]
  %v7182 = vld [vmem:[%s7177 + $0x10] sm:$0xf]
  %v7183 = vld [vmem:[%s7177 + $0x14] sm:$0xf]
  %v7184 = vld [vmem:[%s7177 + $0x18] sm:$0xf]
  %v7185 = vld [vmem:[%s7177 + $0x1c] sm:$0xf]
  %v7194 = vunpack.c.l.b16 %v7178
  %v7195 = vunpack.c.l.b16 %v7179
  %v7196 = vunpack.c.l.b16 %v7180
  %v7197 = vunpack.c.l.b16 %v7181
  %v7198 = vunpack.c.l.b16 %v7182
  %v7199 = vunpack.c.l.b16 %v7183
  %v7200 = vunpack.c.l.b16 %v7184
  %v7201 = vunpack.c.l.b16 %v7185
  %v7202 = vpack.c.b16 %v7195, %v7194
  %v7203 = vpack.c.b16 %v7197, %v7196
  %v7204 = vpack.c.b16 %v7199, %v7198
  %v7205 = vpack.c.b16 %v7201, %v7200
  %v7211 = vsel %vm4210, %v7176, 0
  %7213 = vmatprep.subr.bf16.mxu0 0
  %7214 = vmatpush1.bf16.msra.mxu0 0
  %7215 = vmatprep.subr.bf16.mxu0 0
  %7216 = vmatpush1.bf16.msra.mxu0 0
  %7217 = vmatprep.subr.bf16.mxu0 0
  %7218 = vmatpush1.bf16.msra.mxu0 0
  %7219 = vmatprep.subr.bf16.mxu0 0
  %7220 = vmatpush1.bf16.msra.mxu0 0
  %7221 = vmatprep.subr.bf16.mxu0 0
  %7222 = vmatpush1.bf16.msra.mxu0 %v7205
  %7223 = vmatprep.subr.bf16.mxu0 0
  %7224 = vmatpush1.bf16.msra.mxu0 %v7204
  %7225 = vmatprep.subr.bf16.mxu0 0
  %7226 = vmatpush1.bf16.msra.mxu0 %v7203
  %7227 = vmatprep.subr.bf16.mxu0 0
  %7228 = vmatpush1.bf16.msra.mxu0 %v7202
  %7229 = vmatprep.subr.bf16.mxu0 0
  %7230 = vmatpush2.bf16.msra.mxu0 0
  %7231 = vmatprep.subr.bf16.mxu0 0
  %7232 = vmatpush2.bf16.msra.mxu0 0
  %7233 = vmatprep.subr.bf16.mxu0 0
  %7234 = vmatpush2.bf16.msra.mxu0 0
  %7235 = vmatprep.subr.bf16.mxu0 0
  %7236 = vmatpush2.bf16.msra.mxu0 0
  %7237 = vmatprep.subr.bf16.mxu0 0
  %7238 = vmatpush2.bf16.msra.mxu0 0
  %7239 = vmatprep.subr.bf16.mxu0 0
  %7240 = vmatpush2.bf16.msra.mxu0 0
  %7241 = vmatprep.subr.bf16.mxu0 0
  %7242 = vmatpush2.bf16.msra.mxu0 0
  %7243 = vmatprep.subr.bf16.mxu0 0
  %7244 = vmatpush2.bf16.msra.mxu0 0
  %7245 = vmatprep.mubr.bf16.mxu0 0
  %7246 = vmatmul.mubr.bf16.gmra.mxu0 %v7211
  %v7247 = vpop.f32.mrf.mxu0
  %v7248 = vadd.f32 0.0, %v7247
  %v7249 = vpop.f32.mrf.mxu0
  %v7250 = vpop.f32.mrf.mxu0
  %v7251 = vadd.f32 0.0, %v7250
  %v7252 = vpop.f32.mrf.mxu0
  %7253 = vdwg.mxu0
  %v7254 = vadd.f32 %v7172, %v7248
  %v7255 = vadd.f32 %v7173, %v7251
  %v7256 = vld [vmem:[#allocation2 + $0x240] sm:$0xff]
  %v7257 = vld [vmem:[#allocation2 + $0x248] sm:$0xff]
  %v7258 = vpack.c.bf16 %v7257, %v7256
  %s7259 = scalar_lea.vmem %s7, 1152
  %v7260 = vld [vmem:[%s7259] sm:$0xf]
  %v7261 = vld [vmem:[%s7259 + $0x4] sm:$0xf]
  %v7262 = vld [vmem:[%s7259 + $0x8] sm:$0xf]
  %v7263 = vld [vmem:[%s7259 + $0xc] sm:$0xf]
  %v7264 = vld [vmem:[%s7259 + $0x10] sm:$0xf]
  %v7265 = vld [vmem:[%s7259 + $0x14] sm:$0xf]
  %v7266 = vld [vmem:[%s7259 + $0x18] sm:$0xf]
  %v7267 = vld [vmem:[%s7259 + $0x1c] sm:$0xf]
  %v7276 = vunpack.c.l.b16 %v7260
  %v7277 = vunpack.c.l.b16 %v7261
  %v7278 = vunpack.c.l.b16 %v7262
  %v7279 = vunpack.c.l.b16 %v7263
  %v7280 = vunpack.c.l.b16 %v7264
  %v7281 = vunpack.c.l.b16 %v7265
  %v7282 = vunpack.c.l.b16 %v7266
  %v7283 = vunpack.c.l.b16 %v7267
  %v7284 = vpack.c.b16 %v7277, %v7276
  %v7285 = vpack.c.b16 %v7279, %v7278
  %v7286 = vpack.c.b16 %v7281, %v7280
  %v7287 = vpack.c.b16 %v7283, %v7282
  %v7293 = vsel %vm4210, %v7258, 0
  %7295 = vmatprep.subr.bf16.mxu0 0
  %7296 = vmatpush1.bf16.msra.mxu0 0
  %7297 = vmatprep.subr.bf16.mxu0 0
  %7298 = vmatpush1.bf16.msra.mxu0 0
  %7299 = vmatprep.subr.bf16.mxu0 0
  %7300 = vmatpush1.bf16.msra.mxu0 0
  %7301 = vmatprep.subr.bf16.mxu0 0
  %7302 = vmatpush1.bf16.msra.mxu0 0
  %7303 = vmatprep.subr.bf16.mxu0 0
  %7304 = vmatpush1.bf16.msra.mxu0 %v7287
  %7305 = vmatprep.subr.bf16.mxu0 0
  %7306 = vmatpush1.bf16.msra.mxu0 %v7286
  %7307 = vmatprep.subr.bf16.mxu0 0
  %7308 = vmatpush1.bf16.msra.mxu0 %v7285
  %7309 = vmatprep.subr.bf16.mxu0 0
  %7310 = vmatpush1.bf16.msra.mxu0 %v7284
  %7311 = vmatprep.subr.bf16.mxu0 0
  %7312 = vmatpush2.bf16.msra.mxu0 0
  %7313 = vmatprep.subr.bf16.mxu0 0
  %7314 = vmatpush2.bf16.msra.mxu0 0
  %7315 = vmatprep.subr.bf16.mxu0 0
  %7316 = vmatpush2.bf16.msra.mxu0 0
  %7317 = vmatprep.subr.bf16.mxu0 0
  %7318 = vmatpush2.bf16.msra.mxu0 0
  %7319 = vmatprep.subr.bf16.mxu0 0
  %7320 = vmatpush2.bf16.msra.mxu0 0
  %7321 = vmatprep.subr.bf16.mxu0 0
  %7322 = vmatpush2.bf16.msra.mxu0 0
  %7323 = vmatprep.subr.bf16.mxu0 0
  %7324 = vmatpush2.bf16.msra.mxu0 0
  %7325 = vmatprep.subr.bf16.mxu0 0
  %7326 = vmatpush2.bf16.msra.mxu0 0
  %7327 = vmatprep.mubr.bf16.mxu0 0
  %7328 = vmatmul.mubr.bf16.gmra.mxu0 %v7293
  %v7329 = vpop.f32.mrf.mxu0
  %v7330 = vadd.f32 0.0, %v7329
  %v7331 = vpop.f32.mrf.mxu0
  %v7332 = vpop.f32.mrf.mxu0
  %v7333 = vadd.f32 0.0, %v7332
  %v7334 = vpop.f32.mrf.mxu0
  %7335 = vdwg.mxu0
  %v7336 = vadd.f32 %v7254, %v7330
  %v7337 = vadd.f32 %v7255, %v7333
  %v7338 = vld [vmem:[#allocation2 + $0x250] sm:$0xff]
  %v7339 = vld [vmem:[#allocation2 + $0x258] sm:$0xff]
  %v7340 = vpack.c.bf16 %v7339, %v7338
  %s7341 = scalar_lea.vmem %s7, 1184
  %v7342 = vld [vmem:[%s7341] sm:$0xf]
  %v7343 = vld [vmem:[%s7341 + $0x4] sm:$0xf]
  %v7344 = vld [vmem:[%s7341 + $0x8] sm:$0xf]
  %v7345 = vld [vmem:[%s7341 + $0xc] sm:$0xf]
  %v7346 = vld [vmem:[%s7341 + $0x10] sm:$0xf]
  %v7347 = vld [vmem:[%s7341 + $0x14] sm:$0xf]
  %v7348 = vld [vmem:[%s7341 + $0x18] sm:$0xf]
  %v7349 = vld [vmem:[%s7341 + $0x1c] sm:$0xf]
  %v7358 = vunpack.c.l.b16 %v7342
  %v7359 = vunpack.c.l.b16 %v7343
  %v7360 = vunpack.c.l.b16 %v7344
  %v7361 = vunpack.c.l.b16 %v7345
  %v7362 = vunpack.c.l.b16 %v7346
  %v7363 = vunpack.c.l.b16 %v7347
  %v7364 = vunpack.c.l.b16 %v7348
  %v7365 = vunpack.c.l.b16 %v7349
  %v7366 = vpack.c.b16 %v7359, %v7358
  %v7367 = vpack.c.b16 %v7361, %v7360
  %v7368 = vpack.c.b16 %v7363, %v7362
  %v7369 = vpack.c.b16 %v7365, %v7364
  %v7375 = vsel %vm4210, %v7340, 0
  %7377 = vmatprep.subr.bf16.mxu0 0
  %7378 = vmatpush1.bf16.msra.mxu0 0
  %7379 = vmatprep.subr.bf16.mxu0 0
  %7380 = vmatpush1.bf16.msra.mxu0 0
  %7381 = vmatprep.subr.bf16.mxu0 0
  %7382 = vmatpush1.bf16.msra.mxu0 0
  %7383 = vmatprep.subr.bf16.mxu0 0
  %7384 = vmatpush1.bf16.msra.mxu0 0
  %7385 = vmatprep.subr.bf16.mxu0 0
  %7386 = vmatpush1.bf16.msra.mxu0 %v7369
  %7387 = vmatprep.subr.bf16.mxu0 0
  %7388 = vmatpush1.bf16.msra.mxu0 %v7368
  %7389 = vmatprep.subr.bf16.mxu0 0
  %7390 = vmatpush1.bf16.msra.mxu0 %v7367
  %7391 = vmatprep.subr.bf16.mxu0 0
  %7392 = vmatpush1.bf16.msra.mxu0 %v7366
  %7393 = vmatprep.subr.bf16.mxu0 0
  %7394 = vmatpush2.bf16.msra.mxu0 0
  %7395 = vmatprep.subr.bf16.mxu0 0
  %7396 = vmatpush2.bf16.msra.mxu0 0
  %7397 = vmatprep.subr.bf16.mxu0 0
  %7398 = vmatpush2.bf16.msra.mxu0 0
  %7399 = vmatprep.subr.bf16.mxu0 0
  %7400 = vmatpush2.bf16.msra.mxu0 0
  %7401 = vmatprep.subr.bf16.mxu0 0
  %7402 = vmatpush2.bf16.msra.mxu0 0
  %7403 = vmatprep.subr.bf16.mxu0 0
  %7404 = vmatpush2.bf16.msra.mxu0 0
  %7405 = vmatprep.subr.bf16.mxu0 0
  %7406 = vmatpush2.bf16.msra.mxu0 0
  %7407 = vmatprep.subr.bf16.mxu0 0
  %7408 = vmatpush2.bf16.msra.mxu0 0
  %7409 = vmatprep.mubr.bf16.mxu0 0
  %7410 = vmatmul.mubr.bf16.gmra.mxu0 %v7375
  %v7411 = vpop.f32.mrf.mxu0
  %v7412 = vadd.f32 0.0, %v7411
  %v7413 = vpop.f32.mrf.mxu0
  %v7414 = vpop.f32.mrf.mxu0
  %v7415 = vadd.f32 0.0, %v7414
  %v7416 = vpop.f32.mrf.mxu0
  %7417 = vdwg.mxu0
  %v7418 = vadd.f32 %v7336, %v7412
  %v7419 = vadd.f32 %v7337, %v7415
  %v7420 = vld [vmem:[#allocation2 + $0x260] sm:$0xff]
  %v7421 = vld [vmem:[#allocation2 + $0x268] sm:$0xff]
  %v7422 = vpack.c.bf16 %v7421, %v7420
  %s7423 = scalar_lea.vmem %s7, 1216
  %v7424 = vld [vmem:[%s7423] sm:$0xf]
  %v7425 = vld [vmem:[%s7423 + $0x4] sm:$0xf]
  %v7426 = vld [vmem:[%s7423 + $0x8] sm:$0xf]
  %v7427 = vld [vmem:[%s7423 + $0xc] sm:$0xf]
  %v7428 = vld [vmem:[%s7423 + $0x10] sm:$0xf]
  %v7429 = vld [vmem:[%s7423 + $0x14] sm:$0xf]
  %v7430 = vld [vmem:[%s7423 + $0x18] sm:$0xf]
  %v7431 = vld [vmem:[%s7423 + $0x1c] sm:$0xf]
  %v7440 = vunpack.c.l.b16 %v7424
  %v7441 = vunpack.c.l.b16 %v7425
  %v7442 = vunpack.c.l.b16 %v7426
  %v7443 = vunpack.c.l.b16 %v7427
  %v7444 = vunpack.c.l.b16 %v7428
  %v7445 = vunpack.c.l.b16 %v7429
  %v7446 = vunpack.c.l.b16 %v7430
  %v7447 = vunpack.c.l.b16 %v7431
  %v7448 = vpack.c.b16 %v7441, %v7440
  %v7449 = vpack.c.b16 %v7443, %v7442
  %v7450 = vpack.c.b16 %v7445, %v7444
  %v7451 = vpack.c.b16 %v7447, %v7446
  %v7457 = vsel %vm4210, %v7422, 0
  %7459 = vmatprep.subr.bf16.mxu0 0
  %7460 = vmatpush1.bf16.msra.mxu0 0
  %7461 = vmatprep.subr.bf16.mxu0 0
  %7462 = vmatpush1.bf16.msra.mxu0 0
  %7463 = vmatprep.subr.bf16.mxu0 0
  %7464 = vmatpush1.bf16.msra.mxu0 0
  %7465 = vmatprep.subr.bf16.mxu0 0
  %7466 = vmatpush1.bf16.msra.mxu0 0
  %7467 = vmatprep.subr.bf16.mxu0 0
  %7468 = vmatpush1.bf16.msra.mxu0 %v7451
  %7469 = vmatprep.subr.bf16.mxu0 0
  %7470 = vmatpush1.bf16.msra.mxu0 %v7450
  %7471 = vmatprep.subr.bf16.mxu0 0
  %7472 = vmatpush1.bf16.msra.mxu0 %v7449
  %7473 = vmatprep.subr.bf16.mxu0 0
  %7474 = vmatpush1.bf16.msra.mxu0 %v7448
  %7475 = vmatprep.subr.bf16.mxu0 0
  %7476 = vmatpush2.bf16.msra.mxu0 0
  %7477 = vmatprep.subr.bf16.mxu0 0
  %7478 = vmatpush2.bf16.msra.mxu0 0
  %7479 = vmatprep.subr.bf16.mxu0 0
  %7480 = vmatpush2.bf16.msra.mxu0 0
  %7481 = vmatprep.subr.bf16.mxu0 0
  %7482 = vmatpush2.bf16.msra.mxu0 0
  %7483 = vmatprep.subr.bf16.mxu0 0
  %7484 = vmatpush2.bf16.msra.mxu0 0
  %7485 = vmatprep.subr.bf16.mxu0 0
  %7486 = vmatpush2.bf16.msra.mxu0 0
  %7487 = vmatprep.subr.bf16.mxu0 0
  %7488 = vmatpush2.bf16.msra.mxu0 0
  %7489 = vmatprep.subr.bf16.mxu0 0
  %7490 = vmatpush2.bf16.msra.mxu0 0
  %7491 = vmatprep.mubr.bf16.mxu0 0
  %7492 = vmatmul.mubr.bf16.gmra.mxu0 %v7457
  %v7493 = vpop.f32.mrf.mxu0
  %v7494 = vadd.f32 0.0, %v7493
  %v7495 = vpop.f32.mrf.mxu0
  %v7496 = vpop.f32.mrf.mxu0
  %v7497 = vadd.f32 0.0, %v7496
  %v7498 = vpop.f32.mrf.mxu0
  %7499 = vdwg.mxu0
  %v7500 = vadd.f32 %v7418, %v7494
  %v7501 = vadd.f32 %v7419, %v7497
  %v7502 = vld [vmem:[#allocation2 + $0x270] sm:$0xff]
  %v7503 = vld [vmem:[#allocation2 + $0x278] sm:$0xff]
  %v7504 = vpack.c.bf16 %v7503, %v7502
  %s7505 = scalar_lea.vmem %s7, 1248
  %v7506 = vld [vmem:[%s7505] sm:$0xf]
  %v7507 = vld [vmem:[%s7505 + $0x4] sm:$0xf]
  %v7508 = vld [vmem:[%s7505 + $0x8] sm:$0xf]
  %v7509 = vld [vmem:[%s7505 + $0xc] sm:$0xf]
  %v7510 = vld [vmem:[%s7505 + $0x10] sm:$0xf]
  %v7511 = vld [vmem:[%s7505 + $0x14] sm:$0xf]
  %v7512 = vld [vmem:[%s7505 + $0x18] sm:$0xf]
  %v7513 = vld [vmem:[%s7505 + $0x1c] sm:$0xf]
  %v7522 = vunpack.c.l.b16 %v7506
  %v7523 = vunpack.c.l.b16 %v7507
  %v7524 = vunpack.c.l.b16 %v7508
  %v7525 = vunpack.c.l.b16 %v7509
  %v7526 = vunpack.c.l.b16 %v7510
  %v7527 = vunpack.c.l.b16 %v7511
  %v7528 = vunpack.c.l.b16 %v7512
  %v7529 = vunpack.c.l.b16 %v7513
  %v7530 = vpack.c.b16 %v7523, %v7522
  %v7531 = vpack.c.b16 %v7525, %v7524
  %v7532 = vpack.c.b16 %v7527, %v7526
  %v7533 = vpack.c.b16 %v7529, %v7528
  %v7539 = vsel %vm4210, %v7504, 0
  %7541 = vmatprep.subr.bf16.mxu0 0
  %7542 = vmatpush1.bf16.msra.mxu0 0
  %7543 = vmatprep.subr.bf16.mxu0 0
  %7544 = vmatpush1.bf16.msra.mxu0 0
  %7545 = vmatprep.subr.bf16.mxu0 0
  %7546 = vmatpush1.bf16.msra.mxu0 0
  %7547 = vmatprep.subr.bf16.mxu0 0
  %7548 = vmatpush1.bf16.msra.mxu0 0
  %7549 = vmatprep.subr.bf16.mxu0 0
  %7550 = vmatpush1.bf16.msra.mxu0 %v7533
  %7551 = vmatprep.subr.bf16.mxu0 0
  %7552 = vmatpush1.bf16.msra.mxu0 %v7532
  %7553 = vmatprep.subr.bf16.mxu0 0
  %7554 = vmatpush1.bf16.msra.mxu0 %v7531
  %7555 = vmatprep.subr.bf16.mxu0 0
  %7556 = vmatpush1.bf16.msra.mxu0 %v7530
  %7557 = vmatprep.subr.bf16.mxu0 0
  %7558 = vmatpush2.bf16.msra.mxu0 0
  %7559 = vmatprep.subr.bf16.mxu0 0
  %7560 = vmatpush2.bf16.msra.mxu0 0
  %7561 = vmatprep.subr.bf16.mxu0 0
  %7562 = vmatpush2.bf16.msra.mxu0 0
  %7563 = vmatprep.subr.bf16.mxu0 0
  %7564 = vmatpush2.bf16.msra.mxu0 0
  %7565 = vmatprep.subr.bf16.mxu0 0
  %7566 = vmatpush2.bf16.msra.mxu0 0
  %7567 = vmatprep.subr.bf16.mxu0 0
  %7568 = vmatpush2.bf16.msra.mxu0 0
  %7569 = vmatprep.subr.bf16.mxu0 0
  %7570 = vmatpush2.bf16.msra.mxu0 0
  %7571 = vmatprep.subr.bf16.mxu0 0
  %7572 = vmatpush2.bf16.msra.mxu0 0
  %7573 = vmatprep.mubr.bf16.mxu0 0
  %7574 = vmatmul.mubr.bf16.gmra.mxu0 %v7539
  %v7575 = vpop.f32.mrf.mxu0
  %v7576 = vadd.f32 0.0, %v7575
  %v7577 = vpop.f32.mrf.mxu0
  %v7578 = vpop.f32.mrf.mxu0
  %v7579 = vadd.f32 0.0, %v7578
  %v7580 = vpop.f32.mrf.mxu0
  %7581 = vdwg.mxu0
  %v7582 = vadd.f32 %v7500, %v7576
  %v7583 = vadd.f32 %v7501, %v7579
  %v7584 = vld [vmem:[#allocation2 + $0x280] sm:$0xff]
  %v7585 = vld [vmem:[#allocation2 + $0x288] sm:$0xff]
  %v7586 = vpack.c.bf16 %v7585, %v7584
  %s7587 = scalar_lea.vmem %s7, 1280
  %v7588 = vld [vmem:[%s7587] sm:$0xf]
  %v7589 = vld [vmem:[%s7587 + $0x4] sm:$0xf]
  %v7590 = vld [vmem:[%s7587 + $0x8] sm:$0xf]
  %v7591 = vld [vmem:[%s7587 + $0xc] sm:$0xf]
  %v7592 = vld [vmem:[%s7587 + $0x10] sm:$0xf]
  %v7593 = vld [vmem:[%s7587 + $0x14] sm:$0xf]
  %v7594 = vld [vmem:[%s7587 + $0x18] sm:$0xf]
  %v7595 = vld [vmem:[%s7587 + $0x1c] sm:$0xf]
  %v7604 = vunpack.c.l.b16 %v7588
  %v7605 = vunpack.c.l.b16 %v7589
  %v7606 = vunpack.c.l.b16 %v7590
  %v7607 = vunpack.c.l.b16 %v7591
  %v7608 = vunpack.c.l.b16 %v7592
  %v7609 = vunpack.c.l.b16 %v7593
  %v7610 = vunpack.c.l.b16 %v7594
  %v7611 = vunpack.c.l.b16 %v7595
  %v7612 = vpack.c.b16 %v7605, %v7604
  %v7613 = vpack.c.b16 %v7607, %v7606
  %v7614 = vpack.c.b16 %v7609, %v7608
  %v7615 = vpack.c.b16 %v7611, %v7610
  %v7621 = vsel %vm4210, %v7586, 0
  %7623 = vmatprep.subr.bf16.mxu0 0
  %7624 = vmatpush1.bf16.msra.mxu0 0
  %7625 = vmatprep.subr.bf16.mxu0 0
  %7626 = vmatpush1.bf16.msra.mxu0 0
  %7627 = vmatprep.subr.bf16.mxu0 0
  %7628 = vmatpush1.bf16.msra.mxu0 0
  %7629 = vmatprep.subr.bf16.mxu0 0
  %7630 = vmatpush1.bf16.msra.mxu0 0
  %7631 = vmatprep.subr.bf16.mxu0 0
  %7632 = vmatpush1.bf16.msra.mxu0 %v7615
  %7633 = vmatprep.subr.bf16.mxu0 0
  %7634 = vmatpush1.bf16.msra.mxu0 %v7614
  %7635 = vmatprep.subr.bf16.mxu0 0
  %7636 = vmatpush1.bf16.msra.mxu0 %v7613
  %7637 = vmatprep.subr.bf16.mxu0 0
  %7638 = vmatpush1.bf16.msra.mxu0 %v7612
  %7639 = vmatprep.subr.bf16.mxu0 0
  %7640 = vmatpush2.bf16.msra.mxu0 0
  %7641 = vmatprep.subr.bf16.mxu0 0
  %7642 = vmatpush2.bf16.msra.mxu0 0
  %7643 = vmatprep.subr.bf16.mxu0 0
  %7644 = vmatpush2.bf16.msra.mxu0 0
  %7645 = vmatprep.subr.bf16.mxu0 0
  %7646 = vmatpush2.bf16.msra.mxu0 0
  %7647 = vmatprep.subr.bf16.mxu0 0
  %7648 = vmatpush2.bf16.msra.mxu0 0
  %7649 = vmatprep.subr.bf16.mxu0 0
  %7650 = vmatpush2.bf16.msra.mxu0 0
  %7651 = vmatprep.subr.bf16.mxu0 0
  %7652 = vmatpush2.bf16.msra.mxu0 0
  %7653 = vmatprep.subr.bf16.mxu0 0
  %7654 = vmatpush2.bf16.msra.mxu0 0
  %7655 = vmatprep.mubr.bf16.mxu0 0
  %7656 = vmatmul.mubr.bf16.gmra.mxu0 %v7621
  %v7657 = vpop.f32.mrf.mxu0
  %v7658 = vadd.f32 0.0, %v7657
  %v7659 = vpop.f32.mrf.mxu0
  %v7660 = vpop.f32.mrf.mxu0
  %v7661 = vadd.f32 0.0, %v7660
  %v7662 = vpop.f32.mrf.mxu0
  %7663 = vdwg.mxu0
  %v7664 = vadd.f32 %v7582, %v7658
  %v7665 = vadd.f32 %v7583, %v7661
  %v7666 = vld [vmem:[#allocation2 + $0x290] sm:$0xff]
  %v7667 = vld [vmem:[#allocation2 + $0x298] sm:$0xff]
  %v7668 = vpack.c.bf16 %v7667, %v7666
  %s7669 = scalar_lea.vmem %s7, 1312
  %v7670 = vld [vmem:[%s7669] sm:$0xf]
  %v7671 = vld [vmem:[%s7669 + $0x4] sm:$0xf]
  %v7672 = vld [vmem:[%s7669 + $0x8] sm:$0xf]
  %v7673 = vld [vmem:[%s7669 + $0xc] sm:$0xf]
  %v7674 = vld [vmem:[%s7669 + $0x10] sm:$0xf]
  %v7675 = vld [vmem:[%s7669 + $0x14] sm:$0xf]
  %v7676 = vld [vmem:[%s7669 + $0x18] sm:$0xf]
  %v7677 = vld [vmem:[%s7669 + $0x1c] sm:$0xf]
  %v7686 = vunpack.c.l.b16 %v7670
  %v7687 = vunpack.c.l.b16 %v7671
  %v7688 = vunpack.c.l.b16 %v7672
  %v7689 = vunpack.c.l.b16 %v7673
  %v7690 = vunpack.c.l.b16 %v7674
  %v7691 = vunpack.c.l.b16 %v7675
  %v7692 = vunpack.c.l.b16 %v7676
  %v7693 = vunpack.c.l.b16 %v7677
  %v7694 = vpack.c.b16 %v7687, %v7686
  %v7695 = vpack.c.b16 %v7689, %v7688
  %v7696 = vpack.c.b16 %v7691, %v7690
  %v7697 = vpack.c.b16 %v7693, %v7692
  %v7703 = vsel %vm4210, %v7668, 0
  %7705 = vmatprep.subr.bf16.mxu0 0
  %7706 = vmatpush1.bf16.msra.mxu0 0
  %7707 = vmatprep.subr.bf16.mxu0 0
  %7708 = vmatpush1.bf16.msra.mxu0 0
  %7709 = vmatprep.subr.bf16.mxu0 0
  %7710 = vmatpush1.bf16.msra.mxu0 0
  %7711 = vmatprep.subr.bf16.mxu0 0
  %7712 = vmatpush1.bf16.msra.mxu0 0
  %7713 = vmatprep.subr.bf16.mxu0 0
  %7714 = vmatpush1.bf16.msra.mxu0 %v7697
  %7715 = vmatprep.subr.bf16.mxu0 0
  %7716 = vmatpush1.bf16.msra.mxu0 %v7696
  %7717 = vmatprep.subr.bf16.mxu0 0
  %7718 = vmatpush1.bf16.msra.mxu0 %v7695
  %7719 = vmatprep.subr.bf16.mxu0 0
  %7720 = vmatpush1.bf16.msra.mxu0 %v7694
  %7721 = vmatprep.subr.bf16.mxu0 0
  %7722 = vmatpush2.bf16.msra.mxu0 0
  %7723 = vmatprep.subr.bf16.mxu0 0
  %7724 = vmatpush2.bf16.msra.mxu0 0
  %7725 = vmatprep.subr.bf16.mxu0 0
  %7726 = vmatpush2.bf16.msra.mxu0 0
  %7727 = vmatprep.subr.bf16.mxu0 0
  %7728 = vmatpush2.bf16.msra.mxu0 0
  %7729 = vmatprep.subr.bf16.mxu0 0
  %7730 = vmatpush2.bf16.msra.mxu0 0
  %7731 = vmatprep.subr.bf16.mxu0 0
  %7732 = vmatpush2.bf16.msra.mxu0 0
  %7733 = vmatprep.subr.bf16.mxu0 0
  %7734 = vmatpush2.bf16.msra.mxu0 0
  %7735 = vmatprep.subr.bf16.mxu0 0
  %7736 = vmatpush2.bf16.msra.mxu0 0
  %7737 = vmatprep.mubr.bf16.mxu0 0
  %7738 = vmatmul.mubr.bf16.gmra.mxu0 %v7703
  %v7739 = vpop.f32.mrf.mxu0
  %v7740 = vadd.f32 0.0, %v7739
  %v7741 = vpop.f32.mrf.mxu0
  %v7742 = vpop.f32.mrf.mxu0
  %v7743 = vadd.f32 0.0, %v7742
  %v7744 = vpop.f32.mrf.mxu0
  %7745 = vdwg.mxu0
  %v7746 = vadd.f32 %v7664, %v7740
  %v7747 = vadd.f32 %v7665, %v7743
  %v7748 = vld [vmem:[#allocation2 + $0x2a0] sm:$0xff]
  %v7749 = vld [vmem:[#allocation2 + $0x2a8] sm:$0xff]
  %v7750 = vpack.c.bf16 %v7749, %v7748
  %s7751 = scalar_lea.vmem %s7, 1344
  %v7752 = vld [vmem:[%s7751] sm:$0xf]
  %v7753 = vld [vmem:[%s7751 + $0x4] sm:$0xf]
  %v7754 = vld [vmem:[%s7751 + $0x8] sm:$0xf]
  %v7755 = vld [vmem:[%s7751 + $0xc] sm:$0xf]
  %v7756 = vld [vmem:[%s7751 + $0x10] sm:$0xf]
  %v7757 = vld [vmem:[%s7751 + $0x14] sm:$0xf]
  %v7758 = vld [vmem:[%s7751 + $0x18] sm:$0xf]
  %v7759 = vld [vmem:[%s7751 + $0x1c] sm:$0xf]
  %v7768 = vunpack.c.l.b16 %v7752
  %v7769 = vunpack.c.l.b16 %v7753
  %v7770 = vunpack.c.l.b16 %v7754
  %v7771 = vunpack.c.l.b16 %v7755
  %v7772 = vunpack.c.l.b16 %v7756
  %v7773 = vunpack.c.l.b16 %v7757
  %v7774 = vunpack.c.l.b16 %v7758
  %v7775 = vunpack.c.l.b16 %v7759
  %v7776 = vpack.c.b16 %v7769, %v7768
  %v7777 = vpack.c.b16 %v7771, %v7770
  %v7778 = vpack.c.b16 %v7773, %v7772
  %v7779 = vpack.c.b16 %v7775, %v7774
  %v7785 = vsel %vm4210, %v7750, 0
  %7787 = vmatprep.subr.bf16.mxu0 0
  %7788 = vmatpush1.bf16.msra.mxu0 0
  %7789 = vmatprep.subr.bf16.mxu0 0
  %7790 = vmatpush1.bf16.msra.mxu0 0
  %7791 = vmatprep.subr.bf16.mxu0 0
  %7792 = vmatpush1.bf16.msra.mxu0 0
  %7793 = vmatprep.subr.bf16.mxu0 0
  %7794 = vmatpush1.bf16.msra.mxu0 0
  %7795 = vmatprep.subr.bf16.mxu0 0
  %7796 = vmatpush1.bf16.msra.mxu0 %v7779
  %7797 = vmatprep.subr.bf16.mxu0 0
  %7798 = vmatpush1.bf16.msra.mxu0 %v7778
  %7799 = vmatprep.subr.bf16.mxu0 0
  %7800 = vmatpush1.bf16.msra.mxu0 %v7777
  %7801 = vmatprep.subr.bf16.mxu0 0
  %7802 = vmatpush1.bf16.msra.mxu0 %v7776
  %7803 = vmatprep.subr.bf16.mxu0 0
  %7804 = vmatpush2.bf16.msra.mxu0 0
  %7805 = vmatprep.subr.bf16.mxu0 0
  %7806 = vmatpush2.bf16.msra.mxu0 0
  %7807 = vmatprep.subr.bf16.mxu0 0
  %7808 = vmatpush2.bf16.msra.mxu0 0
  %7809 = vmatprep.subr.bf16.mxu0 0
  %7810 = vmatpush2.bf16.msra.mxu0 0
  %7811 = vmatprep.subr.bf16.mxu0 0
  %7812 = vmatpush2.bf16.msra.mxu0 0
  %7813 = vmatprep.subr.bf16.mxu0 0
  %7814 = vmatpush2.bf16.msra.mxu0 0
  %7815 = vmatprep.subr.bf16.mxu0 0
  %7816 = vmatpush2.bf16.msra.mxu0 0
  %7817 = vmatprep.subr.bf16.mxu0 0
  %7818 = vmatpush2.bf16.msra.mxu0 0
  %7819 = vmatprep.mubr.bf16.mxu0 0
  %7820 = vmatmul.mubr.bf16.gmra.mxu0 %v7785
  %v7821 = vpop.f32.mrf.mxu0
  %v7822 = vadd.f32 0.0, %v7821
  %v7823 = vpop.f32.mrf.mxu0
  %v7824 = vpop.f32.mrf.mxu0
  %v7825 = vadd.f32 0.0, %v7824
  %v7826 = vpop.f32.mrf.mxu0
  %7827 = vdwg.mxu0
  %v7828 = vadd.f32 %v7746, %v7822
  %v7829 = vadd.f32 %v7747, %v7825
  %v7830 = vld [vmem:[#allocation2 + $0x2b0] sm:$0xff]
  %v7831 = vld [vmem:[#allocation2 + $0x2b8] sm:$0xff]
  %v7832 = vpack.c.bf16 %v7831, %v7830
  %s7833 = scalar_lea.vmem %s7, 1376
  %v7834 = vld [vmem:[%s7833] sm:$0xf]
  %v7835 = vld [vmem:[%s7833 + $0x4] sm:$0xf]
  %v7836 = vld [vmem:[%s7833 + $0x8] sm:$0xf]
  %v7837 = vld [vmem:[%s7833 + $0xc] sm:$0xf]
  %v7838 = vld [vmem:[%s7833 + $0x10] sm:$0xf]
  %v7839 = vld [vmem:[%s7833 + $0x14] sm:$0xf]
  %v7840 = vld [vmem:[%s7833 + $0x18] sm:$0xf]
  %v7841 = vld [vmem:[%s7833 + $0x1c] sm:$0xf]
  %v7850 = vunpack.c.l.b16 %v7834
  %v7851 = vunpack.c.l.b16 %v7835
  %v7852 = vunpack.c.l.b16 %v7836
  %v7853 = vunpack.c.l.b16 %v7837
  %v7854 = vunpack.c.l.b16 %v7838
  %v7855 = vunpack.c.l.b16 %v7839
  %v7856 = vunpack.c.l.b16 %v7840
  %v7857 = vunpack.c.l.b16 %v7841
  %v7858 = vpack.c.b16 %v7851, %v7850
  %v7859 = vpack.c.b16 %v7853, %v7852
  %v7860 = vpack.c.b16 %v7855, %v7854
  %v7861 = vpack.c.b16 %v7857, %v7856
  %v7867 = vsel %vm4210, %v7832, 0
  %7869 = vmatprep.subr.bf16.mxu0 0
  %7870 = vmatpush1.bf16.msra.mxu0 0
  %7871 = vmatprep.subr.bf16.mxu0 0
  %7872 = vmatpush1.bf16.msra.mxu0 0
  %7873 = vmatprep.subr.bf16.mxu0 0
  %7874 = vmatpush1.bf16.msra.mxu0 0
  %7875 = vmatprep.subr.bf16.mxu0 0
  %7876 = vmatpush1.bf16.msra.mxu0 0
  %7877 = vmatprep.subr.bf16.mxu0 0
  %7878 = vmatpush1.bf16.msra.mxu0 %v7861
  %7879 = vmatprep.subr.bf16.mxu0 0
  %7880 = vmatpush1.bf16.msra.mxu0 %v7860
  %7881 = vmatprep.subr.bf16.mxu0 0
  %7882 = vmatpush1.bf16.msra.mxu0 %v7859
  %7883 = vmatprep.subr.bf16.mxu0 0
  %7884 = vmatpush1.bf16.msra.mxu0 %v7858
  %7885 = vmatprep.subr.bf16.mxu0 0
  %7886 = vmatpush2.bf16.msra.mxu0 0
  %7887 = vmatprep.subr.bf16.mxu0 0
  %7888 = vmatpush2.bf16.msra.mxu0 0
  %7889 = vmatprep.subr.bf16.mxu0 0
  %7890 = vmatpush2.bf16.msra.mxu0 0
  %7891 = vmatprep.subr.bf16.mxu0 0
  %7892 = vmatpush2.bf16.msra.mxu0 0
  %7893 = vmatprep.subr.bf16.mxu0 0
  %7894 = vmatpush2.bf16.msra.mxu0 0
  %7895 = vmatprep.subr.bf16.mxu0 0
  %7896 = vmatpush2.bf16.msra.mxu0 0
  %7897 = vmatprep.subr.bf16.mxu0 0
  %7898 = vmatpush2.bf16.msra.mxu0 0
  %7899 = vmatprep.subr.bf16.mxu0 0
  %7900 = vmatpush2.bf16.msra.mxu0 0
  %7901 = vmatprep.mubr.bf16.mxu0 0
  %7902 = vmatmul.mubr.bf16.gmra.mxu0 %v7867
  %v7903 = vpop.f32.mrf.mxu0
  %v7904 = vadd.f32 0.0, %v7903
  %v7905 = vpop.f32.mrf.mxu0
  %v7906 = vpop.f32.mrf.mxu0
  %v7907 = vadd.f32 0.0, %v7906
  %v7908 = vpop.f32.mrf.mxu0
  %7909 = vdwg.mxu0
  %v7910 = vadd.f32 %v7828, %v7904
  %v7911 = vadd.f32 %v7829, %v7907
  %v7912 = vld [vmem:[#allocation2 + $0x2c0] sm:$0xff]
  %v7913 = vld [vmem:[#allocation2 + $0x2c8] sm:$0xff]
  %v7914 = vpack.c.bf16 %v7913, %v7912
  %s7915 = scalar_lea.vmem %s7, 1408
  %v7916 = vld [vmem:[%s7915] sm:$0xf]
  %v7917 = vld [vmem:[%s7915 + $0x4] sm:$0xf]
  %v7918 = vld [vmem:[%s7915 + $0x8] sm:$0xf]
  %v7919 = vld [vmem:[%s7915 + $0xc] sm:$0xf]
  %v7920 = vld [vmem:[%s7915 + $0x10] sm:$0xf]
  %v7921 = vld [vmem:[%s7915 + $0x14] sm:$0xf]
  %v7922 = vld [vmem:[%s7915 + $0x18] sm:$0xf]
  %v7923 = vld [vmem:[%s7915 + $0x1c] sm:$0xf]
  %v7932 = vunpack.c.l.b16 %v7916
  %v7933 = vunpack.c.l.b16 %v7917
  %v7934 = vunpack.c.l.b16 %v7918
  %v7935 = vunpack.c.l.b16 %v7919
  %v7936 = vunpack.c.l.b16 %v7920
  %v7937 = vunpack.c.l.b16 %v7921
  %v7938 = vunpack.c.l.b16 %v7922
  %v7939 = vunpack.c.l.b16 %v7923
  %v7940 = vpack.c.b16 %v7933, %v7932
  %v7941 = vpack.c.b16 %v7935, %v7934
  %v7942 = vpack.c.b16 %v7937, %v7936
  %v7943 = vpack.c.b16 %v7939, %v7938
  %v7949 = vsel %vm4210, %v7914, 0
  %7951 = vmatprep.subr.bf16.mxu0 0
  %7952 = vmatpush1.bf16.msra.mxu0 0
  %7953 = vmatprep.subr.bf16.mxu0 0
  %7954 = vmatpush1.bf16.msra.mxu0 0
  %7955 = vmatprep.subr.bf16.mxu0 0
  %7956 = vmatpush1.bf16.msra.mxu0 0
  %7957 = vmatprep.subr.bf16.mxu0 0
  %7958 = vmatpush1.bf16.msra.mxu0 0
  %7959 = vmatprep.subr.bf16.mxu0 0
  %7960 = vmatpush1.bf16.msra.mxu0 %v7943
  %7961 = vmatprep.subr.bf16.mxu0 0
  %7962 = vmatpush1.bf16.msra.mxu0 %v7942
  %7963 = vmatprep.subr.bf16.mxu0 0
  %7964 = vmatpush1.bf16.msra.mxu0 %v7941
  %7965 = vmatprep.subr.bf16.mxu0 0
  %7966 = vmatpush1.bf16.msra.mxu0 %v7940
  %7967 = vmatprep.subr.bf16.mxu0 0
  %7968 = vmatpush2.bf16.msra.mxu0 0
  %7969 = vmatprep.subr.bf16.mxu0 0
  %7970 = vmatpush2.bf16.msra.mxu0 0
  %7971 = vmatprep.subr.bf16.mxu0 0
  %7972 = vmatpush2.bf16.msra.mxu0 0
  %7973 = vmatprep.subr.bf16.mxu0 0
  %7974 = vmatpush2.bf16.msra.mxu0 0
  %7975 = vmatprep.subr.bf16.mxu0 0
  %7976 = vmatpush2.bf16.msra.mxu0 0
  %7977 = vmatprep.subr.bf16.mxu0 0
  %7978 = vmatpush2.bf16.msra.mxu0 0
  %7979 = vmatprep.subr.bf16.mxu0 0
  %7980 = vmatpush2.bf16.msra.mxu0 0
  %7981 = vmatprep.subr.bf16.mxu0 0
  %7982 = vmatpush2.bf16.msra.mxu0 0
  %7983 = vmatprep.mubr.bf16.mxu0 0
  %7984 = vmatmul.mubr.bf16.gmra.mxu0 %v7949
  %v7985 = vpop.f32.mrf.mxu0
  %v7986 = vadd.f32 0.0, %v7985
  %v7987 = vpop.f32.mrf.mxu0
  %v7988 = vpop.f32.mrf.mxu0
  %v7989 = vadd.f32 0.0, %v7988
  %v7990 = vpop.f32.mrf.mxu0
  %7991 = vdwg.mxu0
  %v7992 = vadd.f32 %v7910, %v7986
  %v7993 = vadd.f32 %v7911, %v7989
  %v7994 = vld [vmem:[#allocation2 + $0x2d0] sm:$0xff]
  %v7995 = vld [vmem:[#allocation2 + $0x2d8] sm:$0xff]
  %v7996 = vpack.c.bf16 %v7995, %v7994
  %s7997 = scalar_lea.vmem %s7, 1440
  %v7998 = vld [vmem:[%s7997] sm:$0xf]
  %v7999 = vld [vmem:[%s7997 + $0x4] sm:$0xf]
  %v8000 = vld [vmem:[%s7997 + $0x8] sm:$0xf]
  %v8001 = vld [vmem:[%s7997 + $0xc] sm:$0xf]
  %v8002 = vld [vmem:[%s7997 + $0x10] sm:$0xf]
  %v8003 = vld [vmem:[%s7997 + $0x14] sm:$0xf]
  %v8004 = vld [vmem:[%s7997 + $0x18] sm:$0xf]
  %v8005 = vld [vmem:[%s7997 + $0x1c] sm:$0xf]
  %v8014 = vunpack.c.l.b16 %v7998
  %v8015 = vunpack.c.l.b16 %v7999
  %v8016 = vunpack.c.l.b16 %v8000
  %v8017 = vunpack.c.l.b16 %v8001
  %v8018 = vunpack.c.l.b16 %v8002
  %v8019 = vunpack.c.l.b16 %v8003
  %v8020 = vunpack.c.l.b16 %v8004
  %v8021 = vunpack.c.l.b16 %v8005
  %v8022 = vpack.c.b16 %v8015, %v8014
  %v8023 = vpack.c.b16 %v8017, %v8016
  %v8024 = vpack.c.b16 %v8019, %v8018
  %v8025 = vpack.c.b16 %v8021, %v8020
  %v8031 = vsel %vm4210, %v7996, 0
  %8033 = vmatprep.subr.bf16.mxu0 0
  %8034 = vmatpush1.bf16.msra.mxu0 0
  %8035 = vmatprep.subr.bf16.mxu0 0
  %8036 = vmatpush1.bf16.msra.mxu0 0
  %8037 = vmatprep.subr.bf16.mxu0 0
  %8038 = vmatpush1.bf16.msra.mxu0 0
  %8039 = vmatprep.subr.bf16.mxu0 0
  %8040 = vmatpush1.bf16.msra.mxu0 0
  %8041 = vmatprep.subr.bf16.mxu0 0
  %8042 = vmatpush1.bf16.msra.mxu0 %v8025
  %8043 = vmatprep.subr.bf16.mxu0 0
  %8044 = vmatpush1.bf16.msra.mxu0 %v8024
  %8045 = vmatprep.subr.bf16.mxu0 0
  %8046 = vmatpush1.bf16.msra.mxu0 %v8023
  %8047 = vmatprep.subr.bf16.mxu0 0
  %8048 = vmatpush1.bf16.msra.mxu0 %v8022
  %8049 = vmatprep.subr.bf16.mxu0 0
  %8050 = vmatpush2.bf16.msra.mxu0 0
  %8051 = vmatprep.subr.bf16.mxu0 0
  %8052 = vmatpush2.bf16.msra.mxu0 0
  %8053 = vmatprep.subr.bf16.mxu0 0
  %8054 = vmatpush2.bf16.msra.mxu0 0
  %8055 = vmatprep.subr.bf16.mxu0 0
  %8056 = vmatpush2.bf16.msra.mxu0 0
  %8057 = vmatprep.subr.bf16.mxu0 0
  %8058 = vmatpush2.bf16.msra.mxu0 0
  %8059 = vmatprep.subr.bf16.mxu0 0
  %8060 = vmatpush2.bf16.msra.mxu0 0
  %8061 = vmatprep.subr.bf16.mxu0 0
  %8062 = vmatpush2.bf16.msra.mxu0 0
  %8063 = vmatprep.subr.bf16.mxu0 0
  %8064 = vmatpush2.bf16.msra.mxu0 0
  %8065 = vmatprep.mubr.bf16.mxu0 0
  %8066 = vmatmul.mubr.bf16.gmra.mxu0 %v8031
  %v8067 = vpop.f32.mrf.mxu0
  %v8068 = vadd.f32 0.0, %v8067
  %v8069 = vpop.f32.mrf.mxu0
  %v8070 = vpop.f32.mrf.mxu0
  %v8071 = vadd.f32 0.0, %v8070
  %v8072 = vpop.f32.mrf.mxu0
  %8073 = vdwg.mxu0
  %v8074 = vadd.f32 %v7992, %v8068
  %v8075 = vadd.f32 %v7993, %v8071
  %v8076 = vld [vmem:[#allocation2 + $0x2e0] sm:$0xff]
  %v8077 = vld [vmem:[#allocation2 + $0x2e8] sm:$0xff]
  %v8078 = vpack.c.bf16 %v8077, %v8076
  %s8079 = scalar_lea.vmem %s7, 1472
  %v8080 = vld [vmem:[%s8079] sm:$0xf]
  %v8081 = vld [vmem:[%s8079 + $0x4] sm:$0xf]
  %v8082 = vld [vmem:[%s8079 + $0x8] sm:$0xf]
  %v8083 = vld [vmem:[%s8079 + $0xc] sm:$0xf]
  %v8084 = vld [vmem:[%s8079 + $0x10] sm:$0xf]
  %v8085 = vld [vmem:[%s8079 + $0x14] sm:$0xf]
  %v8086 = vld [vmem:[%s8079 + $0x18] sm:$0xf]
  %v8087 = vld [vmem:[%s8079 + $0x1c] sm:$0xf]
  %v8096 = vunpack.c.l.b16 %v8080
  %v8097 = vunpack.c.l.b16 %v8081
  %v8098 = vunpack.c.l.b16 %v8082
  %v8099 = vunpack.c.l.b16 %v8083
  %v8100 = vunpack.c.l.b16 %v8084
  %v8101 = vunpack.c.l.b16 %v8085
  %v8102 = vunpack.c.l.b16 %v8086
  %v8103 = vunpack.c.l.b16 %v8087
  %v8104 = vpack.c.b16 %v8097, %v8096
  %v8105 = vpack.c.b16 %v8099, %v8098
  %v8106 = vpack.c.b16 %v8101, %v8100
  %v8107 = vpack.c.b16 %v8103, %v8102
  %v8113 = vsel %vm4210, %v8078, 0
  %8115 = vmatprep.subr.bf16.mxu0 0
  %8116 = vmatpush1.bf16.msra.mxu0 0
  %8117 = vmatprep.subr.bf16.mxu0 0
  %8118 = vmatpush1.bf16.msra.mxu0 0
  %8119 = vmatprep.subr.bf16.mxu0 0
  %8120 = vmatpush1.bf16.msra.mxu0 0
  %8121 = vmatprep.subr.bf16.mxu0 0
  %8122 = vmatpush1.bf16.msra.mxu0 0
  %8123 = vmatprep.subr.bf16.mxu0 0
  %8124 = vmatpush1.bf16.msra.mxu0 %v8107
  %8125 = vmatprep.subr.bf16.mxu0 0
  %8126 = vmatpush1.bf16.msra.mxu0 %v8106
  %8127 = vmatprep.subr.bf16.mxu0 0
  %8128 = vmatpush1.bf16.msra.mxu0 %v8105
  %8129 = vmatprep.subr.bf16.mxu0 0
  %8130 = vmatpush1.bf16.msra.mxu0 %v8104
  %8131 = vmatprep.subr.bf16.mxu0 0
  %8132 = vmatpush2.bf16.msra.mxu0 0
  %8133 = vmatprep.subr.bf16.mxu0 0
  %8134 = vmatpush2.bf16.msra.mxu0 0
  %8135 = vmatprep.subr.bf16.mxu0 0
  %8136 = vmatpush2.bf16.msra.mxu0 0
  %8137 = vmatprep.subr.bf16.mxu0 0
  %8138 = vmatpush2.bf16.msra.mxu0 0
  %8139 = vmatprep.subr.bf16.mxu0 0
  %8140 = vmatpush2.bf16.msra.mxu0 0
  %8141 = vmatprep.subr.bf16.mxu0 0
  %8142 = vmatpush2.bf16.msra.mxu0 0
  %8143 = vmatprep.subr.bf16.mxu0 0
  %8144 = vmatpush2.bf16.msra.mxu0 0
  %8145 = vmatprep.subr.bf16.mxu0 0
  %8146 = vmatpush2.bf16.msra.mxu0 0
  %8147 = vmatprep.mubr.bf16.mxu0 0
  %8148 = vmatmul.mubr.bf16.gmra.mxu0 %v8113
  %v8149 = vpop.f32.mrf.mxu0
  %v8150 = vadd.f32 0.0, %v8149
  %v8151 = vpop.f32.mrf.mxu0
  %v8152 = vpop.f32.mrf.mxu0
  %v8153 = vadd.f32 0.0, %v8152
  %v8154 = vpop.f32.mrf.mxu0
  %8155 = vdwg.mxu0
  %v8156 = vadd.f32 %v8074, %v8150
  %v8157 = vadd.f32 %v8075, %v8153
  %v8158 = vld [vmem:[#allocation2 + $0x2f0] sm:$0xff]
  %v8159 = vld [vmem:[#allocation2 + $0x2f8] sm:$0xff]
  %v8160 = vpack.c.bf16 %v8159, %v8158
  %s8161 = scalar_lea.vmem %s7, 1504
  %v8162 = vld [vmem:[%s8161] sm:$0xf]
  %v8163 = vld [vmem:[%s8161 + $0x4] sm:$0xf]
  %v8164 = vld [vmem:[%s8161 + $0x8] sm:$0xf]
  %v8165 = vld [vmem:[%s8161 + $0xc] sm:$0xf]
  %v8166 = vld [vmem:[%s8161 + $0x10] sm:$0xf]
  %v8167 = vld [vmem:[%s8161 + $0x14] sm:$0xf]
  %v8168 = vld [vmem:[%s8161 + $0x18] sm:$0xf]
  %v8169 = vld [vmem:[%s8161 + $0x1c] sm:$0xf]
  %v8178 = vunpack.c.l.b16 %v8162
  %v8179 = vunpack.c.l.b16 %v8163
  %v8180 = vunpack.c.l.b16 %v8164
  %v8181 = vunpack.c.l.b16 %v8165
  %v8182 = vunpack.c.l.b16 %v8166
  %v8183 = vunpack.c.l.b16 %v8167
  %v8184 = vunpack.c.l.b16 %v8168
  %v8185 = vunpack.c.l.b16 %v8169
  %v8186 = vpack.c.b16 %v8179, %v8178
  %v8187 = vpack.c.b16 %v8181, %v8180
  %v8188 = vpack.c.b16 %v8183, %v8182
  %v8189 = vpack.c.b16 %v8185, %v8184
  %v8195 = vsel %vm4210, %v8160, 0
  %8197 = vmatprep.subr.bf16.mxu0 0
  %8198 = vmatpush1.bf16.msra.mxu0 0
  %8199 = vmatprep.subr.bf16.mxu0 0
  %8200 = vmatpush1.bf16.msra.mxu0 0
  %8201 = vmatprep.subr.bf16.mxu0 0
  %8202 = vmatpush1.bf16.msra.mxu0 0
  %8203 = vmatprep.subr.bf16.mxu0 0
  %8204 = vmatpush1.bf16.msra.mxu0 0
  %8205 = vmatprep.subr.bf16.mxu0 0
  %8206 = vmatpush1.bf16.msra.mxu0 %v8189
  %8207 = vmatprep.subr.bf16.mxu0 0
  %8208 = vmatpush1.bf16.msra.mxu0 %v8188
  %8209 = vmatprep.subr.bf16.mxu0 0
  %8210 = vmatpush1.bf16.msra.mxu0 %v8187
  %8211 = vmatprep.subr.bf16.mxu0 0
  %8212 = vmatpush1.bf16.msra.mxu0 %v8186
  %8213 = vmatprep.subr.bf16.mxu0 0
  %8214 = vmatpush2.bf16.msra.mxu0 0
  %8215 = vmatprep.subr.bf16.mxu0 0
  %8216 = vmatpush2.bf16.msra.mxu0 0
  %8217 = vmatprep.subr.bf16.mxu0 0
  %8218 = vmatpush2.bf16.msra.mxu0 0
  %8219 = vmatprep.subr.bf16.mxu0 0
  %8220 = vmatpush2.bf16.msra.mxu0 0
  %8221 = vmatprep.subr.bf16.mxu0 0
  %8222 = vmatpush2.bf16.msra.mxu0 0
  %8223 = vmatprep.subr.bf16.mxu0 0
  %8224 = vmatpush2.bf16.msra.mxu0 0
  %8225 = vmatprep.subr.bf16.mxu0 0
  %8226 = vmatpush2.bf16.msra.mxu0 0
  %8227 = vmatprep.subr.bf16.mxu0 0
  %8228 = vmatpush2.bf16.msra.mxu0 0
  %8229 = vmatprep.mubr.bf16.mxu0 0
  %8230 = vmatmul.mubr.bf16.gmra.mxu0 %v8195
  %v8231 = vpop.f32.mrf.mxu0
  %v8232 = vadd.f32 0.0, %v8231
  %v8233 = vpop.f32.mrf.mxu0
  %v8234 = vpop.f32.mrf.mxu0
  %v8235 = vadd.f32 0.0, %v8234
  %v8236 = vpop.f32.mrf.mxu0
  %8237 = vdwg.mxu0
  %v8238 = vadd.f32 %v8156, %v8232
  %v8239 = vadd.f32 %v8157, %v8235
  %v8240 = vld [vmem:[#allocation2 + $0x300] sm:$0xff]
  %v8241 = vld [vmem:[#allocation2 + $0x308] sm:$0xff]
  %v8242 = vpack.c.bf16 %v8241, %v8240
  %s8243 = scalar_lea.vmem %s7, 1536
  %v8244 = vld [vmem:[%s8243] sm:$0xf]
  %v8245 = vld [vmem:[%s8243 + $0x4] sm:$0xf]
  %v8246 = vld [vmem:[%s8243 + $0x8] sm:$0xf]
  %v8247 = vld [vmem:[%s8243 + $0xc] sm:$0xf]
  %v8248 = vld [vmem:[%s8243 + $0x10] sm:$0xf]
  %v8249 = vld [vmem:[%s8243 + $0x14] sm:$0xf]
  %v8250 = vld [vmem:[%s8243 + $0x18] sm:$0xf]
  %v8251 = vld [vmem:[%s8243 + $0x1c] sm:$0xf]
  %v8260 = vunpack.c.l.b16 %v8244
  %v8261 = vunpack.c.l.b16 %v8245
  %v8262 = vunpack.c.l.b16 %v8246
  %v8263 = vunpack.c.l.b16 %v8247
  %v8264 = vunpack.c.l.b16 %v8248
  %v8265 = vunpack.c.l.b16 %v8249
  %v8266 = vunpack.c.l.b16 %v8250
  %v8267 = vunpack.c.l.b16 %v8251
  %v8268 = vpack.c.b16 %v8261, %v8260
  %v8269 = vpack.c.b16 %v8263, %v8262
  %v8270 = vpack.c.b16 %v8265, %v8264
  %v8271 = vpack.c.b16 %v8267, %v8266
  %v8277 = vsel %vm4210, %v8242, 0
  %8279 = vmatprep.subr.bf16.mxu0 0
  %8280 = vmatpush1.bf16.msra.mxu0 0
  %8281 = vmatprep.subr.bf16.mxu0 0
  %8282 = vmatpush1.bf16.msra.mxu0 0
  %8283 = vmatprep.subr.bf16.mxu0 0
  %8284 = vmatpush1.bf16.msra.mxu0 0
  %8285 = vmatprep.subr.bf16.mxu0 0
  %8286 = vmatpush1.bf16.msra.mxu0 0
  %8287 = vmatprep.subr.bf16.mxu0 0
  %8288 = vmatpush1.bf16.msra.mxu0 %v8271
  %8289 = vmatprep.subr.bf16.mxu0 0
  %8290 = vmatpush1.bf16.msra.mxu0 %v8270
  %8291 = vmatprep.subr.bf16.mxu0 0
  %8292 = vmatpush1.bf16.msra.mxu0 %v8269
  %8293 = vmatprep.subr.bf16.mxu0 0
  %8294 = vmatpush1.bf16.msra.mxu0 %v8268
  %8295 = vmatprep.subr.bf16.mxu0 0
  %8296 = vmatpush2.bf16.msra.mxu0 0
  %8297 = vmatprep.subr.bf16.mxu0 0
  %8298 = vmatpush2.bf16.msra.mxu0 0
  %8299 = vmatprep.subr.bf16.mxu0 0
  %8300 = vmatpush2.bf16.msra.mxu0 0
  %8301 = vmatprep.subr.bf16.mxu0 0
  %8302 = vmatpush2.bf16.msra.mxu0 0
  %8303 = vmatprep.subr.bf16.mxu0 0
  %8304 = vmatpush2.bf16.msra.mxu0 0
  %8305 = vmatprep.subr.bf16.mxu0 0
  %8306 = vmatpush2.bf16.msra.mxu0 0
  %8307 = vmatprep.subr.bf16.mxu0 0
  %8308 = vmatpush2.bf16.msra.mxu0 0
  %8309 = vmatprep.subr.bf16.mxu0 0
  %8310 = vmatpush2.bf16.msra.mxu0 0
  %8311 = vmatprep.mubr.bf16.mxu0 0
  %8312 = vmatmul.mubr.bf16.gmra.mxu0 %v8277
  %v8313 = vpop.f32.mrf.mxu0
  %v8314 = vadd.f32 0.0, %v8313
  %v8315 = vpop.f32.mrf.mxu0
  %v8316 = vpop.f32.mrf.mxu0
  %v8317 = vadd.f32 0.0, %v8316
  %v8318 = vpop.f32.mrf.mxu0
  %8319 = vdwg.mxu0
  %v8320 = vadd.f32 %v8238, %v8314
  %v8321 = vadd.f32 %v8239, %v8317
  %v8322 = vld [vmem:[%s8] sm:$0x1]
  %v8324 = vlaneseq
  %v8325 = vshrl.u32 %v8324, 7
  %v8326 = vsub.s32 0, %v8325
  %v8327 = vrot.slane %v8322, %v8326
  %v8329 = vadd.f32 %v8320, %v8327
  %v8330 = vadd.f32 %v8321, %v8327
  %8331 = vst [vmem:[%s9] sm:$0xff] %v8329
  %8332 = vst [vmem:[%s9 + $0x8] sm:$0xff] %v8330
  // Predicated region
  $region38: #{resnet_visual_encoder.1} parent=0 // pred_check
    _
  $region39: #{resnet_visual_encoder.1} parent=0 // pred_check_branch
    %8334 = sbr.rel (0) target = $region41
  $region40: #{resnet_visual_encoder.1} parent=0 // pred_region
    _
  $region41: #{resnet_visual_encoder.1} parent=0 // pred_fallthru
    _
  // Predicated region
  $region42: #{resnet_visual_encoder.1} parent=0 // pred_check
    _
  $region43: #{resnet_visual_encoder.1} parent=0 // pred_check_branch
    %8336 = sbr.rel (0) target = $region45
  $region44: #{resnet_visual_encoder.1} parent=0 // pred_region
    _
  $region45: #{resnet_visual_encoder.1} parent=0 // pred_fallthru
    _

</llo_original>
